<compile_context>
chip_gen: v5e
topology: v5e:2x2
jax: 0.10.0
libtpu: 0.0.40
codegen_flags: <defaults>
</compile_context>

<pallas_src>
import jax
import jax.numpy as jnp
from jax.experimental import pallas as pl
from jax.experimental.pallas import tpu as pltpu


# --------------------------------------------------------------------------
# Fused forward kernel (one batch block per grid step).
# --------------------------------------------------------------------------
def ascnn_fused_kernel(lens_ref, x_ref, pw_ref, msk_ref,
                       wi_f_ref, wh_f_ref, b_f_ref,
                       wi_b_ref, wh_b_ref, b_b_ref,
                       c1w_ref, c1b_ref, c2w_ref, c2b_ref,
                       fcw_ref, fcb_ref, o_ref, tout_ref):
    Bb, T, D = x_ref.shape
    H = wh_f_ref.shape[0]
    C = 2 * H
    bf16 = jnp.bfloat16

    # ---------------- bidirectional, length-masked LSTM ----------------
    # Hoisted input projections: one matmul per direction over all B*T rows.
    x2d = x_ref[...].reshape(Bb * T, D).astype(bf16)
    zx_f = (jnp.dot(x2d, wi_f_ref[...].astype(bf16),
                    preferred_element_type=jnp.float32)
            + b_f_ref[...]).reshape(Bb, T, 4 * H)
    zx_b = (jnp.dot(x2d, wi_b_ref[...].astype(bf16),
                    preferred_element_type=jnp.float32)
            + b_b_ref[...]).reshape(Bb, T, 4 * H)

    # Validity mask for every timestep, computed once (packed-sequence semantics).
    lens = lens_ref[:, 0, :]                                       # (Bb, 1) int32
    tvec = jax.lax.broadcasted_iota(jnp.int32, (Bb, T), 1)
    keep = (tvec < lens).astype(jnp.float32)                       # (Bb, T)

    wh_f = wh_f_ref[...]
    wh_b = wh_b_ref[...]

    def lstm_gates(z, c):
        i = jax.nn.sigmoid(z[:, 0:H])
        f = jax.nn.sigmoid(z[:, H:2 * H])
        g = jnp.tanh(z[:, 2 * H:3 * H])
        o = jax.nn.sigmoid(z[:, 3 * H:4 * H])
        c_new = f * c + i * g
        return o * jnp.tanh(c_new), c_new

    h_f = jnp.zeros((Bb, H), jnp.float32)
    c_f = h_f
    h_b = h_f
    c_b = h_f
    # Forward (t) and backward (T-1-t) recurrences interleaved: two independent
    # tiny matmul chains per step keep the MXU busier.  Hidden states are written
    # straight into the text_out scratch (no stack/concat epilogue).
    # TODO(synk): for production T (~80+) switch to lax.fori_loop + pl.ds stores.
    for t in range(T):                       # T small & static -> unrolled
        tb = T - 1 - t
        z_f = zx_f[:, t, :] + jnp.dot(h_f, wh_f, preferred_element_type=jnp.float32)
        z_b = zx_b[:, tb, :] + jnp.dot(h_b, wh_b, preferred_element_type=jnp.float32)
        hn_f, cn_f = lstm_gates(z_f, c_f)
        hn_b, cn_b = lstm_gates(z_b, c_b)
        kf = keep[:, t:t + 1]                # (Bb, 1) float blend factors
        kb = keep[:, tb:tb + 1]
        h_f = kf * hn_f + (1.0 - kf) * h_f
        c_f = kf * cn_f + (1.0 - kf) * c_f
        h_b = kb * hn_b + (1.0 - kb) * h_b
        c_b = kb * cn_b + (1.0 - kb) * c_b
        tout_ref[:, t, 0:H] = kf * h_f
        tout_ref[:, tb, H:2 * H] = kb * h_b

    tout = tout_ref[...]                                           # (Bb, T, C)
    tout_bf = tout.astype(bf16)
    pw = pw_ref[...]                                               # (Bb, T, 1)

    # ---------- position-weight -> Conv1d(k=3, pad=1) -> ReLU ----------
    # out[t] = x[t-1]@w0 + x[t]@w1 + x[t+1]@w2 + b ; taps are matmuls from the
    # single X and the shifts happen on the outputs via pltpu.roll + edge masks.
    def conv_relu(xin, w_ref, b_ref):
        x2 = xin.reshape(Bb * T, C).astype(bf16)
        w = w_ref[...].astype(bf16)                                # (3, C, C)
        y0 = jnp.dot(x2, w[0], preferred_element_type=jnp.float32)
        y1 = jnp.dot(x2, w[1], preferred_element_type=jnp.float32)
        y2 = jnp.dot(x2, w[2], preferred_element_type=jnp.float32)
        y0s = pltpu.roll(y0, shift=1, axis=0).reshape(Bb, T, C)          # row <- row-1
        y2s = pltpu.roll(y2, shift=Bb * T - 1, axis=0).reshape(Bb, T, C)  # row <- row+1
        tpos = jax.lax.broadcasted_iota(jnp.int32, (Bb, T, 1), 1)
        y0s = jnp.where(tpos == 0, 0.0, y0s)         # zero padding at t-1 < 0
        y2s = jnp.where(tpos == T - 1, 0.0, y2s)     # zero padding at t+1 >= T
        y = y0s + y1.reshape(Bb, T, C) + y2s + b_ref[...]
        return jnp.maximum(y, 0.0)

    x1 = conv_relu(pw * tout, c1w_ref, c1b_ref)
    x2_ = conv_relu(pw * x1, c2w_ref, c2b_ref)

    # ---------- aspect mask + attention (reduce-then-matvec) + Linear ----------
    xm_sum = jnp.sum(msk_ref[...] * x2_, axis=1, keepdims=True)    # (Bb, 1, C)
    scores = jnp.einsum('bqc,bkc->bqk', xm_sum.astype(bf16), tout_bf,
                        preferred_element_type=jnp.float32)        # (Bb, 1, T)
    scores = scores - jnp.max(scores, axis=2, keepdims=True)
    e = jnp.exp(scores)
    alpha = e * pl.reciprocal(jnp.sum(e, axis=2, keepdims=True), approx=True)
    ctx = jnp.einsum('bqk,bkc->bqc', alpha.astype(bf16), tout_bf,
                     preferred_element_type=jnp.float32)           # (Bb, 1, C)
    logits = (jnp.dot(ctx[:, 0, :].astype(bf16), fcw_ref[...].astype(bf16),
                      preferred_element_type=jnp.float32) + fcb_ref[...])
    o_ref[...] = logits.reshape(Bb, 1, -1)


# --------------------------------------------------------------------------
# Plain-JAX glue: position-weight / aspect-mask tables (pure index arithmetic,
# mirrors ASCNN.position_weight / ASCNN.mask).
# --------------------------------------------------------------------------
def position_weight(left_len, aspect_len, text_len, T):
    j = jnp.arange(T, dtype=jnp.float32)[None, :]                 # (1, T)
    left = left_len[:, None].astype(jnp.float32)
    right = (left_len + aspect_len - 1)[:, None].astype(jnp.float32)
    tl = text_len[:, None].astype(jnp.float32)
    nal = jnp.maximum((text_len - aspect_len)[:, None].astype(jnp.float32), 1.0)
    w_before = 1.0 - (left - j) / nal
    w_after = 1.0 - (j - right) / nal
    w = jnp.where(j < left, w_before,
        jnp.where(j <= right, 0.0,
        jnp.where(j < tl, w_after, 0.0)))
    return w[:, :, None]                                          # (B, T, 1)


def aspect_mask(left_len, aspect_len, T):
    j = jnp.arange(T)[None, :]
    left = left_len[:, None]
    right = (left_len + aspect_len - 1)[:, None]
    m = ((j >= left) & (j <= right)).astype(jnp.float32)
    return m[:, :, None]                                          # (B, T, 1)


# --------------------------------------------------------------------------
# Full forward pass: glue + one fused pallas_call (grid over batch).
# --------------------------------------------------------------------------
def ascnn_forward(params, cattext_indices, aspect_indices, left_indices, b_block=1):
    B, T = cattext_indices.shape
    text_len = jnp.sum(cattext_indices != 0, axis=1).astype(jnp.int32)
    aspect_len = jnp.sum(aspect_indices != 0, axis=-1).astype(jnp.int32)
    left_len = jnp.sum(left_indices != 0, axis=-1).astype(jnp.int32)

    text = params['embedding'][cattext_indices].astype(jnp.float32)   # (B, T, D) gather (glue)
    # nn.Dropout(0.3) is the identity at inference time.
    pw = position_weight(left_len, aspect_len, text_len, T)           # (B, T, 1)
    msk = aspect_mask(left_len, aspect_len, T)                        # (B, T, 1)
    lens3 = text_len.reshape(B, 1, 1)

    D = text.shape[-1]
    H = params['wh_f'].shape[0]
    C = 2 * H
    P = params['fc_w'].shape[-1]
    BB = b_block
    assert B % BB == 0

    bmap = lambda b: (b, 0, 0)
    w2 = lambda b: (0, 0)
    w3 = lambda b: (0, 0, 0)

    out = pl.pallas_call(
        ascnn_fused_kernel,
        grid=(B // BB,),
        in_specs=[
            pl.BlockSpec((BB, 1, 1), bmap),          # text_len
            pl.BlockSpec((BB, T, D), bmap),          # embedded text
            pl.BlockSpec((BB, T, 1), bmap),          # position weights
            pl.BlockSpec((BB, T, 1), bmap),          # aspect mask
            pl.BlockSpec((D, 4 * H), w2),            # wi_f
            pl.BlockSpec((H, 4 * H), w2),            # wh_f
            pl.BlockSpec((1, 4 * H), w2),            # b_f
            pl.BlockSpec((D, 4 * H), w2),            # wi_b
            pl.BlockSpec((H, 4 * H), w2),            # wh_b
            pl.BlockSpec((1, 4 * H), w2),            # b_b
            pl.BlockSpec((3, C, C), w3),             # conv1_w
            pl.BlockSpec((1, C), w2),                # conv1_b
            pl.BlockSpec((3, C, C), w3),             # conv2_w
            pl.BlockSpec((1, C), w2),                # conv2_b
            pl.BlockSpec((C, P), w2),                # fc_w
            pl.BlockSpec((1, P), w2),                # fc_b
        ],
        out_specs=pl.BlockSpec((BB, 1, P), bmap),
        out_shape=jax.ShapeDtypeStruct((B, 1, P), jnp.float32),
        scratch_shapes=[pltpu.VMEM((BB, T, C), jnp.float32)],       # text_out scratch
        compiler_params=pltpu.CompilerParams(
            dimension_semantics=("parallel",)),
    )(lens3, text, pw, msk,
      params['wi_f'], params['wh_f'], params['b_f'],
      params['wi_b'], params['wh_b'], params['b_b'],
      params['conv1_w'], params['conv1_b'],
      params['conv2_w'], params['conv2_b'],
      params['fc_w'], params['fc_b'])
    return out.reshape(B, P)


# --------------------------------------------------------------------------
# Pure-JAX (f32) reference of the same forward pass, for correctness checking.
# --------------------------------------------------------------------------
def reference_forward(params, cattext_indices, aspect_indices, left_indices):
    B, T = cattext_indices.shape
    text_len = jnp.sum(cattext_indices != 0, axis=1).astype(jnp.int32)
    aspect_len = jnp.sum(aspect_indices != 0, axis=-1).astype(jnp.int32)
    left_len = jnp.sum(left_indices != 0, axis=-1).astype(jnp.int32)
    x = params['embedding'][cattext_indices].astype(jnp.float32)
    H = params['wh_f'].shape[0]

    def run_dir(wi, wh, b, reverse):
        h = jnp.zeros((B, H), jnp.float32)
        c = jnp.zeros((B, H), jnp.float32)
        outs = [None] * T
        order = range(T - 1, -1, -1) if reverse else range(T)
        for t in order:
            z = x[:, t, :] @ wi + h @ wh + b
            i = jax.nn.sigmoid(z[:, :H])
            f = jax.nn.sigmoid(z[:, H:2 * H])
            g = jnp.tanh(z[:, 2 * H:3 * H])
            o = jax.nn.sigmoid(z[:, 3 * H:])
            cn = f * c + i * g
            hn = o * jnp.tanh(cn)
            valid = (t < text_len)[:, None]
            h = jnp.where(valid, hn, h)
            c = jnp.where(valid, cn, c)
            outs[t] = jnp.where(valid, h, 0.0)
        return jnp.stack(outs, axis=1)

    tout = jnp.concatenate(
        [run_dir(params['wi_f'], params['wh_f'], params['b_f'], False),
         run_dir(params['wi_b'], params['wh_b'], params['b_b'], True)], axis=-1)

    pw = position_weight(left_len, aspect_len, text_len, T)
    msk = aspect_mask(left_len, aspect_len, T)

    def conv_relu(xin, w, b):
        xp = jnp.pad(xin, ((0, 0), (1, 1), (0, 0)))
        y = xp[:, 0:T, :] @ w[0] + xp[:, 1:T + 1, :] @ w[1] + xp[:, 2:T + 2, :] @ w[2] + b
        return jnp.maximum(y, 0.0)

    x1 = conv_relu(pw * tout, params['conv1_w'], params['conv1_b'])
    x2 = conv_relu(pw * x1, params['conv2_w'], params['conv2_b'])
    xm = msk * x2
    alpha_mat = jnp.einsum('bqc,bkc->bqk', xm, tout)
    alpha = jax.nn.softmax(alpha_mat.sum(axis=1, keepdims=True), axis=2)
    ctx = jnp.einsum('bqk,bkc->bqc', alpha, tout)[:, 0, :]
    return ctx @ params['fc_w'] + params['fc_b']


# --------------------------------------------------------------------------
# Deterministic parameter init (shapes follow ASCNN.__init__).
# --------------------------------------------------------------------------
def init_params(key, vocab, D, H, P):
    C = 2 * H
    ks = jax.random.split(key, 16)
    u = lambda k, shape, s: jax.random.uniform(k, shape, jnp.float32, -s, s)
    s_lstm = 1.0 / jnp.sqrt(H)
    s_conv = 1.0 / jnp.sqrt(C * 3)
    s_fc = 1.0 / jnp.sqrt(C)
    return {
        'embedding': jax.random.normal(ks[0], (vocab, D), jnp.float32) * 0.1,
        # LSTM weights stored transposed: (D, 4H), (H, 4H); bias = b_ih + b_hh.
        'wi_f': u(ks[1], (D, 4 * H), s_lstm),
        'wh_f': u(ks[2], (H, 4 * H), s_lstm),
        'b_f':  u(ks[3], (1, 4 * H), s_lstm),
        'wi_b': u(ks[4], (D, 4 * H), s_lstm),
        'wh_b': u(ks[5], (H, 4 * H), s_lstm),
        'b_b':  u(ks[6], (1, 4 * H), s_lstm),
        # Conv1d weights as (K=3, Cin, Cout) so each tap is a matmul.
        'conv1_w': u(ks[7], (3, C, C), s_conv),
        'conv1_b': u(ks[8], (1, C), s_conv),
        'conv2_w': u(ks[9], (3, C, C), s_conv),
        'conv2_b': u(ks[10], (1, C), s_conv),
        'fc_w': u(ks[11], (C, P), s_fc),
        'fc_b': u(ks[12], (1, P), s_fc),
    }


if __name__ == "__main__":
    B, T = 2, 16          # batch, max sequence length
    V, D = 50, 32         # vocab size, opt.input_dim (embedding dim)
    H, P = 16, 3          # opt.hidden_dim, opt.polarities_dim

    key = jax.random.PRNGKey(0)
    k_par, k_tok = jax.random.split(key)
    params = init_params(k_par, V, D, H, P)

    # deterministic token ids with per-example valid lengths
    text_len_v = jnp.array([12, 10], jnp.int32)
    left_len_v = jnp.array([3, 2], jnp.int32)
    aspect_len_v = jnp.array([2, 3], jnp.int32)

    tok = jax.random.randint(k_tok, (B, T), 1, V, dtype=jnp.int32)
    pos = jnp.arange(T)[None, :]
    cattext_indices = jnp.where(pos < text_len_v[:, None], tok, 0)
    aspect_indices = jnp.where(pos < aspect_len_v[:, None], tok, 0)
    left_indices = jnp.where(pos < left_len_v[:, None], tok, 0)

    out = jax.jit(ascnn_forward)(params, cattext_indices, aspect_indices, left_indices)
    out = jax.block_until_ready(out)
    assert out.shape == (B, P) and bool(jnp.all(jnp.isfinite(out)))

    ref = jax.jit(reference_forward)(params, cattext_indices, aspect_indices, left_indices)
    ref = jax.block_until_ready(ref)
    err = float(jnp.max(jnp.abs(out - ref)))
    assert err < 5e-2, f"kernel/reference mismatch: max|diff|={err}"
    print("KERNEL_OK")
</pallas_src>

<mosaic_0001>
module attributes {stable_mosaic.version = 11 : i64} {
  func.func @ascnn_fused_kernel(%arg0: i32, %arg1: memref<1x1x1xi32, #tpu.memory_space<vmem>>, %arg2: memref<1x16x32xf32, #tpu.memory_space<vmem>>, %arg3: memref<1x16x1xf32, #tpu.memory_space<vmem>>, %arg4: memref<1x16x1xf32, #tpu.memory_space<vmem>>, %arg5: memref<32x64xf32, #tpu.memory_space<vmem>>, %arg6: memref<16x64xf32, #tpu.memory_space<vmem>>, %arg7: memref<1x64xf32, #tpu.memory_space<vmem>>, %arg8: memref<32x64xf32, #tpu.memory_space<vmem>>, %arg9: memref<16x64xf32, #tpu.memory_space<vmem>>, %arg10: memref<1x64xf32, #tpu.memory_space<vmem>>, %arg11: memref<3x32x32xf32, #tpu.memory_space<vmem>>, %arg12: memref<1x32xf32, #tpu.memory_space<vmem>>, %arg13: memref<3x32x32xf32, #tpu.memory_space<vmem>>, %arg14: memref<1x32xf32, #tpu.memory_space<vmem>>, %arg15: memref<32x3xf32, #tpu.memory_space<vmem>>, %arg16: memref<1x3xf32, #tpu.memory_space<vmem>>, %arg17: memref<1x1x3xf32, #tpu.memory_space<vmem>>, %arg18: memref<1x16x32xf32, #tpu.memory_space<vmem>>) attributes {dimension_semantics = [#tpu.dimension_semantics<parallel>], iteration_bounds = array<i64: 2>, scalar_prefetch = 0 : i64, scratch_operands = 1 : i64, tpu.core_type = #tpu.core_type<tc>, window_params = [{transform_indices = @transform_0, window_bounds = array<i64: 1, 1, 1>}, {transform_indices = @transform_1, window_bounds = array<i64: 1, 16, 32>}, {transform_indices = @transform_2, window_bounds = array<i64: 1, 16, 1>}, {transform_indices = @transform_3, window_bounds = array<i64: 1, 16, 1>}, {pipeline_mode = #tpu.pipeline_mode<synchronous>, transform_indices = @transform_4, window_bounds = array<i64: 32, 64>}, {pipeline_mode = #tpu.pipeline_mode<synchronous>, transform_indices = @transform_5, window_bounds = array<i64: 16, 64>}, {pipeline_mode = #tpu.pipeline_mode<synchronous>, transform_indices = @transform_6, window_bounds = array<i64: 1, 64>}, {pipeline_mode = #tpu.pipeline_mode<synchronous>, transform_indices = @transform_7, window_bounds = array<i64: 32, 64>}, {pipeline_mode = #tpu.pipeline_mode<synchronous>, transform_indices = @transform_8, window_bounds = array<i64: 16, 64>}, {pipeline_mode = #tpu.pipeline_mode<synchronous>, transform_indices = @transform_9, window_bounds = array<i64: 1, 64>}, {pipeline_mode = #tpu.pipeline_mode<synchronous>, transform_indices = @transform_10, window_bounds = array<i64: 3, 32, 32>}, {pipeline_mode = #tpu.pipeline_mode<synchronous>, transform_indices = @transform_11, window_bounds = array<i64: 1, 32>}, {pipeline_mode = #tpu.pipeline_mode<synchronous>, transform_indices = @transform_12, window_bounds = array<i64: 3, 32, 32>}, {pipeline_mode = #tpu.pipeline_mode<synchronous>, transform_indices = @transform_13, window_bounds = array<i64: 1, 32>}, {pipeline_mode = #tpu.pipeline_mode<synchronous>, transform_indices = @transform_14, window_bounds = array<i64: 32, 3>}, {pipeline_mode = #tpu.pipeline_mode<synchronous>, transform_indices = @transform_15, window_bounds = array<i64: 1, 3>}, {transform_indices = @transform_16, window_bounds = array<i64: 1, 1, 3>}]} {
    %c0 = arith.constant 0 : index
    %c0_0 = arith.constant 0 : index
    %c0_1 = arith.constant 0 : index
    %0 = vector.load %arg2[%c0, %c0_0, %c0_1] : memref<1x16x32xf32, #tpu.memory_space<vmem>>, vector<1x16x32xf32>
    %1 = vector.shape_cast %0 : vector<1x16x32xf32> to vector<16x32xf32>
    %2 = arith.truncf %1 : vector<16x32xf32> to vector<16x32xbf16>
    %c0_2 = arith.constant 0 : index
    %c0_3 = arith.constant 0 : index
    %3 = vector.load %arg5[%c0_2, %c0_3] : memref<32x64xf32, #tpu.memory_space<vmem>>, vector<32x64xf32>
    %4 = arith.truncf %3 : vector<32x64xf32> to vector<32x64xbf16>
    %cst = arith.constant dense<0.000000e+00> : vector<16x64xf32>
    %5 = tpu.matmul %2, %4, %cst {dimension_numbers = #tpu.dot_dimension_numbers<[1], [0], [0], [1], [0, 0, 1, 1], [], []>} : vector<16x32xbf16>, vector<32x64xbf16>, vector<16x64xf32> -> vector<16x64xf32>
    %c0_4 = arith.constant 0 : index
    %c0_5 = arith.constant 0 : index
    %6 = vector.load %arg7[%c0_4, %c0_5] : memref<1x64xf32, #tpu.memory_space<vmem>>, vector<1x64xf32>
    %7 = vector.broadcast %6 : vector<1x64xf32> to vector<16x64xf32>
    %8 = arith.addf %5, %7 : vector<16x64xf32>
    %9 = vector.shape_cast %8 : vector<16x64xf32> to vector<1x16x64xf32>
    %c0_6 = arith.constant 0 : index
    %c0_7 = arith.constant 0 : index
    %10 = vector.load %arg8[%c0_6, %c0_7] : memref<32x64xf32, #tpu.memory_space<vmem>>, vector<32x64xf32>
    %11 = arith.truncf %10 : vector<32x64xf32> to vector<32x64xbf16>
    %cst_8 = arith.constant dense<0.000000e+00> : vector<16x64xf32>
    %12 = tpu.matmul %2, %11, %cst_8 {dimension_numbers = #tpu.dot_dimension_numbers<[1], [0], [0], [1], [0, 0, 1, 1], [], []>} : vector<16x32xbf16>, vector<32x64xbf16>, vector<16x64xf32> -> vector<16x64xf32>
    %c0_9 = arith.constant 0 : index
    %c0_10 = arith.constant 0 : index
    %13 = vector.load %arg10[%c0_9, %c0_10] : memref<1x64xf32, #tpu.memory_space<vmem>>, vector<1x64xf32>
    %14 = vector.broadcast %13 : vector<1x64xf32> to vector<16x64xf32>
    %15 = arith.addf %12, %14 : vector<16x64xf32>
    %16 = vector.shape_cast %15 : vector<16x64xf32> to vector<1x16x64xf32>
    %c0_11 = arith.constant 0 : index
    %c0_12 = arith.constant 0 : index
    %c0_13 = arith.constant 0 : index
    %17 = vector.load %arg1[%c0_11, %c0_12, %c0_13] : memref<1x1x1xi32, #tpu.memory_space<vmem>>, vector<1x1x1xi32>
    %18 = vector.shape_cast %17 : vector<1x1x1xi32> to vector<1x1xi32>
    %19 = tpu.iota {dimensions = array<i32: 1>} : vector<1x16xi32>
    %20 = vector.broadcast %18 : vector<1x1xi32> to vector<1x16xi32>
    %21 = arith.cmpi slt, %19, %20 : vector<1x16xi32>
    %22 = arith.extui %21 : vector<1x16xi1> to vector<1x16xi32>
    %23 = arith.sitofp %22 : vector<1x16xi32> to vector<1x16xf32>
    %c0_14 = arith.constant 0 : index
    %c0_15 = arith.constant 0 : index
    %24 = vector.load %arg6[%c0_14, %c0_15] : memref<16x64xf32, #tpu.memory_space<vmem>>, vector<16x64xf32>
    %c0_16 = arith.constant 0 : index
    %c0_17 = arith.constant 0 : index
    %25 = vector.load %arg9[%c0_16, %c0_17] : memref<16x64xf32, #tpu.memory_space<vmem>>, vector<16x64xf32>
    %cst_18 = arith.constant 0.000000e+00 : f32
    %26 = vector.broadcast %cst_18 : f32 to vector<1x16xf32>
    %27 = vector.extract_strided_slice %9 {offsets = [0, 0, 0], sizes = [1, 1, 64], strides = [1, 1, 1]} : vector<1x16x64xf32> to vector<1x1x64xf32>
    %28 = vector.shape_cast %27 : vector<1x1x64xf32> to vector<1x64xf32>
    %cst_19 = arith.constant dense<0.000000e+00> : vector<1x64xf32>
    %29 = tpu.matmul %26, %24, %cst_19 {dimension_numbers = #tpu.dot_dimension_numbers<[1], [0], [0], [1], [0, 0, 1, 1], [], []>} : vector<1x16xf32>, vector<16x64xf32>, vector<1x64xf32> -> vector<1x64xf32>
    %30 = arith.addf %28, %29 : vector<1x64xf32>
    %31 = vector.extract_strided_slice %16 {offsets = [0, 15, 0], sizes = [1, 1, 64], strides = [1, 1, 1]} : vector<1x16x64xf32> to vector<1x1x64xf32>
    %32 = vector.shape_cast %31 : vector<1x1x64xf32> to vector<1x64xf32>
    %cst_20 = arith.constant dense<0.000000e+00> : vector<1x64xf32>
    %33 = tpu.matmul %26, %25, %cst_20 {dimension_numbers = #tpu.dot_dimension_numbers<[1], [0], [0], [1], [0, 0, 1, 1], [], []>} : vector<1x16xf32>, vector<16x64xf32>, vector<1x64xf32> -> vector<1x64xf32>
    %34 = arith.addf %32, %33 : vector<1x64xf32>
    %35 = vector.extract_strided_slice %30 {offsets = [0, 0], sizes = [1, 16], strides = [1, 1]} : vector<1x64xf32> to vector<1x16xf32>
    %36 = arith.negf %35 : vector<1x16xf32>
    %37 = math.exp %36 : vector<1x16xf32>
    %cst_21 = arith.constant 1.000000e+00 : f32
    %38 = vector.broadcast %cst_21 : f32 to vector<1x16xf32>
    %39 = arith.addf %38, %37 : vector<1x16xf32>
    %40 = arith.divf %38, %39 : vector<1x16xf32>
    %41 = vector.extract_strided_slice %30 {offsets = [0, 16], sizes = [1, 16], strides = [1, 1]} : vector<1x64xf32> to vector<1x16xf32>
    %42 = arith.negf %41 : vector<1x16xf32>
    %43 = math.exp %42 : vector<1x16xf32>
    %cst_22 = arith.constant 1.000000e+00 : f32
    %44 = vector.broadcast %cst_22 : f32 to vector<1x16xf32>
    %45 = arith.addf %44, %43 : vector<1x16xf32>
    %46 = arith.divf %44, %45 : vector<1x16xf32>
    %47 = vector.extract_strided_slice %30 {offsets = [0, 32], sizes = [1, 16], strides = [1, 1]} : vector<1x64xf32> to vector<1x16xf32>
    %48 = math.tanh %47 : vector<1x16xf32>
    %49 = vector.extract_strided_slice %30 {offsets = [0, 48], sizes = [1, 16], strides = [1, 1]} : vector<1x64xf32> to vector<1x16xf32>
    %50 = arith.negf %49 : vector<1x16xf32>
    %51 = math.exp %50 : vector<1x16xf32>
    %cst_23 = arith.constant 1.000000e+00 : f32
    %52 = vector.broadcast %cst_23 : f32 to vector<1x16xf32>
    %53 = arith.addf %52, %51 : vector<1x16xf32>
    %54 = arith.divf %52, %53 : vector<1x16xf32>
    %55 = arith.mulf %46, %26 : vector<1x16xf32>
    %56 = arith.mulf %40, %48 : vector<1x16xf32>
    %57 = arith.addf %55, %56 : vector<1x16xf32>
    %58 = math.tanh %57 : vector<1x16xf32>
    %59 = arith.mulf %54, %58 : vector<1x16xf32>
    %60 = vector.extract_strided_slice %34 {offsets = [0, 0], sizes = [1, 16], strides = [1, 1]} : vector<1x64xf32> to vector<1x16xf32>
    %61 = arith.negf %60 : vector<1x16xf32>
    %62 = math.exp %61 : vector<1x16xf32>
    %cst_24 = arith.constant 1.000000e+00 : f32
    %63 = vector.broadcast %cst_24 : f32 to vector<1x16xf32>
    %64 = arith.addf %63, %62 : vector<1x16xf32>
    %65 = arith.divf %63, %64 : vector<1x16xf32>
    %66 = vector.extract_strided_slice %34 {offsets = [0, 16], sizes = [1, 16], strides = [1, 1]} : vector<1x64xf32> to vector<1x16xf32>
    %67 = arith.negf %66 : vector<1x16xf32>
    %68 = math.exp %67 : vector<1x16xf32>
    %cst_25 = arith.constant 1.000000e+00 : f32
    %69 = vector.broadcast %cst_25 : f32 to vector<1x16xf32>
    %70 = arith.addf %69, %68 : vector<1x16xf32>
    %71 = arith.divf %69, %70 : vector<1x16xf32>
    %72 = vector.extract_strided_slice %34 {offsets = [0, 32], sizes = [1, 16], strides = [1, 1]} : vector<1x64xf32> to vector<1x16xf32>
    %73 = math.tanh %72 : vector<1x16xf32>
    %74 = vector.extract_strided_slice %34 {offsets = [0, 48], sizes = [1, 16], strides = [1, 1]} : vector<1x64xf32> to vector<1x16xf32>
    %75 = arith.negf %74 : vector<1x16xf32>
    %76 = math.exp %75 : vector<1x16xf32>
    %cst_26 = arith.constant 1.000000e+00 : f32
    %77 = vector.broadcast %cst_26 : f32 to vector<1x16xf32>
    %78 = arith.addf %77, %76 : vector<1x16xf32>
    %79 = arith.divf %77, %78 : vector<1x16xf32>
    %80 = arith.mulf %71, %26 : vector<1x16xf32>
    %81 = arith.mulf %65, %73 : vector<1x16xf32>
    %82 = arith.addf %80, %81 : vector<1x16xf32>
    %83 = math.tanh %82 : vector<1x16xf32>
    %84 = arith.mulf %79, %83 : vector<1x16xf32>
    %85 = vector.extract_strided_slice %23 {offsets = [0, 0], sizes = [1, 1], strides = [1, 1]} : vector<1x16xf32> to vector<1x1xf32>
    %86 = vector.extract_strided_slice %23 {offsets = [0, 15], sizes = [1, 1], strides = [1, 1]} : vector<1x16xf32> to vector<1x1xf32>
    %87 = vector.broadcast %85 : vector<1x1xf32> to vector<1x16xf32>
    %88 = arith.mulf %87, %59 : vector<1x16xf32>
    %cst_27 = arith.constant 1.000000e+00 : f32
    %89 = vector.broadcast %cst_27 : f32 to vector<1x1xf32>
    %90 = arith.subf %89, %85 : vector<1x1xf32>
    %91 = vector.broadcast %90 : vector<1x1xf32> to vector<1x16xf32>
    %92 = arith.mulf %91, %26 : vector<1x16xf32>
    %93 = arith.addf %88, %92 : vector<1x16xf32>
    %94 = vector.broadcast %85 : vector<1x1xf32> to vector<1x16xf32>
    %95 = arith.mulf %94, %57 : vector<1x16xf32>
    %cst_28 = arith.constant 1.000000e+00 : f32
    %96 = vector.broadcast %cst_28 : f32 to vector<1x1xf32>
    %97 = arith.subf %96, %85 : vector<1x1xf32>
    %98 = vector.broadcast %97 : vector<1x1xf32> to vector<1x16xf32>
    %99 = arith.mulf %98, %26 : vector<1x16xf32>
    %100 = arith.addf %95, %99 : vector<1x16xf32>
    %101 = vector.broadcast %86 : vector<1x1xf32> to vector<1x16xf32>
    %102 = arith.mulf %101, %84 : vector<1x16xf32>
    %cst_29 = arith.constant 1.000000e+00 : f32
    %103 = vector.broadcast %cst_29 : f32 to vector<1x1xf32>
    %104 = arith.subf %103, %86 : vector<1x1xf32>
    %105 = vector.broadcast %104 : vector<1x1xf32> to vector<1x16xf32>
    %106 = arith.mulf %105, %26 : vector<1x16xf32>
    %107 = arith.addf %102, %106 : vector<1x16xf32>
    %108 = vector.broadcast %86 : vector<1x1xf32> to vector<1x16xf32>
    %109 = arith.mulf %108, %82 : vector<1x16xf32>
    %cst_30 = arith.constant 1.000000e+00 : f32
    %110 = vector.broadcast %cst_30 : f32 to vector<1x1xf32>
    %111 = arith.subf %110, %86 : vector<1x1xf32>
    %112 = vector.broadcast %111 : vector<1x1xf32> to vector<1x16xf32>
    %113 = arith.mulf %112, %26 : vector<1x16xf32>
    %114 = arith.addf %109, %113 : vector<1x16xf32>
    %115 = vector.broadcast %85 : vector<1x1xf32> to vector<1x16xf32>
    %116 = arith.mulf %115, %93 : vector<1x16xf32>
    %c0_31 = arith.constant 0 : index
    %c0_32 = arith.constant 0 : index
    %c0_33 = arith.constant 0 : index
    %117 = vector.load %arg18[%c0_31, %c0_32, %c0_33] : memref<1x16x32xf32, #tpu.memory_space<vmem>>, vector<1x1x16xf32>
    %118 = vector.shape_cast %117 : vector<1x1x16xf32> to vector<1x16xf32>
    %119 = vector.shape_cast %116 : vector<1x16xf32> to vector<1x1x16xf32>
    tpu.vector_store %arg18[%c0_31, %c0_32, %c0_33], %119 {strides = array<i32>} : memref<1x16x32xf32, #tpu.memory_space<vmem>>, vector<1x1x16xf32>,
    %120 = vector.broadcast %86 : vector<1x1xf32> to vector<1x16xf32>
    %121 = arith.mulf %120, %107 : vector<1x16xf32>
    %c0_34 = arith.constant 0 : index
    %c15 = arith.constant 15 : index
    %c16 = arith.constant 16 : index
    %122 = vector.load %arg18[%c0_34, %c15, %c16] : memref<1x16x32xf32, #tpu.memory_space<vmem>>, vector<1x1x16xf32>
    %123 = vector.shape_cast %122 : vector<1x1x16xf32> to vector<1x16xf32>
    %124 = vector.shape_cast %121 : vector<1x16xf32> to vector<1x1x16xf32>
    tpu.vector_store %arg18[%c0_34, %c15, %c16], %124 {strides = array<i32>} : memref<1x16x32xf32, #tpu.memory_space<vmem>>, vector<1x1x16xf32>,
    %125 = vector.extract_strided_slice %9 {offsets = [0, 1, 0], sizes = [1, 1, 64], strides = [1, 1, 1]} : vector<1x16x64xf32> to vector<1x1x64xf32>
    %126 = vector.shape_cast %125 : vector<1x1x64xf32> to vector<1x64xf32>
    %cst_35 = arith.constant dense<0.000000e+00> : vector<1x64xf32>
    %127 = tpu.matmul %93, %24, %cst_35 {dimension_numbers = #tpu.dot_dimension_numbers<[1], [0], [0], [1], [0, 0, 1, 1], [], []>} : vector<1x16xf32>, vector<16x64xf32>, vector<1x64xf32> -> vector<1x64xf32>
    %128 = arith.addf %126, %127 : vector<1x64xf32>
    %129 = vector.extract_strided_slice %16 {offsets = [0, 14, 0], sizes = [1, 1, 64], strides = [1, 1, 1]} : vector<1x16x64xf32> to vector<1x1x64xf32>
    %130 = vector.shape_cast %129 : vector<1x1x64xf32> to vector<1x64xf32>
    %cst_36 = arith.constant dense<0.000000e+00> : vector<1x64xf32>
    %131 = tpu.matmul %107, %25, %cst_36 {dimension_numbers = #tpu.dot_dimension_numbers<[1], [0], [0], [1], [0, 0, 1, 1], [], []>} : vector<1x16xf32>, vector<16x64xf32>, vector<1x64xf32> -> vector<1x64xf32>
    %132 = arith.addf %130, %131 : vector<1x64xf32>
    %133 = vector.extract_strided_slice %128 {offsets = [0, 0], sizes = [1, 16], strides = [1, 1]} : vector<1x64xf32> to vector<1x16xf32>
    %134 = arith.negf %133 : vector<1x16xf32>
    %135 = math.exp %134 : vector<1x16xf32>
    %cst_37 = arith.constant 1.000000e+00 : f32
    %136 = vector.broadcast %cst_37 : f32 to vector<1x16xf32>
    %137 = arith.addf %136, %135 : vector<1x16xf32>
    %138 = arith.divf %136, %137 : vector<1x16xf32>
    %139 = vector.extract_strided_slice %128 {offsets = [0, 16], sizes = [1, 16], strides = [1, 1]} : vector<1x64xf32> to vector<1x16xf32>
    %140 = arith.negf %139 : vector<1x16xf32>
    %141 = math.exp %140 : vector<1x16xf32>
    %cst_38 = arith.constant 1.000000e+00 : f32
    %142 = vector.broadcast %cst_38 : f32 to vector<1x16xf32>
    %143 = arith.addf %142, %141 : vector<1x16xf32>
    %144 = arith.divf %142, %143 : vector<1x16xf32>
    %145 = vector.extract_strided_slice %128 {offsets = [0, 32], sizes = [1, 16], strides = [1, 1]} : vector<1x64xf32> to vector<1x16xf32>
    %146 = math.tanh %145 : vector<1x16xf32>
    %147 = vector.extract_strided_slice %128 {offsets = [0, 48], sizes = [1, 16], strides = [1, 1]} : vector<1x64xf32> to vector<1x16xf32>
    %148 = arith.negf %147 : vector<1x16xf32>
    %149 = math.exp %148 : vector<1x16xf32>
    %cst_39 = arith.constant 1.000000e+00 : f32
    %150 = vector.broadcast %cst_39 : f32 to vector<1x16xf32>
    %151 = arith.addf %150, %149 : vector<1x16xf32>
    %152 = arith.divf %150, %151 : vector<1x16xf32>
    %153 = arith.mulf %144, %100 : vector<1x16xf32>
    %154 = arith.mulf %138, %146 : vector<1x16xf32>
    %155 = arith.addf %153, %154 : vector<1x16xf32>
    %156 = math.tanh %155 : vector<1x16xf32>
    %157 = arith.mulf %152, %156 : vector<1x16xf32>
    %158 = vector.extract_strided_slice %132 {offsets = [0, 0], sizes = [1, 16], strides = [1, 1]} : vector<1x64xf32> to vector<1x16xf32>
    %159 = arith.negf %158 : vector<1x16xf32>
    %160 = math.exp %159 : vector<1x16xf32>
    %cst_40 = arith.constant 1.000000e+00 : f32
    %161 = vector.broadcast %cst_40 : f32 to vector<1x16xf32>
    %162 = arith.addf %161, %160 : vector<1x16xf32>
    %163 = arith.divf %161, %162 : vector<1x16xf32>
    %164 = vector.extract_strided_slice %132 {offsets = [0, 16], sizes = [1, 16], strides = [1, 1]} : vector<1x64xf32> to vector<1x16xf32>
    %165 = arith.negf %164 : vector<1x16xf32>
    %166 = math.exp %165 : vector<1x16xf32>
    %cst_41 = arith.constant 1.000000e+00 : f32
    %167 = vector.broadcast %cst_41 : f32 to vector<1x16xf32>
    %168 = arith.addf %167, %166 : vector<1x16xf32>
    %169 = arith.divf %167, %168 : vector<1x16xf32>
    %170 = vector.extract_strided_slice %132 {offsets = [0, 32], sizes = [1, 16], strides = [1, 1]} : vector<1x64xf32> to vector<1x16xf32>
    %171 = math.tanh %170 : vector<1x16xf32>
    %172 = vector.extract_strided_slice %132 {offsets = [0, 48], sizes = [1, 16], strides = [1, 1]} : vector<1x64xf32> to vector<1x16xf32>
    %173 = arith.negf %172 : vector<1x16xf32>
    %174 = math.exp %173 : vector<1x16xf32>
    %cst_42 = arith.constant 1.000000e+00 : f32
    %175 = vector.broadcast %cst_42 : f32 to vector<1x16xf32>
    %176 = arith.addf %175, %174 : vector<1x16xf32>
    %177 = arith.divf %175, %176 : vector<1x16xf32>
    %178 = arith.mulf %169, %114 : vector<1x16xf32>
    %179 = arith.mulf %163, %171 : vector<1x16xf32>
    %180 = arith.addf %178, %179 : vector<1x16xf32>
    %181 = math.tanh %180 : vector<1x16xf32>
    %182 = arith.mulf %177, %181 : vector<1x16xf32>
    %183 = vector.extract_strided_slice %23 {offsets = [0, 1], sizes = [1, 1], strides = [1, 1]} : vector<1x16xf32> to vector<1x1xf32>
    %184 = vector.extract_strided_slice %23 {offsets = [0, 14], sizes = [1, 1], strides = [1, 1]} : vector<1x16xf32> to vector<1x1xf32>
    %185 = vector.broadcast %183 : vector<1x1xf32> to vector<1x16xf32>
    %186 = arith.mulf %185, %157 : vector<1x16xf32>
    %cst_43 = arith.constant 1.000000e+00 : f32
    %187 = vector.broadcast %cst_43 : f32 to vector<1x1xf32>
    %188 = arith.subf %187, %183 : vector<1x1xf32>
    %189 = vector.broadcast %188 : vector<1x1xf32> to vector<1x16xf32>
    %190 = arith.mulf %189, %93 : vector<1x16xf32>
    %191 = arith.addf %186, %190 : vector<1x16xf32>
    %192 = vector.broadcast %183 : vector<1x1xf32> to vector<1x16xf32>
    %193 = arith.mulf %192, %155 : vector<1x16xf32>
    %cst_44 = arith.constant 1.000000e+00 : f32
    %194 = vector.broadcast %cst_44 : f32 to vector<1x1xf32>
    %195 = arith.subf %194, %183 : vector<1x1xf32>
    %196 = vector.broadcast %195 : vector<1x1xf32> to vector<1x16xf32>
    %197 = arith.mulf %196, %100 : vector<1x16xf32>
    %198 = arith.addf %193, %197 : vector<1x16xf32>
    %199 = vector.broadcast %184 : vector<1x1xf32> to vector<1x16xf32>
    %200 = arith.mulf %199, %182 : vector<1x16xf32>
    %cst_45 = arith.constant 1.000000e+00 : f32
    %201 = vector.broadcast %cst_45 : f32 to vector<1x1xf32>
    %202 = arith.subf %201, %184 : vector<1x1xf32>
    %203 = vector.broadcast %202 : vector<1x1xf32> to vector<1x16xf32>
    %204 = arith.mulf %203, %107 : vector<1x16xf32>
    %205 = arith.addf %200, %204 : vector<1x16xf32>
    %206 = vector.broadcast %184 : vector<1x1xf32> to vector<1x16xf32>
    %207 = arith.mulf %206, %180 : vector<1x16xf32>
    %cst_46 = arith.constant 1.000000e+00 : f32
    %208 = vector.broadcast %cst_46 : f32 to vector<1x1xf32>
    %209 = arith.subf %208, %184 : vector<1x1xf32>
    %210 = vector.broadcast %209 : vector<1x1xf32> to vector<1x16xf32>
    %211 = arith.mulf %210, %114 : vector<1x16xf32>
    %212 = arith.addf %207, %211 : vector<1x16xf32>
    %213 = vector.broadcast %183 : vector<1x1xf32> to vector<1x16xf32>
    %214 = arith.mulf %213, %191 : vector<1x16xf32>
    %c0_47 = arith.constant 0 : index
    %c1 = arith.constant 1 : index
    %c0_48 = arith.constant 0 : index
    %215 = vector.load %arg18[%c0_47, %c1, %c0_48] : memref<1x16x32xf32, #tpu.memory_space<vmem>>, vector<1x1x16xf32>
    %216 = vector.shape_cast %215 : vector<1x1x16xf32> to vector<1x16xf32>
    %217 = vector.shape_cast %214 : vector<1x16xf32> to vector<1x1x16xf32>
    tpu.vector_store %arg18[%c0_47, %c1, %c0_48], %217 {strides = array<i32>} : memref<1x16x32xf32, #tpu.memory_space<vmem>>, vector<1x1x16xf32>,
    %218 = vector.broadcast %184 : vector<1x1xf32> to vector<1x16xf32>
    %219 = arith.mulf %218, %205 : vector<1x16xf32>
    %c0_49 = arith.constant 0 : index
    %c14 = arith.constant 14 : index
    %c16_50 = arith.constant 16 : index
    %220 = vector.load %arg18[%c0_49, %c14, %c16_50] : memref<1x16x32xf32, #tpu.memory_space<vmem>>, vector<1x1x16xf32>
    %221 = vector.shape_cast %220 : vector<1x1x16xf32> to vector<1x16xf32>
    %222 = vector.shape_cast %219 : vector<1x16xf32> to vector<1x1x16xf32>
    tpu.vector_store %arg18[%c0_49, %c14, %c16_50], %222 {strides = array<i32>} : memref<1x16x32xf32, #tpu.memory_space<vmem>>, vector<1x1x16xf32>,
    %223 = vector.extract_strided_slice %9 {offsets = [0, 2, 0], sizes = [1, 1, 64], strides = [1, 1, 1]} : vector<1x16x64xf32> to vector<1x1x64xf32>
    %224 = vector.shape_cast %223 : vector<1x1x64xf32> to vector<1x64xf32>
    %cst_51 = arith.constant dense<0.000000e+00> : vector<1x64xf32>
    %225 = tpu.matmul %191, %24, %cst_51 {dimension_numbers = #tpu.dot_dimension_numbers<[1], [0], [0], [1], [0, 0, 1, 1], [], []>} : vector<1x16xf32>, vector<16x64xf32>, vector<1x64xf32> -> vector<1x64xf32>
    %226 = arith.addf %224, %225 : vector<1x64xf32>
    %227 = vector.extract_strided_slice %16 {offsets = [0, 13, 0], sizes = [1, 1, 64], strides = [1, 1, 1]} : vector<1x16x64xf32> to vector<1x1x64xf32>
    %228 = vector.shape_cast %227 : vector<1x1x64xf32> to vector<1x64xf32>
    %cst_52 = arith.constant dense<0.000000e+00> : vector<1x64xf32>
    %229 = tpu.matmul %205, %25, %cst_52 {dimension_numbers = #tpu.dot_dimension_numbers<[1], [0], [0], [1], [0, 0, 1, 1], [], []>} : vector<1x16xf32>, vector<16x64xf32>, vector<1x64xf32> -> vector<1x64xf32>
    %230 = arith.addf %228, %229 : vector<1x64xf32>
    %231 = vector.extract_strided_slice %226 {offsets = [0, 0], sizes = [1, 16], strides = [1, 1]} : vector<1x64xf32> to vector<1x16xf32>
    %232 = arith.negf %231 : vector<1x16xf32>
    %233 = math.exp %232 : vector<1x16xf32>
    %cst_53 = arith.constant 1.000000e+00 : f32
    %234 = vector.broadcast %cst_53 : f32 to vector<1x16xf32>
    %235 = arith.addf %234, %233 : vector<1x16xf32>
    %236 = arith.divf %234, %235 : vector<1x16xf32>
    %237 = vector.extract_strided_slice %226 {offsets = [0, 16], sizes = [1, 16], strides = [1, 1]} : vector<1x64xf32> to vector<1x16xf32>
    %238 = arith.negf %237 : vector<1x16xf32>
    %239 = math.exp %238 : vector<1x16xf32>
    %cst_54 = arith.constant 1.000000e+00 : f32
    %240 = vector.broadcast %cst_54 : f32 to vector<1x16xf32>
    %241 = arith.addf %240, %239 : vector<1x16xf32>
    %242 = arith.divf %240, %241 : vector<1x16xf32>
    %243 = vector.extract_strided_slice %226 {offsets = [0, 32], sizes = [1, 16], strides = [1, 1]} : vector<1x64xf32> to vector<1x16xf32>
    %244 = math.tanh %243 : vector<1x16xf32>
    %245 = vector.extract_strided_slice %226 {offsets = [0, 48], sizes = [1, 16], strides = [1, 1]} : vector<1x64xf32> to vector<1x16xf32>
    %246 = arith.negf %245 : vector<1x16xf32>
    %247 = math.exp %246 : vector<1x16xf32>
    %cst_55 = arith.constant 1.000000e+00 : f32
    %248 = vector.broadcast %cst_55 : f32 to vector<1x16xf32>
    %249 = arith.addf %248, %247 : vector<1x16xf32>
    %250 = arith.divf %248, %249 : vector<1x16xf32>
    %251 = arith.mulf %242, %198 : vector<1x16xf32>
    %252 = arith.mulf %236, %244 : vector<1x16xf32>
    %253 = arith.addf %251, %252 : vector<1x16xf32>
    %254 = math.tanh %253 : vector<1x16xf32>
    %255 = arith.mulf %250, %254 : vector<1x16xf32>
    %256 = vector.extract_strided_slice %230 {offsets = [0, 0], sizes = [1, 16], strides = [1, 1]} : vector<1x64xf32> to vector<1x16xf32>
    %257 = arith.negf %256 : vector<1x16xf32>
    %258 = math.exp %257 : vector<1x16xf32>
    %cst_56 = arith.constant 1.000000e+00 : f32
    %259 = vector.broadcast %cst_56 : f32 to vector<1x16xf32>
    %260 = arith.addf %259, %258 : vector<1x16xf32>
    %261 = arith.divf %259, %260 : vector<1x16xf32>
    %262 = vector.extract_strided_slice %230 {offsets = [0, 16], sizes = [1, 16], strides = [1, 1]} : vector<1x64xf32> to vector<1x16xf32>
    %263 = arith.negf %262 : vector<1x16xf32>
    %264 = math.exp %263 : vector<1x16xf32>
    %cst_57 = arith.constant 1.000000e+00 : f32
    %265 = vector.broadcast %cst_57 : f32 to vector<1x16xf32>
    %266 = arith.addf %265, %264 : vector<1x16xf32>
    %267 = arith.divf %265, %266 : vector<1x16xf32>
    %268 = vector.extract_strided_slice %230 {offsets = [0, 32], sizes = [1, 16], strides = [1, 1]} : vector<1x64xf32> to vector<1x16xf32>
    %269 = math.tanh %268 : vector<1x16xf32>
    %270 = vector.extract_strided_slice %230 {offsets = [0, 48], sizes = [1, 16], strides = [1, 1]} : vector<1x64xf32> to vector<1x16xf32>
    %271 = arith.negf %270 : vector<1x16xf32>
    %272 = math.exp %271 : vector<1x16xf32>
    %cst_58 = arith.constant 1.000000e+00 : f32
    %273 = vector.broadcast %cst_58 : f32 to vector<1x16xf32>
    %274 = arith.addf %273, %272 : vector<1x16xf32>
    %275 = arith.divf %273, %274 : vector<1x16xf32>
    %276 = arith.mulf %267, %212 : vector<1x16xf32>
    %277 = arith.mulf %261, %269 : vector<1x16xf32>
    %278 = arith.addf %276, %277 : vector<1x16xf32>
    %279 = math.tanh %278 : vector<1x16xf32>
    %280 = arith.mulf %275, %279 : vector<1x16xf32>
    %281 = vector.extract_strided_slice %23 {offsets = [0, 2], sizes = [1, 1], strides = [1, 1]} : vector<1x16xf32> to vector<1x1xf32>
    %282 = vector.extract_strided_slice %23 {offsets = [0, 13], sizes = [1, 1], strides = [1, 1]} : vector<1x16xf32> to vector<1x1xf32>
    %283 = vector.broadcast %281 : vector<1x1xf32> to vector<1x16xf32>
    %284 = arith.mulf %283, %255 : vector<1x16xf32>
    %cst_59 = arith.constant 1.000000e+00 : f32
    %285 = vector.broadcast %cst_59 : f32 to vector<1x1xf32>
    %286 = arith.subf %285, %281 : vector<1x1xf32>
    %287 = vector.broadcast %286 : vector<1x1xf32> to vector<1x16xf32>
    %288 = arith.mulf %287, %191 : vector<1x16xf32>
    %289 = arith.addf %284, %288 : vector<1x16xf32>
    %290 = vector.broadcast %281 : vector<1x1xf32> to vector<1x16xf32>
    %291 = arith.mulf %290, %253 : vector<1x16xf32>
    %cst_60 = arith.constant 1.000000e+00 : f32
    %292 = vector.broadcast %cst_60 : f32 to vector<1x1xf32>
    %293 = arith.subf %292, %281 : vector<1x1xf32>
    %294 = vector.broadcast %293 : vector<1x1xf32> to vector<1x16xf32>
    %295 = arith.mulf %294, %198 : vector<1x16xf32>
    %296 = arith.addf %291, %295 : vector<1x16xf32>
    %297 = vector.broadcast %282 : vector<1x1xf32> to vector<1x16xf32>
    %298 = arith.mulf %297, %280 : vector<1x16xf32>
    %cst_61 = arith.constant 1.000000e+00 : f32
    %299 = vector.broadcast %cst_61 : f32 to vector<1x1xf32>
    %300 = arith.subf %299, %282 : vector<1x1xf32>
    %301 = vector.broadcast %300 : vector<1x1xf32> to vector<1x16xf32>
    %302 = arith.mulf %301, %205 : vector<1x16xf32>
    %303 = arith.addf %298, %302 : vector<1x16xf32>
    %304 = vector.broadcast %282 : vector<1x1xf32> to vector<1x16xf32>
    %305 = arith.mulf %304, %278 : vector<1x16xf32>
    %cst_62 = arith.constant 1.000000e+00 : f32
    %306 = vector.broadcast %cst_62 : f32 to vector<1x1xf32>
    %307 = arith.subf %306, %282 : vector<1x1xf32>
    %308 = vector.broadcast %307 : vector<1x1xf32> to vector<1x16xf32>
    %309 = arith.mulf %308, %212 : vector<1x16xf32>
    %310 = arith.addf %305, %309 : vector<1x16xf32>
    %311 = vector.broadcast %281 : vector<1x1xf32> to vector<1x16xf32>
    %312 = arith.mulf %311, %289 : vector<1x16xf32>
    %c0_63 = arith.constant 0 : index
    %c2 = arith.constant 2 : index
    %c0_64 = arith.constant 0 : index
    %313 = vector.load %arg18[%c0_63, %c2, %c0_64] : memref<1x16x32xf32, #tpu.memory_space<vmem>>, vector<1x1x16xf32>
    %314 = vector.shape_cast %313 : vector<1x1x16xf32> to vector<1x16xf32>
    %315 = vector.shape_cast %312 : vector<1x16xf32> to vector<1x1x16xf32>
    tpu.vector_store %arg18[%c0_63, %c2, %c0_64], %315 {strides = array<i32>} : memref<1x16x32xf32, #tpu.memory_space<vmem>>, vector<1x1x16xf32>,
    %316 = vector.broadcast %282 : vector<1x1xf32> to vector<1x16xf32>
    %317 = arith.mulf %316, %303 : vector<1x16xf32>
    %c0_65 = arith.constant 0 : index
    %c13 = arith.constant 13 : index
    %c16_66 = arith.constant 16 : index
    %318 = vector.load %arg18[%c0_65, %c13, %c16_66] : memref<1x16x32xf32, #tpu.memory_space<vmem>>, vector<1x1x16xf32>
    %319 = vector.shape_cast %318 : vector<1x1x16xf32> to vector<1x16xf32>
    %320 = vector.shape_cast %317 : vector<1x16xf32> to vector<1x1x16xf32>
    tpu.vector_store %arg18[%c0_65, %c13, %c16_66], %320 {strides = array<i32>} : memref<1x16x32xf32, #tpu.memory_space<vmem>>, vector<1x1x16xf32>,
    %321 = vector.extract_strided_slice %9 {offsets = [0, 3, 0], sizes = [1, 1, 64], strides = [1, 1, 1]} : vector<1x16x64xf32> to vector<1x1x64xf32>
    %322 = vector.shape_cast %321 : vector<1x1x64xf32> to vector<1x64xf32>
    %cst_67 = arith.constant dense<0.000000e+00> : vector<1x64xf32>
    %323 = tpu.matmul %289, %24, %cst_67 {dimension_numbers = #tpu.dot_dimension_numbers<[1], [0], [0], [1], [0, 0, 1, 1], [], []>} : vector<1x16xf32>, vector<16x64xf32>, vector<1x64xf32> -> vector<1x64xf32>
    %324 = arith.addf %322, %323 : vector<1x64xf32>
    %325 = vector.extract_strided_slice %16 {offsets = [0, 12, 0], sizes = [1, 1, 64], strides = [1, 1, 1]} : vector<1x16x64xf32> to vector<1x1x64xf32>
    %326 = vector.shape_cast %325 : vector<1x1x64xf32> to vector<1x64xf32>
    %cst_68 = arith.constant dense<0.000000e+00> : vector<1x64xf32>
    %327 = tpu.matmul %303, %25, %cst_68 {dimension_numbers = #tpu.dot_dimension_numbers<[1], [0], [0], [1], [0, 0, 1, 1], [], []>} : vector<1x16xf32>, vector<16x64xf32>, vector<1x64xf32> -> vector<1x64xf32>
    %328 = arith.addf %326, %327 : vector<1x64xf32>
    %329 = vector.extract_strided_slice %324 {offsets = [0, 0], sizes = [1, 16], strides = [1, 1]} : vector<1x64xf32> to vector<1x16xf32>
    %330 = arith.negf %329 : vector<1x16xf32>
    %331 = math.exp %330 : vector<1x16xf32>
    %cst_69 = arith.constant 1.000000e+00 : f32
    %332 = vector.broadcast %cst_69 : f32 to vector<1x16xf32>
    %333 = arith.addf %332, %331 : vector<1x16xf32>
    %334 = arith.divf %332, %333 : vector<1x16xf32>
    %335 = vector.extract_strided_slice %324 {offsets = [0, 16], sizes = [1, 16], strides = [1, 1]} : vector<1x64xf32> to vector<1x16xf32>
    %336 = arith.negf %335 : vector<1x16xf32>
    %337 = math.exp %336 : vector<1x16xf32>
    %cst_70 = arith.constant 1.000000e+00 : f32
    %338 = vector.broadcast %cst_70 : f32 to vector<1x16xf32>
    %339 = arith.addf %338, %337 : vector<1x16xf32>
    %340 = arith.divf %338, %339 : vector<1x16xf32>
    %341 = vector.extract_strided_slice %324 {offsets = [0, 32], sizes = [1, 16], strides = [1, 1]} : vector<1x64xf32> to vector<1x16xf32>
    %342 = math.tanh %341 : vector<1x16xf32>
    %343 = vector.extract_strided_slice %324 {offsets = [0, 48], sizes = [1, 16], strides = [1, 1]} : vector<1x64xf32> to vector<1x16xf32>
    %344 = arith.negf %343 : vector<1x16xf32>
    %345 = math.exp %344 : vector<1x16xf32>
    %cst_71 = arith.constant 1.000000e+00 : f32
    %346 = vector.broadcast %cst_71 : f32 to vector<1x16xf32>
    %347 = arith.addf %346, %345 : vector<1x16xf32>
    %348 = arith.divf %346, %347 : vector<1x16xf32>
    %349 = arith.mulf %340, %296 : vector<1x16xf32>
    %350 = arith.mulf %334, %342 : vector<1x16xf32>
    %351 = arith.addf %349, %350 : vector<1x16xf32>
    %352 = math.tanh %351 : vector<1x16xf32>
    %353 = arith.mulf %348, %352 : vector<1x16xf32>
    %354 = vector.extract_strided_slice %328 {offsets = [0, 0], sizes = [1, 16], strides = [1, 1]} : vector<1x64xf32> to vector<1x16xf32>
    %355 = arith.negf %354 : vector<1x16xf32>
    %356 = math.exp %355 : vector<1x16xf32>
    %cst_72 = arith.constant 1.000000e+00 : f32
    %357 = vector.broadcast %cst_72 : f32 to vector<1x16xf32>
    %358 = arith.addf %357, %356 : vector<1x16xf32>
    %359 = arith.divf %357, %358 : vector<1x16xf32>
    %360 = vector.extract_strided_slice %328 {offsets = [0, 16], sizes = [1, 16], strides = [1, 1]} : vector<1x64xf32> to vector<1x16xf32>
    %361 = arith.negf %360 : vector<1x16xf32>
    %362 = math.exp %361 : vector<1x16xf32>
    %cst_73 = arith.constant 1.000000e+00 : f32
    %363 = vector.broadcast %cst_73 : f32 to vector<1x16xf32>
    %364 = arith.addf %363, %362 : vector<1x16xf32>
    %365 = arith.divf %363, %364 : vector<1x16xf32>
    %366 = vector.extract_strided_slice %328 {offsets = [0, 32], sizes = [1, 16], strides = [1, 1]} : vector<1x64xf32> to vector<1x16xf32>
    %367 = math.tanh %366 : vector<1x16xf32>
    %368 = vector.extract_strided_slice %328 {offsets = [0, 48], sizes = [1, 16], strides = [1, 1]} : vector<1x64xf32> to vector<1x16xf32>
    %369 = arith.negf %368 : vector<1x16xf32>
    %370 = math.exp %369 : vector<1x16xf32>
    %cst_74 = arith.constant 1.000000e+00 : f32
    %371 = vector.broadcast %cst_74 : f32 to vector<1x16xf32>
    %372 = arith.addf %371, %370 : vector<1x16xf32>
    %373 = arith.divf %371, %372 : vector<1x16xf32>
    %374 = arith.mulf %365, %310 : vector<1x16xf32>
    %375 = arith.mulf %359, %367 : vector<1x16xf32>
    %376 = arith.addf %374, %375 : vector<1x16xf32>
    %377 = math.tanh %376 : vector<1x16xf32>
    %378 = arith.mulf %373, %377 : vector<1x16xf32>
    %379 = vector.extract_strided_slice %23 {offsets = [0, 3], sizes = [1, 1], strides = [1, 1]} : vector<1x16xf32> to vector<1x1xf32>
    %380 = vector.extract_strided_slice %23 {offsets = [0, 12], sizes = [1, 1], strides = [1, 1]} : vector<1x16xf32> to vector<1x1xf32>
    %381 = vector.broadcast %379 : vector<1x1xf32> to vector<1x16xf32>
    %382 = arith.mulf %381, %353 : vector<1x16xf32>
    %cst_75 = arith.constant 1.000000e+00 : f32
    %383 = vector.broadcast %cst_75 : f32 to vector<1x1xf32>
    %384 = arith.subf %383, %379 : vector<1x1xf32>
    %385 = vector.broadcast %384 : vector<1x1xf32> to vector<1x16xf32>
    %386 = arith.mulf %385, %289 : vector<1x16xf32>
    %387 = arith.addf %382, %386 : vector<1x16xf32>
    %388 = vector.broadcast %379 : vector<1x1xf32> to vector<1x16xf32>
    %389 = arith.mulf %388, %351 : vector<1x16xf32>
    %cst_76 = arith.constant 1.000000e+00 : f32
    %390 = vector.broadcast %cst_76 : f32 to vector<1x1xf32>
    %391 = arith.subf %390, %379 : vector<1x1xf32>
    %392 = vector.broadcast %391 : vector<1x1xf32> to vector<1x16xf32>
    %393 = arith.mulf %392, %296 : vector<1x16xf32>
    %394 = arith.addf %389, %393 : vector<1x16xf32>
    %395 = vector.broadcast %380 : vector<1x1xf32> to vector<1x16xf32>
    %396 = arith.mulf %395, %378 : vector<1x16xf32>
    %cst_77 = arith.constant 1.000000e+00 : f32
    %397 = vector.broadcast %cst_77 : f32 to vector<1x1xf32>
    %398 = arith.subf %397, %380 : vector<1x1xf32>
    %399 = vector.broadcast %398 : vector<1x1xf32> to vector<1x16xf32>
    %400 = arith.mulf %399, %303 : vector<1x16xf32>
    %401 = arith.addf %396, %400 : vector<1x16xf32>
    %402 = vector.broadcast %380 : vector<1x1xf32> to vector<1x16xf32>
    %403 = arith.mulf %402, %376 : vector<1x16xf32>
    %cst_78 = arith.constant 1.000000e+00 : f32
    %404 = vector.broadcast %cst_78 : f32 to vector<1x1xf32>
    %405 = arith.subf %404, %380 : vector<1x1xf32>
    %406 = vector.broadcast %405 : vector<1x1xf32> to vector<1x16xf32>
    %407 = arith.mulf %406, %310 : vector<1x16xf32>
    %408 = arith.addf %403, %407 : vector<1x16xf32>
    %409 = vector.broadcast %379 : vector<1x1xf32> to vector<1x16xf32>
    %410 = arith.mulf %409, %387 : vector<1x16xf32>
    %c0_79 = arith.constant 0 : index
    %c3 = arith.constant 3 : index
    %c0_80 = arith.constant 0 : index
    %411 = vector.load %arg18[%c0_79, %c3, %c0_80] : memref<1x16x32xf32, #tpu.memory_space<vmem>>, vector<1x1x16xf32>
    %412 = vector.shape_cast %411 : vector<1x1x16xf32> to vector<1x16xf32>
    %413 = vector.shape_cast %410 : vector<1x16xf32> to vector<1x1x16xf32>
    tpu.vector_store %arg18[%c0_79, %c3, %c0_80], %413 {strides = array<i32>} : memref<1x16x32xf32, #tpu.memory_space<vmem>>, vector<1x1x16xf32>,
    %414 = vector.broadcast %380 : vector<1x1xf32> to vector<1x16xf32>
    %415 = arith.mulf %414, %401 : vector<1x16xf32>
    %c0_81 = arith.constant 0 : index
    %c12 = arith.constant 12 : index
    %c16_82 = arith.constant 16 : index
    %416 = vector.load %arg18[%c0_81, %c12, %c16_82] : memref<1x16x32xf32, #tpu.memory_space<vmem>>, vector<1x1x16xf32>
    %417 = vector.shape_cast %416 : vector<1x1x16xf32> to vector<1x16xf32>
    %418 = vector.shape_cast %415 : vector<1x16xf32> to vector<1x1x16xf32>
    tpu.vector_store %arg18[%c0_81, %c12, %c16_82], %418 {strides = array<i32>} : memref<1x16x32xf32, #tpu.memory_space<vmem>>, vector<1x1x16xf32>,
    %419 = vector.extract_strided_slice %9 {offsets = [0, 4, 0], sizes = [1, 1, 64], strides = [1, 1, 1]} : vector<1x16x64xf32> to vector<1x1x64xf32>
    %420 = vector.shape_cast %419 : vector<1x1x64xf32> to vector<1x64xf32>
    %cst_83 = arith.constant dense<0.000000e+00> : vector<1x64xf32>
    %421 = tpu.matmul %387, %24, %cst_83 {dimension_numbers = #tpu.dot_dimension_numbers<[1], [0], [0], [1], [0, 0, 1, 1], [], []>} : vector<1x16xf32>, vector<16x64xf32>, vector<1x64xf32> -> vector<1x64xf32>
    %422 = arith.addf %420, %421 : vector<1x64xf32>
    %423 = vector.extract_strided_slice %16 {offsets = [0, 11, 0], sizes = [1, 1, 64], strides = [1, 1, 1]} : vector<1x16x64xf32> to vector<1x1x64xf32>
    %424 = vector.shape_cast %423 : vector<1x1x64xf32> to vector<1x64xf32>
    %cst_84 = arith.constant dense<0.000000e+00> : vector<1x64xf32>
    %425 = tpu.matmul %401, %25, %cst_84 {dimension_numbers = #tpu.dot_dimension_numbers<[1], [0], [0], [1], [0, 0, 1, 1], [], []>} : vector<1x16xf32>, vector<16x64xf32>, vector<1x64xf32> -> vector<1x64xf32>
    %426 = arith.addf %424, %425 : vector<1x64xf32>
    %427 = vector.extract_strided_slice %422 {offsets = [0, 0], sizes = [1, 16], strides = [1, 1]} : vector<1x64xf32> to vector<1x16xf32>
    %428 = arith.negf %427 : vector<1x16xf32>
    %429 = math.exp %428 : vector<1x16xf32>
    %cst_85 = arith.constant 1.000000e+00 : f32
    %430 = vector.broadcast %cst_85 : f32 to vector<1x16xf32>
    %431 = arith.addf %430, %429 : vector<1x16xf32>
    %432 = arith.divf %430, %431 : vector<1x16xf32>
    %433 = vector.extract_strided_slice %422 {offsets = [0, 16], sizes = [1, 16], strides = [1, 1]} : vector<1x64xf32> to vector<1x16xf32>
    %434 = arith.negf %433 : vector<1x16xf32>
    %435 = math.exp %434 : vector<1x16xf32>
    %cst_86 = arith.constant 1.000000e+00 : f32
    %436 = vector.broadcast %cst_86 : f32 to vector<1x16xf32>
    %437 = arith.addf %436, %435 : vector<1x16xf32>
    %438 = arith.divf %436, %437 : vector<1x16xf32>
    %439 = vector.extract_strided_slice %422 {offsets = [0, 32], sizes = [1, 16], strides = [1, 1]} : vector<1x64xf32> to vector<1x16xf32>
    %440 = math.tanh %439 : vector<1x16xf32>
    %441 = vector.extract_strided_slice %422 {offsets = [0, 48], sizes = [1, 16], strides = [1, 1]} : vector<1x64xf32> to vector<1x16xf32>
    %442 = arith.negf %441 : vector<1x16xf32>
    %443 = math.exp %442 : vector<1x16xf32>
    %cst_87 = arith.constant 1.000000e+00 : f32
    %444 = vector.broadcast %cst_87 : f32 to vector<1x16xf32>
    %445 = arith.addf %444, %443 : vector<1x16xf32>
    %446 = arith.divf %444, %445 : vector<1x16xf32>
    %447 = arith.mulf %438, %394 : vector<1x16xf32>
    %448 = arith.mulf %432, %440 : vector<1x16xf32>
    %449 = arith.addf %447, %448 : vector<1x16xf32>
    %450 = math.tanh %449 : vector<1x16xf32>
    %451 = arith.mulf %446, %450 : vector<1x16xf32>
    %452 = vector.extract_strided_slice %426 {offsets = [0, 0], sizes = [1, 16], strides = [1, 1]} : vector<1x64xf32> to vector<1x16xf32>
    %453 = arith.negf %452 : vector<1x16xf32>
    %454 = math.exp %453 : vector<1x16xf32>
    %cst_88 = arith.constant 1.000000e+00 : f32
    %455 = vector.broadcast %cst_88 : f32 to vector<1x16xf32>
    %456 = arith.addf %455, %454 : vector<1x16xf32>
    %457 = arith.divf %455, %456 : vector<1x16xf32>
    %458 = vector.extract_strided_slice %426 {offsets = [0, 16], sizes = [1, 16], strides = [1, 1]} : vector<1x64xf32> to vector<1x16xf32>
    %459 = arith.negf %458 : vector<1x16xf32>
    %460 = math.exp %459 : vector<1x16xf32>
    %cst_89 = arith.constant 1.000000e+00 : f32
    %461 = vector.broadcast %cst_89 : f32 to vector<1x16xf32>
    %462 = arith.addf %461, %460 : vector<1x16xf32>
    %463 = arith.divf %461, %462 : vector<1x16xf32>
    %464 = vector.extract_strided_slice %426 {offsets = [0, 32], sizes = [1, 16], strides = [1, 1]} : vector<1x64xf32> to vector<1x16xf32>
    %465 = math.tanh %464 : vector<1x16xf32>
    %466 = vector.extract_strided_slice %426 {offsets = [0, 48], sizes = [1, 16], strides = [1, 1]} : vector<1x64xf32> to vector<1x16xf32>
    %467 = arith.negf %466 : vector<1x16xf32>
    %468 = math.exp %467 : vector<1x16xf32>
    %cst_90 = arith.constant 1.000000e+00 : f32
    %469 = vector.broadcast %cst_90 : f32 to vector<1x16xf32>
    %470 = arith.addf %469, %468 : vector<1x16xf32>
    %471 = arith.divf %469, %470 : vector<1x16xf32>
    %472 = arith.mulf %463, %408 : vector<1x16xf32>
    %473 = arith.mulf %457, %465 : vector<1x16xf32>
    %474 = arith.addf %472, %473 : vector<1x16xf32>
    %475 = math.tanh %474 : vector<1x16xf32>
    %476 = arith.mulf %471, %475 : vector<1x16xf32>
    %477 = vector.extract_strided_slice %23 {offsets = [0, 4], sizes = [1, 1], strides = [1, 1]} : vector<1x16xf32> to vector<1x1xf32>
    %478 = vector.extract_strided_slice %23 {offsets = [0, 11], sizes = [1, 1], strides = [1, 1]} : vector<1x16xf32> to vector<1x1xf32>
    %479 = vector.broadcast %477 : vector<1x1xf32> to vector<1x16xf32>
    %480 = arith.mulf %479, %451 : vector<1x16xf32>
    %cst_91 = arith.constant 1.000000e+00 : f32
    %481 = vector.broadcast %cst_91 : f32 to vector<1x1xf32>
    %482 = arith.subf %481, %477 : vector<1x1xf32>
    %483 = vector.broadcast %482 : vector<1x1xf32> to vector<1x16xf32>
    %484 = arith.mulf %483, %387 : vector<1x16xf32>
    %485 = arith.addf %480, %484 : vector<1x16xf32>
    %486 = vector.broadcast %477 : vector<1x1xf32> to vector<1x16xf32>
    %487 = arith.mulf %486, %449 : vector<1x16xf32>
    %cst_92 = arith.constant 1.000000e+00 : f32
    %488 = vector.broadcast %cst_92 : f32 to vector<1x1xf32>
    %489 = arith.subf %488, %477 : vector<1x1xf32>
    %490 = vector.broadcast %489 : vector<1x1xf32> to vector<1x16xf32>
    %491 = arith.mulf %490, %394 : vector<1x16xf32>
    %492 = arith.addf %487, %491 : vector<1x16xf32>
    %493 = vector.broadcast %478 : vector<1x1xf32> to vector<1x16xf32>
    %494 = arith.mulf %493, %476 : vector<1x16xf32>
    %cst_93 = arith.constant 1.000000e+00 : f32
    %495 = vector.broadcast %cst_93 : f32 to vector<1x1xf32>
    %496 = arith.subf %495, %478 : vector<1x1xf32>
    %497 = vector.broadcast %496 : vector<1x1xf32> to vector<1x16xf32>
    %498 = arith.mulf %497, %401 : vector<1x16xf32>
    %499 = arith.addf %494, %498 : vector<1x16xf32>
    %500 = vector.broadcast %478 : vector<1x1xf32> to vector<1x16xf32>
    %501 = arith.mulf %500, %474 : vector<1x16xf32>
    %cst_94 = arith.constant 1.000000e+00 : f32
    %502 = vector.broadcast %cst_94 : f32 to vector<1x1xf32>
    %503 = arith.subf %502, %478 : vector<1x1xf32>
    %504 = vector.broadcast %503 : vector<1x1xf32> to vector<1x16xf32>
    %505 = arith.mulf %504, %408 : vector<1x16xf32>
    %506 = arith.addf %501, %505 : vector<1x16xf32>
    %507 = vector.broadcast %477 : vector<1x1xf32> to vector<1x16xf32>
    %508 = arith.mulf %507, %485 : vector<1x16xf32>
    %c0_95 = arith.constant 0 : index
    %c4 = arith.constant 4 : index
    %c0_96 = arith.constant 0 : index
    %509 = vector.load %arg18[%c0_95, %c4, %c0_96] : memref<1x16x32xf32, #tpu.memory_space<vmem>>, vector<1x1x16xf32>
    %510 = vector.shape_cast %509 : vector<1x1x16xf32> to vector<1x16xf32>
    %511 = vector.shape_cast %508 : vector<1x16xf32> to vector<1x1x16xf32>
    tpu.vector_store %arg18[%c0_95, %c4, %c0_96], %511 {strides = array<i32>} : memref<1x16x32xf32, #tpu.memory_space<vmem>>, vector<1x1x16xf32>,
    %512 = vector.broadcast %478 : vector<1x1xf32> to vector<1x16xf32>
    %513 = arith.mulf %512, %499 : vector<1x16xf32>
    %c0_97 = arith.constant 0 : index
    %c11 = arith.constant 11 : index
    %c16_98 = arith.constant 16 : index
    %514 = vector.load %arg18[%c0_97, %c11, %c16_98] : memref<1x16x32xf32, #tpu.memory_space<vmem>>, vector<1x1x16xf32>
    %515 = vector.shape_cast %514 : vector<1x1x16xf32> to vector<1x16xf32>
    %516 = vector.shape_cast %513 : vector<1x16xf32> to vector<1x1x16xf32>
    tpu.vector_store %arg18[%c0_97, %c11, %c16_98], %516 {strides = array<i32>} : memref<1x16x32xf32, #tpu.memory_space<vmem>>, vector<1x1x16xf32>,
    %517 = vector.extract_strided_slice %9 {offsets = [0, 5, 0], sizes = [1, 1, 64], strides = [1, 1, 1]} : vector<1x16x64xf32> to vector<1x1x64xf32>
    %518 = vector.shape_cast %517 : vector<1x1x64xf32> to vector<1x64xf32>
    %cst_99 = arith.constant dense<0.000000e+00> : vector<1x64xf32>
    %519 = tpu.matmul %485, %24, %cst_99 {dimension_numbers = #tpu.dot_dimension_numbers<[1], [0], [0], [1], [0, 0, 1, 1], [], []>} : vector<1x16xf32>, vector<16x64xf32>, vector<1x64xf32> -> vector<1x64xf32>
    %520 = arith.addf %518, %519 : vector<1x64xf32>
    %521 = vector.extract_strided_slice %16 {offsets = [0, 10, 0], sizes = [1, 1, 64], strides = [1, 1, 1]} : vector<1x16x64xf32> to vector<1x1x64xf32>
    %522 = vector.shape_cast %521 : vector<1x1x64xf32> to vector<1x64xf32>
    %cst_100 = arith.constant dense<0.000000e+00> : vector<1x64xf32>
    %523 = tpu.matmul %499, %25, %cst_100 {dimension_numbers = #tpu.dot_dimension_numbers<[1], [0], [0], [1], [0, 0, 1, 1], [], []>} : vector<1x16xf32>, vector<16x64xf32>, vector<1x64xf32> -> vector<1x64xf32>
    %524 = arith.addf %522, %523 : vector<1x64xf32>
    %525 = vector.extract_strided_slice %520 {offsets = [0, 0], sizes = [1, 16], strides = [1, 1]} : vector<1x64xf32> to vector<1x16xf32>
    %526 = arith.negf %525 : vector<1x16xf32>
    %527 = math.exp %526 : vector<1x16xf32>
    %cst_101 = arith.constant 1.000000e+00 : f32
    %528 = vector.broadcast %cst_101 : f32 to vector<1x16xf32>
    %529 = arith.addf %528, %527 : vector<1x16xf32>
    %530 = arith.divf %528, %529 : vector<1x16xf32>
    %531 = vector.extract_strided_slice %520 {offsets = [0, 16], sizes = [1, 16], strides = [1, 1]} : vector<1x64xf32> to vector<1x16xf32>
    %532 = arith.negf %531 : vector<1x16xf32>
    %533 = math.exp %532 : vector<1x16xf32>
    %cst_102 = arith.constant 1.000000e+00 : f32
    %534 = vector.broadcast %cst_102 : f32 to vector<1x16xf32>
    %535 = arith.addf %534, %533 : vector<1x16xf32>
    %536 = arith.divf %534, %535 : vector<1x16xf32>
    %537 = vector.extract_strided_slice %520 {offsets = [0, 32], sizes = [1, 16], strides = [1, 1]} : vector<1x64xf32> to vector<1x16xf32>
    %538 = math.tanh %537 : vector<1x16xf32>
    %539 = vector.extract_strided_slice %520 {offsets = [0, 48], sizes = [1, 16], strides = [1, 1]} : vector<1x64xf32> to vector<1x16xf32>
    %540 = arith.negf %539 : vector<1x16xf32>
    %541 = math.exp %540 : vector<1x16xf32>
    %cst_103 = arith.constant 1.000000e+00 : f32
    %542 = vector.broadcast %cst_103 : f32 to vector<1x16xf32>
    %543 = arith.addf %542, %541 : vector<1x16xf32>
    %544 = arith.divf %542, %543 : vector<1x16xf32>
    %545 = arith.mulf %536, %492 : vector<1x16xf32>
    %546 = arith.mulf %530, %538 : vector<1x16xf32>
    %547 = arith.addf %545, %546 : vector<1x16xf32>
    %548 = math.tanh %547 : vector<1x16xf32>
    %549 = arith.mulf %544, %548 : vector<1x16xf32>
    %550 = vector.extract_strided_slice %524 {offsets = [0, 0], sizes = [1, 16], strides = [1, 1]} : vector<1x64xf32> to vector<1x16xf32>
    %551 = arith.negf %550 : vector<1x16xf32>
    %552 = math.exp %551 : vector<1x16xf32>
    %cst_104 = arith.constant 1.000000e+00 : f32
    %553 = vector.broadcast %cst_104 : f32 to vector<1x16xf32>
    %554 = arith.addf %553, %552 : vector<1x16xf32>
    %555 = arith.divf %553, %554 : vector<1x16xf32>
    %556 = vector.extract_strided_slice %524 {offsets = [0, 16], sizes = [1, 16], strides = [1, 1]} : vector<1x64xf32> to vector<1x16xf32>
    %557 = arith.negf %556 : vector<1x16xf32>
    %558 = math.exp %557 : vector<1x16xf32>
    %cst_105 = arith.constant 1.000000e+00 : f32
    %559 = vector.broadcast %cst_105 : f32 to vector<1x16xf32>
    %560 = arith.addf %559, %558 : vector<1x16xf32>
    %561 = arith.divf %559, %560 : vector<1x16xf32>
    %562 = vector.extract_strided_slice %524 {offsets = [0, 32], sizes = [1, 16], strides = [1, 1]} : vector<1x64xf32> to vector<1x16xf32>
    %563 = math.tanh %562 : vector<1x16xf32>
    %564 = vector.extract_strided_slice %524 {offsets = [0, 48], sizes = [1, 16], strides = [1, 1]} : vector<1x64xf32> to vector<1x16xf32>
    %565 = arith.negf %564 : vector<1x16xf32>
    %566 = math.exp %565 : vector<1x16xf32>
    %cst_106 = arith.constant 1.000000e+00 : f32
    %567 = vector.broadcast %cst_106 : f32 to vector<1x16xf32>
    %568 = arith.addf %567, %566 : vector<1x16xf32>
    %569 = arith.divf %567, %568 : vector<1x16xf32>
    %570 = arith.mulf %561, %506 : vector<1x16xf32>
    %571 = arith.mulf %555, %563 : vector<1x16xf32>
    %572 = arith.addf %570, %571 : vector<1x16xf32>
    %573 = math.tanh %572 : vector<1x16xf32>
    %574 = arith.mulf %569, %573 : vector<1x16xf32>
    %575 = vector.extract_strided_slice %23 {offsets = [0, 5], sizes = [1, 1], strides = [1, 1]} : vector<1x16xf32> to vector<1x1xf32>
    %576 = vector.extract_strided_slice %23 {offsets = [0, 10], sizes = [1, 1], strides = [1, 1]} : vector<1x16xf32> to vector<1x1xf32>
    %577 = vector.broadcast %575 : vector<1x1xf32> to vector<1x16xf32>
    %578 = arith.mulf %577, %549 : vector<1x16xf32>
    %cst_107 = arith.constant 1.000000e+00 : f32
    %579 = vector.broadcast %cst_107 : f32 to vector<1x1xf32>
    %580 = arith.subf %579, %575 : vector<1x1xf32>
    %581 = vector.broadcast %580 : vector<1x1xf32> to vector<1x16xf32>
    %582 = arith.mulf %581, %485 : vector<1x16xf32>
    %583 = arith.addf %578, %582 : vector<1x16xf32>
    %584 = vector.broadcast %575 : vector<1x1xf32> to vector<1x16xf32>
    %585 = arith.mulf %584, %547 : vector<1x16xf32>
    %cst_108 = arith.constant 1.000000e+00 : f32
    %586 = vector.broadcast %cst_108 : f32 to vector<1x1xf32>
    %587 = arith.subf %586, %575 : vector<1x1xf32>
    %588 = vector.broadcast %587 : vector<1x1xf32> to vector<1x16xf32>
    %589 = arith.mulf %588, %492 : vector<1x16xf32>
    %590 = arith.addf %585, %589 : vector<1x16xf32>
    %591 = vector.broadcast %576 : vector<1x1xf32> to vector<1x16xf32>
    %592 = arith.mulf %591, %574 : vector<1x16xf32>
    %cst_109 = arith.constant 1.000000e+00 : f32
    %593 = vector.broadcast %cst_109 : f32 to vector<1x1xf32>
    %594 = arith.subf %593, %576 : vector<1x1xf32>
    %595 = vector.broadcast %594 : vector<1x1xf32> to vector<1x16xf32>
    %596 = arith.mulf %595, %499 : vector<1x16xf32>
    %597 = arith.addf %592, %596 : vector<1x16xf32>
    %598 = vector.broadcast %576 : vector<1x1xf32> to vector<1x16xf32>
    %599 = arith.mulf %598, %572 : vector<1x16xf32>
    %cst_110 = arith.constant 1.000000e+00 : f32
    %600 = vector.broadcast %cst_110 : f32 to vector<1x1xf32>
    %601 = arith.subf %600, %576 : vector<1x1xf32>
    %602 = vector.broadcast %601 : vector<1x1xf32> to vector<1x16xf32>
    %603 = arith.mulf %602, %506 : vector<1x16xf32>
    %604 = arith.addf %599, %603 : vector<1x16xf32>
    %605 = vector.broadcast %575 : vector<1x1xf32> to vector<1x16xf32>
    %606 = arith.mulf %605, %583 : vector<1x16xf32>
    %c0_111 = arith.constant 0 : index
    %c5 = arith.constant 5 : index
    %c0_112 = arith.constant 0 : index
    %607 = vector.load %arg18[%c0_111, %c5, %c0_112] : memref<1x16x32xf32, #tpu.memory_space<vmem>>, vector<1x1x16xf32>
    %608 = vector.shape_cast %607 : vector<1x1x16xf32> to vector<1x16xf32>
    %609 = vector.shape_cast %606 : vector<1x16xf32> to vector<1x1x16xf32>
    tpu.vector_store %arg18[%c0_111, %c5, %c0_112], %609 {strides = array<i32>} : memref<1x16x32xf32, #tpu.memory_space<vmem>>, vector<1x1x16xf32>,
    %610 = vector.broadcast %576 : vector<1x1xf32> to vector<1x16xf32>
    %611 = arith.mulf %610, %597 : vector<1x16xf32>
    %c0_113 = arith.constant 0 : index
    %c10 = arith.constant 10 : index
    %c16_114 = arith.constant 16 : index
    %612 = vector.load %arg18[%c0_113, %c10, %c16_114] : memref<1x16x32xf32, #tpu.memory_space<vmem>>, vector<1x1x16xf32>
    %613 = vector.shape_cast %612 : vector<1x1x16xf32> to vector<1x16xf32>
    %614 = vector.shape_cast %611 : vector<1x16xf32> to vector<1x1x16xf32>
    tpu.vector_store %arg18[%c0_113, %c10, %c16_114], %614 {strides = array<i32>} : memref<1x16x32xf32, #tpu.memory_space<vmem>>, vector<1x1x16xf32>,
    %615 = vector.extract_strided_slice %9 {offsets = [0, 6, 0], sizes = [1, 1, 64], strides = [1, 1, 1]} : vector<1x16x64xf32> to vector<1x1x64xf32>
    %616 = vector.shape_cast %615 : vector<1x1x64xf32> to vector<1x64xf32>
    %cst_115 = arith.constant dense<0.000000e+00> : vector<1x64xf32>
    %617 = tpu.matmul %583, %24, %cst_115 {dimension_numbers = #tpu.dot_dimension_numbers<[1], [0], [0], [1], [0, 0, 1, 1], [], []>} : vector<1x16xf32>, vector<16x64xf32>, vector<1x64xf32> -> vector<1x64xf32>
    %618 = arith.addf %616, %617 : vector<1x64xf32>
    %619 = vector.extract_strided_slice %16 {offsets = [0, 9, 0], sizes = [1, 1, 64], strides = [1, 1, 1]} : vector<1x16x64xf32> to vector<1x1x64xf32>
    %620 = vector.shape_cast %619 : vector<1x1x64xf32> to vector<1x64xf32>
    %cst_116 = arith.constant dense<0.000000e+00> : vector<1x64xf32>
    %621 = tpu.matmul %597, %25, %cst_116 {dimension_numbers = #tpu.dot_dimension_numbers<[1], [0], [0], [1], [0, 0, 1, 1], [], []>} : vector<1x16xf32>, vector<16x64xf32>, vector<1x64xf32> -> vector<1x64xf32>
    %622 = arith.addf %620, %621 : vector<1x64xf32>
    %623 = vector.extract_strided_slice %618 {offsets = [0, 0], sizes = [1, 16], strides = [1, 1]} : vector<1x64xf32> to vector<1x16xf32>
    %624 = arith.negf %623 : vector<1x16xf32>
    %625 = math.exp %624 : vector<1x16xf32>
    %cst_117 = arith.constant 1.000000e+00 : f32
    %626 = vector.broadcast %cst_117 : f32 to vector<1x16xf32>
    %627 = arith.addf %626, %625 : vector<1x16xf32>
    %628 = arith.divf %626, %627 : vector<1x16xf32>
    %629 = vector.extract_strided_slice %618 {offsets = [0, 16], sizes = [1, 16], strides = [1, 1]} : vector<1x64xf32> to vector<1x16xf32>
    %630 = arith.negf %629 : vector<1x16xf32>
    %631 = math.exp %630 : vector<1x16xf32>
    %cst_118 = arith.constant 1.000000e+00 : f32
    %632 = vector.broadcast %cst_118 : f32 to vector<1x16xf32>
    %633 = arith.addf %632, %631 : vector<1x16xf32>
    %634 = arith.divf %632, %633 : vector<1x16xf32>
    %635 = vector.extract_strided_slice %618 {offsets = [0, 32], sizes = [1, 16], strides = [1, 1]} : vector<1x64xf32> to vector<1x16xf32>
    %636 = math.tanh %635 : vector<1x16xf32>
    %637 = vector.extract_strided_slice %618 {offsets = [0, 48], sizes = [1, 16], strides = [1, 1]} : vector<1x64xf32> to vector<1x16xf32>
    %638 = arith.negf %637 : vector<1x16xf32>
    %639 = math.exp %638 : vector<1x16xf32>
    %cst_119 = arith.constant 1.000000e+00 : f32
    %640 = vector.broadcast %cst_119 : f32 to vector<1x16xf32>
    %641 = arith.addf %640, %639 : vector<1x16xf32>
    %642 = arith.divf %640, %641 : vector<1x16xf32>
    %643 = arith.mulf %634, %590 : vector<1x16xf32>
    %644 = arith.mulf %628, %636 : vector<1x16xf32>
    %645 = arith.addf %643, %644 : vector<1x16xf32>
    %646 = math.tanh %645 : vector<1x16xf32>
    %647 = arith.mulf %642, %646 : vector<1x16xf32>
    %648 = vector.extract_strided_slice %622 {offsets = [0, 0], sizes = [1, 16], strides = [1, 1]} : vector<1x64xf32> to vector<1x16xf32>
    %649 = arith.negf %648 : vector<1x16xf32>
    %650 = math.exp %649 : vector<1x16xf32>
    %cst_120 = arith.constant 1.000000e+00 : f32
    %651 = vector.broadcast %cst_120 : f32 to vector<1x16xf32>
    %652 = arith.addf %651, %650 : vector<1x16xf32>
    %653 = arith.divf %651, %652 : vector<1x16xf32>
    %654 = vector.extract_strided_slice %622 {offsets = [0, 16], sizes = [1, 16], strides = [1, 1]} : vector<1x64xf32> to vector<1x16xf32>
    %655 = arith.negf %654 : vector<1x16xf32>
    %656 = math.exp %655 : vector<1x16xf32>
    %cst_121 = arith.constant 1.000000e+00 : f32
    %657 = vector.broadcast %cst_121 : f32 to vector<1x16xf32>
    %658 = arith.addf %657, %656 : vector<1x16xf32>
    %659 = arith.divf %657, %658 : vector<1x16xf32>
    %660 = vector.extract_strided_slice %622 {offsets = [0, 32], sizes = [1, 16], strides = [1, 1]} : vector<1x64xf32> to vector<1x16xf32>
    %661 = math.tanh %660 : vector<1x16xf32>
    %662 = vector.extract_strided_slice %622 {offsets = [0, 48], sizes = [1, 16], strides = [1, 1]} : vector<1x64xf32> to vector<1x16xf32>
    %663 = arith.negf %662 : vector<1x16xf32>
    %664 = math.exp %663 : vector<1x16xf32>
    %cst_122 = arith.constant 1.000000e+00 : f32
    %665 = vector.broadcast %cst_122 : f32 to vector<1x16xf32>
    %666 = arith.addf %665, %664 : vector<1x16xf32>
    %667 = arith.divf %665, %666 : vector<1x16xf32>
    %668 = arith.mulf %659, %604 : vector<1x16xf32>
    %669 = arith.mulf %653, %661 : vector<1x16xf32>
    %670 = arith.addf %668, %669 : vector<1x16xf32>
    %671 = math.tanh %670 : vector<1x16xf32>
    %672 = arith.mulf %667, %671 : vector<1x16xf32>
    %673 = vector.extract_strided_slice %23 {offsets = [0, 6], sizes = [1, 1], strides = [1, 1]} : vector<1x16xf32> to vector<1x1xf32>
    %674 = vector.extract_strided_slice %23 {offsets = [0, 9], sizes = [1, 1], strides = [1, 1]} : vector<1x16xf32> to vector<1x1xf32>
    %675 = vector.broadcast %673 : vector<1x1xf32> to vector<1x16xf32>
    %676 = arith.mulf %675, %647 : vector<1x16xf32>
    %cst_123 = arith.constant 1.000000e+00 : f32
    %677 = vector.broadcast %cst_123 : f32 to vector<1x1xf32>
    %678 = arith.subf %677, %673 : vector<1x1xf32>
    %679 = vector.broadcast %678 : vector<1x1xf32> to vector<1x16xf32>
    %680 = arith.mulf %679, %583 : vector<1x16xf32>
    %681 = arith.addf %676, %680 : vector<1x16xf32>
    %682 = vector.broadcast %673 : vector<1x1xf32> to vector<1x16xf32>
    %683 = arith.mulf %682, %645 : vector<1x16xf32>
    %cst_124 = arith.constant 1.000000e+00 : f32
    %684 = vector.broadcast %cst_124 : f32 to vector<1x1xf32>
    %685 = arith.subf %684, %673 : vector<1x1xf32>
    %686 = vector.broadcast %685 : vector<1x1xf32> to vector<1x16xf32>
    %687 = arith.mulf %686, %590 : vector<1x16xf32>
    %688 = arith.addf %683, %687 : vector<1x16xf32>
    %689 = vector.broadcast %674 : vector<1x1xf32> to vector<1x16xf32>
    %690 = arith.mulf %689, %672 : vector<1x16xf32>
    %cst_125 = arith.constant 1.000000e+00 : f32
    %691 = vector.broadcast %cst_125 : f32 to vector<1x1xf32>
    %692 = arith.subf %691, %674 : vector<1x1xf32>
    %693 = vector.broadcast %692 : vector<1x1xf32> to vector<1x16xf32>
    %694 = arith.mulf %693, %597 : vector<1x16xf32>
    %695 = arith.addf %690, %694 : vector<1x16xf32>
    %696 = vector.broadcast %674 : vector<1x1xf32> to vector<1x16xf32>
    %697 = arith.mulf %696, %670 : vector<1x16xf32>
    %cst_126 = arith.constant 1.000000e+00 : f32
    %698 = vector.broadcast %cst_126 : f32 to vector<1x1xf32>
    %699 = arith.subf %698, %674 : vector<1x1xf32>
    %700 = vector.broadcast %699 : vector<1x1xf32> to vector<1x16xf32>
    %701 = arith.mulf %700, %604 : vector<1x16xf32>
    %702 = arith.addf %697, %701 : vector<1x16xf32>
    %703 = vector.broadcast %673 : vector<1x1xf32> to vector<1x16xf32>
    %704 = arith.mulf %703, %681 : vector<1x16xf32>
    %c0_127 = arith.constant 0 : index
    %c6 = arith.constant 6 : index
    %c0_128 = arith.constant 0 : index
    %705 = vector.load %arg18[%c0_127, %c6, %c0_128] : memref<1x16x32xf32, #tpu.memory_space<vmem>>, vector<1x1x16xf32>
    %706 = vector.shape_cast %705 : vector<1x1x16xf32> to vector<1x16xf32>
    %707 = vector.shape_cast %704 : vector<1x16xf32> to vector<1x1x16xf32>
    tpu.vector_store %arg18[%c0_127, %c6, %c0_128], %707 {strides = array<i32>} : memref<1x16x32xf32, #tpu.memory_space<vmem>>, vector<1x1x16xf32>,
    %708 = vector.broadcast %674 : vector<1x1xf32> to vector<1x16xf32>
    %709 = arith.mulf %708, %695 : vector<1x16xf32>
    %c0_129 = arith.constant 0 : index
    %c9 = arith.constant 9 : index
    %c16_130 = arith.constant 16 : index
    %710 = vector.load %arg18[%c0_129, %c9, %c16_130] : memref<1x16x32xf32, #tpu.memory_space<vmem>>, vector<1x1x16xf32>
    %711 = vector.shape_cast %710 : vector<1x1x16xf32> to vector<1x16xf32>
    %712 = vector.shape_cast %709 : vector<1x16xf32> to vector<1x1x16xf32>
    tpu.vector_store %arg18[%c0_129, %c9, %c16_130], %712 {strides = array<i32>} : memref<1x16x32xf32, #tpu.memory_space<vmem>>, vector<1x1x16xf32>,
    %713 = vector.extract_strided_slice %9 {offsets = [0, 7, 0], sizes = [1, 1, 64], strides = [1, 1, 1]} : vector<1x16x64xf32> to vector<1x1x64xf32>
    %714 = vector.shape_cast %713 : vector<1x1x64xf32> to vector<1x64xf32>
    %cst_131 = arith.constant dense<0.000000e+00> : vector<1x64xf32>
    %715 = tpu.matmul %681, %24, %cst_131 {dimension_numbers = #tpu.dot_dimension_numbers<[1], [0], [0], [1], [0, 0, 1, 1], [], []>} : vector<1x16xf32>, vector<16x64xf32>, vector<1x64xf32> -> vector<1x64xf32>
    %716 = arith.addf %714, %715 : vector<1x64xf32>
    %717 = vector.extract_strided_slice %16 {offsets = [0, 8, 0], sizes = [1, 1, 64], strides = [1, 1, 1]} : vector<1x16x64xf32> to vector<1x1x64xf32>
    %718 = vector.shape_cast %717 : vector<1x1x64xf32> to vector<1x64xf32>
    %cst_132 = arith.constant dense<0.000000e+00> : vector<1x64xf32>
    %719 = tpu.matmul %695, %25, %cst_132 {dimension_numbers = #tpu.dot_dimension_numbers<[1], [0], [0], [1], [0, 0, 1, 1], [], []>} : vector<1x16xf32>, vector<16x64xf32>, vector<1x64xf32> -> vector<1x64xf32>
    %720 = arith.addf %718, %719 : vector<1x64xf32>
    %721 = vector.extract_strided_slice %716 {offsets = [0, 0], sizes = [1, 16], strides = [1, 1]} : vector<1x64xf32> to vector<1x16xf32>
    %722 = arith.negf %721 : vector<1x16xf32>
    %723 = math.exp %722 : vector<1x16xf32>
    %cst_133 = arith.constant 1.000000e+00 : f32
    %724 = vector.broadcast %cst_133 : f32 to vector<1x16xf32>
    %725 = arith.addf %724, %723 : vector<1x16xf32>
    %726 = arith.divf %724, %725 : vector<1x16xf32>
    %727 = vector.extract_strided_slice %716 {offsets = [0, 16], sizes = [1, 16], strides = [1, 1]} : vector<1x64xf32> to vector<1x16xf32>
    %728 = arith.negf %727 : vector<1x16xf32>
    %729 = math.exp %728 : vector<1x16xf32>
    %cst_134 = arith.constant 1.000000e+00 : f32
    %730 = vector.broadcast %cst_134 : f32 to vector<1x16xf32>
    %731 = arith.addf %730, %729 : vector<1x16xf32>
    %732 = arith.divf %730, %731 : vector<1x16xf32>
    %733 = vector.extract_strided_slice %716 {offsets = [0, 32], sizes = [1, 16], strides = [1, 1]} : vector<1x64xf32> to vector<1x16xf32>
    %734 = math.tanh %733 : vector<1x16xf32>
    %735 = vector.extract_strided_slice %716 {offsets = [0, 48], sizes = [1, 16], strides = [1, 1]} : vector<1x64xf32> to vector<1x16xf32>
    %736 = arith.negf %735 : vector<1x16xf32>
    %737 = math.exp %736 : vector<1x16xf32>
    %cst_135 = arith.constant 1.000000e+00 : f32
    %738 = vector.broadcast %cst_135 : f32 to vector<1x16xf32>
    %739 = arith.addf %738, %737 : vector<1x16xf32>
    %740 = arith.divf %738, %739 : vector<1x16xf32>
    %741 = arith.mulf %732, %688 : vector<1x16xf32>
    %742 = arith.mulf %726, %734 : vector<1x16xf32>
    %743 = arith.addf %741, %742 : vector<1x16xf32>
    %744 = math.tanh %743 : vector<1x16xf32>
    %745 = arith.mulf %740, %744 : vector<1x16xf32>
    %746 = vector.extract_strided_slice %720 {offsets = [0, 0], sizes = [1, 16], strides = [1, 1]} : vector<1x64xf32> to vector<1x16xf32>
    %747 = arith.negf %746 : vector<1x16xf32>
    %748 = math.exp %747 : vector<1x16xf32>
    %cst_136 = arith.constant 1.000000e+00 : f32
    %749 = vector.broadcast %cst_136 : f32 to vector<1x16xf32>
    %750 = arith.addf %749, %748 : vector<1x16xf32>
    %751 = arith.divf %749, %750 : vector<1x16xf32>
    %752 = vector.extract_strided_slice %720 {offsets = [0, 16], sizes = [1, 16], strides = [1, 1]} : vector<1x64xf32> to vector<1x16xf32>
    %753 = arith.negf %752 : vector<1x16xf32>
    %754 = math.exp %753 : vector<1x16xf32>
    %cst_137 = arith.constant 1.000000e+00 : f32
    %755 = vector.broadcast %cst_137 : f32 to vector<1x16xf32>
    %756 = arith.addf %755, %754 : vector<1x16xf32>
    %757 = arith.divf %755, %756 : vector<1x16xf32>
    %758 = vector.extract_strided_slice %720 {offsets = [0, 32], sizes = [1, 16], strides = [1, 1]} : vector<1x64xf32> to vector<1x16xf32>
    %759 = math.tanh %758 : vector<1x16xf32>
    %760 = vector.extract_strided_slice %720 {offsets = [0, 48], sizes = [1, 16], strides = [1, 1]} : vector<1x64xf32> to vector<1x16xf32>
    %761 = arith.negf %760 : vector<1x16xf32>
    %762 = math.exp %761 : vector<1x16xf32>
    %cst_138 = arith.constant 1.000000e+00 : f32
    %763 = vector.broadcast %cst_138 : f32 to vector<1x16xf32>
    %764 = arith.addf %763, %762 : vector<1x16xf32>
    %765 = arith.divf %763, %764 : vector<1x16xf32>
    %766 = arith.mulf %757, %702 : vector<1x16xf32>
    %767 = arith.mulf %751, %759 : vector<1x16xf32>
    %768 = arith.addf %766, %767 : vector<1x16xf32>
    %769 = math.tanh %768 : vector<1x16xf32>
    %770 = arith.mulf %765, %769 : vector<1x16xf32>
    %771 = vector.extract_strided_slice %23 {offsets = [0, 7], sizes = [1, 1], strides = [1, 1]} : vector<1x16xf32> to vector<1x1xf32>
    %772 = vector.extract_strided_slice %23 {offsets = [0, 8], sizes = [1, 1], strides = [1, 1]} : vector<1x16xf32> to vector<1x1xf32>
    %773 = vector.broadcast %771 : vector<1x1xf32> to vector<1x16xf32>
    %774 = arith.mulf %773, %745 : vector<1x16xf32>
    %cst_139 = arith.constant 1.000000e+00 : f32
    %775 = vector.broadcast %cst_139 : f32 to vector<1x1xf32>
    %776 = arith.subf %775, %771 : vector<1x1xf32>
    %777 = vector.broadcast %776 : vector<1x1xf32> to vector<1x16xf32>
    %778 = arith.mulf %777, %681 : vector<1x16xf32>
    %779 = arith.addf %774, %778 : vector<1x16xf32>
    %780 = vector.broadcast %771 : vector<1x1xf32> to vector<1x16xf32>
    %781 = arith.mulf %780, %743 : vector<1x16xf32>
    %cst_140 = arith.constant 1.000000e+00 : f32
    %782 = vector.broadcast %cst_140 : f32 to vector<1x1xf32>
    %783 = arith.subf %782, %771 : vector<1x1xf32>
    %784 = vector.broadcast %783 : vector<1x1xf32> to vector<1x16xf32>
    %785 = arith.mulf %784, %688 : vector<1x16xf32>
    %786 = arith.addf %781, %785 : vector<1x16xf32>
    %787 = vector.broadcast %772 : vector<1x1xf32> to vector<1x16xf32>
    %788 = arith.mulf %787, %770 : vector<1x16xf32>
    %cst_141 = arith.constant 1.000000e+00 : f32
    %789 = vector.broadcast %cst_141 : f32 to vector<1x1xf32>
    %790 = arith.subf %789, %772 : vector<1x1xf32>
    %791 = vector.broadcast %790 : vector<1x1xf32> to vector<1x16xf32>
    %792 = arith.mulf %791, %695 : vector<1x16xf32>
    %793 = arith.addf %788, %792 : vector<1x16xf32>
    %794 = vector.broadcast %772 : vector<1x1xf32> to vector<1x16xf32>
    %795 = arith.mulf %794, %768 : vector<1x16xf32>
    %cst_142 = arith.constant 1.000000e+00 : f32
    %796 = vector.broadcast %cst_142 : f32 to vector<1x1xf32>
    %797 = arith.subf %796, %772 : vector<1x1xf32>
    %798 = vector.broadcast %797 : vector<1x1xf32> to vector<1x16xf32>
    %799 = arith.mulf %798, %702 : vector<1x16xf32>
    %800 = arith.addf %795, %799 : vector<1x16xf32>
    %801 = vector.broadcast %771 : vector<1x1xf32> to vector<1x16xf32>
    %802 = arith.mulf %801, %779 : vector<1x16xf32>
    %c0_143 = arith.constant 0 : index
    %c7 = arith.constant 7 : index
    %c0_144 = arith.constant 0 : index
    %803 = vector.load %arg18[%c0_143, %c7, %c0_144] : memref<1x16x32xf32, #tpu.memory_space<vmem>>, vector<1x1x16xf32>
    %804 = vector.shape_cast %803 : vector<1x1x16xf32> to vector<1x16xf32>
    %805 = vector.shape_cast %802 : vector<1x16xf32> to vector<1x1x16xf32>
    tpu.vector_store %arg18[%c0_143, %c7, %c0_144], %805 {strides = array<i32>} : memref<1x16x32xf32, #tpu.memory_space<vmem>>, vector<1x1x16xf32>,
    %806 = vector.broadcast %772 : vector<1x1xf32> to vector<1x16xf32>
    %807 = arith.mulf %806, %793 : vector<1x16xf32>
    %c0_145 = arith.constant 0 : index
    %c8 = arith.constant 8 : index
    %c16_146 = arith.constant 16 : index
    %808 = vector.load %arg18[%c0_145, %c8, %c16_146] : memref<1x16x32xf32, #tpu.memory_space<vmem>>, vector<1x1x16xf32>
    %809 = vector.shape_cast %808 : vector<1x1x16xf32> to vector<1x16xf32>
    %810 = vector.shape_cast %807 : vector<1x16xf32> to vector<1x1x16xf32>
    tpu.vector_store %arg18[%c0_145, %c8, %c16_146], %810 {strides = array<i32>} : memref<1x16x32xf32, #tpu.memory_space<vmem>>, vector<1x1x16xf32>,
    %811 = vector.extract_strided_slice %9 {offsets = [0, 8, 0], sizes = [1, 1, 64], strides = [1, 1, 1]} : vector<1x16x64xf32> to vector<1x1x64xf32>
    %812 = vector.shape_cast %811 : vector<1x1x64xf32> to vector<1x64xf32>
    %cst_147 = arith.constant dense<0.000000e+00> : vector<1x64xf32>
    %813 = tpu.matmul %779, %24, %cst_147 {dimension_numbers = #tpu.dot_dimension_numbers<[1], [0], [0], [1], [0, 0, 1, 1], [], []>} : vector<1x16xf32>, vector<16x64xf32>, vector<1x64xf32> -> vector<1x64xf32>
    %814 = arith.addf %812, %813 : vector<1x64xf32>
    %815 = vector.extract_strided_slice %16 {offsets = [0, 7, 0], sizes = [1, 1, 64], strides = [1, 1, 1]} : vector<1x16x64xf32> to vector<1x1x64xf32>
    %816 = vector.shape_cast %815 : vector<1x1x64xf32> to vector<1x64xf32>
    %cst_148 = arith.constant dense<0.000000e+00> : vector<1x64xf32>
    %817 = tpu.matmul %793, %25, %cst_148 {dimension_numbers = #tpu.dot_dimension_numbers<[1], [0], [0], [1], [0, 0, 1, 1], [], []>} : vector<1x16xf32>, vector<16x64xf32>, vector<1x64xf32> -> vector<1x64xf32>
    %818 = arith.addf %816, %817 : vector<1x64xf32>
    %819 = vector.extract_strided_slice %814 {offsets = [0, 0], sizes = [1, 16], strides = [1, 1]} : vector<1x64xf32> to vector<1x16xf32>
    %820 = arith.negf %819 : vector<1x16xf32>
    %821 = math.exp %820 : vector<1x16xf32>
    %cst_149 = arith.constant 1.000000e+00 : f32
    %822 = vector.broadcast %cst_149 : f32 to vector<1x16xf32>
    %823 = arith.addf %822, %821 : vector<1x16xf32>
    %824 = arith.divf %822, %823 : vector<1x16xf32>
    %825 = vector.extract_strided_slice %814 {offsets = [0, 16], sizes = [1, 16], strides = [1, 1]} : vector<1x64xf32> to vector<1x16xf32>
    %826 = arith.negf %825 : vector<1x16xf32>
    %827 = math.exp %826 : vector<1x16xf32>
    %cst_150 = arith.constant 1.000000e+00 : f32
    %828 = vector.broadcast %cst_150 : f32 to vector<1x16xf32>
    %829 = arith.addf %828, %827 : vector<1x16xf32>
    %830 = arith.divf %828, %829 : vector<1x16xf32>
    %831 = vector.extract_strided_slice %814 {offsets = [0, 32], sizes = [1, 16], strides = [1, 1]} : vector<1x64xf32> to vector<1x16xf32>
    %832 = math.tanh %831 : vector<1x16xf32>
    %833 = vector.extract_strided_slice %814 {offsets = [0, 48], sizes = [1, 16], strides = [1, 1]} : vector<1x64xf32> to vector<1x16xf32>
    %834 = arith.negf %833 : vector<1x16xf32>
    %835 = math.exp %834 : vector<1x16xf32>
    %cst_151 = arith.constant 1.000000e+00 : f32
    %836 = vector.broadcast %cst_151 : f32 to vector<1x16xf32>
    %837 = arith.addf %836, %835 : vector<1x16xf32>
    %838 = arith.divf %836, %837 : vector<1x16xf32>
    %839 = arith.mulf %830, %786 : vector<1x16xf32>
    %840 = arith.mulf %824, %832 : vector<1x16xf32>
    %841 = arith.addf %839, %840 : vector<1x16xf32>
    %842 = math.tanh %841 : vector<1x16xf32>
    %843 = arith.mulf %838, %842 : vector<1x16xf32>
    %844 = vector.extract_strided_slice %818 {offsets = [0, 0], sizes = [1, 16], strides = [1, 1]} : vector<1x64xf32> to vector<1x16xf32>
    %845 = arith.negf %844 : vector<1x16xf32>
    %846 = math.exp %845 : vector<1x16xf32>
    %cst_152 = arith.constant 1.000000e+00 : f32
    %847 = vector.broadcast %cst_152 : f32 to vector<1x16xf32>
    %848 = arith.addf %847, %846 : vector<1x16xf32>
    %849 = arith.divf %847, %848 : vector<1x16xf32>
    %850 = vector.extract_strided_slice %818 {offsets = [0, 16], sizes = [1, 16], strides = [1, 1]} : vector<1x64xf32> to vector<1x16xf32>
    %851 = arith.negf %850 : vector<1x16xf32>
    %852 = math.exp %851 : vector<1x16xf32>
    %cst_153 = arith.constant 1.000000e+00 : f32
    %853 = vector.broadcast %cst_153 : f32 to vector<1x16xf32>
    %854 = arith.addf %853, %852 : vector<1x16xf32>
    %855 = arith.divf %853, %854 : vector<1x16xf32>
    %856 = vector.extract_strided_slice %818 {offsets = [0, 32], sizes = [1, 16], strides = [1, 1]} : vector<1x64xf32> to vector<1x16xf32>
    %857 = math.tanh %856 : vector<1x16xf32>
    %858 = vector.extract_strided_slice %818 {offsets = [0, 48], sizes = [1, 16], strides = [1, 1]} : vector<1x64xf32> to vector<1x16xf32>
    %859 = arith.negf %858 : vector<1x16xf32>
    %860 = math.exp %859 : vector<1x16xf32>
    %cst_154 = arith.constant 1.000000e+00 : f32
    %861 = vector.broadcast %cst_154 : f32 to vector<1x16xf32>
    %862 = arith.addf %861, %860 : vector<1x16xf32>
    %863 = arith.divf %861, %862 : vector<1x16xf32>
    %864 = arith.mulf %855, %800 : vector<1x16xf32>
    %865 = arith.mulf %849, %857 : vector<1x16xf32>
    %866 = arith.addf %864, %865 : vector<1x16xf32>
    %867 = math.tanh %866 : vector<1x16xf32>
    %868 = arith.mulf %863, %867 : vector<1x16xf32>
    %869 = vector.extract_strided_slice %23 {offsets = [0, 8], sizes = [1, 1], strides = [1, 1]} : vector<1x16xf32> to vector<1x1xf32>
    %870 = vector.extract_strided_slice %23 {offsets = [0, 7], sizes = [1, 1], strides = [1, 1]} : vector<1x16xf32> to vector<1x1xf32>
    %871 = vector.broadcast %869 : vector<1x1xf32> to vector<1x16xf32>
    %872 = arith.mulf %871, %843 : vector<1x16xf32>
    %cst_155 = arith.constant 1.000000e+00 : f32
    %873 = vector.broadcast %cst_155 : f32 to vector<1x1xf32>
    %874 = arith.subf %873, %869 : vector<1x1xf32>
    %875 = vector.broadcast %874 : vector<1x1xf32> to vector<1x16xf32>
    %876 = arith.mulf %875, %779 : vector<1x16xf32>
    %877 = arith.addf %872, %876 : vector<1x16xf32>
    %878 = vector.broadcast %869 : vector<1x1xf32> to vector<1x16xf32>
    %879 = arith.mulf %878, %841 : vector<1x16xf32>
    %cst_156 = arith.constant 1.000000e+00 : f32
    %880 = vector.broadcast %cst_156 : f32 to vector<1x1xf32>
    %881 = arith.subf %880, %869 : vector<1x1xf32>
    %882 = vector.broadcast %881 : vector<1x1xf32> to vector<1x16xf32>
    %883 = arith.mulf %882, %786 : vector<1x16xf32>
    %884 = arith.addf %879, %883 : vector<1x16xf32>
    %885 = vector.broadcast %870 : vector<1x1xf32> to vector<1x16xf32>
    %886 = arith.mulf %885, %868 : vector<1x16xf32>
    %cst_157 = arith.constant 1.000000e+00 : f32
    %887 = vector.broadcast %cst_157 : f32 to vector<1x1xf32>
    %888 = arith.subf %887, %870 : vector<1x1xf32>
    %889 = vector.broadcast %888 : vector<1x1xf32> to vector<1x16xf32>
    %890 = arith.mulf %889, %793 : vector<1x16xf32>
    %891 = arith.addf %886, %890 : vector<1x16xf32>
    %892 = vector.broadcast %870 : vector<1x1xf32> to vector<1x16xf32>
    %893 = arith.mulf %892, %866 : vector<1x16xf32>
    %cst_158 = arith.constant 1.000000e+00 : f32
    %894 = vector.broadcast %cst_158 : f32 to vector<1x1xf32>
    %895 = arith.subf %894, %870 : vector<1x1xf32>
    %896 = vector.broadcast %895 : vector<1x1xf32> to vector<1x16xf32>
    %897 = arith.mulf %896, %800 : vector<1x16xf32>
    %898 = arith.addf %893, %897 : vector<1x16xf32>
    %899 = vector.broadcast %869 : vector<1x1xf32> to vector<1x16xf32>
    %900 = arith.mulf %899, %877 : vector<1x16xf32>
    %c0_159 = arith.constant 0 : index
    %c8_160 = arith.constant 8 : index
    %c0_161 = arith.constant 0 : index
    %901 = vector.load %arg18[%c0_159, %c8_160, %c0_161] : memref<1x16x32xf32, #tpu.memory_space<vmem>>, vector<1x1x16xf32>
    %902 = vector.shape_cast %901 : vector<1x1x16xf32> to vector<1x16xf32>
    %903 = vector.shape_cast %900 : vector<1x16xf32> to vector<1x1x16xf32>
    tpu.vector_store %arg18[%c0_159, %c8_160, %c0_161], %903 {strides = array<i32>} : memref<1x16x32xf32, #tpu.memory_space<vmem>>, vector<1x1x16xf32>,
    %904 = vector.broadcast %870 : vector<1x1xf32> to vector<1x16xf32>
    %905 = arith.mulf %904, %891 : vector<1x16xf32>
    %c0_162 = arith.constant 0 : index
    %c7_163 = arith.constant 7 : index
    %c16_164 = arith.constant 16 : index
    %906 = vector.load %arg18[%c0_162, %c7_163, %c16_164] : memref<1x16x32xf32, #tpu.memory_space<vmem>>, vector<1x1x16xf32>
    %907 = vector.shape_cast %906 : vector<1x1x16xf32> to vector<1x16xf32>
    %908 = vector.shape_cast %905 : vector<1x16xf32> to vector<1x1x16xf32>
    tpu.vector_store %arg18[%c0_162, %c7_163, %c16_164], %908 {strides = array<i32>} : memref<1x16x32xf32, #tpu.memory_space<vmem>>, vector<1x1x16xf32>,
    %909 = vector.extract_strided_slice %9 {offsets = [0, 9, 0], sizes = [1, 1, 64], strides = [1, 1, 1]} : vector<1x16x64xf32> to vector<1x1x64xf32>
    %910 = vector.shape_cast %909 : vector<1x1x64xf32> to vector<1x64xf32>
    %cst_165 = arith.constant dense<0.000000e+00> : vector<1x64xf32>
    %911 = tpu.matmul %877, %24, %cst_165 {dimension_numbers = #tpu.dot_dimension_numbers<[1], [0], [0], [1], [0, 0, 1, 1], [], []>} : vector<1x16xf32>, vector<16x64xf32>, vector<1x64xf32> -> vector<1x64xf32>
    %912 = arith.addf %910, %911 : vector<1x64xf32>
    %913 = vector.extract_strided_slice %16 {offsets = [0, 6, 0], sizes = [1, 1, 64], strides = [1, 1, 1]} : vector<1x16x64xf32> to vector<1x1x64xf32>
    %914 = vector.shape_cast %913 : vector<1x1x64xf32> to vector<1x64xf32>
    %cst_166 = arith.constant dense<0.000000e+00> : vector<1x64xf32>
    %915 = tpu.matmul %891, %25, %cst_166 {dimension_numbers = #tpu.dot_dimension_numbers<[1], [0], [0], [1], [0, 0, 1, 1], [], []>} : vector<1x16xf32>, vector<16x64xf32>, vector<1x64xf32> -> vector<1x64xf32>
    %916 = arith.addf %914, %915 : vector<1x64xf32>
    %917 = vector.extract_strided_slice %912 {offsets = [0, 0], sizes = [1, 16], strides = [1, 1]} : vector<1x64xf32> to vector<1x16xf32>
    %918 = arith.negf %917 : vector<1x16xf32>
    %919 = math.exp %918 : vector<1x16xf32>
    %cst_167 = arith.constant 1.000000e+00 : f32
    %920 = vector.broadcast %cst_167 : f32 to vector<1x16xf32>
    %921 = arith.addf %920, %919 : vector<1x16xf32>
    %922 = arith.divf %920, %921 : vector<1x16xf32>
    %923 = vector.extract_strided_slice %912 {offsets = [0, 16], sizes = [1, 16], strides = [1, 1]} : vector<1x64xf32> to vector<1x16xf32>
    %924 = arith.negf %923 : vector<1x16xf32>
    %925 = math.exp %924 : vector<1x16xf32>
    %cst_168 = arith.constant 1.000000e+00 : f32
    %926 = vector.broadcast %cst_168 : f32 to vector<1x16xf32>
    %927 = arith.addf %926, %925 : vector<1x16xf32>
    %928 = arith.divf %926, %927 : vector<1x16xf32>
    %929 = vector.extract_strided_slice %912 {offsets = [0, 32], sizes = [1, 16], strides = [1, 1]} : vector<1x64xf32> to vector<1x16xf32>
    %930 = math.tanh %929 : vector<1x16xf32>
    %931 = vector.extract_strided_slice %912 {offsets = [0, 48], sizes = [1, 16], strides = [1, 1]} : vector<1x64xf32> to vector<1x16xf32>
    %932 = arith.negf %931 : vector<1x16xf32>
    %933 = math.exp %932 : vector<1x16xf32>
    %cst_169 = arith.constant 1.000000e+00 : f32
    %934 = vector.broadcast %cst_169 : f32 to vector<1x16xf32>
    %935 = arith.addf %934, %933 : vector<1x16xf32>
    %936 = arith.divf %934, %935 : vector<1x16xf32>
    %937 = arith.mulf %928, %884 : vector<1x16xf32>
    %938 = arith.mulf %922, %930 : vector<1x16xf32>
    %939 = arith.addf %937, %938 : vector<1x16xf32>
    %940 = math.tanh %939 : vector<1x16xf32>
    %941 = arith.mulf %936, %940 : vector<1x16xf32>
    %942 = vector.extract_strided_slice %916 {offsets = [0, 0], sizes = [1, 16], strides = [1, 1]} : vector<1x64xf32> to vector<1x16xf32>
    %943 = arith.negf %942 : vector<1x16xf32>
    %944 = math.exp %943 : vector<1x16xf32>
    %cst_170 = arith.constant 1.000000e+00 : f32
    %945 = vector.broadcast %cst_170 : f32 to vector<1x16xf32>
    %946 = arith.addf %945, %944 : vector<1x16xf32>
    %947 = arith.divf %945, %946 : vector<1x16xf32>
    %948 = vector.extract_strided_slice %916 {offsets = [0, 16], sizes = [1, 16], strides = [1, 1]} : vector<1x64xf32> to vector<1x16xf32>
    %949 = arith.negf %948 : vector<1x16xf32>
    %950 = math.exp %949 : vector<1x16xf32>
    %cst_171 = arith.constant 1.000000e+00 : f32
    %951 = vector.broadcast %cst_171 : f32 to vector<1x16xf32>
    %952 = arith.addf %951, %950 : vector<1x16xf32>
    %953 = arith.divf %951, %952 : vector<1x16xf32>
    %954 = vector.extract_strided_slice %916 {offsets = [0, 32], sizes = [1, 16], strides = [1, 1]} : vector<1x64xf32> to vector<1x16xf32>
    %955 = math.tanh %954 : vector<1x16xf32>
    %956 = vector.extract_strided_slice %916 {offsets = [0, 48], sizes = [1, 16], strides = [1, 1]} : vector<1x64xf32> to vector<1x16xf32>
    %957 = arith.negf %956 : vector<1x16xf32>
    %958 = math.exp %957 : vector<1x16xf32>
    %cst_172 = arith.constant 1.000000e+00 : f32
    %959 = vector.broadcast %cst_172 : f32 to vector<1x16xf32>
    %960 = arith.addf %959, %958 : vector<1x16xf32>
    %961 = arith.divf %959, %960 : vector<1x16xf32>
    %962 = arith.mulf %953, %898 : vector<1x16xf32>
    %963 = arith.mulf %947, %955 : vector<1x16xf32>
    %964 = arith.addf %962, %963 : vector<1x16xf32>
    %965 = math.tanh %964 : vector<1x16xf32>
    %966 = arith.mulf %961, %965 : vector<1x16xf32>
    %967 = vector.extract_strided_slice %23 {offsets = [0, 9], sizes = [1, 1], strides = [1, 1]} : vector<1x16xf32> to vector<1x1xf32>
    %968 = vector.extract_strided_slice %23 {offsets = [0, 6], sizes = [1, 1], strides = [1, 1]} : vector<1x16xf32> to vector<1x1xf32>
    %969 = vector.broadcast %967 : vector<1x1xf32> to vector<1x16xf32>
    %970 = arith.mulf %969, %941 : vector<1x16xf32>
    %cst_173 = arith.constant 1.000000e+00 : f32
    %971 = vector.broadcast %cst_173 : f32 to vector<1x1xf32>
    %972 = arith.subf %971, %967 : vector<1x1xf32>
    %973 = vector.broadcast %972 : vector<1x1xf32> to vector<1x16xf32>
    %974 = arith.mulf %973, %877 : vector<1x16xf32>
    %975 = arith.addf %970, %974 : vector<1x16xf32>
    %976 = vector.broadcast %967 : vector<1x1xf32> to vector<1x16xf32>
    %977 = arith.mulf %976, %939 : vector<1x16xf32>
    %cst_174 = arith.constant 1.000000e+00 : f32
    %978 = vector.broadcast %cst_174 : f32 to vector<1x1xf32>
    %979 = arith.subf %978, %967 : vector<1x1xf32>
    %980 = vector.broadcast %979 : vector<1x1xf32> to vector<1x16xf32>
    %981 = arith.mulf %980, %884 : vector<1x16xf32>
    %982 = arith.addf %977, %981 : vector<1x16xf32>
    %983 = vector.broadcast %968 : vector<1x1xf32> to vector<1x16xf32>
    %984 = arith.mulf %983, %966 : vector<1x16xf32>
    %cst_175 = arith.constant 1.000000e+00 : f32
    %985 = vector.broadcast %cst_175 : f32 to vector<1x1xf32>
    %986 = arith.subf %985, %968 : vector<1x1xf32>
    %987 = vector.broadcast %986 : vector<1x1xf32> to vector<1x16xf32>
    %988 = arith.mulf %987, %891 : vector<1x16xf32>
    %989 = arith.addf %984, %988 : vector<1x16xf32>
    %990 = vector.broadcast %968 : vector<1x1xf32> to vector<1x16xf32>
    %991 = arith.mulf %990, %964 : vector<1x16xf32>
    %cst_176 = arith.constant 1.000000e+00 : f32
    %992 = vector.broadcast %cst_176 : f32 to vector<1x1xf32>
    %993 = arith.subf %992, %968 : vector<1x1xf32>
    %994 = vector.broadcast %993 : vector<1x1xf32> to vector<1x16xf32>
    %995 = arith.mulf %994, %898 : vector<1x16xf32>
    %996 = arith.addf %991, %995 : vector<1x16xf32>
    %997 = vector.broadcast %967 : vector<1x1xf32> to vector<1x16xf32>
    %998 = arith.mulf %997, %975 : vector<1x16xf32>
    %c0_177 = arith.constant 0 : index
    %c9_178 = arith.constant 9 : index
    %c0_179 = arith.constant 0 : index
    %999 = vector.load %arg18[%c0_177, %c9_178, %c0_179] : memref<1x16x32xf32, #tpu.memory_space<vmem>>, vector<1x1x16xf32>
    %1000 = vector.shape_cast %999 : vector<1x1x16xf32> to vector<1x16xf32>
    %1001 = vector.shape_cast %998 : vector<1x16xf32> to vector<1x1x16xf32>
    tpu.vector_store %arg18[%c0_177, %c9_178, %c0_179], %1001 {strides = array<i32>} : memref<1x16x32xf32, #tpu.memory_space<vmem>>, vector<1x1x16xf32>,
    %1002 = vector.broadcast %968 : vector<1x1xf32> to vector<1x16xf32>
    %1003 = arith.mulf %1002, %989 : vector<1x16xf32>
    %c0_180 = arith.constant 0 : index
    %c6_181 = arith.constant 6 : index
    %c16_182 = arith.constant 16 : index
    %1004 = vector.load %arg18[%c0_180, %c6_181, %c16_182] : memref<1x16x32xf32, #tpu.memory_space<vmem>>, vector<1x1x16xf32>
    %1005 = vector.shape_cast %1004 : vector<1x1x16xf32> to vector<1x16xf32>
    %1006 = vector.shape_cast %1003 : vector<1x16xf32> to vector<1x1x16xf32>
    tpu.vector_store %arg18[%c0_180, %c6_181, %c16_182], %1006 {strides = array<i32>} : memref<1x16x32xf32, #tpu.memory_space<vmem>>, vector<1x1x16xf32>,
    %1007 = vector.extract_strided_slice %9 {offsets = [0, 10, 0], sizes = [1, 1, 64], strides = [1, 1, 1]} : vector<1x16x64xf32> to vector<1x1x64xf32>
    %1008 = vector.shape_cast %1007 : vector<1x1x64xf32> to vector<1x64xf32>
    %cst_183 = arith.constant dense<0.000000e+00> : vector<1x64xf32>
    %1009 = tpu.matmul %975, %24, %cst_183 {dimension_numbers = #tpu.dot_dimension_numbers<[1], [0], [0], [1], [0, 0, 1, 1], [], []>} : vector<1x16xf32>, vector<16x64xf32>, vector<1x64xf32> -> vector<1x64xf32>
    %1010 = arith.addf %1008, %1009 : vector<1x64xf32>
    %1011 = vector.extract_strided_slice %16 {offsets = [0, 5, 0], sizes = [1, 1, 64], strides = [1, 1, 1]} : vector<1x16x64xf32> to vector<1x1x64xf32>
    %1012 = vector.shape_cast %1011 : vector<1x1x64xf32> to vector<1x64xf32>
    %cst_184 = arith.constant dense<0.000000e+00> : vector<1x64xf32>
    %1013 = tpu.matmul %989, %25, %cst_184 {dimension_numbers = #tpu.dot_dimension_numbers<[1], [0], [0], [1], [0, 0, 1, 1], [], []>} : vector<1x16xf32>, vector<16x64xf32>, vector<1x64xf32> -> vector<1x64xf32>
    %1014 = arith.addf %1012, %1013 : vector<1x64xf32>
    %1015 = vector.extract_strided_slice %1010 {offsets = [0, 0], sizes = [1, 16], strides = [1, 1]} : vector<1x64xf32> to vector<1x16xf32>
    %1016 = arith.negf %1015 : vector<1x16xf32>
    %1017 = math.exp %1016 : vector<1x16xf32>
    %cst_185 = arith.constant 1.000000e+00 : f32
    %1018 = vector.broadcast %cst_185 : f32 to vector<1x16xf32>
    %1019 = arith.addf %1018, %1017 : vector<1x16xf32>
    %1020 = arith.divf %1018, %1019 : vector<1x16xf32>
    %1021 = vector.extract_strided_slice %1010 {offsets = [0, 16], sizes = [1, 16], strides = [1, 1]} : vector<1x64xf32> to vector<1x16xf32>
    %1022 = arith.negf %1021 : vector<1x16xf32>
    %1023 = math.exp %1022 : vector<1x16xf32>
    %cst_186 = arith.constant 1.000000e+00 : f32
    %1024 = vector.broadcast %cst_186 : f32 to vector<1x16xf32>
    %1025 = arith.addf %1024, %1023 : vector<1x16xf32>
    %1026 = arith.divf %1024, %1025 : vector<1x16xf32>
    %1027 = vector.extract_strided_slice %1010 {offsets = [0, 32], sizes = [1, 16], strides = [1, 1]} : vector<1x64xf32> to vector<1x16xf32>
    %1028 = math.tanh %1027 : vector<1x16xf32>
    %1029 = vector.extract_strided_slice %1010 {offsets = [0, 48], sizes = [1, 16], strides = [1, 1]} : vector<1x64xf32> to vector<1x16xf32>
    %1030 = arith.negf %1029 : vector<1x16xf32>
    %1031 = math.exp %1030 : vector<1x16xf32>
    %cst_187 = arith.constant 1.000000e+00 : f32
    %1032 = vector.broadcast %cst_187 : f32 to vector<1x16xf32>
    %1033 = arith.addf %1032, %1031 : vector<1x16xf32>
    %1034 = arith.divf %1032, %1033 : vector<1x16xf32>
    %1035 = arith.mulf %1026, %982 : vector<1x16xf32>
    %1036 = arith.mulf %1020, %1028 : vector<1x16xf32>
    %1037 = arith.addf %1035, %1036 : vector<1x16xf32>
    %1038 = math.tanh %1037 : vector<1x16xf32>
    %1039 = arith.mulf %1034, %1038 : vector<1x16xf32>
    %1040 = vector.extract_strided_slice %1014 {offsets = [0, 0], sizes = [1, 16], strides = [1, 1]} : vector<1x64xf32> to vector<1x16xf32>
    %1041 = arith.negf %1040 : vector<1x16xf32>
    %1042 = math.exp %1041 : vector<1x16xf32>
    %cst_188 = arith.constant 1.000000e+00 : f32
    %1043 = vector.broadcast %cst_188 : f32 to vector<1x16xf32>
    %1044 = arith.addf %1043, %1042 : vector<1x16xf32>
    %1045 = arith.divf %1043, %1044 : vector<1x16xf32>
    %1046 = vector.extract_strided_slice %1014 {offsets = [0, 16], sizes = [1, 16], strides = [1, 1]} : vector<1x64xf32> to vector<1x16xf32>
    %1047 = arith.negf %1046 : vector<1x16xf32>
    %1048 = math.exp %1047 : vector<1x16xf32>
    %cst_189 = arith.constant 1.000000e+00 : f32
    %1049 = vector.broadcast %cst_189 : f32 to vector<1x16xf32>
    %1050 = arith.addf %1049, %1048 : vector<1x16xf32>
    %1051 = arith.divf %1049, %1050 : vector<1x16xf32>
    %1052 = vector.extract_strided_slice %1014 {offsets = [0, 32], sizes = [1, 16], strides = [1, 1]} : vector<1x64xf32> to vector<1x16xf32>
    %1053 = math.tanh %1052 : vector<1x16xf32>
    %1054 = vector.extract_strided_slice %1014 {offsets = [0, 48], sizes = [1, 16], strides = [1, 1]} : vector<1x64xf32> to vector<1x16xf32>
    %1055 = arith.negf %1054 : vector<1x16xf32>
    %1056 = math.exp %1055 : vector<1x16xf32>
    %cst_190 = arith.constant 1.000000e+00 : f32
    %1057 = vector.broadcast %cst_190 : f32 to vector<1x16xf32>
    %1058 = arith.addf %1057, %1056 : vector<1x16xf32>
    %1059 = arith.divf %1057, %1058 : vector<1x16xf32>
    %1060 = arith.mulf %1051, %996 : vector<1x16xf32>
    %1061 = arith.mulf %1045, %1053 : vector<1x16xf32>
    %1062 = arith.addf %1060, %1061 : vector<1x16xf32>
    %1063 = math.tanh %1062 : vector<1x16xf32>
    %1064 = arith.mulf %1059, %1063 : vector<1x16xf32>
    %1065 = vector.extract_strided_slice %23 {offsets = [0, 10], sizes = [1, 1], strides = [1, 1]} : vector<1x16xf32> to vector<1x1xf32>
    %1066 = vector.extract_strided_slice %23 {offsets = [0, 5], sizes = [1, 1], strides = [1, 1]} : vector<1x16xf32> to vector<1x1xf32>
    %1067 = vector.broadcast %1065 : vector<1x1xf32> to vector<1x16xf32>
    %1068 = arith.mulf %1067, %1039 : vector<1x16xf32>
    %cst_191 = arith.constant 1.000000e+00 : f32
    %1069 = vector.broadcast %cst_191 : f32 to vector<1x1xf32>
    %1070 = arith.subf %1069, %1065 : vector<1x1xf32>
    %1071 = vector.broadcast %1070 : vector<1x1xf32> to vector<1x16xf32>
    %1072 = arith.mulf %1071, %975 : vector<1x16xf32>
    %1073 = arith.addf %1068, %1072 : vector<1x16xf32>
    %1074 = vector.broadcast %1065 : vector<1x1xf32> to vector<1x16xf32>
    %1075 = arith.mulf %1074, %1037 : vector<1x16xf32>
    %cst_192 = arith.constant 1.000000e+00 : f32
    %1076 = vector.broadcast %cst_192 : f32 to vector<1x1xf32>
    %1077 = arith.subf %1076, %1065 : vector<1x1xf32>
    %1078 = vector.broadcast %1077 : vector<1x1xf32> to vector<1x16xf32>
    %1079 = arith.mulf %1078, %982 : vector<1x16xf32>
    %1080 = arith.addf %1075, %1079 : vector<1x16xf32>
    %1081 = vector.broadcast %1066 : vector<1x1xf32> to vector<1x16xf32>
    %1082 = arith.mulf %1081, %1064 : vector<1x16xf32>
    %cst_193 = arith.constant 1.000000e+00 : f32
    %1083 = vector.broadcast %cst_193 : f32 to vector<1x1xf32>
    %1084 = arith.subf %1083, %1066 : vector<1x1xf32>
    %1085 = vector.broadcast %1084 : vector<1x1xf32> to vector<1x16xf32>
    %1086 = arith.mulf %1085, %989 : vector<1x16xf32>
    %1087 = arith.addf %1082, %1086 : vector<1x16xf32>
    %1088 = vector.broadcast %1066 : vector<1x1xf32> to vector<1x16xf32>
    %1089 = arith.mulf %1088, %1062 : vector<1x16xf32>
    %cst_194 = arith.constant 1.000000e+00 : f32
    %1090 = vector.broadcast %cst_194 : f32 to vector<1x1xf32>
    %1091 = arith.subf %1090, %1066 : vector<1x1xf32>
    %1092 = vector.broadcast %1091 : vector<1x1xf32> to vector<1x16xf32>
    %1093 = arith.mulf %1092, %996 : vector<1x16xf32>
    %1094 = arith.addf %1089, %1093 : vector<1x16xf32>
    %1095 = vector.broadcast %1065 : vector<1x1xf32> to vector<1x16xf32>
    %1096 = arith.mulf %1095, %1073 : vector<1x16xf32>
    %c0_195 = arith.constant 0 : index
    %c10_196 = arith.constant 10 : index
    %c0_197 = arith.constant 0 : index
    %1097 = vector.load %arg18[%c0_195, %c10_196, %c0_197] : memref<1x16x32xf32, #tpu.memory_space<vmem>>, vector<1x1x16xf32>
    %1098 = vector.shape_cast %1097 : vector<1x1x16xf32> to vector<1x16xf32>
    %1099 = vector.shape_cast %1096 : vector<1x16xf32> to vector<1x1x16xf32>
    tpu.vector_store %arg18[%c0_195, %c10_196, %c0_197], %1099 {strides = array<i32>} : memref<1x16x32xf32, #tpu.memory_space<vmem>>, vector<1x1x16xf32>,
    %1100 = vector.broadcast %1066 : vector<1x1xf32> to vector<1x16xf32>
    %1101 = arith.mulf %1100, %1087 : vector<1x16xf32>
    %c0_198 = arith.constant 0 : index
    %c5_199 = arith.constant 5 : index
    %c16_200 = arith.constant 16 : index
    %1102 = vector.load %arg18[%c0_198, %c5_199, %c16_200] : memref<1x16x32xf32, #tpu.memory_space<vmem>>, vector<1x1x16xf32>
    %1103 = vector.shape_cast %1102 : vector<1x1x16xf32> to vector<1x16xf32>
    %1104 = vector.shape_cast %1101 : vector<1x16xf32> to vector<1x1x16xf32>
    tpu.vector_store %arg18[%c0_198, %c5_199, %c16_200], %1104 {strides = array<i32>} : memref<1x16x32xf32, #tpu.memory_space<vmem>>, vector<1x1x16xf32>,
    %1105 = vector.extract_strided_slice %9 {offsets = [0, 11, 0], sizes = [1, 1, 64], strides = [1, 1, 1]} : vector<1x16x64xf32> to vector<1x1x64xf32>
    %1106 = vector.shape_cast %1105 : vector<1x1x64xf32> to vector<1x64xf32>
    %cst_201 = arith.constant dense<0.000000e+00> : vector<1x64xf32>
    %1107 = tpu.matmul %1073, %24, %cst_201 {dimension_numbers = #tpu.dot_dimension_numbers<[1], [0], [0], [1], [0, 0, 1, 1], [], []>} : vector<1x16xf32>, vector<16x64xf32>, vector<1x64xf32> -> vector<1x64xf32>
    %1108 = arith.addf %1106, %1107 : vector<1x64xf32>
    %1109 = vector.extract_strided_slice %16 {offsets = [0, 4, 0], sizes = [1, 1, 64], strides = [1, 1, 1]} : vector<1x16x64xf32> to vector<1x1x64xf32>
    %1110 = vector.shape_cast %1109 : vector<1x1x64xf32> to vector<1x64xf32>
    %cst_202 = arith.constant dense<0.000000e+00> : vector<1x64xf32>
    %1111 = tpu.matmul %1087, %25, %cst_202 {dimension_numbers = #tpu.dot_dimension_numbers<[1], [0], [0], [1], [0, 0, 1, 1], [], []>} : vector<1x16xf32>, vector<16x64xf32>, vector<1x64xf32> -> vector<1x64xf32>
    %1112 = arith.addf %1110, %1111 : vector<1x64xf32>
    %1113 = vector.extract_strided_slice %1108 {offsets = [0, 0], sizes = [1, 16], strides = [1, 1]} : vector<1x64xf32> to vector<1x16xf32>
    %1114 = arith.negf %1113 : vector<1x16xf32>
    %1115 = math.exp %1114 : vector<1x16xf32>
    %cst_203 = arith.constant 1.000000e+00 : f32
    %1116 = vector.broadcast %cst_203 : f32 to vector<1x16xf32>
    %1117 = arith.addf %1116, %1115 : vector<1x16xf32>
    %1118 = arith.divf %1116, %1117 : vector<1x16xf32>
    %1119 = vector.extract_strided_slice %1108 {offsets = [0, 16], sizes = [1, 16], strides = [1, 1]} : vector<1x64xf32> to vector<1x16xf32>
    %1120 = arith.negf %1119 : vector<1x16xf32>
    %1121 = math.exp %1120 : vector<1x16xf32>
    %cst_204 = arith.constant 1.000000e+00 : f32
    %1122 = vector.broadcast %cst_204 : f32 to vector<1x16xf32>
    %1123 = arith.addf %1122, %1121 : vector<1x16xf32>
    %1124 = arith.divf %1122, %1123 : vector<1x16xf32>
    %1125 = vector.extract_strided_slice %1108 {offsets = [0, 32], sizes = [1, 16], strides = [1, 1]} : vector<1x64xf32> to vector<1x16xf32>
    %1126 = math.tanh %1125 : vector<1x16xf32>
    %1127 = vector.extract_strided_slice %1108 {offsets = [0, 48], sizes = [1, 16], strides = [1, 1]} : vector<1x64xf32> to vector<1x16xf32>
    %1128 = arith.negf %1127 : vector<1x16xf32>
    %1129 = math.exp %1128 : vector<1x16xf32>
    %cst_205 = arith.constant 1.000000e+00 : f32
    %1130 = vector.broadcast %cst_205 : f32 to vector<1x16xf32>
    %1131 = arith.addf %1130, %1129 : vector<1x16xf32>
    %1132 = arith.divf %1130, %1131 : vector<1x16xf32>
    %1133 = arith.mulf %1124, %1080 : vector<1x16xf32>
    %1134 = arith.mulf %1118, %1126 : vector<1x16xf32>
    %1135 = arith.addf %1133, %1134 : vector<1x16xf32>
    %1136 = math.tanh %1135 : vector<1x16xf32>
    %1137 = arith.mulf %1132, %1136 : vector<1x16xf32>
    %1138 = vector.extract_strided_slice %1112 {offsets = [0, 0], sizes = [1, 16], strides = [1, 1]} : vector<1x64xf32> to vector<1x16xf32>
    %1139 = arith.negf %1138 : vector<1x16xf32>
    %1140 = math.exp %1139 : vector<1x16xf32>
    %cst_206 = arith.constant 1.000000e+00 : f32
    %1141 = vector.broadcast %cst_206 : f32 to vector<1x16xf32>
    %1142 = arith.addf %1141, %1140 : vector<1x16xf32>
    %1143 = arith.divf %1141, %1142 : vector<1x16xf32>
    %1144 = vector.extract_strided_slice %1112 {offsets = [0, 16], sizes = [1, 16], strides = [1, 1]} : vector<1x64xf32> to vector<1x16xf32>
    %1145 = arith.negf %1144 : vector<1x16xf32>
    %1146 = math.exp %1145 : vector<1x16xf32>
    %cst_207 = arith.constant 1.000000e+00 : f32
    %1147 = vector.broadcast %cst_207 : f32 to vector<1x16xf32>
    %1148 = arith.addf %1147, %1146 : vector<1x16xf32>
    %1149 = arith.divf %1147, %1148 : vector<1x16xf32>
    %1150 = vector.extract_strided_slice %1112 {offsets = [0, 32], sizes = [1, 16], strides = [1, 1]} : vector<1x64xf32> to vector<1x16xf32>
    %1151 = math.tanh %1150 : vector<1x16xf32>
    %1152 = vector.extract_strided_slice %1112 {offsets = [0, 48], sizes = [1, 16], strides = [1, 1]} : vector<1x64xf32> to vector<1x16xf32>
    %1153 = arith.negf %1152 : vector<1x16xf32>
    %1154 = math.exp %1153 : vector<1x16xf32>
    %cst_208 = arith.constant 1.000000e+00 : f32
    %1155 = vector.broadcast %cst_208 : f32 to vector<1x16xf32>
    %1156 = arith.addf %1155, %1154 : vector<1x16xf32>
    %1157 = arith.divf %1155, %1156 : vector<1x16xf32>
    %1158 = arith.mulf %1149, %1094 : vector<1x16xf32>
    %1159 = arith.mulf %1143, %1151 : vector<1x16xf32>
    %1160 = arith.addf %1158, %1159 : vector<1x16xf32>
    %1161 = math.tanh %1160 : vector<1x16xf32>
    %1162 = arith.mulf %1157, %1161 : vector<1x16xf32>
    %1163 = vector.extract_strided_slice %23 {offsets = [0, 11], sizes = [1, 1], strides = [1, 1]} : vector<1x16xf32> to vector<1x1xf32>
    %1164 = vector.extract_strided_slice %23 {offsets = [0, 4], sizes = [1, 1], strides = [1, 1]} : vector<1x16xf32> to vector<1x1xf32>
    %1165 = vector.broadcast %1163 : vector<1x1xf32> to vector<1x16xf32>
    %1166 = arith.mulf %1165, %1137 : vector<1x16xf32>
    %cst_209 = arith.constant 1.000000e+00 : f32
    %1167 = vector.broadcast %cst_209 : f32 to vector<1x1xf32>
    %1168 = arith.subf %1167, %1163 : vector<1x1xf32>
    %1169 = vector.broadcast %1168 : vector<1x1xf32> to vector<1x16xf32>
    %1170 = arith.mulf %1169, %1073 : vector<1x16xf32>
    %1171 = arith.addf %1166, %1170 : vector<1x16xf32>
    %1172 = vector.broadcast %1163 : vector<1x1xf32> to vector<1x16xf32>
    %1173 = arith.mulf %1172, %1135 : vector<1x16xf32>
    %cst_210 = arith.constant 1.000000e+00 : f32
    %1174 = vector.broadcast %cst_210 : f32 to vector<1x1xf32>
    %1175 = arith.subf %1174, %1163 : vector<1x1xf32>
    %1176 = vector.broadcast %1175 : vector<1x1xf32> to vector<1x16xf32>
    %1177 = arith.mulf %1176, %1080 : vector<1x16xf32>
    %1178 = arith.addf %1173, %1177 : vector<1x16xf32>
    %1179 = vector.broadcast %1164 : vector<1x1xf32> to vector<1x16xf32>
    %1180 = arith.mulf %1179, %1162 : vector<1x16xf32>
    %cst_211 = arith.constant 1.000000e+00 : f32
    %1181 = vector.broadcast %cst_211 : f32 to vector<1x1xf32>
    %1182 = arith.subf %1181, %1164 : vector<1x1xf32>
    %1183 = vector.broadcast %1182 : vector<1x1xf32> to vector<1x16xf32>
    %1184 = arith.mulf %1183, %1087 : vector<1x16xf32>
    %1185 = arith.addf %1180, %1184 : vector<1x16xf32>
    %1186 = vector.broadcast %1164 : vector<1x1xf32> to vector<1x16xf32>
    %1187 = arith.mulf %1186, %1160 : vector<1x16xf32>
    %cst_212 = arith.constant 1.000000e+00 : f32
    %1188 = vector.broadcast %cst_212 : f32 to vector<1x1xf32>
    %1189 = arith.subf %1188, %1164 : vector<1x1xf32>
    %1190 = vector.broadcast %1189 : vector<1x1xf32> to vector<1x16xf32>
    %1191 = arith.mulf %1190, %1094 : vector<1x16xf32>
    %1192 = arith.addf %1187, %1191 : vector<1x16xf32>
    %1193 = vector.broadcast %1163 : vector<1x1xf32> to vector<1x16xf32>
    %1194 = arith.mulf %1193, %1171 : vector<1x16xf32>
    %c0_213 = arith.constant 0 : index
    %c11_214 = arith.constant 11 : index
    %c0_215 = arith.constant 0 : index
    %1195 = vector.load %arg18[%c0_213, %c11_214, %c0_215] : memref<1x16x32xf32, #tpu.memory_space<vmem>>, vector<1x1x16xf32>
    %1196 = vector.shape_cast %1195 : vector<1x1x16xf32> to vector<1x16xf32>
    %1197 = vector.shape_cast %1194 : vector<1x16xf32> to vector<1x1x16xf32>
    tpu.vector_store %arg18[%c0_213, %c11_214, %c0_215], %1197 {strides = array<i32>} : memref<1x16x32xf32, #tpu.memory_space<vmem>>, vector<1x1x16xf32>,
    %1198 = vector.broadcast %1164 : vector<1x1xf32> to vector<1x16xf32>
    %1199 = arith.mulf %1198, %1185 : vector<1x16xf32>
    %c0_216 = arith.constant 0 : index
    %c4_217 = arith.constant 4 : index
    %c16_218 = arith.constant 16 : index
    %1200 = vector.load %arg18[%c0_216, %c4_217, %c16_218] : memref<1x16x32xf32, #tpu.memory_space<vmem>>, vector<1x1x16xf32>
    %1201 = vector.shape_cast %1200 : vector<1x1x16xf32> to vector<1x16xf32>
    %1202 = vector.shape_cast %1199 : vector<1x16xf32> to vector<1x1x16xf32>
    tpu.vector_store %arg18[%c0_216, %c4_217, %c16_218], %1202 {strides = array<i32>} : memref<1x16x32xf32, #tpu.memory_space<vmem>>, vector<1x1x16xf32>,
    %1203 = vector.extract_strided_slice %9 {offsets = [0, 12, 0], sizes = [1, 1, 64], strides = [1, 1, 1]} : vector<1x16x64xf32> to vector<1x1x64xf32>
    %1204 = vector.shape_cast %1203 : vector<1x1x64xf32> to vector<1x64xf32>
    %cst_219 = arith.constant dense<0.000000e+00> : vector<1x64xf32>
    %1205 = tpu.matmul %1171, %24, %cst_219 {dimension_numbers = #tpu.dot_dimension_numbers<[1], [0], [0], [1], [0, 0, 1, 1], [], []>} : vector<1x16xf32>, vector<16x64xf32>, vector<1x64xf32> -> vector<1x64xf32>
    %1206 = arith.addf %1204, %1205 : vector<1x64xf32>
    %1207 = vector.extract_strided_slice %16 {offsets = [0, 3, 0], sizes = [1, 1, 64], strides = [1, 1, 1]} : vector<1x16x64xf32> to vector<1x1x64xf32>
    %1208 = vector.shape_cast %1207 : vector<1x1x64xf32> to vector<1x64xf32>
    %cst_220 = arith.constant dense<0.000000e+00> : vector<1x64xf32>
    %1209 = tpu.matmul %1185, %25, %cst_220 {dimension_numbers = #tpu.dot_dimension_numbers<[1], [0], [0], [1], [0, 0, 1, 1], [], []>} : vector<1x16xf32>, vector<16x64xf32>, vector<1x64xf32> -> vector<1x64xf32>
    %1210 = arith.addf %1208, %1209 : vector<1x64xf32>
    %1211 = vector.extract_strided_slice %1206 {offsets = [0, 0], sizes = [1, 16], strides = [1, 1]} : vector<1x64xf32> to vector<1x16xf32>
    %1212 = arith.negf %1211 : vector<1x16xf32>
    %1213 = math.exp %1212 : vector<1x16xf32>
    %cst_221 = arith.constant 1.000000e+00 : f32
    %1214 = vector.broadcast %cst_221 : f32 to vector<1x16xf32>
    %1215 = arith.addf %1214, %1213 : vector<1x16xf32>
    %1216 = arith.divf %1214, %1215 : vector<1x16xf32>
    %1217 = vector.extract_strided_slice %1206 {offsets = [0, 16], sizes = [1, 16], strides = [1, 1]} : vector<1x64xf32> to vector<1x16xf32>
    %1218 = arith.negf %1217 : vector<1x16xf32>
    %1219 = math.exp %1218 : vector<1x16xf32>
    %cst_222 = arith.constant 1.000000e+00 : f32
    %1220 = vector.broadcast %cst_222 : f32 to vector<1x16xf32>
    %1221 = arith.addf %1220, %1219 : vector<1x16xf32>
    %1222 = arith.divf %1220, %1221 : vector<1x16xf32>
    %1223 = vector.extract_strided_slice %1206 {offsets = [0, 32], sizes = [1, 16], strides = [1, 1]} : vector<1x64xf32> to vector<1x16xf32>
    %1224 = math.tanh %1223 : vector<1x16xf32>
    %1225 = vector.extract_strided_slice %1206 {offsets = [0, 48], sizes = [1, 16], strides = [1, 1]} : vector<1x64xf32> to vector<1x16xf32>
    %1226 = arith.negf %1225 : vector<1x16xf32>
    %1227 = math.exp %1226 : vector<1x16xf32>
    %cst_223 = arith.constant 1.000000e+00 : f32
    %1228 = vector.broadcast %cst_223 : f32 to vector<1x16xf32>
    %1229 = arith.addf %1228, %1227 : vector<1x16xf32>
    %1230 = arith.divf %1228, %1229 : vector<1x16xf32>
    %1231 = arith.mulf %1222, %1178 : vector<1x16xf32>
    %1232 = arith.mulf %1216, %1224 : vector<1x16xf32>
    %1233 = arith.addf %1231, %1232 : vector<1x16xf32>
    %1234 = math.tanh %1233 : vector<1x16xf32>
    %1235 = arith.mulf %1230, %1234 : vector<1x16xf32>
    %1236 = vector.extract_strided_slice %1210 {offsets = [0, 0], sizes = [1, 16], strides = [1, 1]} : vector<1x64xf32> to vector<1x16xf32>
    %1237 = arith.negf %1236 : vector<1x16xf32>
    %1238 = math.exp %1237 : vector<1x16xf32>
    %cst_224 = arith.constant 1.000000e+00 : f32
    %1239 = vector.broadcast %cst_224 : f32 to vector<1x16xf32>
    %1240 = arith.addf %1239, %1238 : vector<1x16xf32>
    %1241 = arith.divf %1239, %1240 : vector<1x16xf32>
    %1242 = vector.extract_strided_slice %1210 {offsets = [0, 16], sizes = [1, 16], strides = [1, 1]} : vector<1x64xf32> to vector<1x16xf32>
    %1243 = arith.negf %1242 : vector<1x16xf32>
    %1244 = math.exp %1243 : vector<1x16xf32>
    %cst_225 = arith.constant 1.000000e+00 : f32
    %1245 = vector.broadcast %cst_225 : f32 to vector<1x16xf32>
    %1246 = arith.addf %1245, %1244 : vector<1x16xf32>
    %1247 = arith.divf %1245, %1246 : vector<1x16xf32>
    %1248 = vector.extract_strided_slice %1210 {offsets = [0, 32], sizes = [1, 16], strides = [1, 1]} : vector<1x64xf32> to vector<1x16xf32>
    %1249 = math.tanh %1248 : vector<1x16xf32>
    %1250 = vector.extract_strided_slice %1210 {offsets = [0, 48], sizes = [1, 16], strides = [1, 1]} : vector<1x64xf32> to vector<1x16xf32>
    %1251 = arith.negf %1250 : vector<1x16xf32>
    %1252 = math.exp %1251 : vector<1x16xf32>
    %cst_226 = arith.constant 1.000000e+00 : f32
    %1253 = vector.broadcast %cst_226 : f32 to vector<1x16xf32>
    %1254 = arith.addf %1253, %1252 : vector<1x16xf32>
    %1255 = arith.divf %1253, %1254 : vector<1x16xf32>
    %1256 = arith.mulf %1247, %1192 : vector<1x16xf32>
    %1257 = arith.mulf %1241, %1249 : vector<1x16xf32>
    %1258 = arith.addf %1256, %1257 : vector<1x16xf32>
    %1259 = math.tanh %1258 : vector<1x16xf32>
    %1260 = arith.mulf %1255, %1259 : vector<1x16xf32>
    %1261 = vector.extract_strided_slice %23 {offsets = [0, 12], sizes = [1, 1], strides = [1, 1]} : vector<1x16xf32> to vector<1x1xf32>
    %1262 = vector.extract_strided_slice %23 {offsets = [0, 3], sizes = [1, 1], strides = [1, 1]} : vector<1x16xf32> to vector<1x1xf32>
    %1263 = vector.broadcast %1261 : vector<1x1xf32> to vector<1x16xf32>
    %1264 = arith.mulf %1263, %1235 : vector<1x16xf32>
    %cst_227 = arith.constant 1.000000e+00 : f32
    %1265 = vector.broadcast %cst_227 : f32 to vector<1x1xf32>
    %1266 = arith.subf %1265, %1261 : vector<1x1xf32>
    %1267 = vector.broadcast %1266 : vector<1x1xf32> to vector<1x16xf32>
    %1268 = arith.mulf %1267, %1171 : vector<1x16xf32>
    %1269 = arith.addf %1264, %1268 : vector<1x16xf32>
    %1270 = vector.broadcast %1261 : vector<1x1xf32> to vector<1x16xf32>
    %1271 = arith.mulf %1270, %1233 : vector<1x16xf32>
    %cst_228 = arith.constant 1.000000e+00 : f32
    %1272 = vector.broadcast %cst_228 : f32 to vector<1x1xf32>
    %1273 = arith.subf %1272, %1261 : vector<1x1xf32>
    %1274 = vector.broadcast %1273 : vector<1x1xf32> to vector<1x16xf32>
    %1275 = arith.mulf %1274, %1178 : vector<1x16xf32>
    %1276 = arith.addf %1271, %1275 : vector<1x16xf32>
    %1277 = vector.broadcast %1262 : vector<1x1xf32> to vector<1x16xf32>
    %1278 = arith.mulf %1277, %1260 : vector<1x16xf32>
    %cst_229 = arith.constant 1.000000e+00 : f32
    %1279 = vector.broadcast %cst_229 : f32 to vector<1x1xf32>
    %1280 = arith.subf %1279, %1262 : vector<1x1xf32>
    %1281 = vector.broadcast %1280 : vector<1x1xf32> to vector<1x16xf32>
    %1282 = arith.mulf %1281, %1185 : vector<1x16xf32>
    %1283 = arith.addf %1278, %1282 : vector<1x16xf32>
    %1284 = vector.broadcast %1262 : vector<1x1xf32> to vector<1x16xf32>
    %1285 = arith.mulf %1284, %1258 : vector<1x16xf32>
    %cst_230 = arith.constant 1.000000e+00 : f32
    %1286 = vector.broadcast %cst_230 : f32 to vector<1x1xf32>
    %1287 = arith.subf %1286, %1262 : vector<1x1xf32>
    %1288 = vector.broadcast %1287 : vector<1x1xf32> to vector<1x16xf32>
    %1289 = arith.mulf %1288, %1192 : vector<1x16xf32>
    %1290 = arith.addf %1285, %1289 : vector<1x16xf32>
    %1291 = vector.broadcast %1261 : vector<1x1xf32> to vector<1x16xf32>
    %1292 = arith.mulf %1291, %1269 : vector<1x16xf32>
    %c0_231 = arith.constant 0 : index
    %c12_232 = arith.constant 12 : index
    %c0_233 = arith.constant 0 : index
    %1293 = vector.load %arg18[%c0_231, %c12_232, %c0_233] : memref<1x16x32xf32, #tpu.memory_space<vmem>>, vector<1x1x16xf32>
    %1294 = vector.shape_cast %1293 : vector<1x1x16xf32> to vector<1x16xf32>
    %1295 = vector.shape_cast %1292 : vector<1x16xf32> to vector<1x1x16xf32>
    tpu.vector_store %arg18[%c0_231, %c12_232, %c0_233], %1295 {strides = array<i32>} : memref<1x16x32xf32, #tpu.memory_space<vmem>>, vector<1x1x16xf32>,
    %1296 = vector.broadcast %1262 : vector<1x1xf32> to vector<1x16xf32>
    %1297 = arith.mulf %1296, %1283 : vector<1x16xf32>
    %c0_234 = arith.constant 0 : index
    %c3_235 = arith.constant 3 : index
    %c16_236 = arith.constant 16 : index
    %1298 = vector.load %arg18[%c0_234, %c3_235, %c16_236] : memref<1x16x32xf32, #tpu.memory_space<vmem>>, vector<1x1x16xf32>
    %1299 = vector.shape_cast %1298 : vector<1x1x16xf32> to vector<1x16xf32>
    %1300 = vector.shape_cast %1297 : vector<1x16xf32> to vector<1x1x16xf32>
    tpu.vector_store %arg18[%c0_234, %c3_235, %c16_236], %1300 {strides = array<i32>} : memref<1x16x32xf32, #tpu.memory_space<vmem>>, vector<1x1x16xf32>,
    %1301 = vector.extract_strided_slice %9 {offsets = [0, 13, 0], sizes = [1, 1, 64], strides = [1, 1, 1]} : vector<1x16x64xf32> to vector<1x1x64xf32>
    %1302 = vector.shape_cast %1301 : vector<1x1x64xf32> to vector<1x64xf32>
    %cst_237 = arith.constant dense<0.000000e+00> : vector<1x64xf32>
    %1303 = tpu.matmul %1269, %24, %cst_237 {dimension_numbers = #tpu.dot_dimension_numbers<[1], [0], [0], [1], [0, 0, 1, 1], [], []>} : vector<1x16xf32>, vector<16x64xf32>, vector<1x64xf32> -> vector<1x64xf32>
    %1304 = arith.addf %1302, %1303 : vector<1x64xf32>
    %1305 = vector.extract_strided_slice %16 {offsets = [0, 2, 0], sizes = [1, 1, 64], strides = [1, 1, 1]} : vector<1x16x64xf32> to vector<1x1x64xf32>
    %1306 = vector.shape_cast %1305 : vector<1x1x64xf32> to vector<1x64xf32>
    %cst_238 = arith.constant dense<0.000000e+00> : vector<1x64xf32>
    %1307 = tpu.matmul %1283, %25, %cst_238 {dimension_numbers = #tpu.dot_dimension_numbers<[1], [0], [0], [1], [0, 0, 1, 1], [], []>} : vector<1x16xf32>, vector<16x64xf32>, vector<1x64xf32> -> vector<1x64xf32>
    %1308 = arith.addf %1306, %1307 : vector<1x64xf32>
    %1309 = vector.extract_strided_slice %1304 {offsets = [0, 0], sizes = [1, 16], strides = [1, 1]} : vector<1x64xf32> to vector<1x16xf32>
    %1310 = arith.negf %1309 : vector<1x16xf32>
    %1311 = math.exp %1310 : vector<1x16xf32>
    %cst_239 = arith.constant 1.000000e+00 : f32
    %1312 = vector.broadcast %cst_239 : f32 to vector<1x16xf32>
    %1313 = arith.addf %1312, %1311 : vector<1x16xf32>
    %1314 = arith.divf %1312, %1313 : vector<1x16xf32>
    %1315 = vector.extract_strided_slice %1304 {offsets = [0, 16], sizes = [1, 16], strides = [1, 1]} : vector<1x64xf32> to vector<1x16xf32>
    %1316 = arith.negf %1315 : vector<1x16xf32>
    %1317 = math.exp %1316 : vector<1x16xf32>
    %cst_240 = arith.constant 1.000000e+00 : f32
    %1318 = vector.broadcast %cst_240 : f32 to vector<1x16xf32>
    %1319 = arith.addf %1318, %1317 : vector<1x16xf32>
    %1320 = arith.divf %1318, %1319 : vector<1x16xf32>
    %1321 = vector.extract_strided_slice %1304 {offsets = [0, 32], sizes = [1, 16], strides = [1, 1]} : vector<1x64xf32> to vector<1x16xf32>
    %1322 = math.tanh %1321 : vector<1x16xf32>
    %1323 = vector.extract_strided_slice %1304 {offsets = [0, 48], sizes = [1, 16], strides = [1, 1]} : vector<1x64xf32> to vector<1x16xf32>
    %1324 = arith.negf %1323 : vector<1x16xf32>
    %1325 = math.exp %1324 : vector<1x16xf32>
    %cst_241 = arith.constant 1.000000e+00 : f32
    %1326 = vector.broadcast %cst_241 : f32 to vector<1x16xf32>
    %1327 = arith.addf %1326, %1325 : vector<1x16xf32>
    %1328 = arith.divf %1326, %1327 : vector<1x16xf32>
    %1329 = arith.mulf %1320, %1276 : vector<1x16xf32>
    %1330 = arith.mulf %1314, %1322 : vector<1x16xf32>
    %1331 = arith.addf %1329, %1330 : vector<1x16xf32>
    %1332 = math.tanh %1331 : vector<1x16xf32>
    %1333 = arith.mulf %1328, %1332 : vector<1x16xf32>
    %1334 = vector.extract_strided_slice %1308 {offsets = [0, 0], sizes = [1, 16], strides = [1, 1]} : vector<1x64xf32> to vector<1x16xf32>
    %1335 = arith.negf %1334 : vector<1x16xf32>
    %1336 = math.exp %1335 : vector<1x16xf32>
    %cst_242 = arith.constant 1.000000e+00 : f32
    %1337 = vector.broadcast %cst_242 : f32 to vector<1x16xf32>
    %1338 = arith.addf %1337, %1336 : vector<1x16xf32>
    %1339 = arith.divf %1337, %1338 : vector<1x16xf32>
    %1340 = vector.extract_strided_slice %1308 {offsets = [0, 16], sizes = [1, 16], strides = [1, 1]} : vector<1x64xf32> to vector<1x16xf32>
    %1341 = arith.negf %1340 : vector<1x16xf32>
    %1342 = math.exp %1341 : vector<1x16xf32>
    %cst_243 = arith.constant 1.000000e+00 : f32
    %1343 = vector.broadcast %cst_243 : f32 to vector<1x16xf32>
    %1344 = arith.addf %1343, %1342 : vector<1x16xf32>
    %1345 = arith.divf %1343, %1344 : vector<1x16xf32>
    %1346 = vector.extract_strided_slice %1308 {offsets = [0, 32], sizes = [1, 16], strides = [1, 1]} : vector<1x64xf32> to vector<1x16xf32>
    %1347 = math.tanh %1346 : vector<1x16xf32>
    %1348 = vector.extract_strided_slice %1308 {offsets = [0, 48], sizes = [1, 16], strides = [1, 1]} : vector<1x64xf32> to vector<1x16xf32>
    %1349 = arith.negf %1348 : vector<1x16xf32>
    %1350 = math.exp %1349 : vector<1x16xf32>
    %cst_244 = arith.constant 1.000000e+00 : f32
    %1351 = vector.broadcast %cst_244 : f32 to vector<1x16xf32>
    %1352 = arith.addf %1351, %1350 : vector<1x16xf32>
    %1353 = arith.divf %1351, %1352 : vector<1x16xf32>
    %1354 = arith.mulf %1345, %1290 : vector<1x16xf32>
    %1355 = arith.mulf %1339, %1347 : vector<1x16xf32>
    %1356 = arith.addf %1354, %1355 : vector<1x16xf32>
    %1357 = math.tanh %1356 : vector<1x16xf32>
    %1358 = arith.mulf %1353, %1357 : vector<1x16xf32>
    %1359 = vector.extract_strided_slice %23 {offsets = [0, 13], sizes = [1, 1], strides = [1, 1]} : vector<1x16xf32> to vector<1x1xf32>
    %1360 = vector.extract_strided_slice %23 {offsets = [0, 2], sizes = [1, 1], strides = [1, 1]} : vector<1x16xf32> to vector<1x1xf32>
    %1361 = vector.broadcast %1359 : vector<1x1xf32> to vector<1x16xf32>
    %1362 = arith.mulf %1361, %1333 : vector<1x16xf32>
    %cst_245 = arith.constant 1.000000e+00 : f32
    %1363 = vector.broadcast %cst_245 : f32 to vector<1x1xf32>
    %1364 = arith.subf %1363, %1359 : vector<1x1xf32>
    %1365 = vector.broadcast %1364 : vector<1x1xf32> to vector<1x16xf32>
    %1366 = arith.mulf %1365, %1269 : vector<1x16xf32>
    %1367 = arith.addf %1362, %1366 : vector<1x16xf32>
    %1368 = vector.broadcast %1359 : vector<1x1xf32> to vector<1x16xf32>
    %1369 = arith.mulf %1368, %1331 : vector<1x16xf32>
    %cst_246 = arith.constant 1.000000e+00 : f32
    %1370 = vector.broadcast %cst_246 : f32 to vector<1x1xf32>
    %1371 = arith.subf %1370, %1359 : vector<1x1xf32>
    %1372 = vector.broadcast %1371 : vector<1x1xf32> to vector<1x16xf32>
    %1373 = arith.mulf %1372, %1276 : vector<1x16xf32>
    %1374 = arith.addf %1369, %1373 : vector<1x16xf32>
    %1375 = vector.broadcast %1360 : vector<1x1xf32> to vector<1x16xf32>
    %1376 = arith.mulf %1375, %1358 : vector<1x16xf32>
    %cst_247 = arith.constant 1.000000e+00 : f32
    %1377 = vector.broadcast %cst_247 : f32 to vector<1x1xf32>
    %1378 = arith.subf %1377, %1360 : vector<1x1xf32>
    %1379 = vector.broadcast %1378 : vector<1x1xf32> to vector<1x16xf32>
    %1380 = arith.mulf %1379, %1283 : vector<1x16xf32>
    %1381 = arith.addf %1376, %1380 : vector<1x16xf32>
    %1382 = vector.broadcast %1360 : vector<1x1xf32> to vector<1x16xf32>
    %1383 = arith.mulf %1382, %1356 : vector<1x16xf32>
    %cst_248 = arith.constant 1.000000e+00 : f32
    %1384 = vector.broadcast %cst_248 : f32 to vector<1x1xf32>
    %1385 = arith.subf %1384, %1360 : vector<1x1xf32>
    %1386 = vector.broadcast %1385 : vector<1x1xf32> to vector<1x16xf32>
    %1387 = arith.mulf %1386, %1290 : vector<1x16xf32>
    %1388 = arith.addf %1383, %1387 : vector<1x16xf32>
    %1389 = vector.broadcast %1359 : vector<1x1xf32> to vector<1x16xf32>
    %1390 = arith.mulf %1389, %1367 : vector<1x16xf32>
    %c0_249 = arith.constant 0 : index
    %c13_250 = arith.constant 13 : index
    %c0_251 = arith.constant 0 : index
    %1391 = vector.load %arg18[%c0_249, %c13_250, %c0_251] : memref<1x16x32xf32, #tpu.memory_space<vmem>>, vector<1x1x16xf32>
    %1392 = vector.shape_cast %1391 : vector<1x1x16xf32> to vector<1x16xf32>
    %1393 = vector.shape_cast %1390 : vector<1x16xf32> to vector<1x1x16xf32>
    tpu.vector_store %arg18[%c0_249, %c13_250, %c0_251], %1393 {strides = array<i32>} : memref<1x16x32xf32, #tpu.memory_space<vmem>>, vector<1x1x16xf32>,
    %1394 = vector.broadcast %1360 : vector<1x1xf32> to vector<1x16xf32>
    %1395 = arith.mulf %1394, %1381 : vector<1x16xf32>
    %c0_252 = arith.constant 0 : index
    %c2_253 = arith.constant 2 : index
    %c16_254 = arith.constant 16 : index
    %1396 = vector.load %arg18[%c0_252, %c2_253, %c16_254] : memref<1x16x32xf32, #tpu.memory_space<vmem>>, vector<1x1x16xf32>
    %1397 = vector.shape_cast %1396 : vector<1x1x16xf32> to vector<1x16xf32>
    %1398 = vector.shape_cast %1395 : vector<1x16xf32> to vector<1x1x16xf32>
    tpu.vector_store %arg18[%c0_252, %c2_253, %c16_254], %1398 {strides = array<i32>} : memref<1x16x32xf32, #tpu.memory_space<vmem>>, vector<1x1x16xf32>,
    %1399 = vector.extract_strided_slice %9 {offsets = [0, 14, 0], sizes = [1, 1, 64], strides = [1, 1, 1]} : vector<1x16x64xf32> to vector<1x1x64xf32>
    %1400 = vector.shape_cast %1399 : vector<1x1x64xf32> to vector<1x64xf32>
    %cst_255 = arith.constant dense<0.000000e+00> : vector<1x64xf32>
    %1401 = tpu.matmul %1367, %24, %cst_255 {dimension_numbers = #tpu.dot_dimension_numbers<[1], [0], [0], [1], [0, 0, 1, 1], [], []>} : vector<1x16xf32>, vector<16x64xf32>, vector<1x64xf32> -> vector<1x64xf32>
    %1402 = arith.addf %1400, %1401 : vector<1x64xf32>
    %1403 = vector.extract_strided_slice %16 {offsets = [0, 1, 0], sizes = [1, 1, 64], strides = [1, 1, 1]} : vector<1x16x64xf32> to vector<1x1x64xf32>
    %1404 = vector.shape_cast %1403 : vector<1x1x64xf32> to vector<1x64xf32>
    %cst_256 = arith.constant dense<0.000000e+00> : vector<1x64xf32>
    %1405 = tpu.matmul %1381, %25, %cst_256 {dimension_numbers = #tpu.dot_dimension_numbers<[1], [0], [0], [1], [0, 0, 1, 1], [], []>} : vector<1x16xf32>, vector<16x64xf32>, vector<1x64xf32> -> vector<1x64xf32>
    %1406 = arith.addf %1404, %1405 : vector<1x64xf32>
    %1407 = vector.extract_strided_slice %1402 {offsets = [0, 0], sizes = [1, 16], strides = [1, 1]} : vector<1x64xf32> to vector<1x16xf32>
    %1408 = arith.negf %1407 : vector<1x16xf32>
    %1409 = math.exp %1408 : vector<1x16xf32>
    %cst_257 = arith.constant 1.000000e+00 : f32
    %1410 = vector.broadcast %cst_257 : f32 to vector<1x16xf32>
    %1411 = arith.addf %1410, %1409 : vector<1x16xf32>
    %1412 = arith.divf %1410, %1411 : vector<1x16xf32>
    %1413 = vector.extract_strided_slice %1402 {offsets = [0, 16], sizes = [1, 16], strides = [1, 1]} : vector<1x64xf32> to vector<1x16xf32>
    %1414 = arith.negf %1413 : vector<1x16xf32>
    %1415 = math.exp %1414 : vector<1x16xf32>
    %cst_258 = arith.constant 1.000000e+00 : f32
    %1416 = vector.broadcast %cst_258 : f32 to vector<1x16xf32>
    %1417 = arith.addf %1416, %1415 : vector<1x16xf32>
    %1418 = arith.divf %1416, %1417 : vector<1x16xf32>
    %1419 = vector.extract_strided_slice %1402 {offsets = [0, 32], sizes = [1, 16], strides = [1, 1]} : vector<1x64xf32> to vector<1x16xf32>
    %1420 = math.tanh %1419 : vector<1x16xf32>
    %1421 = vector.extract_strided_slice %1402 {offsets = [0, 48], sizes = [1, 16], strides = [1, 1]} : vector<1x64xf32> to vector<1x16xf32>
    %1422 = arith.negf %1421 : vector<1x16xf32>
    %1423 = math.exp %1422 : vector<1x16xf32>
    %cst_259 = arith.constant 1.000000e+00 : f32
    %1424 = vector.broadcast %cst_259 : f32 to vector<1x16xf32>
    %1425 = arith.addf %1424, %1423 : vector<1x16xf32>
    %1426 = arith.divf %1424, %1425 : vector<1x16xf32>
    %1427 = arith.mulf %1418, %1374 : vector<1x16xf32>
    %1428 = arith.mulf %1412, %1420 : vector<1x16xf32>
    %1429 = arith.addf %1427, %1428 : vector<1x16xf32>
    %1430 = math.tanh %1429 : vector<1x16xf32>
    %1431 = arith.mulf %1426, %1430 : vector<1x16xf32>
    %1432 = vector.extract_strided_slice %1406 {offsets = [0, 0], sizes = [1, 16], strides = [1, 1]} : vector<1x64xf32> to vector<1x16xf32>
    %1433 = arith.negf %1432 : vector<1x16xf32>
    %1434 = math.exp %1433 : vector<1x16xf32>
    %cst_260 = arith.constant 1.000000e+00 : f32
    %1435 = vector.broadcast %cst_260 : f32 to vector<1x16xf32>
    %1436 = arith.addf %1435, %1434 : vector<1x16xf32>
    %1437 = arith.divf %1435, %1436 : vector<1x16xf32>
    %1438 = vector.extract_strided_slice %1406 {offsets = [0, 16], sizes = [1, 16], strides = [1, 1]} : vector<1x64xf32> to vector<1x16xf32>
    %1439 = arith.negf %1438 : vector<1x16xf32>
    %1440 = math.exp %1439 : vector<1x16xf32>
    %cst_261 = arith.constant 1.000000e+00 : f32
    %1441 = vector.broadcast %cst_261 : f32 to vector<1x16xf32>
    %1442 = arith.addf %1441, %1440 : vector<1x16xf32>
    %1443 = arith.divf %1441, %1442 : vector<1x16xf32>
    %1444 = vector.extract_strided_slice %1406 {offsets = [0, 32], sizes = [1, 16], strides = [1, 1]} : vector<1x64xf32> to vector<1x16xf32>
    %1445 = math.tanh %1444 : vector<1x16xf32>
    %1446 = vector.extract_strided_slice %1406 {offsets = [0, 48], sizes = [1, 16], strides = [1, 1]} : vector<1x64xf32> to vector<1x16xf32>
    %1447 = arith.negf %1446 : vector<1x16xf32>
    %1448 = math.exp %1447 : vector<1x16xf32>
    %cst_262 = arith.constant 1.000000e+00 : f32
    %1449 = vector.broadcast %cst_262 : f32 to vector<1x16xf32>
    %1450 = arith.addf %1449, %1448 : vector<1x16xf32>
    %1451 = arith.divf %1449, %1450 : vector<1x16xf32>
    %1452 = arith.mulf %1443, %1388 : vector<1x16xf32>
    %1453 = arith.mulf %1437, %1445 : vector<1x16xf32>
    %1454 = arith.addf %1452, %1453 : vector<1x16xf32>
    %1455 = math.tanh %1454 : vector<1x16xf32>
    %1456 = arith.mulf %1451, %1455 : vector<1x16xf32>
    %1457 = vector.extract_strided_slice %23 {offsets = [0, 14], sizes = [1, 1], strides = [1, 1]} : vector<1x16xf32> to vector<1x1xf32>
    %1458 = vector.extract_strided_slice %23 {offsets = [0, 1], sizes = [1, 1], strides = [1, 1]} : vector<1x16xf32> to vector<1x1xf32>
    %1459 = vector.broadcast %1457 : vector<1x1xf32> to vector<1x16xf32>
    %1460 = arith.mulf %1459, %1431 : vector<1x16xf32>
    %cst_263 = arith.constant 1.000000e+00 : f32
    %1461 = vector.broadcast %cst_263 : f32 to vector<1x1xf32>
    %1462 = arith.subf %1461, %1457 : vector<1x1xf32>
    %1463 = vector.broadcast %1462 : vector<1x1xf32> to vector<1x16xf32>
    %1464 = arith.mulf %1463, %1367 : vector<1x16xf32>
    %1465 = arith.addf %1460, %1464 : vector<1x16xf32>
    %1466 = vector.broadcast %1457 : vector<1x1xf32> to vector<1x16xf32>
    %1467 = arith.mulf %1466, %1429 : vector<1x16xf32>
    %cst_264 = arith.constant 1.000000e+00 : f32
    %1468 = vector.broadcast %cst_264 : f32 to vector<1x1xf32>
    %1469 = arith.subf %1468, %1457 : vector<1x1xf32>
    %1470 = vector.broadcast %1469 : vector<1x1xf32> to vector<1x16xf32>
    %1471 = arith.mulf %1470, %1374 : vector<1x16xf32>
    %1472 = arith.addf %1467, %1471 : vector<1x16xf32>
    %1473 = vector.broadcast %1458 : vector<1x1xf32> to vector<1x16xf32>
    %1474 = arith.mulf %1473, %1456 : vector<1x16xf32>
    %cst_265 = arith.constant 1.000000e+00 : f32
    %1475 = vector.broadcast %cst_265 : f32 to vector<1x1xf32>
    %1476 = arith.subf %1475, %1458 : vector<1x1xf32>
    %1477 = vector.broadcast %1476 : vector<1x1xf32> to vector<1x16xf32>
    %1478 = arith.mulf %1477, %1381 : vector<1x16xf32>
    %1479 = arith.addf %1474, %1478 : vector<1x16xf32>
    %1480 = vector.broadcast %1458 : vector<1x1xf32> to vector<1x16xf32>
    %1481 = arith.mulf %1480, %1454 : vector<1x16xf32>
    %cst_266 = arith.constant 1.000000e+00 : f32
    %1482 = vector.broadcast %cst_266 : f32 to vector<1x1xf32>
    %1483 = arith.subf %1482, %1458 : vector<1x1xf32>
    %1484 = vector.broadcast %1483 : vector<1x1xf32> to vector<1x16xf32>
    %1485 = arith.mulf %1484, %1388 : vector<1x16xf32>
    %1486 = arith.addf %1481, %1485 : vector<1x16xf32>
    %1487 = vector.broadcast %1457 : vector<1x1xf32> to vector<1x16xf32>
    %1488 = arith.mulf %1487, %1465 : vector<1x16xf32>
    %c0_267 = arith.constant 0 : index
    %c14_268 = arith.constant 14 : index
    %c0_269 = arith.constant 0 : index
    %1489 = vector.load %arg18[%c0_267, %c14_268, %c0_269] : memref<1x16x32xf32, #tpu.memory_space<vmem>>, vector<1x1x16xf32>
    %1490 = vector.shape_cast %1489 : vector<1x1x16xf32> to vector<1x16xf32>
    %1491 = vector.shape_cast %1488 : vector<1x16xf32> to vector<1x1x16xf32>
    tpu.vector_store %arg18[%c0_267, %c14_268, %c0_269], %1491 {strides = array<i32>} : memref<1x16x32xf32, #tpu.memory_space<vmem>>, vector<1x1x16xf32>,
    %1492 = vector.broadcast %1458 : vector<1x1xf32> to vector<1x16xf32>
    %1493 = arith.mulf %1492, %1479 : vector<1x16xf32>
    %c0_270 = arith.constant 0 : index
    %c1_271 = arith.constant 1 : index
    %c16_272 = arith.constant 16 : index
    %1494 = vector.load %arg18[%c0_270, %c1_271, %c16_272] : memref<1x16x32xf32, #tpu.memory_space<vmem>>, vector<1x1x16xf32>
    %1495 = vector.shape_cast %1494 : vector<1x1x16xf32> to vector<1x16xf32>
    %1496 = vector.shape_cast %1493 : vector<1x16xf32> to vector<1x1x16xf32>
    tpu.vector_store %arg18[%c0_270, %c1_271, %c16_272], %1496 {strides = array<i32>} : memref<1x16x32xf32, #tpu.memory_space<vmem>>, vector<1x1x16xf32>,
    %1497 = vector.extract_strided_slice %9 {offsets = [0, 15, 0], sizes = [1, 1, 64], strides = [1, 1, 1]} : vector<1x16x64xf32> to vector<1x1x64xf32>
    %1498 = vector.shape_cast %1497 : vector<1x1x64xf32> to vector<1x64xf32>
    %cst_273 = arith.constant dense<0.000000e+00> : vector<1x64xf32>
    %1499 = tpu.matmul %1465, %24, %cst_273 {dimension_numbers = #tpu.dot_dimension_numbers<[1], [0], [0], [1], [0, 0, 1, 1], [], []>} : vector<1x16xf32>, vector<16x64xf32>, vector<1x64xf32> -> vector<1x64xf32>
    %1500 = arith.addf %1498, %1499 : vector<1x64xf32>
    %1501 = vector.extract_strided_slice %16 {offsets = [0, 0, 0], sizes = [1, 1, 64], strides = [1, 1, 1]} : vector<1x16x64xf32> to vector<1x1x64xf32>
    %1502 = vector.shape_cast %1501 : vector<1x1x64xf32> to vector<1x64xf32>
    %cst_274 = arith.constant dense<0.000000e+00> : vector<1x64xf32>
    %1503 = tpu.matmul %1479, %25, %cst_274 {dimension_numbers = #tpu.dot_dimension_numbers<[1], [0], [0], [1], [0, 0, 1, 1], [], []>} : vector<1x16xf32>, vector<16x64xf32>, vector<1x64xf32> -> vector<1x64xf32>
    %1504 = arith.addf %1502, %1503 : vector<1x64xf32>
    %1505 = vector.extract_strided_slice %1500 {offsets = [0, 0], sizes = [1, 16], strides = [1, 1]} : vector<1x64xf32> to vector<1x16xf32>
    %1506 = arith.negf %1505 : vector<1x16xf32>
    %1507 = math.exp %1506 : vector<1x16xf32>
    %cst_275 = arith.constant 1.000000e+00 : f32
    %1508 = vector.broadcast %cst_275 : f32 to vector<1x16xf32>
    %1509 = arith.addf %1508, %1507 : vector<1x16xf32>
    %1510 = arith.divf %1508, %1509 : vector<1x16xf32>
    %1511 = vector.extract_strided_slice %1500 {offsets = [0, 16], sizes = [1, 16], strides = [1, 1]} : vector<1x64xf32> to vector<1x16xf32>
    %1512 = arith.negf %1511 : vector<1x16xf32>
    %1513 = math.exp %1512 : vector<1x16xf32>
    %cst_276 = arith.constant 1.000000e+00 : f32
    %1514 = vector.broadcast %cst_276 : f32 to vector<1x16xf32>
    %1515 = arith.addf %1514, %1513 : vector<1x16xf32>
    %1516 = arith.divf %1514, %1515 : vector<1x16xf32>
    %1517 = vector.extract_strided_slice %1500 {offsets = [0, 32], sizes = [1, 16], strides = [1, 1]} : vector<1x64xf32> to vector<1x16xf32>
    %1518 = math.tanh %1517 : vector<1x16xf32>
    %1519 = vector.extract_strided_slice %1500 {offsets = [0, 48], sizes = [1, 16], strides = [1, 1]} : vector<1x64xf32> to vector<1x16xf32>
    %1520 = arith.negf %1519 : vector<1x16xf32>
    %1521 = math.exp %1520 : vector<1x16xf32>
    %cst_277 = arith.constant 1.000000e+00 : f32
    %1522 = vector.broadcast %cst_277 : f32 to vector<1x16xf32>
    %1523 = arith.addf %1522, %1521 : vector<1x16xf32>
    %1524 = arith.divf %1522, %1523 : vector<1x16xf32>
    %1525 = arith.mulf %1516, %1472 : vector<1x16xf32>
    %1526 = arith.mulf %1510, %1518 : vector<1x16xf32>
    %1527 = arith.addf %1525, %1526 : vector<1x16xf32>
    %1528 = math.tanh %1527 : vector<1x16xf32>
    %1529 = arith.mulf %1524, %1528 : vector<1x16xf32>
    %1530 = vector.extract_strided_slice %1504 {offsets = [0, 0], sizes = [1, 16], strides = [1, 1]} : vector<1x64xf32> to vector<1x16xf32>
    %1531 = arith.negf %1530 : vector<1x16xf32>
    %1532 = math.exp %1531 : vector<1x16xf32>
    %cst_278 = arith.constant 1.000000e+00 : f32
    %1533 = vector.broadcast %cst_278 : f32 to vector<1x16xf32>
    %1534 = arith.addf %1533, %1532 : vector<1x16xf32>
    %1535 = arith.divf %1533, %1534 : vector<1x16xf32>
    %1536 = vector.extract_strided_slice %1504 {offsets = [0, 16], sizes = [1, 16], strides = [1, 1]} : vector<1x64xf32> to vector<1x16xf32>
    %1537 = arith.negf %1536 : vector<1x16xf32>
    %1538 = math.exp %1537 : vector<1x16xf32>
    %cst_279 = arith.constant 1.000000e+00 : f32
    %1539 = vector.broadcast %cst_279 : f32 to vector<1x16xf32>
    %1540 = arith.addf %1539, %1538 : vector<1x16xf32>
    %1541 = arith.divf %1539, %1540 : vector<1x16xf32>
    %1542 = vector.extract_strided_slice %1504 {offsets = [0, 32], sizes = [1, 16], strides = [1, 1]} : vector<1x64xf32> to vector<1x16xf32>
    %1543 = math.tanh %1542 : vector<1x16xf32>
    %1544 = vector.extract_strided_slice %1504 {offsets = [0, 48], sizes = [1, 16], strides = [1, 1]} : vector<1x64xf32> to vector<1x16xf32>
    %1545 = arith.negf %1544 : vector<1x16xf32>
    %1546 = math.exp %1545 : vector<1x16xf32>
    %cst_280 = arith.constant 1.000000e+00 : f32
    %1547 = vector.broadcast %cst_280 : f32 to vector<1x16xf32>
    %1548 = arith.addf %1547, %1546 : vector<1x16xf32>
    %1549 = arith.divf %1547, %1548 : vector<1x16xf32>
    %1550 = arith.mulf %1541, %1486 : vector<1x16xf32>
    %1551 = arith.mulf %1535, %1543 : vector<1x16xf32>
    %1552 = arith.addf %1550, %1551 : vector<1x16xf32>
    %1553 = math.tanh %1552 : vector<1x16xf32>
    %1554 = arith.mulf %1549, %1553 : vector<1x16xf32>
    %1555 = vector.extract_strided_slice %23 {offsets = [0, 15], sizes = [1, 1], strides = [1, 1]} : vector<1x16xf32> to vector<1x1xf32>
    %1556 = vector.extract_strided_slice %23 {offsets = [0, 0], sizes = [1, 1], strides = [1, 1]} : vector<1x16xf32> to vector<1x1xf32>
    %1557 = vector.broadcast %1555 : vector<1x1xf32> to vector<1x16xf32>
    %1558 = arith.mulf %1557, %1529 : vector<1x16xf32>
    %cst_281 = arith.constant 1.000000e+00 : f32
    %1559 = vector.broadcast %cst_281 : f32 to vector<1x1xf32>
    %1560 = arith.subf %1559, %1555 : vector<1x1xf32>
    %1561 = vector.broadcast %1560 : vector<1x1xf32> to vector<1x16xf32>
    %1562 = arith.mulf %1561, %1465 : vector<1x16xf32>
    %1563 = arith.addf %1558, %1562 : vector<1x16xf32>
    %1564 = vector.broadcast %1556 : vector<1x1xf32> to vector<1x16xf32>
    %1565 = arith.mulf %1564, %1554 : vector<1x16xf32>
    %cst_282 = arith.constant 1.000000e+00 : f32
    %1566 = vector.broadcast %cst_282 : f32 to vector<1x1xf32>
    %1567 = arith.subf %1566, %1556 : vector<1x1xf32>
    %1568 = vector.broadcast %1567 : vector<1x1xf32> to vector<1x16xf32>
    %1569 = arith.mulf %1568, %1479 : vector<1x16xf32>
    %1570 = arith.addf %1565, %1569 : vector<1x16xf32>
    %1571 = vector.broadcast %1555 : vector<1x1xf32> to vector<1x16xf32>
    %1572 = arith.mulf %1571, %1563 : vector<1x16xf32>
    %c0_283 = arith.constant 0 : index
    %c15_284 = arith.constant 15 : index
    %c0_285 = arith.constant 0 : index
    %1573 = vector.load %arg18[%c0_283, %c15_284, %c0_285] : memref<1x16x32xf32, #tpu.memory_space<vmem>>, vector<1x1x16xf32>
    %1574 = vector.shape_cast %1573 : vector<1x1x16xf32> to vector<1x16xf32>
    %1575 = vector.shape_cast %1572 : vector<1x16xf32> to vector<1x1x16xf32>
    tpu.vector_store %arg18[%c0_283, %c15_284, %c0_285], %1575 {strides = array<i32>} : memref<1x16x32xf32, #tpu.memory_space<vmem>>, vector<1x1x16xf32>,
    %1576 = vector.broadcast %1556 : vector<1x1xf32> to vector<1x16xf32>
    %1577 = arith.mulf %1576, %1570 : vector<1x16xf32>
    %c0_286 = arith.constant 0 : index
    %c0_287 = arith.constant 0 : index
    %c16_288 = arith.constant 16 : index
    %1578 = vector.load %arg18[%c0_286, %c0_287, %c16_288] : memref<1x16x32xf32, #tpu.memory_space<vmem>>, vector<1x1x16xf32>
    %1579 = vector.shape_cast %1578 : vector<1x1x16xf32> to vector<1x16xf32>
    %1580 = vector.shape_cast %1577 : vector<1x16xf32> to vector<1x1x16xf32>
    tpu.vector_store %arg18[%c0_286, %c0_287, %c16_288], %1580 {strides = array<i32>} : memref<1x16x32xf32, #tpu.memory_space<vmem>>, vector<1x1x16xf32>,
    %c0_289 = arith.constant 0 : index
    %c0_290 = arith.constant 0 : index
    %c0_291 = arith.constant 0 : index
    %1581 = vector.load %arg18[%c0_289, %c0_290, %c0_291] : memref<1x16x32xf32, #tpu.memory_space<vmem>>, vector<1x16x32xf32>
    %1582 = arith.truncf %1581 : vector<1x16x32xf32> to vector<1x16x32xbf16>
    %c0_292 = arith.constant 0 : index
    %c0_293 = arith.constant 0 : index
    %c0_294 = arith.constant 0 : index
    %1583 = vector.load %arg3[%c0_292, %c0_293, %c0_294] : memref<1x16x1xf32, #tpu.memory_space<vmem>>, vector<1x16x1xf32>
    %1584 = vector.broadcast %1583 : vector<1x16x1xf32> to vector<1x16x32xf32>
    %1585 = arith.mulf %1584, %1581 : vector<1x16x32xf32>
    %1586 = vector.shape_cast %1585 : vector<1x16x32xf32> to vector<16x32xf32>
    %1587 = arith.truncf %1586 : vector<16x32xf32> to vector<16x32xbf16>
    %c0_295 = arith.constant 0 : index
    %c0_296 = arith.constant 0 : index
    %c0_297 = arith.constant 0 : index
    %1588 = vector.load %arg11[%c0_295, %c0_296, %c0_297] : memref<3x32x32xf32, #tpu.memory_space<vmem>>, vector<3x32x32xf32>
    %1589 = arith.truncf %1588 : vector<3x32x32xf32> to vector<3x32x32xbf16>
    %1590 = vector.extract_strided_slice %1589 {offsets = [0, 0, 0], sizes = [1, 32, 32], strides = [1, 1, 1]} : vector<3x32x32xbf16> to vector<1x32x32xbf16>
    %1591 = vector.shape_cast %1590 : vector<1x32x32xbf16> to vector<32x32xbf16>
    %cst_298 = arith.constant dense<0.000000e+00> : vector<16x32xf32>
    %1592 = tpu.matmul %1587, %1591, %cst_298 {dimension_numbers = #tpu.dot_dimension_numbers<[1], [0], [0], [1], [0, 0, 1, 1], [], []>} : vector<16x32xbf16>, vector<32x32xbf16>, vector<16x32xf32> -> vector<16x32xf32>
    %1593 = vector.extract_strided_slice %1589 {offsets = [1, 0, 0], sizes = [1, 32, 32], strides = [1, 1, 1]} : vector<3x32x32xbf16> to vector<1x32x32xbf16>
    %1594 = vector.shape_cast %1593 : vector<1x32x32xbf16> to vector<32x32xbf16>
    %cst_299 = arith.constant dense<0.000000e+00> : vector<16x32xf32>
    %1595 = tpu.matmul %1587, %1594, %cst_299 {dimension_numbers = #tpu.dot_dimension_numbers<[1], [0], [0], [1], [0, 0, 1, 1], [], []>} : vector<16x32xbf16>, vector<32x32xbf16>, vector<16x32xf32> -> vector<16x32xf32>
    %1596 = vector.extract_strided_slice %1589 {offsets = [2, 0, 0], sizes = [1, 32, 32], strides = [1, 1, 1]} : vector<3x32x32xbf16> to vector<1x32x32xbf16>
    %1597 = vector.shape_cast %1596 : vector<1x32x32xbf16> to vector<32x32xbf16>
    %cst_300 = arith.constant dense<0.000000e+00> : vector<16x32xf32>
    %1598 = tpu.matmul %1587, %1597, %cst_300 {dimension_numbers = #tpu.dot_dimension_numbers<[1], [0], [0], [1], [0, 0, 1, 1], [], []>} : vector<16x32xbf16>, vector<32x32xbf16>, vector<16x32xf32> -> vector<16x32xf32>
    %c1_i32 = arith.constant 1 : i32
    %1599 = tpu.dynamic_rotate %1592 by %c1_i32 dim 0 : vector<16x32xf32>, i32 -> vector<16x32xf32>
    %1600 = vector.shape_cast %1599 : vector<16x32xf32> to vector<1x16x32xf32>
    %c15_i32 = arith.constant 15 : i32
    %1601 = tpu.dynamic_rotate %1598 by %c15_i32 dim 0 : vector<16x32xf32>, i32 -> vector<16x32xf32>
    %1602 = vector.shape_cast %1601 : vector<16x32xf32> to vector<1x16x32xf32>
    %1603 = tpu.iota {dimensions = array<i32: 1>} : vector<1x16x1xi32>
    %c0_i32 = arith.constant 0 : i32
    %1604 = vector.broadcast %c0_i32 : i32 to vector<1x16x1xi32>
    %1605 = arith.cmpi eq, %1603, %1604 : vector<1x16x1xi32>
    %cst_301 = arith.constant 0.000000e+00 : f32
    %1606 = vector.shape_cast %1605 : vector<1x16x1xi1> to vector<1x16x1xi1>
    %1607 = vector.broadcast %1606 : vector<1x16x1xi1> to vector<1x16x32xi1>
    %1608 = vector.broadcast %cst_301 : f32 to vector<1x16x32xf32>
    %1609 = arith.select %1607, %1608, %1600 : vector<1x16x32xi1>, vector<1x16x32xf32>
    %c15_i32_302 = arith.constant 15 : i32
    %1610 = vector.broadcast %c15_i32_302 : i32 to vector<1x16x1xi32>
    %1611 = arith.cmpi eq, %1603, %1610 : vector<1x16x1xi32>
    %cst_303 = arith.constant 0.000000e+00 : f32
    %1612 = vector.shape_cast %1611 : vector<1x16x1xi1> to vector<1x16x1xi1>
    %1613 = vector.broadcast %1612 : vector<1x16x1xi1> to vector<1x16x32xi1>
    %1614 = vector.broadcast %cst_303 : f32 to vector<1x16x32xf32>
    %1615 = arith.select %1613, %1614, %1602 : vector<1x16x32xi1>, vector<1x16x32xf32>
    %1616 = vector.shape_cast %1595 : vector<16x32xf32> to vector<1x16x32xf32>
    %1617 = arith.addf %1609, %1616 : vector<1x16x32xf32>
    %1618 = arith.addf %1617, %1615 : vector<1x16x32xf32>
    %c0_304 = arith.constant 0 : index
    %c0_305 = arith.constant 0 : index
    %1619 = vector.load %arg12[%c0_304, %c0_305] : memref<1x32xf32, #tpu.memory_space<vmem>>, vector<1x32xf32>
    %1620 = vector.shape_cast %1619 : vector<1x32xf32> to vector<1x1x32xf32>
    %1621 = vector.broadcast %1620 : vector<1x1x32xf32> to vector<1x16x32xf32>
    %1622 = arith.addf %1618, %1621 : vector<1x16x32xf32>
    %cst_306 = arith.constant 0.000000e+00 : f32
    %1623 = vector.broadcast %cst_306 : f32 to vector<1x16x32xf32>
    %1624 = arith.maximumf %1622, %1623 : vector<1x16x32xf32>
    %1625 = vector.broadcast %1583 : vector<1x16x1xf32> to vector<1x16x32xf32>
    %1626 = arith.mulf %1625, %1624 : vector<1x16x32xf32>
    %1627 = vector.shape_cast %1626 : vector<1x16x32xf32> to vector<16x32xf32>
    %1628 = arith.truncf %1627 : vector<16x32xf32> to vector<16x32xbf16>
    %c0_307 = arith.constant 0 : index
    %c0_308 = arith.constant 0 : index
    %c0_309 = arith.constant 0 : index
    %1629 = vector.load %arg13[%c0_307, %c0_308, %c0_309] : memref<3x32x32xf32, #tpu.memory_space<vmem>>, vector<3x32x32xf32>
    %1630 = arith.truncf %1629 : vector<3x32x32xf32> to vector<3x32x32xbf16>
    %1631 = vector.extract_strided_slice %1630 {offsets = [0, 0, 0], sizes = [1, 32, 32], strides = [1, 1, 1]} : vector<3x32x32xbf16> to vector<1x32x32xbf16>
    %1632 = vector.shape_cast %1631 : vector<1x32x32xbf16> to vector<32x32xbf16>
    %cst_310 = arith.constant dense<0.000000e+00> : vector<16x32xf32>
    %1633 = tpu.matmul %1628, %1632, %cst_310 {dimension_numbers = #tpu.dot_dimension_numbers<[1], [0], [0], [1], [0, 0, 1, 1], [], []>} : vector<16x32xbf16>, vector<32x32xbf16>, vector<16x32xf32> -> vector<16x32xf32>
    %1634 = vector.extract_strided_slice %1630 {offsets = [1, 0, 0], sizes = [1, 32, 32], strides = [1, 1, 1]} : vector<3x32x32xbf16> to vector<1x32x32xbf16>
    %1635 = vector.shape_cast %1634 : vector<1x32x32xbf16> to vector<32x32xbf16>
    %cst_311 = arith.constant dense<0.000000e+00> : vector<16x32xf32>
    %1636 = tpu.matmul %1628, %1635, %cst_311 {dimension_numbers = #tpu.dot_dimension_numbers<[1], [0], [0], [1], [0, 0, 1, 1], [], []>} : vector<16x32xbf16>, vector<32x32xbf16>, vector<16x32xf32> -> vector<16x32xf32>
    %1637 = vector.extract_strided_slice %1630 {offsets = [2, 0, 0], sizes = [1, 32, 32], strides = [1, 1, 1]} : vector<3x32x32xbf16> to vector<1x32x32xbf16>
    %1638 = vector.shape_cast %1637 : vector<1x32x32xbf16> to vector<32x32xbf16>
    %cst_312 = arith.constant dense<0.000000e+00> : vector<16x32xf32>
    %1639 = tpu.matmul %1628, %1638, %cst_312 {dimension_numbers = #tpu.dot_dimension_numbers<[1], [0], [0], [1], [0, 0, 1, 1], [], []>} : vector<16x32xbf16>, vector<32x32xbf16>, vector<16x32xf32> -> vector<16x32xf32>
    %c1_i32_313 = arith.constant 1 : i32
    %1640 = tpu.dynamic_rotate %1633 by %c1_i32_313 dim 0 : vector<16x32xf32>, i32 -> vector<16x32xf32>
    %1641 = vector.shape_cast %1640 : vector<16x32xf32> to vector<1x16x32xf32>
    %c15_i32_314 = arith.constant 15 : i32
    %1642 = tpu.dynamic_rotate %1639 by %c15_i32_314 dim 0 : vector<16x32xf32>, i32 -> vector<16x32xf32>
    %1643 = vector.shape_cast %1642 : vector<16x32xf32> to vector<1x16x32xf32>
    %1644 = tpu.iota {dimensions = array<i32: 1>} : vector<1x16x1xi32>
    %c0_i32_315 = arith.constant 0 : i32
    %1645 = vector.broadcast %c0_i32_315 : i32 to vector<1x16x1xi32>
    %1646 = arith.cmpi eq, %1644, %1645 : vector<1x16x1xi32>
    %cst_316 = arith.constant 0.000000e+00 : f32
    %1647 = vector.shape_cast %1646 : vector<1x16x1xi1> to vector<1x16x1xi1>
    %1648 = vector.broadcast %1647 : vector<1x16x1xi1> to vector<1x16x32xi1>
    %1649 = vector.broadcast %cst_316 : f32 to vector<1x16x32xf32>
    %1650 = arith.select %1648, %1649, %1641 : vector<1x16x32xi1>, vector<1x16x32xf32>
    %c15_i32_317 = arith.constant 15 : i32
    %1651 = vector.broadcast %c15_i32_317 : i32 to vector<1x16x1xi32>
    %1652 = arith.cmpi eq, %1644, %1651 : vector<1x16x1xi32>
    %cst_318 = arith.constant 0.000000e+00 : f32
    %1653 = vector.shape_cast %1652 : vector<1x16x1xi1> to vector<1x16x1xi1>
    %1654 = vector.broadcast %1653 : vector<1x16x1xi1> to vector<1x16x32xi1>
    %1655 = vector.broadcast %cst_318 : f32 to vector<1x16x32xf32>
    %1656 = arith.select %1654, %1655, %1643 : vector<1x16x32xi1>, vector<1x16x32xf32>
    %1657 = vector.shape_cast %1636 : vector<16x32xf32> to vector<1x16x32xf32>
    %1658 = arith.addf %1650, %1657 : vector<1x16x32xf32>
    %1659 = arith.addf %1658, %1656 : vector<1x16x32xf32>
    %c0_319 = arith.constant 0 : index
    %c0_320 = arith.constant 0 : index
    %1660 = vector.load %arg14[%c0_319, %c0_320] : memref<1x32xf32, #tpu.memory_space<vmem>>, vector<1x32xf32>
    %1661 = vector.shape_cast %1660 : vector<1x32xf32> to vector<1x1x32xf32>
    %1662 = vector.broadcast %1661 : vector<1x1x32xf32> to vector<1x16x32xf32>
    %1663 = arith.addf %1659, %1662 : vector<1x16x32xf32>
    %cst_321 = arith.constant 0.000000e+00 : f32
    %1664 = vector.broadcast %cst_321 : f32 to vector<1x16x32xf32>
    %1665 = arith.maximumf %1663, %1664 : vector<1x16x32xf32>
    %c0_322 = arith.constant 0 : index
    %c0_323 = arith.constant 0 : index
    %c0_324 = arith.constant 0 : index
    %1666 = vector.load %arg4[%c0_322, %c0_323, %c0_324] : memref<1x16x1xf32, #tpu.memory_space<vmem>>, vector<1x16x1xf32>
    %1667 = vector.broadcast %1666 : vector<1x16x1xf32> to vector<1x16x32xf32>
    %1668 = arith.mulf %1667, %1665 : vector<1x16x32xf32>
    %cst_325 = arith.constant dense<0.000000e+00> : vector<1x32xf32>
    %1669 = vector.multi_reduction <add>, %1668, %cst_325 [1] : vector<1x16x32xf32> to vector<1x32xf32>
    %1670 = vector.shape_cast %1669 : vector<1x32xf32> to vector<1x1x32xf32>
    %1671 = arith.truncf %1670 : vector<1x1x32xf32> to vector<1x1x32xbf16>
    "tpu.trace_start"() <{level = 10 : i32, message = "bqc,bkc->bqk"}> : () -> ()
    %cst_326 = arith.constant dense<0.000000e+00> : vector<1x1x16xf32>
    %1672 = tpu.matmul %1671, %1582, %cst_326 {dimension_numbers = #tpu.dot_dimension_numbers<[2], [2], [1], [1], [0, 0, 0, 1, 1, 1], [0], [0]>} : vector<1x1x32xbf16>, vector<1x16x32xbf16>, vector<1x1x16xf32> -> vector<1x1x16xf32>
    "tpu.trace_stop"() : () -> ()
    %cst_327 = arith.constant dense<0xFF800000> : vector<1x1xf32>
    %1673 = vector.multi_reduction <maximumf>, %1672, %cst_327 [2] : vector<1x1x16xf32> to vector<1x1xf32>
    %1674 = vector.shape_cast %1673 : vector<1x1xf32> to vector<1x1x1xf32>
    %1675 = vector.broadcast %1674 : vector<1x1x1xf32> to vector<1x1x16xf32>
    %1676 = arith.subf %1672, %1675 : vector<1x1x16xf32>
    %1677 = math.exp %1676 : vector<1x1x16xf32>
    %cst_328 = arith.constant dense<0.000000e+00> : vector<1x1xf32>
    %1678 = vector.multi_reduction <add>, %1677, %cst_328 [2] : vector<1x1x16xf32> to vector<1x1xf32>
    %1679 = vector.shape_cast %1678 : vector<1x1xf32> to vector<1x1x1xf32>
    %1680 = tpu.reciprocal %1679 {approx = true} : vector<1x1x1xf32> -> vector<1x1x1xf32>
    %1681 = vector.broadcast %1680 : vector<1x1x1xf32> to vector<1x1x16xf32>
    %1682 = arith.mulf %1677, %1681 : vector<1x1x16xf32>
    %1683 = arith.truncf %1682 : vector<1x1x16xf32> to vector<1x1x16xbf16>
    "tpu.trace_start"() <{level = 10 : i32, message = "bqk,bkc->bqc"}> : () -> ()
    %cst_329 = arith.constant dense<0.000000e+00> : vector<1x1x32xf32>
    %1684 = tpu.matmul %1683, %1582, %cst_329 {dimension_numbers = #tpu.dot_dimension_numbers<[2], [1], [1], [2], [0, 0, 0, 1, 1, 2], [0], [0]>} : vector<1x1x16xbf16>, vector<1x16x32xbf16>, vector<1x1x32xf32> -> vector<1x1x32xf32>
    "tpu.trace_stop"() : () -> ()
    %1685 = vector.shape_cast %1684 : vector<1x1x32xf32> to vector<1x32xf32>
    %1686 = arith.truncf %1685 : vector<1x32xf32> to vector<1x32xbf16>
    %c0_330 = arith.constant 0 : index
    %c0_331 = arith.constant 0 : index
    %1687 = vector.load %arg15[%c0_330, %c0_331] : memref<32x3xf32, #tpu.memory_space<vmem>>, vector<32x3xf32>
    %1688 = arith.truncf %1687 : vector<32x3xf32> to vector<32x3xbf16>
    %cst_332 = arith.constant dense<0.000000e+00> : vector<1x3xf32>
    %1689 = tpu.matmul %1686, %1688, %cst_332 {dimension_numbers = #tpu.dot_dimension_numbers<[1], [0], [0], [1], [0, 0, 1, 1], [], []>} : vector<1x32xbf16>, vector<32x3xbf16>, vector<1x3xf32> -> vector<1x3xf32>
    %c0_333 = arith.constant 0 : index
    %c0_334 = arith.constant 0 : index
    %1690 = vector.load %arg16[%c0_333, %c0_334] : memref<1x3xf32, #tpu.memory_space<vmem>>, vector<1x3xf32>
    %1691 = arith.addf %1689, %1690 : vector<1x3xf32>
    %1692 = vector.shape_cast %1691 : vector<1x3xf32> to vector<1x1x3xf32>
    %c0_335 = arith.constant 0 : index
    %c0_336 = arith.constant 0 : index
    %c0_337 = arith.constant 0 : index
    %1693 = vector.load %arg17[%c0_335, %c0_336, %c0_337] : memref<1x1x3xf32, #tpu.memory_space<vmem>>, vector<1x1x3xf32>
    tpu.vector_store %arg17[%c0_335, %c0_336, %c0_337], %1692 {strides = array<i32>} : memref<1x1x3xf32, #tpu.memory_space<vmem>>, vector<1x1x3xf32>,
    return
  }
  func.func @transform_0(%arg0: i32) -> (i32, i32, i32) {
    %c0_i32 = arith.constant 0 : i32
    %c0_i32_0 = arith.constant 0 : i32
    %c0_i32_1 = arith.constant 0 : i32
    return %arg0, %c0_i32, %c0_i32_0 : i32, i32, i32
  }
  func.func @transform_1(%arg0: i32) -> (i32, i32, i32) {
    %c0_i32 = arith.constant 0 : i32
    %c0_i32_0 = arith.constant 0 : i32
    %c0_i32_1 = arith.constant 0 : i32
    return %arg0, %c0_i32, %c0_i32_0 : i32, i32, i32
  }
  func.func @transform_2(%arg0: i32) -> (i32, i32, i32) {
    %c0_i32 = arith.constant 0 : i32
    %c0_i32_0 = arith.constant 0 : i32
    %c0_i32_1 = arith.constant 0 : i32
    return %arg0, %c0_i32, %c0_i32_0 : i32, i32, i32
  }
  func.func @transform_3(%arg0: i32) -> (i32, i32, i32) {
    %c0_i32 = arith.constant 0 : i32
    %c0_i32_0 = arith.constant 0 : i32
    %c0_i32_1 = arith.constant 0 : i32
    return %arg0, %c0_i32, %c0_i32_0 : i32, i32, i32
  }
  func.func @transform_4(%arg0: i32) -> (i32, i32) {
    %c0_i32 = arith.constant 0 : i32
    %c0_i32_0 = arith.constant 0 : i32
    %c0_i32_1 = arith.constant 0 : i32
    return %c0_i32, %c0_i32_0 : i32, i32
  }
  func.func @transform_5(%arg0: i32) -> (i32, i32) {
    %c0_i32 = arith.constant 0 : i32
    %c0_i32_0 = arith.constant 0 : i32
    %c0_i32_1 = arith.constant 0 : i32
    return %c0_i32, %c0_i32_0 : i32, i32
  }
  func.func @transform_6(%arg0: i32) -> (i32, i32) {
    %c0_i32 = arith.constant 0 : i32
    %c0_i32_0 = arith.constant 0 : i32
    %c0_i32_1 = arith.constant 0 : i32
    return %c0_i32, %c0_i32_0 : i32, i32
  }
  func.func @transform_7(%arg0: i32) -> (i32, i32) {
    %c0_i32 = arith.constant 0 : i32
    %c0_i32_0 = arith.constant 0 : i32
    %c0_i32_1 = arith.constant 0 : i32
    return %c0_i32, %c0_i32_0 : i32, i32
  }
  func.func @transform_8(%arg0: i32) -> (i32, i32) {
    %c0_i32 = arith.constant 0 : i32
    %c0_i32_0 = arith.constant 0 : i32
    %c0_i32_1 = arith.constant 0 : i32
    return %c0_i32, %c0_i32_0 : i32, i32
  }
  func.func @transform_9(%arg0: i32) -> (i32, i32) {
    %c0_i32 = arith.constant 0 : i32
    %c0_i32_0 = arith.constant 0 : i32
    %c0_i32_1 = arith.constant 0 : i32
    return %c0_i32, %c0_i32_0 : i32, i32
  }
  func.func @transform_10(%arg0: i32) -> (i32, i32, i32) {
    %c0_i32 = arith.constant 0 : i32
    %c0_i32_0 = arith.constant 0 : i32
    %c0_i32_1 = arith.constant 0 : i32
    %c0_i32_2 = arith.constant 0 : i32
    return %c0_i32, %c0_i32_0, %c0_i32_1 : i32, i32, i32
  }
  func.func @transform_11(%arg0: i32) -> (i32, i32) {
    %c0_i32 = arith.constant 0 : i32
    %c0_i32_0 = arith.constant 0 : i32
    %c0_i32_1 = arith.constant 0 : i32
    return %c0_i32, %c0_i32_0 : i32, i32
  }
  func.func @transform_12(%arg0: i32) -> (i32, i32, i32) {
    %c0_i32 = arith.constant 0 : i32
    %c0_i32_0 = arith.constant 0 : i32
    %c0_i32_1 = arith.constant 0 : i32
    %c0_i32_2 = arith.constant 0 : i32
    return %c0_i32, %c0_i32_0, %c0_i32_1 : i32, i32, i32
  }
  func.func @transform_13(%arg0: i32) -> (i32, i32) {
    %c0_i32 = arith.constant 0 : i32
    %c0_i32_0 = arith.constant 0 : i32
    %c0_i32_1 = arith.constant 0 : i32
    return %c0_i32, %c0_i32_0 : i32, i32
  }
  func.func @transform_14(%arg0: i32) -> (i32, i32) {
    %c0_i32 = arith.constant 0 : i32
    %c0_i32_0 = arith.constant 0 : i32
    %c0_i32_1 = arith.constant 0 : i32
    return %c0_i32, %c0_i32_0 : i32, i32
  }
  func.func @transform_15(%arg0: i32) -> (i32, i32) {
    %c0_i32 = arith.constant 0 : i32
    %c0_i32_0 = arith.constant 0 : i32
    %c0_i32_1 = arith.constant 0 : i32
    return %c0_i32, %c0_i32_0 : i32, i32
  }
  func.func @transform_16(%arg0: i32) -> (i32, i32, i32) {
    %c0_i32 = arith.constant 0 : i32
    %c0_i32_0 = arith.constant 0 : i32
    %c0_i32_1 = arith.constant 0 : i32
    return %arg0, %c0_i32, %c0_i32_0 : i32, i32, i32
  }
}

</mosaic_0001>

<llo_original>
// kernel: ascnn_forward.1
$region0: #{ascnn_forward.1}
  #allocation0 [shape = 'u32[]', space=smem, size = 0x4, offset = 0x4, fixed_abs, tag = 'smem constant byte address 0x4 - core index']
  #allocation1 [shape = 'u32[72,128]{1,0:T(1,128)}', space=vmem, size = 0x9000, scoped, tag = 'internal scratch']
  #allocation2 [shape = 'f32[1,16,32]{2,1,0:T(8,128)}', space=vmem, size = 0x2000, scoped, tag = 'scratch operand']
  %s0 = inlined_call_operand.vmem [shape: s32[2,1,1], index: 0, kind: input, shape index: {}]
  %s1 = inlined_call_operand.vmem [shape: f32[2,16,32], index: 1, kind: input, shape index: {}]
  %s2 = inlined_call_operand.vmem [shape: f32[2,16,1], index: 2, kind: input, shape index: {}]
  %s3 = inlined_call_operand.vmem [shape: f32[2,16,1], index: 3, kind: input, shape index: {}]
  %s4 = inlined_call_operand.vmem [shape: f32[32,64], index: 4, kind: input, shape index: {}]
  %s5 = inlined_call_operand.vmem [shape: f32[16,64], index: 5, kind: input, shape index: {}]
  %s6 = inlined_call_operand.vmem [shape: f32[1,64], index: 6, kind: input, shape index: {}]
  %s7 = inlined_call_operand.vmem [shape: f32[32,64], index: 7, kind: input, shape index: {}]
  %s8 = inlined_call_operand.vmem [shape: f32[16,64], index: 8, kind: input, shape index: {}]
  %s9 = inlined_call_operand.vmem [shape: f32[1,64], index: 9, kind: input, shape index: {}]
  %s10 = inlined_call_operand.vmem [shape: f32[3,32,32], index: 10, kind: input, shape index: {}]
  %s11 = inlined_call_operand.vmem [shape: f32[1,32], index: 11, kind: input, shape index: {}]
  %s12 = inlined_call_operand.vmem [shape: f32[3,32,32], index: 12, kind: input, shape index: {}]
  %s13 = inlined_call_operand.vmem [shape: f32[1,32], index: 13, kind: input, shape index: {}]
  %s14 = inlined_call_operand.vmem [shape: f32[32,3], index: 14, kind: input, shape index: {}]
  %s15 = inlined_call_operand.vmem [shape: f32[1,3], index: 15, kind: input, shape index: {}]
  %s16 = inlined_call_operand.hbm [shape: f32[2,1,3], index: 16, kind: output, shape index: {}]
  %s17 = sld [smem:[#allocation0]]
  $region97: #{ascnn_forward.1} parent=0
    _
  %s19 = ssub.s32 1, %s17
  %s20 = scalar_select 0, %s19, %s17
  $region1: #{ascnn_forward.1} parent=0
    #allocation3 [shape = 'u8[1024]{0}', space=vmem, size = 0x400, scoped, tag = 'output window, operand 0']
    #allocation4 [shape = 's32[2]{0}', space=sflag, size = 0x8, scoped, tag = 'scoped memory for ascnn_forward.1']
    %21 = vsyncpa [#allocation4], 0
    %s22 = scalar_lea.sflag [#allocation4], 1
    %23 = vsyncpa %s22, 0
    loop: start=0, step=1, limit=4
    $region2: #{ascnn_forward.1} parent=1 // loop_pre_header
      _
    $region3: #{ascnn_forward.1} parent=1 // loop_header
      %s25 = sphi 0, %s29
      %p26 = scmp.ge.s32.totalorder %s25, 4
      %s35 = sphi 0, %s37
      %s38 = sphi 0, %s35
      %s39 = sphi 0, %s38
      %s55 = sphi 0, %s39
      %s61 = sphi 0, %s63
      %s64 = sphi 0, %s61
      %s65 = sphi 0, %s64
      %s81 = sphi 0, %s65
      %s87 = sphi 0, %s89
      %s90 = sphi 0, %s87
      %s91 = sphi 0, %s90
      %s107 = sphi 0, %s91
      %s113 = sphi 0, %s115
      %s116 = sphi 0, %s113
      %s117 = sphi 0, %s116
      %s133 = sphi 0, %s117
      %s137 = sphi 0, %s137
      %s139 = sphi 0, %s137
      %s140 = sphi 0, %s139
      %s154 = sphi 0, %s140
      %s158 = sphi 0, %s158
      %s160 = sphi 0, %s158
      %s161 = sphi 0, %s160
      %s175 = sphi 0, %s161
      %s179 = sphi 0, %s179
      %s181 = sphi 0, %s179
      %s182 = sphi 0, %s181
      %s196 = sphi 0, %s182
      %s200 = sphi 0, %s200
      %s202 = sphi 0, %s200
      %s203 = sphi 0, %s202
      %s217 = sphi 0, %s203
      %s221 = sphi 0, %s221
      %s223 = sphi 0, %s221
      %s224 = sphi 0, %s223
      %s238 = sphi 0, %s224
      %s242 = sphi 0, %s242
      %s244 = sphi 0, %s242
      %s245 = sphi 0, %s244
      %s259 = sphi 0, %s245
      %s263 = sphi 0, %s263
      %s265 = sphi 0, %s263
      %s266 = sphi 0, %s265
      %s280 = sphi 0, %s266
      %s284 = sphi 0, %s284
      %s286 = sphi 0, %s284
      %s287 = sphi 0, %s286
      %s301 = sphi 0, %s287
      %s305 = sphi 0, %s305
      %s307 = sphi 0, %s305
      %s308 = sphi 0, %s307
      %s322 = sphi 0, %s308
      %s326 = sphi 0, %s326
      %s328 = sphi 0, %s326
      %s329 = sphi 0, %s328
      %s343 = sphi 0, %s329
      %s347 = sphi 0, %s347
      %s349 = sphi 0, %s347
      %s350 = sphi 0, %s349
      %s364 = sphi 0, %s350
      %s368 = sphi 0, %s368
      %s370 = sphi 0, %s368
      %s371 = sphi 0, %s370
      %s385 = sphi 0, %s371
      %s391 = sphi 0, %s393
      %s394 = sphi 0, %s391
      %s395 = sphi 0, %s394
      %s411 = sphi 0, %s395
    $region4: #{ascnn_forward.1} parent=1 // loop_header_branch
      %28 = sbr.rel (%p26) target = $region8
    $region5: #{ascnn_forward.1} parent=1 // loop_body
      %s30 = ssub.s32 %s25, 1
      %s31 = ssub.s32 %s25, 2
      %s32 = sadd.s32 %s25, 1
      %s33 = ssub.s32 %s25, %s32
      %p34 = scmp.eq.s32.totalorder %s33, 0
      %s36 = sadd.s32 %s35, 1
      %s37 = scalar_select %p34, %s35, %s36
      %p40 = pneg %p34
      %p41 = scmp.eq.s32.totalorder %s25, 1
      %p42 = por %p40, %p41
      %p43 = scmp.ne.s32.totalorder %s35, %s38
      %p44 = scmp.eq.s32.totalorder %s25, 0
      %p45 = por %p43, %p44
      %p46 = scmp.ne.s32.totalorder %s35, %s38
      %p47 = scmp.eq.s32.totalorder %s30, 1
      %p48 = por %p46, %p47
      %p49 = scmp.ne.s32.totalorder %s38, %s39
      %p50 = scmp.eq.s32.totalorder %s30, 0
      %p51 = por %p49, %p50
      %p52 = scmp.ne.s32.totalorder %s38, %s39
      %p53 = scmp.eq.s32.totalorder %s31, 1
      %p54 = por %p52, %p53
      %p56 = scmp.ne.s32.totalorder %s39, %s55
      %p57 = scmp.eq.s32.totalorder %s31, 0
      %p58 = por %p56, %p57
      %s59 = ssub.s32 %s25, %s32
      %p60 = scmp.eq.s32.totalorder %s59, 0
      %s62 = sadd.s32 %s61, 1
      %s63 = scalar_select %p60, %s61, %s62
      %p66 = pneg %p60
      %p67 = scmp.eq.s32.totalorder %s25, 1
      %p68 = por %p66, %p67
      %p69 = scmp.ne.s32.totalorder %s61, %s64
      %p70 = scmp.eq.s32.totalorder %s25, 0
      %p71 = por %p69, %p70
      %p72 = scmp.ne.s32.totalorder %s61, %s64
      %p73 = scmp.eq.s32.totalorder %s30, 1
      %p74 = por %p72, %p73
      %p75 = scmp.ne.s32.totalorder %s64, %s65
      %p76 = scmp.eq.s32.totalorder %s30, 0
      %p77 = por %p75, %p76
      %p78 = scmp.ne.s32.totalorder %s64, %s65
      %p79 = scmp.eq.s32.totalorder %s31, 1
      %p80 = por %p78, %p79
      %p82 = scmp.ne.s32.totalorder %s65, %s81
      %p83 = scmp.eq.s32.totalorder %s31, 0
      %p84 = por %p82, %p83
      %s85 = ssub.s32 %s25, %s32
      %p86 = scmp.eq.s32.totalorder %s85, 0
      %s88 = sadd.s32 %s87, 1
      %s89 = scalar_select %p86, %s87, %s88
      %p92 = pneg %p86
      %p93 = scmp.eq.s32.totalorder %s25, 1
      %p94 = por %p92, %p93
      %p95 = scmp.ne.s32.totalorder %s87, %s90
      %p96 = scmp.eq.s32.totalorder %s25, 0
      %p97 = por %p95, %p96
      %p98 = scmp.ne.s32.totalorder %s87, %s90
      %p99 = scmp.eq.s32.totalorder %s30, 1
      %p100 = por %p98, %p99
      %p101 = scmp.ne.s32.totalorder %s90, %s91
      %p102 = scmp.eq.s32.totalorder %s30, 0
      %p103 = por %p101, %p102
      %p104 = scmp.ne.s32.totalorder %s90, %s91
      %p105 = scmp.eq.s32.totalorder %s31, 1
      %p106 = por %p104, %p105
      %p108 = scmp.ne.s32.totalorder %s91, %s107
      %p109 = scmp.eq.s32.totalorder %s31, 0
      %p110 = por %p108, %p109
      %s111 = ssub.s32 %s25, %s32
      %p112 = scmp.eq.s32.totalorder %s111, 0
      %s114 = sadd.s32 %s113, 1
      %s115 = scalar_select %p112, %s113, %s114
      %p118 = pneg %p112
      %p119 = scmp.eq.s32.totalorder %s25, 1
      %p120 = por %p118, %p119
      %p121 = scmp.ne.s32.totalorder %s113, %s116
      %p122 = scmp.eq.s32.totalorder %s25, 0
      %p123 = por %p121, %p122
      %p124 = scmp.ne.s32.totalorder %s113, %s116
      %p125 = scmp.eq.s32.totalorder %s30, 1
      %p126 = por %p124, %p125
      %p127 = scmp.ne.s32.totalorder %s116, %s117
      %p128 = scmp.eq.s32.totalorder %s30, 0
      %p129 = por %p127, %p128
      %p130 = scmp.ne.s32.totalorder %s116, %s117
      %p131 = scmp.eq.s32.totalorder %s31, 1
      %p132 = por %p130, %p131
      %p134 = scmp.ne.s32.totalorder %s117, %s133
      %p135 = scmp.eq.s32.totalorder %s31, 0
      %p136 = por %p134, %p135
      %s138 = sadd.s32 %s137, 1
      %p141 = scmp.eq.s32.totalorder %s25, 1
      %p142 = scmp.ne.s32.totalorder %s137, %s139
      %p143 = scmp.eq.s32.totalorder %s25, 0
      %p144 = por %p142, %p143
      %p145 = scmp.ne.s32.totalorder %s137, %s139
      %p146 = scmp.eq.s32.totalorder %s30, 1
      %p147 = por %p145, %p146
      %p148 = scmp.ne.s32.totalorder %s139, %s140
      %p149 = scmp.eq.s32.totalorder %s30, 0
      %p150 = por %p148, %p149
      %p151 = scmp.ne.s32.totalorder %s139, %s140
      %p152 = scmp.eq.s32.totalorder %s31, 1
      %p153 = por %p151, %p152
      %p155 = scmp.ne.s32.totalorder %s140, %s154
      %p156 = scmp.eq.s32.totalorder %s31, 0
      %p157 = por %p155, %p156
      %s159 = sadd.s32 %s158, 1
      %p162 = scmp.eq.s32.totalorder %s25, 1
      %p163 = scmp.ne.s32.totalorder %s158, %s160
      %p164 = scmp.eq.s32.totalorder %s25, 0
      %p165 = por %p163, %p164
      %p166 = scmp.ne.s32.totalorder %s158, %s160
      %p167 = scmp.eq.s32.totalorder %s30, 1
      %p168 = por %p166, %p167
      %p169 = scmp.ne.s32.totalorder %s160, %s161
      %p170 = scmp.eq.s32.totalorder %s30, 0
      %p171 = por %p169, %p170
      %p172 = scmp.ne.s32.totalorder %s160, %s161
      %p173 = scmp.eq.s32.totalorder %s31, 1
      %p174 = por %p172, %p173
      %p176 = scmp.ne.s32.totalorder %s161, %s175
      %p177 = scmp.eq.s32.totalorder %s31, 0
      %p178 = por %p176, %p177
      %s180 = sadd.s32 %s179, 1
      %p183 = scmp.eq.s32.totalorder %s25, 1
      %p184 = scmp.ne.s32.totalorder %s179, %s181
      %p185 = scmp.eq.s32.totalorder %s25, 0
      %p186 = por %p184, %p185
      %p187 = scmp.ne.s32.totalorder %s179, %s181
      %p188 = scmp.eq.s32.totalorder %s30, 1
      %p189 = por %p187, %p188
      %p190 = scmp.ne.s32.totalorder %s181, %s182
      %p191 = scmp.eq.s32.totalorder %s30, 0
      %p192 = por %p190, %p191
      %p193 = scmp.ne.s32.totalorder %s181, %s182
      %p194 = scmp.eq.s32.totalorder %s31, 1
      %p195 = por %p193, %p194
      %p197 = scmp.ne.s32.totalorder %s182, %s196
      %p198 = scmp.eq.s32.totalorder %s31, 0
      %p199 = por %p197, %p198
      %s201 = sadd.s32 %s200, 1
      %p204 = scmp.eq.s32.totalorder %s25, 1
      %p205 = scmp.ne.s32.totalorder %s200, %s202
      %p206 = scmp.eq.s32.totalorder %s25, 0
      %p207 = por %p205, %p206
      %p208 = scmp.ne.s32.totalorder %s200, %s202
      %p209 = scmp.eq.s32.totalorder %s30, 1
      %p210 = por %p208, %p209
      %p211 = scmp.ne.s32.totalorder %s202, %s203
      %p212 = scmp.eq.s32.totalorder %s30, 0
      %p213 = por %p211, %p212
      %p214 = scmp.ne.s32.totalorder %s202, %s203
      %p215 = scmp.eq.s32.totalorder %s31, 1
      %p216 = por %p214, %p215
      %p218 = scmp.ne.s32.totalorder %s203, %s217
      %p219 = scmp.eq.s32.totalorder %s31, 0
      %p220 = por %p218, %p219
      %s222 = sadd.s32 %s221, 1
      %p225 = scmp.eq.s32.totalorder %s25, 1
      %p226 = scmp.ne.s32.totalorder %s221, %s223
      %p227 = scmp.eq.s32.totalorder %s25, 0
      %p228 = por %p226, %p227
      %p229 = scmp.ne.s32.totalorder %s221, %s223
      %p230 = scmp.eq.s32.totalorder %s30, 1
      %p231 = por %p229, %p230
      %p232 = scmp.ne.s32.totalorder %s223, %s224
      %p233 = scmp.eq.s32.totalorder %s30, 0
      %p234 = por %p232, %p233
      %p235 = scmp.ne.s32.totalorder %s223, %s224
      %p236 = scmp.eq.s32.totalorder %s31, 1
      %p237 = por %p235, %p236
      %p239 = scmp.ne.s32.totalorder %s224, %s238
      %p240 = scmp.eq.s32.totalorder %s31, 0
      %p241 = por %p239, %p240
      %s243 = sadd.s32 %s242, 1
      %p246 = scmp.eq.s32.totalorder %s25, 1
      %p247 = scmp.ne.s32.totalorder %s242, %s244
      %p248 = scmp.eq.s32.totalorder %s25, 0
      %p249 = por %p247, %p248
      %p250 = scmp.ne.s32.totalorder %s242, %s244
      %p251 = scmp.eq.s32.totalorder %s30, 1
      %p252 = por %p250, %p251
      %p253 = scmp.ne.s32.totalorder %s244, %s245
      %p254 = scmp.eq.s32.totalorder %s30, 0
      %p255 = por %p253, %p254
      %p256 = scmp.ne.s32.totalorder %s244, %s245
      %p257 = scmp.eq.s32.totalorder %s31, 1
      %p258 = por %p256, %p257
      %p260 = scmp.ne.s32.totalorder %s245, %s259
      %p261 = scmp.eq.s32.totalorder %s31, 0
      %p262 = por %p260, %p261
      %s264 = sadd.s32 %s263, 1
      %p267 = scmp.eq.s32.totalorder %s25, 1
      %p268 = scmp.ne.s32.totalorder %s263, %s265
      %p269 = scmp.eq.s32.totalorder %s25, 0
      %p270 = por %p268, %p269
      %p271 = scmp.ne.s32.totalorder %s263, %s265
      %p272 = scmp.eq.s32.totalorder %s30, 1
      %p273 = por %p271, %p272
      %p274 = scmp.ne.s32.totalorder %s265, %s266
      %p275 = scmp.eq.s32.totalorder %s30, 0
      %p276 = por %p274, %p275
      %p277 = scmp.ne.s32.totalorder %s265, %s266
      %p278 = scmp.eq.s32.totalorder %s31, 1
      %p279 = por %p277, %p278
      %p281 = scmp.ne.s32.totalorder %s266, %s280
      %p282 = scmp.eq.s32.totalorder %s31, 0
      %p283 = por %p281, %p282
      %s285 = sadd.s32 %s284, 1
      %p288 = scmp.eq.s32.totalorder %s25, 1
      %p289 = scmp.ne.s32.totalorder %s284, %s286
      %p290 = scmp.eq.s32.totalorder %s25, 0
      %p291 = por %p289, %p290
      %p292 = scmp.ne.s32.totalorder %s284, %s286
      %p293 = scmp.eq.s32.totalorder %s30, 1
      %p294 = por %p292, %p293
      %p295 = scmp.ne.s32.totalorder %s286, %s287
      %p296 = scmp.eq.s32.totalorder %s30, 0
      %p297 = por %p295, %p296
      %p298 = scmp.ne.s32.totalorder %s286, %s287
      %p299 = scmp.eq.s32.totalorder %s31, 1
      %p300 = por %p298, %p299
      %p302 = scmp.ne.s32.totalorder %s287, %s301
      %p303 = scmp.eq.s32.totalorder %s31, 0
      %p304 = por %p302, %p303
      %s306 = sadd.s32 %s305, 1
      %p309 = scmp.eq.s32.totalorder %s25, 1
      %p310 = scmp.ne.s32.totalorder %s305, %s307
      %p311 = scmp.eq.s32.totalorder %s25, 0
      %p312 = por %p310, %p311
      %p313 = scmp.ne.s32.totalorder %s305, %s307
      %p314 = scmp.eq.s32.totalorder %s30, 1
      %p315 = por %p313, %p314
      %p316 = scmp.ne.s32.totalorder %s307, %s308
      %p317 = scmp.eq.s32.totalorder %s30, 0
      %p318 = por %p316, %p317
      %p319 = scmp.ne.s32.totalorder %s307, %s308
      %p320 = scmp.eq.s32.totalorder %s31, 1
      %p321 = por %p319, %p320
      %p323 = scmp.ne.s32.totalorder %s308, %s322
      %p324 = scmp.eq.s32.totalorder %s31, 0
      %p325 = por %p323, %p324
      %s327 = sadd.s32 %s326, 1
      %p330 = scmp.eq.s32.totalorder %s25, 1
      %p331 = scmp.ne.s32.totalorder %s326, %s328
      %p332 = scmp.eq.s32.totalorder %s25, 0
      %p333 = por %p331, %p332
      %p334 = scmp.ne.s32.totalorder %s326, %s328
      %p335 = scmp.eq.s32.totalorder %s30, 1
      %p336 = por %p334, %p335
      %p337 = scmp.ne.s32.totalorder %s328, %s329
      %p338 = scmp.eq.s32.totalorder %s30, 0
      %p339 = por %p337, %p338
      %p340 = scmp.ne.s32.totalorder %s328, %s329
      %p341 = scmp.eq.s32.totalorder %s31, 1
      %p342 = por %p340, %p341
      %p344 = scmp.ne.s32.totalorder %s329, %s343
      %p345 = scmp.eq.s32.totalorder %s31, 0
      %p346 = por %p344, %p345
      %s348 = sadd.s32 %s347, 1
      %p351 = scmp.eq.s32.totalorder %s25, 1
      %p352 = scmp.ne.s32.totalorder %s347, %s349
      %p353 = scmp.eq.s32.totalorder %s25, 0
      %p354 = por %p352, %p353
      %p355 = scmp.ne.s32.totalorder %s347, %s349
      %p356 = scmp.eq.s32.totalorder %s30, 1
      %p357 = por %p355, %p356
      %p358 = scmp.ne.s32.totalorder %s349, %s350
      %p359 = scmp.eq.s32.totalorder %s30, 0
      %p360 = por %p358, %p359
      %p361 = scmp.ne.s32.totalorder %s349, %s350
      %p362 = scmp.eq.s32.totalorder %s31, 1
      %p363 = por %p361, %p362
      %p365 = scmp.ne.s32.totalorder %s350, %s364
      %p366 = scmp.eq.s32.totalorder %s31, 0
      %p367 = por %p365, %p366
      %s369 = sadd.s32 %s368, 1
      %p372 = scmp.eq.s32.totalorder %s25, 1
      %p373 = scmp.ne.s32.totalorder %s368, %s370
      %p374 = scmp.eq.s32.totalorder %s25, 0
      %p375 = por %p373, %p374
      %p376 = scmp.ne.s32.totalorder %s368, %s370
      %p377 = scmp.eq.s32.totalorder %s30, 1
      %p378 = por %p376, %p377
      %p379 = scmp.ne.s32.totalorder %s370, %s371
      %p380 = scmp.eq.s32.totalorder %s30, 0
      %p381 = por %p379, %p380
      %p382 = scmp.ne.s32.totalorder %s370, %s371
      %p383 = scmp.eq.s32.totalorder %s31, 1
      %p384 = por %p382, %p383
      %p386 = scmp.ne.s32.totalorder %s371, %s385
      %p387 = scmp.eq.s32.totalorder %s31, 0
      %p388 = por %p386, %p387
      %s389 = ssub.s32 %s25, %s32
      %p390 = scmp.eq.s32.totalorder %s389, 0
      %s392 = sadd.s32 %s391, 1
      %s393 = scalar_select %p390, %s391, %s392
      %p396 = pneg %p390
      %p397 = scmp.eq.s32.totalorder %s25, 1
      %p398 = por %p396, %p397
      %p399 = scmp.ne.s32.totalorder %s391, %s394
      %p400 = scmp.eq.s32.totalorder %s25, 0
      %p401 = por %p399, %p400
      %p402 = scmp.ne.s32.totalorder %s391, %s394
      %p403 = scmp.eq.s32.totalorder %s30, 1
      %p404 = por %p402, %p403
      %p405 = scmp.ne.s32.totalorder %s394, %s395
      %p406 = scmp.eq.s32.totalorder %s30, 0
      %p407 = por %p405, %p406
      %p408 = scmp.ne.s32.totalorder %s394, %s395
      %p409 = scmp.eq.s32.totalorder %s31, 1
      %p410 = por %p408, %p409
      %p412 = scmp.ne.s32.totalorder %s395, %s411
      %p413 = scmp.eq.s32.totalorder %s31, 0
      %p414 = por %p412, %p413
      %p415 = scmp.le.s32.totalorder 1, %s25
      %p416 = scmp.lt.s32.totalorder %s25, 3
      %p417 = pnand %p415, %p416
      %p418 = pneg %p417
      // Predicated region
      $region9: #{ascnn_forward.1} parent=5 // pred_check
        _
      $region10: #{ascnn_forward.1} parent=5 // pred_check_branch
        %420 = sbr.rel (%p417) target = $region12
      $region11: #{ascnn_forward.1} parent=5 // pred_region
        %s421 = ssub.s32 %s25, 1
        // Predicated region
        $region13: #{ascnn_forward.1} parent=11 // pred_check
          %p422 = pneg %p150
        $region14: #{ascnn_forward.1} parent=11 // pred_check_branch
          %424 = sbr.rel (%p422) target = $region16
        $region15: #{ascnn_forward.1} parent=11 // pred_region
          _
        $region16: #{ascnn_forward.1} parent=11 // pred_fallthru
          _
        // Predicated region
        $region17: #{ascnn_forward.1} parent=11 // pred_check
          %p425 = pneg %p171
        $region18: #{ascnn_forward.1} parent=11 // pred_check_branch
          %427 = sbr.rel (%p425) target = $region20
        $region19: #{ascnn_forward.1} parent=11 // pred_region
          _
        $region20: #{ascnn_forward.1} parent=11 // pred_fallthru
          _
        // Predicated region
        $region21: #{ascnn_forward.1} parent=11 // pred_check
          %p428 = pneg %p192
        $region22: #{ascnn_forward.1} parent=11 // pred_check_branch
          %430 = sbr.rel (%p428) target = $region24
        $region23: #{ascnn_forward.1} parent=11 // pred_region
          _
        $region24: #{ascnn_forward.1} parent=11 // pred_fallthru
          _
        // Predicated region
        $region25: #{ascnn_forward.1} parent=11 // pred_check
          %p431 = pneg %p213
        $region26: #{ascnn_forward.1} parent=11 // pred_check_branch
          %433 = sbr.rel (%p431) target = $region28
        $region27: #{ascnn_forward.1} parent=11 // pred_region
          _
        $region28: #{ascnn_forward.1} parent=11 // pred_fallthru
          _
        // Predicated region
        $region29: #{ascnn_forward.1} parent=11 // pred_check
          %p434 = pneg %p234
        $region30: #{ascnn_forward.1} parent=11 // pred_check_branch
          %436 = sbr.rel (%p434) target = $region32
        $region31: #{ascnn_forward.1} parent=11 // pred_region
          _
        $region32: #{ascnn_forward.1} parent=11 // pred_fallthru
          _
        // Predicated region
        $region33: #{ascnn_forward.1} parent=11 // pred_check
          %p437 = pneg %p255
        $region34: #{ascnn_forward.1} parent=11 // pred_check_branch
          %439 = sbr.rel (%p437) target = $region36
        $region35: #{ascnn_forward.1} parent=11 // pred_region
          _
        $region36: #{ascnn_forward.1} parent=11 // pred_fallthru
          _
        // Predicated region
        $region37: #{ascnn_forward.1} parent=11 // pred_check
          %p440 = pneg %p276
        $region38: #{ascnn_forward.1} parent=11 // pred_check_branch
          %442 = sbr.rel (%p440) target = $region40
        $region39: #{ascnn_forward.1} parent=11 // pred_region
          _
        $region40: #{ascnn_forward.1} parent=11 // pred_fallthru
          _
        // Predicated region
        $region41: #{ascnn_forward.1} parent=11 // pred_check
          %p443 = pneg %p297
        $region42: #{ascnn_forward.1} parent=11 // pred_check_branch
          %445 = sbr.rel (%p443) target = $region44
        $region43: #{ascnn_forward.1} parent=11 // pred_region
          _
        $region44: #{ascnn_forward.1} parent=11 // pred_fallthru
          _
        // Predicated region
        $region45: #{ascnn_forward.1} parent=11 // pred_check
          %p446 = pneg %p318
        $region46: #{ascnn_forward.1} parent=11 // pred_check_branch
          %448 = sbr.rel (%p446) target = $region48
        $region47: #{ascnn_forward.1} parent=11 // pred_region
          _
        $region48: #{ascnn_forward.1} parent=11 // pred_fallthru
          _
        // Predicated region
        $region49: #{ascnn_forward.1} parent=11 // pred_check
          %p449 = pneg %p339
        $region50: #{ascnn_forward.1} parent=11 // pred_check_branch
          %451 = sbr.rel (%p449) target = $region52
        $region51: #{ascnn_forward.1} parent=11 // pred_region
          _
        $region52: #{ascnn_forward.1} parent=11 // pred_fallthru
          _
        // Predicated region
        $region53: #{ascnn_forward.1} parent=11 // pred_check
          %p452 = pneg %p360
        $region54: #{ascnn_forward.1} parent=11 // pred_check_branch
          %454 = sbr.rel (%p452) target = $region56
        $region55: #{ascnn_forward.1} parent=11 // pred_region
          _
        $region56: #{ascnn_forward.1} parent=11 // pred_fallthru
          _
        // Predicated region
        $region57: #{ascnn_forward.1} parent=11 // pred_check
          %p455 = pneg %p381
        $region58: #{ascnn_forward.1} parent=11 // pred_check_branch
          %457 = sbr.rel (%p455) target = $region60
        $region59: #{ascnn_forward.1} parent=11 // pred_region
          _
        $region60: #{ascnn_forward.1} parent=11 // pred_fallthru
          _
      $region12: #{ascnn_forward.1} parent=5 // pred_fallthru
        _
      %p458 = scmp.lt.s32.totalorder %s25, 2
      // Predicated region
      $region61: #{ascnn_forward.1} parent=5 // pred_check
        %p459 = pneg %p458
      $region62: #{ascnn_forward.1} parent=5 // pred_check_branch
        %461 = sbr.rel (%p459) target = $region64
      $region63: #{ascnn_forward.1} parent=5 // pred_region
        // Predicated region
        $region65: #{ascnn_forward.1} parent=63 // pred_check
          %p462 = pneg %p45
        $region66: #{ascnn_forward.1} parent=63 // pred_check_branch
          %464 = sbr.rel (%p462) target = $region68
        $region67: #{ascnn_forward.1} parent=63 // pred_region
          %p465 = scmp.lt.s32.totalorder %s25, 1
          %s466 = scalar_select %p465, %s25, 1
          %s467 = scalar_lea.vmem %s0, %s466
        $region68: #{ascnn_forward.1} parent=63 // pred_fallthru
          _
        // Predicated region
        $region69: #{ascnn_forward.1} parent=63 // pred_check
          %p468 = pneg %p71
        $region70: #{ascnn_forward.1} parent=63 // pred_check_branch
          %470 = sbr.rel (%p468) target = $region72
        $region71: #{ascnn_forward.1} parent=63 // pred_region
          %p471 = scmp.lt.s32.totalorder %s25, 1
          %s472 = scalar_select %p471, %s25, 1
          %s473 = smul.addr %s472, 2
          %s474 = smul.addr %s473, 8
          %s475 = scalar_lea.vmem %s1, %s474
        $region72: #{ascnn_forward.1} parent=63 // pred_fallthru
          _
        // Predicated region
        $region73: #{ascnn_forward.1} parent=63 // pred_check
          %p476 = pneg %p97
        $region74: #{ascnn_forward.1} parent=63 // pred_check_branch
          %478 = sbr.rel (%p476) target = $region76
        $region75: #{ascnn_forward.1} parent=63 // pred_region
          %p479 = scmp.lt.s32.totalorder %s25, 1
          %s480 = scalar_select %p479, %s25, 1
          %s481 = smul.addr %s480, 2
          %s482 = smul.addr %s481, 8
          %s483 = scalar_lea.vmem %s2, %s482
        $region76: #{ascnn_forward.1} parent=63 // pred_fallthru
          _
        // Predicated region
        $region77: #{ascnn_forward.1} parent=63 // pred_check
          %p484 = pneg %p123
        $region78: #{ascnn_forward.1} parent=63 // pred_check_branch
          %486 = sbr.rel (%p484) target = $region80
        $region79: #{ascnn_forward.1} parent=63 // pred_region
          %p487 = scmp.lt.s32.totalorder %s25, 1
          %s488 = scalar_select %p487, %s25, 1
          %s489 = smul.addr %s488, 2
          %s490 = smul.addr %s489, 8
          %s491 = scalar_lea.vmem %s3, %s490
        $region80: #{ascnn_forward.1} parent=63 // pred_fallthru
          _
      $region64: #{ascnn_forward.1} parent=5 // pred_fallthru
        _
      %p492 = scmp.le.s32.totalorder 1, %s25
      %p493 = scmp.lt.s32.totalorder %s25, 3
      %p494 = pnand %p492, %p493
      %p495 = pneg %p494
      // Predicated region
      $region81: #{ascnn_forward.1} parent=5 // pred_check
        _
      $region82: #{ascnn_forward.1} parent=5 // pred_check_branch
        %497 = sbr.rel (%p494) target = $region84
      $region83: #{ascnn_forward.1} parent=5 // pred_region
        %s498 = ssub.s32 %s25, 1
        %p499 = scmp.lt.s32.totalorder %s30, 1
        %s500 = scalar_select %p499, %s30, 1
        %s501 = scalar_lea.vmem %s0, %s500
        %p502 = pneg %p51
        %p503 = pneg %p48
        %p504 = scmp.lt.s32.totalorder %s30, 1
        %s505 = scalar_select %p504, %s30, 1
        %s506 = smul.addr %s505, 2
        %s507 = smul.addr %s506, 8
        %s508 = scalar_lea.vmem %s1, %s507
        %p509 = pneg %p77
        %p510 = pneg %p74
        %p511 = scmp.lt.s32.totalorder %s30, 1
        %s512 = scalar_select %p511, %s30, 1
        %s513 = smul.addr %s512, 2
        %s514 = smul.addr %s513, 8
        %s515 = scalar_lea.vmem %s2, %s514
        %p516 = pneg %p103
        %p517 = pneg %p100
        %p518 = scmp.lt.s32.totalorder %s30, 1
        %s519 = scalar_select %p518, %s30, 1
        %s520 = smul.addr %s519, 2
        %s521 = smul.addr %s520, 8
        %s522 = scalar_lea.vmem %s3, %s521
        %p523 = pneg %p129
        %p524 = pneg %p126
        %p525 = pneg %p150
        %p526 = pneg %p147
        %p527 = pneg %p171
        %p528 = pneg %p168
        %p529 = pneg %p192
        %p530 = pneg %p189
        %p531 = pneg %p213
        %p532 = pneg %p210
        %p533 = pneg %p234
        %p534 = pneg %p231
        %p535 = pneg %p255
        %p536 = pneg %p252
        %p537 = pneg %p276
        %p538 = pneg %p273
        %p539 = pneg %p297
        %p540 = pneg %p294
        %p541 = pneg %p318
        %p542 = pneg %p315
        %p543 = pneg %p339
        %p544 = pneg %p336
        %p545 = pneg %p360
        %p546 = pneg %p357
        %p547 = pneg %p381
        %p548 = pneg %p378
        %p549 = pneg %p407
        %p550 = pneg %p404
        %s551 = sand.u32 %s394, 1
        %s552 = scalar_lea.sflag [#allocation4], %s551
        %s553 = sand.u32 %s394, 1
        %s554 = scalar_lea.vmem [#allocation3], %s553
        %p555 = scmp.lt.s32.totalorder %s30, 1
        %s556 = scalar_select %p555, %s30, 1
        %s557 = scalar_lea.vmem %s0, %s556
        %p558 = scmp.lt.s32.totalorder %s30, 1
        %s559 = scalar_select %p558, %s30, 1
        %s560 = smul.addr %s559, 2
        %s561 = smul.addr %s560, 8
        %s562 = scalar_lea.vmem %s1, %s561
        %p563 = scmp.lt.s32.totalorder %s30, 1
        %s564 = scalar_select %p563, %s30, 1
        %s565 = smul.addr %s564, 2
        %s566 = smul.addr %s565, 8
        %s567 = scalar_lea.vmem %s2, %s566
        %p568 = scmp.lt.s32.totalorder %s30, 1
        %s569 = scalar_select %p568, %s30, 1
        %s570 = smul.addr %s569, 2
        %s571 = smul.addr %s570, 8
        %s572 = scalar_lea.vmem %s3, %s571
        %v574 = vld [vmem:[%s562] sm:$0xff]
        %v575 = vld [vmem:[%s562 + $0x8] sm:$0xff]
        %v576 = vpack.c.bf16 %v575, %v574
        %v577 = vld [vmem:[%s4] sm:$0xff]
        %v578 = vld [vmem:[%s4 + $0x8] sm:$0xff]
        %v579 = vld [vmem:[%s4 + $0x10] sm:$0xff]
        %v580 = vld [vmem:[%s4 + $0x18] sm:$0xff]
        %v581 = vpack.c.bf16 %v578, %v577
        %v582 = vpack.c.bf16 %v580, %v579
        %v583 = vld [vmem:[%s6] sm:$0x1]
        %v585 = vperm.slane %v583, 0
        %vm587 = vcmask 261120
        %v589 = vsel %vm587, %v576, 0
        %591 = vmatpush.bf16.msra.mxu0 0
        %592 = vmatpush.bf16.msra.mxu0 0
        %593 = vmatpush.bf16.msra.mxu0 0
        %594 = vmatpush.bf16.msra.mxu0 0
        %595 = vmatpush.bf16.msra.mxu0 0
        %596 = vmatpush.bf16.msra.mxu0 0
        %597 = vmatpush.bf16.msra.mxu0 %v582
        %598 = vmatpush.bf16.msra.mxu0 %v581
        %599 = vmatmul.bf16.gmra.mxu0 %v589
        %v600 = vpop.f32.mrf.mxu0
        %v601 = vadd.f32 %v585, %v600
        %v602 = vpop.f32.mrf.mxu0
        %v603 = vadd.f32 %v585, %v602
        %604 = vdwg.mxu0
        %v605 = vld [vmem:[%s7] sm:$0xff]
        %v606 = vld [vmem:[%s7 + $0x8] sm:$0xff]
        %v607 = vld [vmem:[%s7 + $0x10] sm:$0xff]
        %v608 = vld [vmem:[%s7 + $0x18] sm:$0xff]
        %v609 = vpack.c.bf16 %v606, %v605
        %v610 = vpack.c.bf16 %v608, %v607
        %v611 = vld [vmem:[%s9] sm:$0x1]
        %v613 = vperm.slane %v611, 0
        %615 = vmatpush.bf16.msra.mxu0 0
        %616 = vmatpush.bf16.msra.mxu0 0
        %617 = vmatpush.bf16.msra.mxu0 0
        %618 = vmatpush.bf16.msra.mxu0 0
        %619 = vmatpush.bf16.msra.mxu0 0
        %620 = vmatpush.bf16.msra.mxu0 0
        %621 = vmatpush.bf16.msra.mxu0 %v610
        %622 = vmatpush.bf16.msra.mxu0 %v609
        %623 = vmatmul.bf16.gmra.mxu0 %v589
        %v624 = vpop.f32.mrf.mxu0
        %v625 = vadd.f32 %v613, %v624
        %v626 = vpop.f32.mrf.mxu0
        %v627 = vadd.f32 %v613, %v626
        %628 = vdwg.mxu0
        %v629 = vld [vmem:[%s557] sm:$0x1]
        %v630 = vlaneseq
        %v631 = vand.u32 %v630, 127
        %632 = vset.pattern.permute.xlu0 0
        %633 = vperm.xlu0 %632, %v629
        %v634 = vpop.permute.xlu0 %633
        %v635 = vperm.slane %v634, 0
        %vm636 = vcmp.lt.s32.totalorder %v631, %v635
        %v637 = vsel %vm636, 1, 0
        %v638 = vcvt.s32.f32 %v637
        %v639 = vld [vmem:[%s5] sm:$0xff]
        %v640 = vld [vmem:[%s5 + $0x8] sm:$0xff]
        %v641 = vld [vmem:[%s8] sm:$0xff]
        %v642 = vld [vmem:[%s8 + $0x8] sm:$0xff]
        %vm643 = vcmask 130048
        %v645 = vsel %vm643, 0.0, 0
        %647 = vmatpush.msra.mxu0 0.0
        %648 = vmatpush.msra.mxu0 0.0
        %649 = vmatpush.msra.mxu0 0.0
        %650 = vmatpush.msra.mxu0 0.0
        %651 = vmatpush.msra.mxu0 0.0
        %652 = vmatpush.msra.mxu0 0.0
        %653 = vmatpush.msra.mxu0 0.0
        %654 = vmatpush.msra.mxu0 0.0
        %655 = vmatpush.msra.mxu0 0.0
        %656 = vmatpush.msra.mxu0 0.0
        %657 = vmatpush.msra.mxu0 0.0
        %658 = vmatpush.msra.mxu0 0.0
        %659 = vmatpush.msra.mxu0 0.0
        %660 = vmatpush.msra.mxu0 0.0
        %661 = vmatpush.msra.mxu0 %v640
        %662 = vmatpush.msra.mxu0 %v639
        %663 = vmatmul.f32.gmra.mxu0 %v645
        %v664 = vpop.f32.mrf.mxu0
        %v665 = vadd.f32 0.0, %v664
        %666 = vdwg.mxu0
        %v667 = vadd.f32 %v601, %v665
        %668 = vmatpush.msra.mxu0 0.0
        %669 = vmatpush.msra.mxu0 0.0
        %670 = vmatpush.msra.mxu0 0.0
        %671 = vmatpush.msra.mxu0 0.0
        %672 = vmatpush.msra.mxu0 0.0
        %673 = vmatpush.msra.mxu0 0.0
        %674 = vmatpush.msra.mxu0 0.0
        %675 = vmatpush.msra.mxu0 0.0
        %676 = vmatpush.msra.mxu0 0.0
        %677 = vmatpush.msra.mxu0 0.0
        %678 = vmatpush.msra.mxu0 0.0
        %679 = vmatpush.msra.mxu0 0.0
        %680 = vmatpush.msra.mxu0 0.0
        %681 = vmatpush.msra.mxu0 0.0
        %682 = vmatpush.msra.mxu0 %v642
        %683 = vmatpush.msra.mxu0 %v641
        %684 = vmatmul.f32.gmra.mxu0 %v645
        %v685 = vpop.f32.mrf.mxu0
        %v686 = vadd.f32 0.0, %v685
        %687 = vdwg.mxu0
        %v689 = vrot.slane %v686, 1
        %v691 = vadd.f32 %v627, %v689
        %v692 = vxor.u32 %v667, 2147483648
        %v693 = vmul.f32 %v692, 1.442695
        %v694 = vpow.pop %v693
        %v695 = vadd.f32 %v694, 1.0
        %v696 = vrcp.pop %v695
        %v697 = vmul.f32 %v695, %v696
        %v698 = vsub.f32 1.0, %v697
        %v699 = vmul.f32 %v696, %v698
        %v700 = vadd.f32 %v696, %v699
        %vm701 = vweird.f32 %v695
        %vm702 = vweird.f32 %v696
        %vm703 = vmor %vm701, %vm702
        %v704 = vsel %vm703, %v696, %v700
        %v705 = vand.u32 2147483647, %v695
        %vm706 = vcmp.eq.f32.partialorder %v705, 8.507059e+37
        %v707 = vand.u32 %v695, 2147483648
        %v708 = vor.u32 1.1754944e-38, %v707
        %v709 = vsel %vm706, %v708, %v704
        %v710 = vmul.f32 1.0, %v709
        %v711 = vtanh.pop %v667
        %v712 = vmul.f32 %v710, 0.0
        %714 = vrot.lane.b32.xlu0 %v711, 96
        %v715 = vpop.permute.xlu0 %714
        %v717 = vmul.f32 %v710, %v715
        %719 = vrot.lane.b32.xlu0 %v717, 16
        %v720 = vpop.permute.xlu0 %719
        %v722 = vadd.f32 %v712, %v720
        %v723 = vtanh.pop %v722
        %725 = vrot.lane.b32.xlu0 %v723, 32
        %v726 = vpop.permute.xlu0 %725
        %v728 = vmul.f32 %v710, %v726
        %v729 = vxor.u32 %v691, 2147483648
        %v730 = vmul.f32 %v729, 1.442695
        %v731 = vpow.pop %v730
        %v732 = vadd.f32 %v731, 1.0
        %v733 = vrcp.pop %v732
        %v734 = vmul.f32 %v732, %v733
        %v735 = vsub.f32 1.0, %v734
        %v736 = vmul.f32 %v733, %v735
        %v737 = vadd.f32 %v733, %v736
        %vm738 = vweird.f32 %v732
        %vm739 = vweird.f32 %v733
        %vm740 = vmor %vm738, %vm739
        %v741 = vsel %vm740, %v733, %v737
        %v742 = vand.u32 2147483647, %v732
        %vm743 = vcmp.eq.f32.partialorder %v742, 8.507059e+37
        %v744 = vand.u32 %v732, 2147483648
        %v745 = vor.u32 1.1754944e-38, %v744
        %v746 = vsel %vm743, %v745, %v741
        %v747 = vmul.f32 1.0, %v746
        %v748 = vtanh.pop %v691
        %v749 = vmul.f32 %v747, 0.0
        %751 = vrot.lane.b32.xlu0 %v748, 96
        %v752 = vpop.permute.xlu0 %751
        %v754 = vmul.f32 %v747, %v752
        %756 = vrot.lane.b32.xlu0 %v754, 16
        %v757 = vpop.permute.xlu0 %756
        %v759 = vadd.f32 %v749, %v757
        %v760 = vtanh.pop %v759
        %762 = vrot.lane.b32.xlu0 %v760, 32
        %v763 = vpop.permute.xlu0 %762
        %v765 = vmul.f32 %v747, %v763
        %767 = vset.pattern.permute.xlu0 0
        %768 = vperm.xlu0 %767, %v638
        %v769 = vpop.permute.xlu0 %768
        %v771 = vmul.f32 %v769, %v728
        %v772 = vsub.f32 1.0, %v638
        %774 = vset.pattern.permute.xlu0 0
        %775 = vperm.xlu0 %774, %v772
        %v776 = vpop.permute.xlu0 %775
        %v778 = vmul.f32 %v776, 0.0
        %v779 = vadd.f32 %v771, %v778
        %v780 = vmul.f32 %v769, %v722
        %v781 = vadd.f32 %v780, %v778
        %782 = vset.pattern.permute.xlu0 15
        %783 = vperm.xlu0 %782, %v638
        %v784 = vpop.permute.xlu0 %783
        %v786 = vmul.f32 %v784, %v765
        %787 = vset.pattern.permute.xlu0 15
        %788 = vperm.xlu0 %787, %v772
        %v789 = vpop.permute.xlu0 %788
        %v791 = vmul.f32 %v789, 0.0
        %v792 = vadd.f32 %v786, %v791
        %v793 = vmul.f32 %v784, %v759
        %v794 = vadd.f32 %v793, %v791
        %v795 = vmul.f32 %v769, %v779
        %797 = vrot.lane.b32.xlu0 %v795, 80
        %v798 = vpop.permute.xlu0 %797
        %vm800 = vcmask 122880
        %801 = vst.msk [vmem:[#allocation2] sm:$0x1] %vm800, %v798
        %v802 = vmul.f32 %v784, %v792
        %804 = vrot.lane.b32.xlu0 %v802, 96
        %v805 = vpop.permute.xlu0 %804
        %vm807 = vcmask 261255
        %808 = vst.msk [vmem:[#allocation2 + $0x8] sm:$0x80] %vm807, %v805
        %810 = vrot.lane.b32.xlu0 %v779, 80
        %v811 = vpop.permute.xlu0 %810
        %v812 = vsel %vm643, %v811, 0
        %814 = vmatpush.msra.mxu0 0.0
        %815 = vmatpush.msra.mxu0 0.0
        %816 = vmatpush.msra.mxu0 0.0
        %817 = vmatpush.msra.mxu0 0.0
        %818 = vmatpush.msra.mxu0 0.0
        %819 = vmatpush.msra.mxu0 0.0
        %820 = vmatpush.msra.mxu0 0.0
        %821 = vmatpush.msra.mxu0 0.0
        %822 = vmatpush.msra.mxu0 0.0
        %823 = vmatpush.msra.mxu0 0.0
        %824 = vmatpush.msra.mxu0 0.0
        %825 = vmatpush.msra.mxu0 0.0
        %826 = vmatpush.msra.mxu0 0.0
        %827 = vmatpush.msra.mxu0 0.0
        %828 = vmatpush.msra.mxu0 %v640
        %829 = vmatpush.msra.mxu0 %v639
        %830 = vmatmul.f32.gmra.mxu0 %v812
        %v831 = vpop.f32.mrf.mxu0
        %v832 = vadd.f32 0.0, %v831
        %833 = vdwg.mxu0
        %v835 = vrot.slane %v832, 7
        %v837 = vadd.f32 %v601, %v835
        %v839 = vrot.slane %v792, 7
        %840 = vrot.lane.b32.xlu0 %v839, 80
        %v841 = vpop.permute.xlu0 %840
        %v842 = vsel %vm643, %v841, 0
        %844 = vmatpush.msra.mxu0 0.0
        %845 = vmatpush.msra.mxu0 0.0
        %846 = vmatpush.msra.mxu0 0.0
        %847 = vmatpush.msra.mxu0 0.0
        %848 = vmatpush.msra.mxu0 0.0
        %849 = vmatpush.msra.mxu0 0.0
        %850 = vmatpush.msra.mxu0 0.0
        %851 = vmatpush.msra.mxu0 0.0
        %852 = vmatpush.msra.mxu0 0.0
        %853 = vmatpush.msra.mxu0 0.0
        %854 = vmatpush.msra.mxu0 0.0
        %855 = vmatpush.msra.mxu0 0.0
        %856 = vmatpush.msra.mxu0 0.0
        %857 = vmatpush.msra.mxu0 0.0
        %858 = vmatpush.msra.mxu0 %v642
        %859 = vmatpush.msra.mxu0 %v641
        %860 = vmatmul.f32.gmra.mxu0 %v842
        %v861 = vpop.f32.mrf.mxu0
        %v862 = vadd.f32 0.0, %v861
        %863 = vdwg.mxu0
        %v865 = vrot.slane %v862, 2
        %v867 = vadd.f32 %v627, %v865
        %v868 = vxor.u32 %v837, 2147483648
        %v869 = vmul.f32 %v868, 1.442695
        %v870 = vpow.pop %v869
        %v871 = vadd.f32 %v870, 1.0
        %v872 = vrcp.pop %v871
        %v873 = vmul.f32 %v871, %v872
        %v874 = vsub.f32 1.0, %v873
        %v875 = vmul.f32 %v872, %v874
        %v876 = vadd.f32 %v872, %v875
        %vm877 = vweird.f32 %v871
        %vm878 = vweird.f32 %v872
        %vm879 = vmor %vm877, %vm878
        %v880 = vsel %vm879, %v872, %v876
        %v881 = vand.u32 2147483647, %v871
        %vm882 = vcmp.eq.f32.partialorder %v881, 8.507059e+37
        %v883 = vand.u32 %v871, 2147483648
        %v884 = vor.u32 1.1754944e-38, %v883
        %v885 = vsel %vm882, %v884, %v880
        %v886 = vmul.f32 1.0, %v885
        %v887 = vtanh.pop %v837
        %v889 = vrot.slane %v781, 7
        %v891 = vmul.f32 %v886, %v889
        %893 = vrot.lane.b32.xlu0 %v887, 96
        %v894 = vpop.permute.xlu0 %893
        %v896 = vmul.f32 %v886, %v894
        %898 = vrot.lane.b32.xlu0 %v896, 16
        %v899 = vpop.permute.xlu0 %898
        %v901 = vadd.f32 %v891, %v899
        %v902 = vtanh.pop %v901
        %904 = vrot.lane.b32.xlu0 %v902, 32
        %v905 = vpop.permute.xlu0 %904
        %v907 = vmul.f32 %v886, %v905
        %v908 = vxor.u32 %v867, 2147483648
        %v909 = vmul.f32 %v908, 1.442695
        %v910 = vpow.pop %v909
        %v911 = vadd.f32 %v910, 1.0
        %v912 = vrcp.pop %v911
        %v913 = vmul.f32 %v911, %v912
        %v914 = vsub.f32 1.0, %v913
        %v915 = vmul.f32 %v912, %v914
        %v916 = vadd.f32 %v912, %v915
        %vm917 = vweird.f32 %v911
        %vm918 = vweird.f32 %v912
        %vm919 = vmor %vm917, %vm918
        %v920 = vsel %vm919, %v912, %v916
        %v921 = vand.u32 2147483647, %v911
        %vm922 = vcmp.eq.f32.partialorder %v921, 8.507059e+37
        %v923 = vand.u32 %v911, 2147483648
        %v924 = vor.u32 1.1754944e-38, %v923
        %v925 = vsel %vm922, %v924, %v920
        %v926 = vmul.f32 1.0, %v925
        %v927 = vtanh.pop %v867
        %v929 = vrot.slane %v794, 1
        %v931 = vmul.f32 %v926, %v929
        %933 = vrot.lane.b32.xlu0 %v927, 96
        %v934 = vpop.permute.xlu0 %933
        %v936 = vmul.f32 %v926, %v934
        %938 = vrot.lane.b32.xlu0 %v936, 16
        %v939 = vpop.permute.xlu0 %938
        %v941 = vadd.f32 %v931, %v939
        %v942 = vtanh.pop %v941
        %944 = vrot.lane.b32.xlu0 %v942, 32
        %v945 = vpop.permute.xlu0 %944
        %v947 = vmul.f32 %v926, %v945
        %948 = vset.pattern.permute.xlu0 1
        %949 = vperm.xlu0 %948, %v638
        %v950 = vpop.permute.xlu0 %949
        %v952 = vmul.f32 %v950, %v907
        %953 = vset.pattern.permute.xlu0 1
        %954 = vperm.xlu0 %953, %v772
        %v955 = vpop.permute.xlu0 %954
        %v957 = vmul.f32 %v955, %v779
        %v959 = vrot.slane %v957, 7
        %v961 = vadd.f32 %v952, %v959
        %v962 = vmul.f32 %v950, %v901
        %v963 = vmul.f32 %v955, %v781
        %v965 = vrot.slane %v963, 7
        %v967 = vadd.f32 %v962, %v965
        %968 = vset.pattern.permute.xlu0 14
        %969 = vperm.xlu0 %968, %v638
        %v970 = vpop.permute.xlu0 %969
        %v972 = vmul.f32 %v970, %v947
        %973 = vset.pattern.permute.xlu0 14
        %974 = vperm.xlu0 %973, %v772
        %v975 = vpop.permute.xlu0 %974
        %v977 = vmul.f32 %v975, %v792
        %v979 = vrot.slane %v977, 1
        %v981 = vadd.f32 %v972, %v979
        %v982 = vmul.f32 %v970, %v941
        %v983 = vmul.f32 %v975, %v794
        %v985 = vrot.slane %v983, 1
        %v987 = vadd.f32 %v982, %v985
        %v988 = vmul.f32 %v950, %v961
        %990 = vrot.lane.b32.xlu0 %v988, 80
        %v991 = vpop.permute.xlu0 %990
        %vm993 = vcmask 123905
        %994 = vst.msk [vmem:[#allocation2] sm:$0x2] %vm993, %v991
        %v995 = vmul.f32 %v970, %v981
        %997 = vrot.lane.b32.xlu0 %v995, 96
        %v998 = vpop.permute.xlu0 %997
        %vm1000 = vcmask 260230
        %1001 = vst.msk [vmem:[#allocation2 + $0x8] sm:$0x40] %vm1000, %v998
        %v1003 = vrot.slane %v961, 1
        %1004 = vrot.lane.b32.xlu0 %v1003, 80
        %v1005 = vpop.permute.xlu0 %1004
        %v1006 = vsel %vm643, %v1005, 0
        %1008 = vmatpush.msra.mxu0 0.0
        %1009 = vmatpush.msra.mxu0 0.0
        %1010 = vmatpush.msra.mxu0 0.0
        %1011 = vmatpush.msra.mxu0 0.0
        %1012 = vmatpush.msra.mxu0 0.0
        %1013 = vmatpush.msra.mxu0 0.0
        %1014 = vmatpush.msra.mxu0 0.0
        %1015 = vmatpush.msra.mxu0 0.0
        %1016 = vmatpush.msra.mxu0 0.0
        %1017 = vmatpush.msra.mxu0 0.0
        %1018 = vmatpush.msra.mxu0 0.0
        %1019 = vmatpush.msra.mxu0 0.0
        %1020 = vmatpush.msra.mxu0 0.0
        %1021 = vmatpush.msra.mxu0 0.0
        %1022 = vmatpush.msra.mxu0 %v640
        %1023 = vmatpush.msra.mxu0 %v639
        %1024 = vmatmul.f32.gmra.mxu0 %v1006
        %v1025 = vpop.f32.mrf.mxu0
        %v1026 = vadd.f32 0.0, %v1025
        %1027 = vdwg.mxu0
        %v1029 = vrot.slane %v1026, 6
        %v1031 = vadd.f32 %v601, %v1029
        %v1033 = vrot.slane %v981, 6
        %1034 = vrot.lane.b32.xlu0 %v1033, 80
        %v1035 = vpop.permute.xlu0 %1034
        %v1036 = vsel %vm643, %v1035, 0
        %1038 = vmatpush.msra.mxu0 0.0
        %1039 = vmatpush.msra.mxu0 0.0
        %1040 = vmatpush.msra.mxu0 0.0
        %1041 = vmatpush.msra.mxu0 0.0
        %1042 = vmatpush.msra.mxu0 0.0
        %1043 = vmatpush.msra.mxu0 0.0
        %1044 = vmatpush.msra.mxu0 0.0
        %1045 = vmatpush.msra.mxu0 0.0
        %1046 = vmatpush.msra.mxu0 0.0
        %1047 = vmatpush.msra.mxu0 0.0
        %1048 = vmatpush.msra.mxu0 0.0
        %1049 = vmatpush.msra.mxu0 0.0
        %1050 = vmatpush.msra.mxu0 0.0
        %1051 = vmatpush.msra.mxu0 0.0
        %1052 = vmatpush.msra.mxu0 %v642
        %1053 = vmatpush.msra.mxu0 %v641
        %1054 = vmatmul.f32.gmra.mxu0 %v1036
        %v1055 = vpop.f32.mrf.mxu0
        %v1056 = vadd.f32 0.0, %v1055
        %1057 = vdwg.mxu0
        %v1059 = vrot.slane %v1056, 3
        %v1061 = vadd.f32 %v627, %v1059
        %v1062 = vxor.u32 %v1031, 2147483648
        %v1063 = vmul.f32 %v1062, 1.442695
        %v1064 = vpow.pop %v1063
        %v1065 = vadd.f32 %v1064, 1.0
        %v1066 = vrcp.pop %v1065
        %v1067 = vmul.f32 %v1065, %v1066
        %v1068 = vsub.f32 1.0, %v1067
        %v1069 = vmul.f32 %v1066, %v1068
        %v1070 = vadd.f32 %v1066, %v1069
        %vm1071 = vweird.f32 %v1065
        %vm1072 = vweird.f32 %v1066
        %vm1073 = vmor %vm1071, %vm1072
        %v1074 = vsel %vm1073, %v1066, %v1070
        %v1075 = vand.u32 2147483647, %v1065
        %vm1076 = vcmp.eq.f32.partialorder %v1075, 8.507059e+37
        %v1077 = vand.u32 %v1065, 2147483648
        %v1078 = vor.u32 1.1754944e-38, %v1077
        %v1079 = vsel %vm1076, %v1078, %v1074
        %v1080 = vmul.f32 1.0, %v1079
        %v1081 = vtanh.pop %v1031
        %v1083 = vrot.slane %v967, 7
        %v1085 = vmul.f32 %v1080, %v1083
        %1087 = vrot.lane.b32.xlu0 %v1081, 96
        %v1088 = vpop.permute.xlu0 %1087
        %v1090 = vmul.f32 %v1080, %v1088
        %1092 = vrot.lane.b32.xlu0 %v1090, 16
        %v1093 = vpop.permute.xlu0 %1092
        %v1095 = vadd.f32 %v1085, %v1093
        %v1096 = vtanh.pop %v1095
        %1098 = vrot.lane.b32.xlu0 %v1096, 32
        %v1099 = vpop.permute.xlu0 %1098
        %v1101 = vmul.f32 %v1080, %v1099
        %v1102 = vxor.u32 %v1061, 2147483648
        %v1103 = vmul.f32 %v1102, 1.442695
        %v1104 = vpow.pop %v1103
        %v1105 = vadd.f32 %v1104, 1.0
        %v1106 = vrcp.pop %v1105
        %v1107 = vmul.f32 %v1105, %v1106
        %v1108 = vsub.f32 1.0, %v1107
        %v1109 = vmul.f32 %v1106, %v1108
        %v1110 = vadd.f32 %v1106, %v1109
        %vm1111 = vweird.f32 %v1105
        %vm1112 = vweird.f32 %v1106
        %vm1113 = vmor %vm1111, %vm1112
        %v1114 = vsel %vm1113, %v1106, %v1110
        %v1115 = vand.u32 2147483647, %v1105
        %vm1116 = vcmp.eq.f32.partialorder %v1115, 8.507059e+37
        %v1117 = vand.u32 %v1105, 2147483648
        %v1118 = vor.u32 1.1754944e-38, %v1117
        %v1119 = vsel %vm1116, %v1118, %v1114
        %v1120 = vmul.f32 1.0, %v1119
        %v1121 = vtanh.pop %v1061
        %v1123 = vrot.slane %v987, 1
        %v1125 = vmul.f32 %v1120, %v1123
        %1127 = vrot.lane.b32.xlu0 %v1121, 96
        %v1128 = vpop.permute.xlu0 %1127
        %v1130 = vmul.f32 %v1120, %v1128
        %1132 = vrot.lane.b32.xlu0 %v1130, 16
        %v1133 = vpop.permute.xlu0 %1132
        %v1135 = vadd.f32 %v1125, %v1133
        %v1136 = vtanh.pop %v1135
        %1138 = vrot.lane.b32.xlu0 %v1136, 32
        %v1139 = vpop.permute.xlu0 %1138
        %v1141 = vmul.f32 %v1120, %v1139
        %1142 = vset.pattern.permute.xlu0 2
        %1143 = vperm.xlu0 %1142, %v638
        %v1144 = vpop.permute.xlu0 %1143
        %v1146 = vmul.f32 %v1144, %v1101
        %1147 = vset.pattern.permute.xlu0 2
        %1148 = vperm.xlu0 %1147, %v772
        %v1149 = vpop.permute.xlu0 %1148
        %v1151 = vmul.f32 %v1149, %v961
        %v1153 = vrot.slane %v1151, 7
        %v1155 = vadd.f32 %v1146, %v1153
        %v1156 = vmul.f32 %v1144, %v1095
        %v1157 = vmul.f32 %v1149, %v967
        %v1159 = vrot.slane %v1157, 7
        %v1161 = vadd.f32 %v1156, %v1159
        %1162 = vset.pattern.permute.xlu0 13
        %1163 = vperm.xlu0 %1162, %v638
        %v1164 = vpop.permute.xlu0 %1163
        %v1166 = vmul.f32 %v1164, %v1141
        %1167 = vset.pattern.permute.xlu0 13
        %1168 = vperm.xlu0 %1167, %v772
        %v1169 = vpop.permute.xlu0 %1168
        %v1171 = vmul.f32 %v1169, %v981
        %v1173 = vrot.slane %v1171, 1
        %v1175 = vadd.f32 %v1166, %v1173
        %v1176 = vmul.f32 %v1164, %v1135
        %v1177 = vmul.f32 %v1169, %v987
        %v1179 = vrot.slane %v1177, 1
        %v1181 = vadd.f32 %v1176, %v1179
        %v1182 = vmul.f32 %v1144, %v1155
        %1184 = vrot.lane.b32.xlu0 %v1182, 80
        %v1185 = vpop.permute.xlu0 %1184
        %vm1187 = vcmask 124930
        %1188 = vst.msk [vmem:[#allocation2] sm:$0x4] %vm1187, %v1185
        %v1189 = vmul.f32 %v1164, %v1175
        %1191 = vrot.lane.b32.xlu0 %v1189, 96
        %v1192 = vpop.permute.xlu0 %1191
        %vm1194 = vcmask 259205
        %1195 = vst.msk [vmem:[#allocation2 + $0x8] sm:$0x20] %vm1194, %v1192
        %v1197 = vrot.slane %v1155, 2
        %1198 = vrot.lane.b32.xlu0 %v1197, 80
        %v1199 = vpop.permute.xlu0 %1198
        %v1200 = vsel %vm643, %v1199, 0
        %1202 = vmatpush.msra.mxu0 0.0
        %1203 = vmatpush.msra.mxu0 0.0
        %1204 = vmatpush.msra.mxu0 0.0
        %1205 = vmatpush.msra.mxu0 0.0
        %1206 = vmatpush.msra.mxu0 0.0
        %1207 = vmatpush.msra.mxu0 0.0
        %1208 = vmatpush.msra.mxu0 0.0
        %1209 = vmatpush.msra.mxu0 0.0
        %1210 = vmatpush.msra.mxu0 0.0
        %1211 = vmatpush.msra.mxu0 0.0
        %1212 = vmatpush.msra.mxu0 0.0
        %1213 = vmatpush.msra.mxu0 0.0
        %1214 = vmatpush.msra.mxu0 0.0
        %1215 = vmatpush.msra.mxu0 0.0
        %1216 = vmatpush.msra.mxu0 %v640
        %1217 = vmatpush.msra.mxu0 %v639
        %1218 = vmatmul.f32.gmra.mxu0 %v1200
        %v1219 = vpop.f32.mrf.mxu0
        %v1220 = vadd.f32 0.0, %v1219
        %1221 = vdwg.mxu0
        %v1223 = vrot.slane %v1220, 5
        %v1225 = vadd.f32 %v601, %v1223
        %v1227 = vrot.slane %v1175, 5
        %1228 = vrot.lane.b32.xlu0 %v1227, 80
        %v1229 = vpop.permute.xlu0 %1228
        %v1230 = vsel %vm643, %v1229, 0
        %1232 = vmatpush.msra.mxu0 0.0
        %1233 = vmatpush.msra.mxu0 0.0
        %1234 = vmatpush.msra.mxu0 0.0
        %1235 = vmatpush.msra.mxu0 0.0
        %1236 = vmatpush.msra.mxu0 0.0
        %1237 = vmatpush.msra.mxu0 0.0
        %1238 = vmatpush.msra.mxu0 0.0
        %1239 = vmatpush.msra.mxu0 0.0
        %1240 = vmatpush.msra.mxu0 0.0
        %1241 = vmatpush.msra.mxu0 0.0
        %1242 = vmatpush.msra.mxu0 0.0
        %1243 = vmatpush.msra.mxu0 0.0
        %1244 = vmatpush.msra.mxu0 0.0
        %1245 = vmatpush.msra.mxu0 0.0
        %1246 = vmatpush.msra.mxu0 %v642
        %1247 = vmatpush.msra.mxu0 %v641
        %1248 = vmatmul.f32.gmra.mxu0 %v1230
        %v1249 = vpop.f32.mrf.mxu0
        %v1250 = vadd.f32 0.0, %v1249
        %1251 = vdwg.mxu0
        %v1253 = vrot.slane %v1250, 4
        %v1255 = vadd.f32 %v627, %v1253
        %v1256 = vxor.u32 %v1225, 2147483648
        %v1257 = vmul.f32 %v1256, 1.442695
        %v1258 = vpow.pop %v1257
        %v1259 = vadd.f32 %v1258, 1.0
        %v1260 = vrcp.pop %v1259
        %v1261 = vmul.f32 %v1259, %v1260
        %v1262 = vsub.f32 1.0, %v1261
        %v1263 = vmul.f32 %v1260, %v1262
        %v1264 = vadd.f32 %v1260, %v1263
        %vm1265 = vweird.f32 %v1259
        %vm1266 = vweird.f32 %v1260
        %vm1267 = vmor %vm1265, %vm1266
        %v1268 = vsel %vm1267, %v1260, %v1264
        %v1269 = vand.u32 2147483647, %v1259
        %vm1270 = vcmp.eq.f32.partialorder %v1269, 8.507059e+37
        %v1271 = vand.u32 %v1259, 2147483648
        %v1272 = vor.u32 1.1754944e-38, %v1271
        %v1273 = vsel %vm1270, %v1272, %v1268
        %v1274 = vmul.f32 1.0, %v1273
        %v1275 = vtanh.pop %v1225
        %v1277 = vrot.slane %v1161, 7
        %v1279 = vmul.f32 %v1274, %v1277
        %1281 = vrot.lane.b32.xlu0 %v1275, 96
        %v1282 = vpop.permute.xlu0 %1281
        %v1284 = vmul.f32 %v1274, %v1282
        %1286 = vrot.lane.b32.xlu0 %v1284, 16
        %v1287 = vpop.permute.xlu0 %1286
        %v1289 = vadd.f32 %v1279, %v1287
        %v1290 = vtanh.pop %v1289
        %1292 = vrot.lane.b32.xlu0 %v1290, 32
        %v1293 = vpop.permute.xlu0 %1292
        %v1295 = vmul.f32 %v1274, %v1293
        %v1296 = vxor.u32 %v1255, 2147483648
        %v1297 = vmul.f32 %v1296, 1.442695
        %v1298 = vpow.pop %v1297
        %v1299 = vadd.f32 %v1298, 1.0
        %v1300 = vrcp.pop %v1299
        %v1301 = vmul.f32 %v1299, %v1300
        %v1302 = vsub.f32 1.0, %v1301
        %v1303 = vmul.f32 %v1300, %v1302
        %v1304 = vadd.f32 %v1300, %v1303
        %vm1305 = vweird.f32 %v1299
        %vm1306 = vweird.f32 %v1300
        %vm1307 = vmor %vm1305, %vm1306
        %v1308 = vsel %vm1307, %v1300, %v1304
        %v1309 = vand.u32 2147483647, %v1299
        %vm1310 = vcmp.eq.f32.partialorder %v1309, 8.507059e+37
        %v1311 = vand.u32 %v1299, 2147483648
        %v1312 = vor.u32 1.1754944e-38, %v1311
        %v1313 = vsel %vm1310, %v1312, %v1308
        %v1314 = vmul.f32 1.0, %v1313
        %v1315 = vtanh.pop %v1255
        %v1317 = vrot.slane %v1181, 1
        %v1319 = vmul.f32 %v1314, %v1317
        %1321 = vrot.lane.b32.xlu0 %v1315, 96
        %v1322 = vpop.permute.xlu0 %1321
        %v1324 = vmul.f32 %v1314, %v1322
        %1326 = vrot.lane.b32.xlu0 %v1324, 16
        %v1327 = vpop.permute.xlu0 %1326
        %v1329 = vadd.f32 %v1319, %v1327
        %v1330 = vtanh.pop %v1329
        %1332 = vrot.lane.b32.xlu0 %v1330, 32
        %v1333 = vpop.permute.xlu0 %1332
        %v1335 = vmul.f32 %v1314, %v1333
        %1336 = vset.pattern.permute.xlu0 3
        %1337 = vperm.xlu0 %1336, %v638
        %v1338 = vpop.permute.xlu0 %1337
        %v1340 = vmul.f32 %v1338, %v1295
        %1341 = vset.pattern.permute.xlu0 3
        %1342 = vperm.xlu0 %1341, %v772
        %v1343 = vpop.permute.xlu0 %1342
        %v1345 = vmul.f32 %v1343, %v1155
        %v1347 = vrot.slane %v1345, 7
        %v1349 = vadd.f32 %v1340, %v1347
        %v1350 = vmul.f32 %v1338, %v1289
        %v1351 = vmul.f32 %v1343, %v1161
        %v1353 = vrot.slane %v1351, 7
        %v1355 = vadd.f32 %v1350, %v1353
        %1356 = vset.pattern.permute.xlu0 12
        %1357 = vperm.xlu0 %1356, %v638
        %v1358 = vpop.permute.xlu0 %1357
        %v1360 = vmul.f32 %v1358, %v1335
        %1361 = vset.pattern.permute.xlu0 12
        %1362 = vperm.xlu0 %1361, %v772
        %v1363 = vpop.permute.xlu0 %1362
        %v1365 = vmul.f32 %v1363, %v1175
        %v1367 = vrot.slane %v1365, 1
        %v1369 = vadd.f32 %v1360, %v1367
        %v1370 = vmul.f32 %v1358, %v1329
        %v1371 = vmul.f32 %v1363, %v1181
        %v1373 = vrot.slane %v1371, 1
        %v1375 = vadd.f32 %v1370, %v1373
        %v1376 = vmul.f32 %v1338, %v1349
        %1378 = vrot.lane.b32.xlu0 %v1376, 80
        %v1379 = vpop.permute.xlu0 %1378
        %vm1381 = vcmask 125955
        %1382 = vst.msk [vmem:[#allocation2] sm:$0x8] %vm1381, %v1379
        %v1383 = vmul.f32 %v1358, %v1369
        %1385 = vrot.lane.b32.xlu0 %v1383, 96
        %v1386 = vpop.permute.xlu0 %1385
        %vm1388 = vcmask 258180
        %1389 = vst.msk [vmem:[#allocation2 + $0x8] sm:$0x10] %vm1388, %v1386
        %v1391 = vrot.slane %v1349, 3
        %1392 = vrot.lane.b32.xlu0 %v1391, 80
        %v1393 = vpop.permute.xlu0 %1392
        %v1394 = vsel %vm643, %v1393, 0
        %1396 = vmatpush.msra.mxu0 0.0
        %1397 = vmatpush.msra.mxu0 0.0
        %1398 = vmatpush.msra.mxu0 0.0
        %1399 = vmatpush.msra.mxu0 0.0
        %1400 = vmatpush.msra.mxu0 0.0
        %1401 = vmatpush.msra.mxu0 0.0
        %1402 = vmatpush.msra.mxu0 0.0
        %1403 = vmatpush.msra.mxu0 0.0
        %1404 = vmatpush.msra.mxu0 0.0
        %1405 = vmatpush.msra.mxu0 0.0
        %1406 = vmatpush.msra.mxu0 0.0
        %1407 = vmatpush.msra.mxu0 0.0
        %1408 = vmatpush.msra.mxu0 0.0
        %1409 = vmatpush.msra.mxu0 0.0
        %1410 = vmatpush.msra.mxu0 %v640
        %1411 = vmatpush.msra.mxu0 %v639
        %1412 = vmatmul.f32.gmra.mxu0 %v1394
        %v1413 = vpop.f32.mrf.mxu0
        %v1414 = vadd.f32 0.0, %v1413
        %1415 = vdwg.mxu0
        %v1417 = vrot.slane %v1414, 4
        %v1419 = vadd.f32 %v601, %v1417
        %v1421 = vrot.slane %v1369, 4
        %1422 = vrot.lane.b32.xlu0 %v1421, 80
        %v1423 = vpop.permute.xlu0 %1422
        %v1424 = vsel %vm643, %v1423, 0
        %1426 = vmatpush.msra.mxu0 0.0
        %1427 = vmatpush.msra.mxu0 0.0
        %1428 = vmatpush.msra.mxu0 0.0
        %1429 = vmatpush.msra.mxu0 0.0
        %1430 = vmatpush.msra.mxu0 0.0
        %1431 = vmatpush.msra.mxu0 0.0
        %1432 = vmatpush.msra.mxu0 0.0
        %1433 = vmatpush.msra.mxu0 0.0
        %1434 = vmatpush.msra.mxu0 0.0
        %1435 = vmatpush.msra.mxu0 0.0
        %1436 = vmatpush.msra.mxu0 0.0
        %1437 = vmatpush.msra.mxu0 0.0
        %1438 = vmatpush.msra.mxu0 0.0
        %1439 = vmatpush.msra.mxu0 0.0
        %1440 = vmatpush.msra.mxu0 %v642
        %1441 = vmatpush.msra.mxu0 %v641
        %1442 = vmatmul.f32.gmra.mxu0 %v1424
        %v1443 = vpop.f32.mrf.mxu0
        %v1444 = vadd.f32 0.0, %v1443
        %1445 = vdwg.mxu0
        %v1447 = vrot.slane %v1444, 5
        %v1449 = vadd.f32 %v627, %v1447
        %v1450 = vxor.u32 %v1419, 2147483648
        %v1451 = vmul.f32 %v1450, 1.442695
        %v1452 = vpow.pop %v1451
        %v1453 = vadd.f32 %v1452, 1.0
        %v1454 = vrcp.pop %v1453
        %v1455 = vmul.f32 %v1453, %v1454
        %v1456 = vsub.f32 1.0, %v1455
        %v1457 = vmul.f32 %v1454, %v1456
        %v1458 = vadd.f32 %v1454, %v1457
        %vm1459 = vweird.f32 %v1453
        %vm1460 = vweird.f32 %v1454
        %vm1461 = vmor %vm1459, %vm1460
        %v1462 = vsel %vm1461, %v1454, %v1458
        %v1463 = vand.u32 2147483647, %v1453
        %vm1464 = vcmp.eq.f32.partialorder %v1463, 8.507059e+37
        %v1465 = vand.u32 %v1453, 2147483648
        %v1466 = vor.u32 1.1754944e-38, %v1465
        %v1467 = vsel %vm1464, %v1466, %v1462
        %v1468 = vmul.f32 1.0, %v1467
        %v1469 = vtanh.pop %v1419
        %v1471 = vrot.slane %v1355, 7
        %v1473 = vmul.f32 %v1468, %v1471
        %1475 = vrot.lane.b32.xlu0 %v1469, 96
        %v1476 = vpop.permute.xlu0 %1475
        %v1478 = vmul.f32 %v1468, %v1476
        %1480 = vrot.lane.b32.xlu0 %v1478, 16
        %v1481 = vpop.permute.xlu0 %1480
        %v1483 = vadd.f32 %v1473, %v1481
        %v1484 = vtanh.pop %v1483
        %1486 = vrot.lane.b32.xlu0 %v1484, 32
        %v1487 = vpop.permute.xlu0 %1486
        %v1489 = vmul.f32 %v1468, %v1487
        %v1490 = vxor.u32 %v1449, 2147483648
        %v1491 = vmul.f32 %v1490, 1.442695
        %v1492 = vpow.pop %v1491
        %v1493 = vadd.f32 %v1492, 1.0
        %v1494 = vrcp.pop %v1493
        %v1495 = vmul.f32 %v1493, %v1494
        %v1496 = vsub.f32 1.0, %v1495
        %v1497 = vmul.f32 %v1494, %v1496
        %v1498 = vadd.f32 %v1494, %v1497
        %vm1499 = vweird.f32 %v1493
        %vm1500 = vweird.f32 %v1494
        %vm1501 = vmor %vm1499, %vm1500
        %v1502 = vsel %vm1501, %v1494, %v1498
        %v1503 = vand.u32 2147483647, %v1493
        %vm1504 = vcmp.eq.f32.partialorder %v1503, 8.507059e+37
        %v1505 = vand.u32 %v1493, 2147483648
        %v1506 = vor.u32 1.1754944e-38, %v1505
        %v1507 = vsel %vm1504, %v1506, %v1502
        %v1508 = vmul.f32 1.0, %v1507
        %v1509 = vtanh.pop %v1449
        %v1511 = vrot.slane %v1375, 1
        %v1513 = vmul.f32 %v1508, %v1511
        %1515 = vrot.lane.b32.xlu0 %v1509, 96
        %v1516 = vpop.permute.xlu0 %1515
        %v1518 = vmul.f32 %v1508, %v1516
        %1520 = vrot.lane.b32.xlu0 %v1518, 16
        %v1521 = vpop.permute.xlu0 %1520
        %v1523 = vadd.f32 %v1513, %v1521
        %v1524 = vtanh.pop %v1523
        %1526 = vrot.lane.b32.xlu0 %v1524, 32
        %v1527 = vpop.permute.xlu0 %1526
        %v1529 = vmul.f32 %v1508, %v1527
        %1530 = vset.pattern.permute.xlu0 4
        %1531 = vperm.xlu0 %1530, %v638
        %v1532 = vpop.permute.xlu0 %1531
        %v1534 = vmul.f32 %v1532, %v1489
        %1535 = vset.pattern.permute.xlu0 4
        %1536 = vperm.xlu0 %1535, %v772
        %v1537 = vpop.permute.xlu0 %1536
        %v1539 = vmul.f32 %v1537, %v1349
        %v1541 = vrot.slane %v1539, 7
        %v1543 = vadd.f32 %v1534, %v1541
        %v1544 = vmul.f32 %v1532, %v1483
        %v1545 = vmul.f32 %v1537, %v1355
        %v1547 = vrot.slane %v1545, 7
        %v1549 = vadd.f32 %v1544, %v1547
        %1550 = vset.pattern.permute.xlu0 11
        %1551 = vperm.xlu0 %1550, %v638
        %v1552 = vpop.permute.xlu0 %1551
        %v1554 = vmul.f32 %v1552, %v1529
        %1555 = vset.pattern.permute.xlu0 11
        %1556 = vperm.xlu0 %1555, %v772
        %v1557 = vpop.permute.xlu0 %1556
        %v1559 = vmul.f32 %v1557, %v1369
        %v1561 = vrot.slane %v1559, 1
        %v1563 = vadd.f32 %v1554, %v1561
        %v1564 = vmul.f32 %v1552, %v1523
        %v1565 = vmul.f32 %v1557, %v1375
        %v1567 = vrot.slane %v1565, 1
        %v1569 = vadd.f32 %v1564, %v1567
        %v1570 = vmul.f32 %v1532, %v1543
        %1572 = vrot.lane.b32.xlu0 %v1570, 80
        %v1573 = vpop.permute.xlu0 %1572
        %vm1575 = vcmask 126980
        %1576 = vst.msk [vmem:[#allocation2] sm:$0x10] %vm1575, %v1573
        %v1577 = vmul.f32 %v1552, %v1563
        %1579 = vrot.lane.b32.xlu0 %v1577, 96
        %v1580 = vpop.permute.xlu0 %1579
        %vm1582 = vcmask 257155
        %1583 = vst.msk [vmem:[#allocation2 + $0x8] sm:$0x8] %vm1582, %v1580
        %v1585 = vrot.slane %v1543, 4
        %1586 = vrot.lane.b32.xlu0 %v1585, 80
        %v1587 = vpop.permute.xlu0 %1586
        %v1588 = vsel %vm643, %v1587, 0
        %1590 = vmatpush.msra.mxu0 0.0
        %1591 = vmatpush.msra.mxu0 0.0
        %1592 = vmatpush.msra.mxu0 0.0
        %1593 = vmatpush.msra.mxu0 0.0
        %1594 = vmatpush.msra.mxu0 0.0
        %1595 = vmatpush.msra.mxu0 0.0
        %1596 = vmatpush.msra.mxu0 0.0
        %1597 = vmatpush.msra.mxu0 0.0
        %1598 = vmatpush.msra.mxu0 0.0
        %1599 = vmatpush.msra.mxu0 0.0
        %1600 = vmatpush.msra.mxu0 0.0
        %1601 = vmatpush.msra.mxu0 0.0
        %1602 = vmatpush.msra.mxu0 0.0
        %1603 = vmatpush.msra.mxu0 0.0
        %1604 = vmatpush.msra.mxu0 %v640
        %1605 = vmatpush.msra.mxu0 %v639
        %1606 = vmatmul.f32.gmra.mxu0 %v1588
        %v1607 = vpop.f32.mrf.mxu0
        %v1608 = vadd.f32 0.0, %v1607
        %1609 = vdwg.mxu0
        %v1611 = vrot.slane %v1608, 3
        %v1613 = vadd.f32 %v601, %v1611
        %v1615 = vrot.slane %v1563, 3
        %1616 = vrot.lane.b32.xlu0 %v1615, 80
        %v1617 = vpop.permute.xlu0 %1616
        %v1618 = vsel %vm643, %v1617, 0
        %1620 = vmatpush.msra.mxu0 0.0
        %1621 = vmatpush.msra.mxu0 0.0
        %1622 = vmatpush.msra.mxu0 0.0
        %1623 = vmatpush.msra.mxu0 0.0
        %1624 = vmatpush.msra.mxu0 0.0
        %1625 = vmatpush.msra.mxu0 0.0
        %1626 = vmatpush.msra.mxu0 0.0
        %1627 = vmatpush.msra.mxu0 0.0
        %1628 = vmatpush.msra.mxu0 0.0
        %1629 = vmatpush.msra.mxu0 0.0
        %1630 = vmatpush.msra.mxu0 0.0
        %1631 = vmatpush.msra.mxu0 0.0
        %1632 = vmatpush.msra.mxu0 0.0
        %1633 = vmatpush.msra.mxu0 0.0
        %1634 = vmatpush.msra.mxu0 %v642
        %1635 = vmatpush.msra.mxu0 %v641
        %1636 = vmatmul.f32.gmra.mxu0 %v1618
        %v1637 = vpop.f32.mrf.mxu0
        %v1638 = vadd.f32 0.0, %v1637
        %1639 = vdwg.mxu0
        %v1641 = vrot.slane %v1638, 6
        %v1643 = vadd.f32 %v627, %v1641
        %v1644 = vxor.u32 %v1613, 2147483648
        %v1645 = vmul.f32 %v1644, 1.442695
        %v1646 = vpow.pop %v1645
        %v1647 = vadd.f32 %v1646, 1.0
        %v1648 = vrcp.pop %v1647
        %v1649 = vmul.f32 %v1647, %v1648
        %v1650 = vsub.f32 1.0, %v1649
        %v1651 = vmul.f32 %v1648, %v1650
        %v1652 = vadd.f32 %v1648, %v1651
        %vm1653 = vweird.f32 %v1647
        %vm1654 = vweird.f32 %v1648
        %vm1655 = vmor %vm1653, %vm1654
        %v1656 = vsel %vm1655, %v1648, %v1652
        %v1657 = vand.u32 2147483647, %v1647
        %vm1658 = vcmp.eq.f32.partialorder %v1657, 8.507059e+37
        %v1659 = vand.u32 %v1647, 2147483648
        %v1660 = vor.u32 1.1754944e-38, %v1659
        %v1661 = vsel %vm1658, %v1660, %v1656
        %v1662 = vmul.f32 1.0, %v1661
        %v1663 = vtanh.pop %v1613
        %v1665 = vrot.slane %v1549, 7
        %v1667 = vmul.f32 %v1662, %v1665
        %1669 = vrot.lane.b32.xlu0 %v1663, 96
        %v1670 = vpop.permute.xlu0 %1669
        %v1672 = vmul.f32 %v1662, %v1670
        %1674 = vrot.lane.b32.xlu0 %v1672, 16
        %v1675 = vpop.permute.xlu0 %1674
        %v1677 = vadd.f32 %v1667, %v1675
        %v1678 = vtanh.pop %v1677
        %1680 = vrot.lane.b32.xlu0 %v1678, 32
        %v1681 = vpop.permute.xlu0 %1680
        %v1683 = vmul.f32 %v1662, %v1681
        %v1684 = vxor.u32 %v1643, 2147483648
        %v1685 = vmul.f32 %v1684, 1.442695
        %v1686 = vpow.pop %v1685
        %v1687 = vadd.f32 %v1686, 1.0
        %v1688 = vrcp.pop %v1687
        %v1689 = vmul.f32 %v1687, %v1688
        %v1690 = vsub.f32 1.0, %v1689
        %v1691 = vmul.f32 %v1688, %v1690
        %v1692 = vadd.f32 %v1688, %v1691
        %vm1693 = vweird.f32 %v1687
        %vm1694 = vweird.f32 %v1688
        %vm1695 = vmor %vm1693, %vm1694
        %v1696 = vsel %vm1695, %v1688, %v1692
        %v1697 = vand.u32 2147483647, %v1687
        %vm1698 = vcmp.eq.f32.partialorder %v1697, 8.507059e+37
        %v1699 = vand.u32 %v1687, 2147483648
        %v1700 = vor.u32 1.1754944e-38, %v1699
        %v1701 = vsel %vm1698, %v1700, %v1696
        %v1702 = vmul.f32 1.0, %v1701
        %v1703 = vtanh.pop %v1643
        %v1705 = vrot.slane %v1569, 1
        %v1707 = vmul.f32 %v1702, %v1705
        %1709 = vrot.lane.b32.xlu0 %v1703, 96
        %v1710 = vpop.permute.xlu0 %1709
        %v1712 = vmul.f32 %v1702, %v1710
        %1714 = vrot.lane.b32.xlu0 %v1712, 16
        %v1715 = vpop.permute.xlu0 %1714
        %v1717 = vadd.f32 %v1707, %v1715
        %v1718 = vtanh.pop %v1717
        %1720 = vrot.lane.b32.xlu0 %v1718, 32
        %v1721 = vpop.permute.xlu0 %1720
        %v1723 = vmul.f32 %v1702, %v1721
        %1724 = vset.pattern.permute.xlu0 5
        %1725 = vperm.xlu0 %1724, %v638
        %v1726 = vpop.permute.xlu0 %1725
        %v1728 = vmul.f32 %v1726, %v1683
        %1729 = vset.pattern.permute.xlu0 5
        %1730 = vperm.xlu0 %1729, %v772
        %v1731 = vpop.permute.xlu0 %1730
        %v1733 = vmul.f32 %v1731, %v1543
        %v1735 = vrot.slane %v1733, 7
        %v1737 = vadd.f32 %v1728, %v1735
        %v1738 = vmul.f32 %v1726, %v1677
        %v1739 = vmul.f32 %v1731, %v1549
        %v1741 = vrot.slane %v1739, 7
        %v1743 = vadd.f32 %v1738, %v1741
        %1744 = vset.pattern.permute.xlu0 10
        %1745 = vperm.xlu0 %1744, %v638
        %v1746 = vpop.permute.xlu0 %1745
        %v1748 = vmul.f32 %v1746, %v1723
        %1749 = vset.pattern.permute.xlu0 10
        %1750 = vperm.xlu0 %1749, %v772
        %v1751 = vpop.permute.xlu0 %1750
        %v1753 = vmul.f32 %v1751, %v1563
        %v1755 = vrot.slane %v1753, 1
        %v1757 = vadd.f32 %v1748, %v1755
        %v1758 = vmul.f32 %v1746, %v1717
        %v1759 = vmul.f32 %v1751, %v1569
        %v1761 = vrot.slane %v1759, 1
        %v1763 = vadd.f32 %v1758, %v1761
        %v1764 = vmul.f32 %v1726, %v1737
        %1766 = vrot.lane.b32.xlu0 %v1764, 80
        %v1767 = vpop.permute.xlu0 %1766
        %vm1769 = vcmask 128005
        %1770 = vst.msk [vmem:[#allocation2] sm:$0x20] %vm1769, %v1767
        %v1771 = vmul.f32 %v1746, %v1757
        %1773 = vrot.lane.b32.xlu0 %v1771, 96
        %v1774 = vpop.permute.xlu0 %1773
        %vm1776 = vcmask 256130
        %1777 = vst.msk [vmem:[#allocation2 + $0x8] sm:$0x4] %vm1776, %v1774
        %v1779 = vrot.slane %v1737, 5
        %1780 = vrot.lane.b32.xlu0 %v1779, 80
        %v1781 = vpop.permute.xlu0 %1780
        %v1782 = vsel %vm643, %v1781, 0
        %1784 = vmatpush.msra.mxu0 0.0
        %1785 = vmatpush.msra.mxu0 0.0
        %1786 = vmatpush.msra.mxu0 0.0
        %1787 = vmatpush.msra.mxu0 0.0
        %1788 = vmatpush.msra.mxu0 0.0
        %1789 = vmatpush.msra.mxu0 0.0
        %1790 = vmatpush.msra.mxu0 0.0
        %1791 = vmatpush.msra.mxu0 0.0
        %1792 = vmatpush.msra.mxu0 0.0
        %1793 = vmatpush.msra.mxu0 0.0
        %1794 = vmatpush.msra.mxu0 0.0
        %1795 = vmatpush.msra.mxu0 0.0
        %1796 = vmatpush.msra.mxu0 0.0
        %1797 = vmatpush.msra.mxu0 0.0
        %1798 = vmatpush.msra.mxu0 %v640
        %1799 = vmatpush.msra.mxu0 %v639
        %1800 = vmatmul.f32.gmra.mxu0 %v1782
        %v1801 = vpop.f32.mrf.mxu0
        %v1802 = vadd.f32 0.0, %v1801
        %1803 = vdwg.mxu0
        %v1805 = vrot.slane %v1802, 2
        %v1807 = vadd.f32 %v601, %v1805
        %v1809 = vrot.slane %v1757, 2
        %1810 = vrot.lane.b32.xlu0 %v1809, 80
        %v1811 = vpop.permute.xlu0 %1810
        %v1812 = vsel %vm643, %v1811, 0
        %1814 = vmatpush.msra.mxu0 0.0
        %1815 = vmatpush.msra.mxu0 0.0
        %1816 = vmatpush.msra.mxu0 0.0
        %1817 = vmatpush.msra.mxu0 0.0
        %1818 = vmatpush.msra.mxu0 0.0
        %1819 = vmatpush.msra.mxu0 0.0
        %1820 = vmatpush.msra.mxu0 0.0
        %1821 = vmatpush.msra.mxu0 0.0
        %1822 = vmatpush.msra.mxu0 0.0
        %1823 = vmatpush.msra.mxu0 0.0
        %1824 = vmatpush.msra.mxu0 0.0
        %1825 = vmatpush.msra.mxu0 0.0
        %1826 = vmatpush.msra.mxu0 0.0
        %1827 = vmatpush.msra.mxu0 0.0
        %1828 = vmatpush.msra.mxu0 %v642
        %1829 = vmatpush.msra.mxu0 %v641
        %1830 = vmatmul.f32.gmra.mxu0 %v1812
        %v1831 = vpop.f32.mrf.mxu0
        %v1832 = vadd.f32 0.0, %v1831
        %1833 = vdwg.mxu0
        %v1835 = vrot.slane %v1832, 7
        %v1837 = vadd.f32 %v627, %v1835
        %v1838 = vxor.u32 %v1807, 2147483648
        %v1839 = vmul.f32 %v1838, 1.442695
        %v1840 = vpow.pop %v1839
        %v1841 = vadd.f32 %v1840, 1.0
        %v1842 = vrcp.pop %v1841
        %v1843 = vmul.f32 %v1841, %v1842
        %v1844 = vsub.f32 1.0, %v1843
        %v1845 = vmul.f32 %v1842, %v1844
        %v1846 = vadd.f32 %v1842, %v1845
        %vm1847 = vweird.f32 %v1841
        %vm1848 = vweird.f32 %v1842
        %vm1849 = vmor %vm1847, %vm1848
        %v1850 = vsel %vm1849, %v1842, %v1846
        %v1851 = vand.u32 2147483647, %v1841
        %vm1852 = vcmp.eq.f32.partialorder %v1851, 8.507059e+37
        %v1853 = vand.u32 %v1841, 2147483648
        %v1854 = vor.u32 1.1754944e-38, %v1853
        %v1855 = vsel %vm1852, %v1854, %v1850
        %v1856 = vmul.f32 1.0, %v1855
        %v1857 = vtanh.pop %v1807
        %v1859 = vrot.slane %v1743, 7
        %v1861 = vmul.f32 %v1856, %v1859
        %1863 = vrot.lane.b32.xlu0 %v1857, 96
        %v1864 = vpop.permute.xlu0 %1863
        %v1866 = vmul.f32 %v1856, %v1864
        %1868 = vrot.lane.b32.xlu0 %v1866, 16
        %v1869 = vpop.permute.xlu0 %1868
        %v1871 = vadd.f32 %v1861, %v1869
        %v1872 = vtanh.pop %v1871
        %1874 = vrot.lane.b32.xlu0 %v1872, 32
        %v1875 = vpop.permute.xlu0 %1874
        %v1877 = vmul.f32 %v1856, %v1875
        %v1878 = vxor.u32 %v1837, 2147483648
        %v1879 = vmul.f32 %v1878, 1.442695
        %v1880 = vpow.pop %v1879
        %v1881 = vadd.f32 %v1880, 1.0
        %v1882 = vrcp.pop %v1881
        %v1883 = vmul.f32 %v1881, %v1882
        %v1884 = vsub.f32 1.0, %v1883
        %v1885 = vmul.f32 %v1882, %v1884
        %v1886 = vadd.f32 %v1882, %v1885
        %vm1887 = vweird.f32 %v1881
        %vm1888 = vweird.f32 %v1882
        %vm1889 = vmor %vm1887, %vm1888
        %v1890 = vsel %vm1889, %v1882, %v1886
        %v1891 = vand.u32 2147483647, %v1881
        %vm1892 = vcmp.eq.f32.partialorder %v1891, 8.507059e+37
        %v1893 = vand.u32 %v1881, 2147483648
        %v1894 = vor.u32 1.1754944e-38, %v1893
        %v1895 = vsel %vm1892, %v1894, %v1890
        %v1896 = vmul.f32 1.0, %v1895
        %v1897 = vtanh.pop %v1837
        %v1899 = vrot.slane %v1763, 1
        %v1901 = vmul.f32 %v1896, %v1899
        %1903 = vrot.lane.b32.xlu0 %v1897, 96
        %v1904 = vpop.permute.xlu0 %1903
        %v1906 = vmul.f32 %v1896, %v1904
        %1908 = vrot.lane.b32.xlu0 %v1906, 16
        %v1909 = vpop.permute.xlu0 %1908
        %v1911 = vadd.f32 %v1901, %v1909
        %v1912 = vtanh.pop %v1911
        %1914 = vrot.lane.b32.xlu0 %v1912, 32
        %v1915 = vpop.permute.xlu0 %1914
        %v1917 = vmul.f32 %v1896, %v1915
        %1918 = vset.pattern.permute.xlu0 6
        %1919 = vperm.xlu0 %1918, %v638
        %v1920 = vpop.permute.xlu0 %1919
        %v1922 = vmul.f32 %v1920, %v1877
        %1923 = vset.pattern.permute.xlu0 6
        %1924 = vperm.xlu0 %1923, %v772
        %v1925 = vpop.permute.xlu0 %1924
        %v1927 = vmul.f32 %v1925, %v1737
        %v1929 = vrot.slane %v1927, 7
        %v1931 = vadd.f32 %v1922, %v1929
        %v1932 = vmul.f32 %v1920, %v1871
        %v1933 = vmul.f32 %v1925, %v1743
        %v1935 = vrot.slane %v1933, 7
        %v1937 = vadd.f32 %v1932, %v1935
        %1938 = vset.pattern.permute.xlu0 9
        %1939 = vperm.xlu0 %1938, %v638
        %v1940 = vpop.permute.xlu0 %1939
        %v1942 = vmul.f32 %v1940, %v1917
        %1943 = vset.pattern.permute.xlu0 9
        %1944 = vperm.xlu0 %1943, %v772
        %v1945 = vpop.permute.xlu0 %1944
        %v1947 = vmul.f32 %v1945, %v1757
        %v1949 = vrot.slane %v1947, 1
        %v1951 = vadd.f32 %v1942, %v1949
        %v1952 = vmul.f32 %v1940, %v1911
        %v1953 = vmul.f32 %v1945, %v1763
        %v1955 = vrot.slane %v1953, 1
        %v1957 = vadd.f32 %v1952, %v1955
        %v1958 = vmul.f32 %v1920, %v1931
        %1960 = vrot.lane.b32.xlu0 %v1958, 80
        %v1961 = vpop.permute.xlu0 %1960
        %vm1963 = vcmask 129030
        %1964 = vst.msk [vmem:[#allocation2] sm:$0x40] %vm1963, %v1961
        %v1965 = vmul.f32 %v1940, %v1951
        %1967 = vrot.lane.b32.xlu0 %v1965, 96
        %v1968 = vpop.permute.xlu0 %1967
        %vm1970 = vcmask 255105
        %1971 = vst.msk [vmem:[#allocation2 + $0x8] sm:$0x2] %vm1970, %v1968
        %v1973 = vrot.slane %v1931, 6
        %1974 = vrot.lane.b32.xlu0 %v1973, 80
        %v1975 = vpop.permute.xlu0 %1974
        %v1976 = vsel %vm643, %v1975, 0
        %1978 = vmatpush.msra.mxu0 0.0
        %1979 = vmatpush.msra.mxu0 0.0
        %1980 = vmatpush.msra.mxu0 0.0
        %1981 = vmatpush.msra.mxu0 0.0
        %1982 = vmatpush.msra.mxu0 0.0
        %1983 = vmatpush.msra.mxu0 0.0
        %1984 = vmatpush.msra.mxu0 0.0
        %1985 = vmatpush.msra.mxu0 0.0
        %1986 = vmatpush.msra.mxu0 0.0
        %1987 = vmatpush.msra.mxu0 0.0
        %1988 = vmatpush.msra.mxu0 0.0
        %1989 = vmatpush.msra.mxu0 0.0
        %1990 = vmatpush.msra.mxu0 0.0
        %1991 = vmatpush.msra.mxu0 0.0
        %1992 = vmatpush.msra.mxu0 %v640
        %1993 = vmatpush.msra.mxu0 %v639
        %1994 = vmatmul.f32.gmra.mxu0 %v1976
        %v1995 = vpop.f32.mrf.mxu0
        %v1996 = vadd.f32 0.0, %v1995
        %1997 = vdwg.mxu0
        %v1999 = vrot.slane %v1996, 1
        %v2001 = vadd.f32 %v601, %v1999
        %v2003 = vrot.slane %v1951, 1
        %2004 = vrot.lane.b32.xlu0 %v2003, 80
        %v2005 = vpop.permute.xlu0 %2004
        %v2006 = vsel %vm643, %v2005, 0
        %2008 = vmatpush.msra.mxu0 0.0
        %2009 = vmatpush.msra.mxu0 0.0
        %2010 = vmatpush.msra.mxu0 0.0
        %2011 = vmatpush.msra.mxu0 0.0
        %2012 = vmatpush.msra.mxu0 0.0
        %2013 = vmatpush.msra.mxu0 0.0
        %2014 = vmatpush.msra.mxu0 0.0
        %2015 = vmatpush.msra.mxu0 0.0
        %2016 = vmatpush.msra.mxu0 0.0
        %2017 = vmatpush.msra.mxu0 0.0
        %2018 = vmatpush.msra.mxu0 0.0
        %2019 = vmatpush.msra.mxu0 0.0
        %2020 = vmatpush.msra.mxu0 0.0
        %2021 = vmatpush.msra.mxu0 0.0
        %2022 = vmatpush.msra.mxu0 %v642
        %2023 = vmatpush.msra.mxu0 %v641
        %2024 = vmatmul.f32.gmra.mxu0 %v2006
        %v2025 = vpop.f32.mrf.mxu0
        %v2026 = vadd.f32 0.0, %v2025
        %2027 = vdwg.mxu0
        %v2028 = vadd.f32 %v627, %v2026
        %v2029 = vxor.u32 %v2001, 2147483648
        %v2030 = vmul.f32 %v2029, 1.442695
        %v2031 = vpow.pop %v2030
        %v2032 = vadd.f32 %v2031, 1.0
        %v2033 = vrcp.pop %v2032
        %v2034 = vmul.f32 %v2032, %v2033
        %v2035 = vsub.f32 1.0, %v2034
        %v2036 = vmul.f32 %v2033, %v2035
        %v2037 = vadd.f32 %v2033, %v2036
        %vm2038 = vweird.f32 %v2032
        %vm2039 = vweird.f32 %v2033
        %vm2040 = vmor %vm2038, %vm2039
        %v2041 = vsel %vm2040, %v2033, %v2037
        %v2042 = vand.u32 2147483647, %v2032
        %vm2043 = vcmp.eq.f32.partialorder %v2042, 8.507059e+37
        %v2044 = vand.u32 %v2032, 2147483648
        %v2045 = vor.u32 1.1754944e-38, %v2044
        %v2046 = vsel %vm2043, %v2045, %v2041
        %v2047 = vmul.f32 1.0, %v2046
        %v2048 = vtanh.pop %v2001
        %v2050 = vrot.slane %v1937, 7
        %v2052 = vmul.f32 %v2047, %v2050
        %2054 = vrot.lane.b32.xlu0 %v2048, 96
        %v2055 = vpop.permute.xlu0 %2054
        %v2057 = vmul.f32 %v2047, %v2055
        %2059 = vrot.lane.b32.xlu0 %v2057, 16
        %v2060 = vpop.permute.xlu0 %2059
        %v2062 = vadd.f32 %v2052, %v2060
        %v2063 = vtanh.pop %v2062
        %2065 = vrot.lane.b32.xlu0 %v2063, 32
        %v2066 = vpop.permute.xlu0 %2065
        %v2068 = vmul.f32 %v2047, %v2066
        %v2069 = vxor.u32 %v2028, 2147483648
        %v2070 = vmul.f32 %v2069, 1.442695
        %v2071 = vpow.pop %v2070
        %v2072 = vadd.f32 %v2071, 1.0
        %v2073 = vrcp.pop %v2072
        %v2074 = vmul.f32 %v2072, %v2073
        %v2075 = vsub.f32 1.0, %v2074
        %v2076 = vmul.f32 %v2073, %v2075
        %v2077 = vadd.f32 %v2073, %v2076
        %vm2078 = vweird.f32 %v2072
        %vm2079 = vweird.f32 %v2073
        %vm2080 = vmor %vm2078, %vm2079
        %v2081 = vsel %vm2080, %v2073, %v2077
        %v2082 = vand.u32 2147483647, %v2072
        %vm2083 = vcmp.eq.f32.partialorder %v2082, 8.507059e+37
        %v2084 = vand.u32 %v2072, 2147483648
        %v2085 = vor.u32 1.1754944e-38, %v2084
        %v2086 = vsel %vm2083, %v2085, %v2081
        %v2087 = vmul.f32 1.0, %v2086
        %v2088 = vtanh.pop %v2028
        %v2090 = vrot.slane %v1957, 1
        %v2092 = vmul.f32 %v2087, %v2090
        %2094 = vrot.lane.b32.xlu0 %v2088, 96
        %v2095 = vpop.permute.xlu0 %2094
        %v2097 = vmul.f32 %v2087, %v2095
        %2099 = vrot.lane.b32.xlu0 %v2097, 16
        %v2100 = vpop.permute.xlu0 %2099
        %v2102 = vadd.f32 %v2092, %v2100
        %v2103 = vtanh.pop %v2102
        %2105 = vrot.lane.b32.xlu0 %v2103, 32
        %v2106 = vpop.permute.xlu0 %2105
        %v2108 = vmul.f32 %v2087, %v2106
        %2109 = vset.pattern.permute.xlu0 7
        %2110 = vperm.xlu0 %2109, %v638
        %v2111 = vpop.permute.xlu0 %2110
        %v2113 = vmul.f32 %v2111, %v2068
        %2114 = vset.pattern.permute.xlu0 7
        %2115 = vperm.xlu0 %2114, %v772
        %v2116 = vpop.permute.xlu0 %2115
        %v2118 = vmul.f32 %v2116, %v1931
        %v2120 = vrot.slane %v2118, 7
        %v2122 = vadd.f32 %v2113, %v2120
        %v2123 = vmul.f32 %v2111, %v2062
        %v2124 = vmul.f32 %v2116, %v1937
        %v2126 = vrot.slane %v2124, 7
        %v2128 = vadd.f32 %v2123, %v2126
        %2129 = vset.pattern.permute.xlu0 8
        %2130 = vperm.xlu0 %2129, %v638
        %v2131 = vpop.permute.xlu0 %2130
        %v2133 = vmul.f32 %v2131, %v2108
        %2134 = vset.pattern.permute.xlu0 8
        %2135 = vperm.xlu0 %2134, %v772
        %v2136 = vpop.permute.xlu0 %2135
        %v2138 = vmul.f32 %v2136, %v1951
        %v2140 = vrot.slane %v2138, 1
        %v2142 = vadd.f32 %v2133, %v2140
        %v2143 = vmul.f32 %v2131, %v2102
        %v2144 = vmul.f32 %v2136, %v1957
        %v2146 = vrot.slane %v2144, 1
        %v2148 = vadd.f32 %v2143, %v2146
        %v2149 = vmul.f32 %v2111, %v2122
        %2151 = vrot.lane.b32.xlu0 %v2149, 80
        %v2152 = vpop.permute.xlu0 %2151
        %vm2154 = vcmask 130055
        %2155 = vst.msk [vmem:[#allocation2] sm:$0x80] %vm2154, %v2152
        %v2156 = vmul.f32 %v2131, %v2142
        %2158 = vrot.lane.b32.xlu0 %v2156, 96
        %v2159 = vpop.permute.xlu0 %2158
        %vm2161 = vcmask 254080
        %2162 = vst.msk [vmem:[#allocation2 + $0x8] sm:$0x1] %vm2161, %v2159
        %v2164 = vrot.slane %v2122, 7
        %2165 = vrot.lane.b32.xlu0 %v2164, 80
        %v2166 = vpop.permute.xlu0 %2165
        %v2167 = vsel %vm643, %v2166, 0
        %2169 = vmatpush.msra.mxu0 0.0
        %2170 = vmatpush.msra.mxu0 0.0
        %2171 = vmatpush.msra.mxu0 0.0
        %2172 = vmatpush.msra.mxu0 0.0
        %2173 = vmatpush.msra.mxu0 0.0
        %2174 = vmatpush.msra.mxu0 0.0
        %2175 = vmatpush.msra.mxu0 0.0
        %2176 = vmatpush.msra.mxu0 0.0
        %2177 = vmatpush.msra.mxu0 0.0
        %2178 = vmatpush.msra.mxu0 0.0
        %2179 = vmatpush.msra.mxu0 0.0
        %2180 = vmatpush.msra.mxu0 0.0
        %2181 = vmatpush.msra.mxu0 0.0
        %2182 = vmatpush.msra.mxu0 0.0
        %2183 = vmatpush.msra.mxu0 %v640
        %2184 = vmatpush.msra.mxu0 %v639
        %2185 = vmatmul.f32.gmra.mxu0 %v2167
        %v2186 = vpop.f32.mrf.mxu0
        %v2187 = vadd.f32 0.0, %v2186
        %2188 = vdwg.mxu0
        %v2189 = vadd.f32 %v603, %v2187
        %2191 = vrot.lane.b32.xlu0 %v2142, 80
        %v2192 = vpop.permute.xlu0 %2191
        %v2193 = vsel %vm643, %v2192, 0
        %2195 = vmatpush.msra.mxu0 0.0
        %2196 = vmatpush.msra.mxu0 0.0
        %2197 = vmatpush.msra.mxu0 0.0
        %2198 = vmatpush.msra.mxu0 0.0
        %2199 = vmatpush.msra.mxu0 0.0
        %2200 = vmatpush.msra.mxu0 0.0
        %2201 = vmatpush.msra.mxu0 0.0
        %2202 = vmatpush.msra.mxu0 0.0
        %2203 = vmatpush.msra.mxu0 0.0
        %2204 = vmatpush.msra.mxu0 0.0
        %2205 = vmatpush.msra.mxu0 0.0
        %2206 = vmatpush.msra.mxu0 0.0
        %2207 = vmatpush.msra.mxu0 0.0
        %2208 = vmatpush.msra.mxu0 0.0
        %2209 = vmatpush.msra.mxu0 %v642
        %2210 = vmatpush.msra.mxu0 %v641
        %2211 = vmatmul.f32.gmra.mxu0 %v2193
        %v2212 = vpop.f32.mrf.mxu0
        %v2213 = vadd.f32 0.0, %v2212
        %2214 = vdwg.mxu0
        %v2216 = vrot.slane %v2213, 1
        %v2218 = vadd.f32 %v625, %v2216
        %v2219 = vxor.u32 %v2189, 2147483648
        %v2220 = vmul.f32 %v2219, 1.442695
        %v2221 = vpow.pop %v2220
        %v2222 = vadd.f32 %v2221, 1.0
        %v2223 = vrcp.pop %v2222
        %v2224 = vmul.f32 %v2222, %v2223
        %v2225 = vsub.f32 1.0, %v2224
        %v2226 = vmul.f32 %v2223, %v2225
        %v2227 = vadd.f32 %v2223, %v2226
        %vm2228 = vweird.f32 %v2222
        %vm2229 = vweird.f32 %v2223
        %vm2230 = vmor %vm2228, %vm2229
        %v2231 = vsel %vm2230, %v2223, %v2227
        %v2232 = vand.u32 2147483647, %v2222
        %vm2233 = vcmp.eq.f32.partialorder %v2232, 8.507059e+37
        %v2234 = vand.u32 %v2222, 2147483648
        %v2235 = vor.u32 1.1754944e-38, %v2234
        %v2236 = vsel %vm2233, %v2235, %v2231
        %v2237 = vmul.f32 1.0, %v2236
        %v2238 = vtanh.pop %v2189
        %v2240 = vrot.slane %v2128, 7
        %v2242 = vmul.f32 %v2237, %v2240
        %2244 = vrot.lane.b32.xlu0 %v2238, 96
        %v2245 = vpop.permute.xlu0 %2244
        %v2247 = vmul.f32 %v2237, %v2245
        %2249 = vrot.lane.b32.xlu0 %v2247, 16
        %v2250 = vpop.permute.xlu0 %2249
        %v2252 = vadd.f32 %v2242, %v2250
        %v2253 = vtanh.pop %v2252
        %2255 = vrot.lane.b32.xlu0 %v2253, 32
        %v2256 = vpop.permute.xlu0 %2255
        %v2258 = vmul.f32 %v2237, %v2256
        %v2259 = vxor.u32 %v2218, 2147483648
        %v2260 = vmul.f32 %v2259, 1.442695
        %v2261 = vpow.pop %v2260
        %v2262 = vadd.f32 %v2261, 1.0
        %v2263 = vrcp.pop %v2262
        %v2264 = vmul.f32 %v2262, %v2263
        %v2265 = vsub.f32 1.0, %v2264
        %v2266 = vmul.f32 %v2263, %v2265
        %v2267 = vadd.f32 %v2263, %v2266
        %vm2268 = vweird.f32 %v2262
        %vm2269 = vweird.f32 %v2263
        %vm2270 = vmor %vm2268, %vm2269
        %v2271 = vsel %vm2270, %v2263, %v2267
        %v2272 = vand.u32 2147483647, %v2262
        %vm2273 = vcmp.eq.f32.partialorder %v2272, 8.507059e+37
        %v2274 = vand.u32 %v2262, 2147483648
        %v2275 = vor.u32 1.1754944e-38, %v2274
        %v2276 = vsel %vm2273, %v2275, %v2271
        %v2277 = vmul.f32 1.0, %v2276
        %v2278 = vtanh.pop %v2218
        %v2280 = vrot.slane %v2148, 1
        %v2282 = vmul.f32 %v2277, %v2280
        %2284 = vrot.lane.b32.xlu0 %v2278, 96
        %v2285 = vpop.permute.xlu0 %2284
        %v2287 = vmul.f32 %v2277, %v2285
        %2289 = vrot.lane.b32.xlu0 %v2287, 16
        %v2290 = vpop.permute.xlu0 %2289
        %v2292 = vadd.f32 %v2282, %v2290
        %v2293 = vtanh.pop %v2292
        %2295 = vrot.lane.b32.xlu0 %v2293, 32
        %v2296 = vpop.permute.xlu0 %2295
        %v2298 = vmul.f32 %v2277, %v2296
        %v2299 = vmul.f32 %v2131, %v2258
        %v2300 = vmul.f32 %v2136, %v2122
        %v2302 = vrot.slane %v2300, 7
        %v2304 = vadd.f32 %v2299, %v2302
        %v2305 = vmul.f32 %v2131, %v2252
        %v2306 = vmul.f32 %v2136, %v2128
        %v2308 = vrot.slane %v2306, 7
        %v2310 = vadd.f32 %v2305, %v2308
        %v2311 = vmul.f32 %v2111, %v2298
        %v2312 = vmul.f32 %v2116, %v2142
        %v2314 = vrot.slane %v2312, 1
        %v2316 = vadd.f32 %v2311, %v2314
        %v2317 = vmul.f32 %v2111, %v2292
        %v2318 = vmul.f32 %v2116, %v2148
        %v2320 = vrot.slane %v2318, 1
        %v2322 = vadd.f32 %v2317, %v2320
        %v2323 = vmul.f32 %v2131, %v2304
        %2325 = vrot.lane.b32.xlu0 %v2323, 80
        %v2326 = vpop.permute.xlu0 %2325
        %2328 = vst.msk [vmem:[#allocation2 + $0x8] sm:$0x1] %vm800, %v2326
        %v2329 = vmul.f32 %v2111, %v2316
        %2331 = vrot.lane.b32.xlu0 %v2329, 96
        %v2332 = vpop.permute.xlu0 %2331
        %2334 = vst.msk [vmem:[#allocation2] sm:$0x80] %vm807, %v2332
        %2336 = vrot.lane.b32.xlu0 %v2304, 80
        %v2337 = vpop.permute.xlu0 %2336
        %v2338 = vsel %vm643, %v2337, 0
        %2340 = vmatpush.msra.mxu0 0.0
        %2341 = vmatpush.msra.mxu0 0.0
        %2342 = vmatpush.msra.mxu0 0.0
        %2343 = vmatpush.msra.mxu0 0.0
        %2344 = vmatpush.msra.mxu0 0.0
        %2345 = vmatpush.msra.mxu0 0.0
        %2346 = vmatpush.msra.mxu0 0.0
        %2347 = vmatpush.msra.mxu0 0.0
        %2348 = vmatpush.msra.mxu0 0.0
        %2349 = vmatpush.msra.mxu0 0.0
        %2350 = vmatpush.msra.mxu0 0.0
        %2351 = vmatpush.msra.mxu0 0.0
        %2352 = vmatpush.msra.mxu0 0.0
        %2353 = vmatpush.msra.mxu0 0.0
        %2354 = vmatpush.msra.mxu0 %v640
        %2355 = vmatpush.msra.mxu0 %v639
        %2356 = vmatmul.f32.gmra.mxu0 %v2338
        %v2357 = vpop.f32.mrf.mxu0
        %v2358 = vadd.f32 0.0, %v2357
        %2359 = vdwg.mxu0
        %v2361 = vrot.slane %v2358, 7
        %v2363 = vadd.f32 %v603, %v2361
        %v2365 = vrot.slane %v2316, 7
        %2366 = vrot.lane.b32.xlu0 %v2365, 80
        %v2367 = vpop.permute.xlu0 %2366
        %v2368 = vsel %vm643, %v2367, 0
        %2370 = vmatpush.msra.mxu0 0.0
        %2371 = vmatpush.msra.mxu0 0.0
        %2372 = vmatpush.msra.mxu0 0.0
        %2373 = vmatpush.msra.mxu0 0.0
        %2374 = vmatpush.msra.mxu0 0.0
        %2375 = vmatpush.msra.mxu0 0.0
        %2376 = vmatpush.msra.mxu0 0.0
        %2377 = vmatpush.msra.mxu0 0.0
        %2378 = vmatpush.msra.mxu0 0.0
        %2379 = vmatpush.msra.mxu0 0.0
        %2380 = vmatpush.msra.mxu0 0.0
        %2381 = vmatpush.msra.mxu0 0.0
        %2382 = vmatpush.msra.mxu0 0.0
        %2383 = vmatpush.msra.mxu0 0.0
        %2384 = vmatpush.msra.mxu0 %v642
        %2385 = vmatpush.msra.mxu0 %v641
        %2386 = vmatmul.f32.gmra.mxu0 %v2368
        %v2387 = vpop.f32.mrf.mxu0
        %v2388 = vadd.f32 0.0, %v2387
        %2389 = vdwg.mxu0
        %v2391 = vrot.slane %v2388, 2
        %v2393 = vadd.f32 %v625, %v2391
        %v2394 = vxor.u32 %v2363, 2147483648
        %v2395 = vmul.f32 %v2394, 1.442695
        %v2396 = vpow.pop %v2395
        %v2397 = vadd.f32 %v2396, 1.0
        %v2398 = vrcp.pop %v2397
        %v2399 = vmul.f32 %v2397, %v2398
        %v2400 = vsub.f32 1.0, %v2399
        %v2401 = vmul.f32 %v2398, %v2400
        %v2402 = vadd.f32 %v2398, %v2401
        %vm2403 = vweird.f32 %v2397
        %vm2404 = vweird.f32 %v2398
        %vm2405 = vmor %vm2403, %vm2404
        %v2406 = vsel %vm2405, %v2398, %v2402
        %v2407 = vand.u32 2147483647, %v2397
        %vm2408 = vcmp.eq.f32.partialorder %v2407, 8.507059e+37
        %v2409 = vand.u32 %v2397, 2147483648
        %v2410 = vor.u32 1.1754944e-38, %v2409
        %v2411 = vsel %vm2408, %v2410, %v2406
        %v2412 = vmul.f32 1.0, %v2411
        %v2413 = vtanh.pop %v2363
        %v2415 = vrot.slane %v2310, 7
        %v2417 = vmul.f32 %v2412, %v2415
        %2419 = vrot.lane.b32.xlu0 %v2413, 96
        %v2420 = vpop.permute.xlu0 %2419
        %v2422 = vmul.f32 %v2412, %v2420
        %2424 = vrot.lane.b32.xlu0 %v2422, 16
        %v2425 = vpop.permute.xlu0 %2424
        %v2427 = vadd.f32 %v2417, %v2425
        %v2428 = vtanh.pop %v2427
        %2430 = vrot.lane.b32.xlu0 %v2428, 32
        %v2431 = vpop.permute.xlu0 %2430
        %v2433 = vmul.f32 %v2412, %v2431
        %v2434 = vxor.u32 %v2393, 2147483648
        %v2435 = vmul.f32 %v2434, 1.442695
        %v2436 = vpow.pop %v2435
        %v2437 = vadd.f32 %v2436, 1.0
        %v2438 = vrcp.pop %v2437
        %v2439 = vmul.f32 %v2437, %v2438
        %v2440 = vsub.f32 1.0, %v2439
        %v2441 = vmul.f32 %v2438, %v2440
        %v2442 = vadd.f32 %v2438, %v2441
        %vm2443 = vweird.f32 %v2437
        %vm2444 = vweird.f32 %v2438
        %vm2445 = vmor %vm2443, %vm2444
        %v2446 = vsel %vm2445, %v2438, %v2442
        %v2447 = vand.u32 2147483647, %v2437
        %vm2448 = vcmp.eq.f32.partialorder %v2447, 8.507059e+37
        %v2449 = vand.u32 %v2437, 2147483648
        %v2450 = vor.u32 1.1754944e-38, %v2449
        %v2451 = vsel %vm2448, %v2450, %v2446
        %v2452 = vmul.f32 1.0, %v2451
        %v2453 = vtanh.pop %v2393
        %v2455 = vrot.slane %v2322, 1
        %v2457 = vmul.f32 %v2452, %v2455
        %2459 = vrot.lane.b32.xlu0 %v2453, 96
        %v2460 = vpop.permute.xlu0 %2459
        %v2462 = vmul.f32 %v2452, %v2460
        %2464 = vrot.lane.b32.xlu0 %v2462, 16
        %v2465 = vpop.permute.xlu0 %2464
        %v2467 = vadd.f32 %v2457, %v2465
        %v2468 = vtanh.pop %v2467
        %2470 = vrot.lane.b32.xlu0 %v2468, 32
        %v2471 = vpop.permute.xlu0 %2470
        %v2473 = vmul.f32 %v2452, %v2471
        %v2474 = vmul.f32 %v1940, %v2433
        %v2475 = vmul.f32 %v1945, %v2304
        %v2477 = vrot.slane %v2475, 7
        %v2479 = vadd.f32 %v2474, %v2477
        %v2480 = vmul.f32 %v1940, %v2427
        %v2481 = vmul.f32 %v1945, %v2310
        %v2483 = vrot.slane %v2481, 7
        %v2485 = vadd.f32 %v2480, %v2483
        %v2486 = vmul.f32 %v1920, %v2473
        %v2487 = vmul.f32 %v1925, %v2316
        %v2489 = vrot.slane %v2487, 1
        %v2491 = vadd.f32 %v2486, %v2489
        %v2492 = vmul.f32 %v1920, %v2467
        %v2493 = vmul.f32 %v1925, %v2322
        %v2495 = vrot.slane %v2493, 1
        %v2497 = vadd.f32 %v2492, %v2495
        %v2498 = vmul.f32 %v1940, %v2479
        %2500 = vrot.lane.b32.xlu0 %v2498, 80
        %v2501 = vpop.permute.xlu0 %2500
        %2503 = vst.msk [vmem:[#allocation2 + $0x8] sm:$0x2] %vm993, %v2501
        %v2504 = vmul.f32 %v1920, %v2491
        %2506 = vrot.lane.b32.xlu0 %v2504, 96
        %v2507 = vpop.permute.xlu0 %2506
        %2509 = vst.msk [vmem:[#allocation2] sm:$0x40] %vm1000, %v2507
        %v2511 = vrot.slane %v2479, 1
        %2512 = vrot.lane.b32.xlu0 %v2511, 80
        %v2513 = vpop.permute.xlu0 %2512
        %v2514 = vsel %vm643, %v2513, 0
        %2516 = vmatpush.msra.mxu0 0.0
        %2517 = vmatpush.msra.mxu0 0.0
        %2518 = vmatpush.msra.mxu0 0.0
        %2519 = vmatpush.msra.mxu0 0.0
        %2520 = vmatpush.msra.mxu0 0.0
        %2521 = vmatpush.msra.mxu0 0.0
        %2522 = vmatpush.msra.mxu0 0.0
        %2523 = vmatpush.msra.mxu0 0.0
        %2524 = vmatpush.msra.mxu0 0.0
        %2525 = vmatpush.msra.mxu0 0.0
        %2526 = vmatpush.msra.mxu0 0.0
        %2527 = vmatpush.msra.mxu0 0.0
        %2528 = vmatpush.msra.mxu0 0.0
        %2529 = vmatpush.msra.mxu0 0.0
        %2530 = vmatpush.msra.mxu0 %v640
        %2531 = vmatpush.msra.mxu0 %v639
        %2532 = vmatmul.f32.gmra.mxu0 %v2514
        %v2533 = vpop.f32.mrf.mxu0
        %v2534 = vadd.f32 0.0, %v2533
        %2535 = vdwg.mxu0
        %v2537 = vrot.slane %v2534, 6
        %v2539 = vadd.f32 %v603, %v2537
        %v2541 = vrot.slane %v2491, 6
        %2542 = vrot.lane.b32.xlu0 %v2541, 80
        %v2543 = vpop.permute.xlu0 %2542
        %v2544 = vsel %vm643, %v2543, 0
        %2546 = vmatpush.msra.mxu0 0.0
        %2547 = vmatpush.msra.mxu0 0.0
        %2548 = vmatpush.msra.mxu0 0.0
        %2549 = vmatpush.msra.mxu0 0.0
        %2550 = vmatpush.msra.mxu0 0.0
        %2551 = vmatpush.msra.mxu0 0.0
        %2552 = vmatpush.msra.mxu0 0.0
        %2553 = vmatpush.msra.mxu0 0.0
        %2554 = vmatpush.msra.mxu0 0.0
        %2555 = vmatpush.msra.mxu0 0.0
        %2556 = vmatpush.msra.mxu0 0.0
        %2557 = vmatpush.msra.mxu0 0.0
        %2558 = vmatpush.msra.mxu0 0.0
        %2559 = vmatpush.msra.mxu0 0.0
        %2560 = vmatpush.msra.mxu0 %v642
        %2561 = vmatpush.msra.mxu0 %v641
        %2562 = vmatmul.f32.gmra.mxu0 %v2544
        %v2563 = vpop.f32.mrf.mxu0
        %v2564 = vadd.f32 0.0, %v2563
        %2565 = vdwg.mxu0
        %v2567 = vrot.slane %v2564, 3
        %v2569 = vadd.f32 %v625, %v2567
        %v2570 = vxor.u32 %v2539, 2147483648
        %v2571 = vmul.f32 %v2570, 1.442695
        %v2572 = vpow.pop %v2571
        %v2573 = vadd.f32 %v2572, 1.0
        %v2574 = vrcp.pop %v2573
        %v2575 = vmul.f32 %v2573, %v2574
        %v2576 = vsub.f32 1.0, %v2575
        %v2577 = vmul.f32 %v2574, %v2576
        %v2578 = vadd.f32 %v2574, %v2577
        %vm2579 = vweird.f32 %v2573
        %vm2580 = vweird.f32 %v2574
        %vm2581 = vmor %vm2579, %vm2580
        %v2582 = vsel %vm2581, %v2574, %v2578
        %v2583 = vand.u32 2147483647, %v2573
        %vm2584 = vcmp.eq.f32.partialorder %v2583, 8.507059e+37
        %v2585 = vand.u32 %v2573, 2147483648
        %v2586 = vor.u32 1.1754944e-38, %v2585
        %v2587 = vsel %vm2584, %v2586, %v2582
        %v2588 = vmul.f32 1.0, %v2587
        %v2589 = vtanh.pop %v2539
        %v2591 = vrot.slane %v2485, 7
        %v2593 = vmul.f32 %v2588, %v2591
        %2595 = vrot.lane.b32.xlu0 %v2589, 96
        %v2596 = vpop.permute.xlu0 %2595
        %v2598 = vmul.f32 %v2588, %v2596
        %2600 = vrot.lane.b32.xlu0 %v2598, 16
        %v2601 = vpop.permute.xlu0 %2600
        %v2603 = vadd.f32 %v2593, %v2601
        %v2604 = vtanh.pop %v2603
        %2606 = vrot.lane.b32.xlu0 %v2604, 32
        %v2607 = vpop.permute.xlu0 %2606
        %v2609 = vmul.f32 %v2588, %v2607
        %v2610 = vxor.u32 %v2569, 2147483648
        %v2611 = vmul.f32 %v2610, 1.442695
        %v2612 = vpow.pop %v2611
        %v2613 = vadd.f32 %v2612, 1.0
        %v2614 = vrcp.pop %v2613
        %v2615 = vmul.f32 %v2613, %v2614
        %v2616 = vsub.f32 1.0, %v2615
        %v2617 = vmul.f32 %v2614, %v2616
        %v2618 = vadd.f32 %v2614, %v2617
        %vm2619 = vweird.f32 %v2613
        %vm2620 = vweird.f32 %v2614
        %vm2621 = vmor %vm2619, %vm2620
        %v2622 = vsel %vm2621, %v2614, %v2618
        %v2623 = vand.u32 2147483647, %v2613
        %vm2624 = vcmp.eq.f32.partialorder %v2623, 8.507059e+37
        %v2625 = vand.u32 %v2613, 2147483648
        %v2626 = vor.u32 1.1754944e-38, %v2625
        %v2627 = vsel %vm2624, %v2626, %v2622
        %v2628 = vmul.f32 1.0, %v2627
        %v2629 = vtanh.pop %v2569
        %v2631 = vrot.slane %v2497, 1
        %v2633 = vmul.f32 %v2628, %v2631
        %2635 = vrot.lane.b32.xlu0 %v2629, 96
        %v2636 = vpop.permute.xlu0 %2635
        %v2638 = vmul.f32 %v2628, %v2636
        %2640 = vrot.lane.b32.xlu0 %v2638, 16
        %v2641 = vpop.permute.xlu0 %2640
        %v2643 = vadd.f32 %v2633, %v2641
        %v2644 = vtanh.pop %v2643
        %2646 = vrot.lane.b32.xlu0 %v2644, 32
        %v2647 = vpop.permute.xlu0 %2646
        %v2649 = vmul.f32 %v2628, %v2647
        %v2650 = vmul.f32 %v1746, %v2609
        %v2651 = vmul.f32 %v1751, %v2479
        %v2653 = vrot.slane %v2651, 7
        %v2655 = vadd.f32 %v2650, %v2653
        %v2656 = vmul.f32 %v1746, %v2603
        %v2657 = vmul.f32 %v1751, %v2485
        %v2659 = vrot.slane %v2657, 7
        %v2661 = vadd.f32 %v2656, %v2659
        %v2662 = vmul.f32 %v1726, %v2649
        %v2663 = vmul.f32 %v1731, %v2491
        %v2665 = vrot.slane %v2663, 1
        %v2667 = vadd.f32 %v2662, %v2665
        %v2668 = vmul.f32 %v1726, %v2643
        %v2669 = vmul.f32 %v1731, %v2497
        %v2671 = vrot.slane %v2669, 1
        %v2673 = vadd.f32 %v2668, %v2671
        %v2674 = vmul.f32 %v1746, %v2655
        %2676 = vrot.lane.b32.xlu0 %v2674, 80
        %v2677 = vpop.permute.xlu0 %2676
        %2679 = vst.msk [vmem:[#allocation2 + $0x8] sm:$0x4] %vm1187, %v2677
        %v2680 = vmul.f32 %v1726, %v2667
        %2682 = vrot.lane.b32.xlu0 %v2680, 96
        %v2683 = vpop.permute.xlu0 %2682
        %2685 = vst.msk [vmem:[#allocation2] sm:$0x20] %vm1194, %v2683
        %v2687 = vrot.slane %v2655, 2
        %2688 = vrot.lane.b32.xlu0 %v2687, 80
        %v2689 = vpop.permute.xlu0 %2688
        %v2690 = vsel %vm643, %v2689, 0
        %2692 = vmatpush.msra.mxu0 0.0
        %2693 = vmatpush.msra.mxu0 0.0
        %2694 = vmatpush.msra.mxu0 0.0
        %2695 = vmatpush.msra.mxu0 0.0
        %2696 = vmatpush.msra.mxu0 0.0
        %2697 = vmatpush.msra.mxu0 0.0
        %2698 = vmatpush.msra.mxu0 0.0
        %2699 = vmatpush.msra.mxu0 0.0
        %2700 = vmatpush.msra.mxu0 0.0
        %2701 = vmatpush.msra.mxu0 0.0
        %2702 = vmatpush.msra.mxu0 0.0
        %2703 = vmatpush.msra.mxu0 0.0
        %2704 = vmatpush.msra.mxu0 0.0
        %2705 = vmatpush.msra.mxu0 0.0
        %2706 = vmatpush.msra.mxu0 %v640
        %2707 = vmatpush.msra.mxu0 %v639
        %2708 = vmatmul.f32.gmra.mxu0 %v2690
        %v2709 = vpop.f32.mrf.mxu0
        %v2710 = vadd.f32 0.0, %v2709
        %2711 = vdwg.mxu0
        %v2713 = vrot.slane %v2710, 5
        %v2715 = vadd.f32 %v603, %v2713
        %v2717 = vrot.slane %v2667, 5
        %2718 = vrot.lane.b32.xlu0 %v2717, 80
        %v2719 = vpop.permute.xlu0 %2718
        %v2720 = vsel %vm643, %v2719, 0
        %2722 = vmatpush.msra.mxu0 0.0
        %2723 = vmatpush.msra.mxu0 0.0
        %2724 = vmatpush.msra.mxu0 0.0
        %2725 = vmatpush.msra.mxu0 0.0
        %2726 = vmatpush.msra.mxu0 0.0
        %2727 = vmatpush.msra.mxu0 0.0
        %2728 = vmatpush.msra.mxu0 0.0
        %2729 = vmatpush.msra.mxu0 0.0
        %2730 = vmatpush.msra.mxu0 0.0
        %2731 = vmatpush.msra.mxu0 0.0
        %2732 = vmatpush.msra.mxu0 0.0
        %2733 = vmatpush.msra.mxu0 0.0
        %2734 = vmatpush.msra.mxu0 0.0
        %2735 = vmatpush.msra.mxu0 0.0
        %2736 = vmatpush.msra.mxu0 %v642
        %2737 = vmatpush.msra.mxu0 %v641
        %2738 = vmatmul.f32.gmra.mxu0 %v2720
        %v2739 = vpop.f32.mrf.mxu0
        %v2740 = vadd.f32 0.0, %v2739
        %2741 = vdwg.mxu0
        %v2743 = vrot.slane %v2740, 4
        %v2745 = vadd.f32 %v625, %v2743
        %v2746 = vxor.u32 %v2715, 2147483648
        %v2747 = vmul.f32 %v2746, 1.442695
        %v2748 = vpow.pop %v2747
        %v2749 = vadd.f32 %v2748, 1.0
        %v2750 = vrcp.pop %v2749
        %v2751 = vmul.f32 %v2749, %v2750
        %v2752 = vsub.f32 1.0, %v2751
        %v2753 = vmul.f32 %v2750, %v2752
        %v2754 = vadd.f32 %v2750, %v2753
        %vm2755 = vweird.f32 %v2749
        %vm2756 = vweird.f32 %v2750
        %vm2757 = vmor %vm2755, %vm2756
        %v2758 = vsel %vm2757, %v2750, %v2754
        %v2759 = vand.u32 2147483647, %v2749
        %vm2760 = vcmp.eq.f32.partialorder %v2759, 8.507059e+37
        %v2761 = vand.u32 %v2749, 2147483648
        %v2762 = vor.u32 1.1754944e-38, %v2761
        %v2763 = vsel %vm2760, %v2762, %v2758
        %v2764 = vmul.f32 1.0, %v2763
        %v2765 = vtanh.pop %v2715
        %v2767 = vrot.slane %v2661, 7
        %v2769 = vmul.f32 %v2764, %v2767
        %2771 = vrot.lane.b32.xlu0 %v2765, 96
        %v2772 = vpop.permute.xlu0 %2771
        %v2774 = vmul.f32 %v2764, %v2772
        %2776 = vrot.lane.b32.xlu0 %v2774, 16
        %v2777 = vpop.permute.xlu0 %2776
        %v2779 = vadd.f32 %v2769, %v2777
        %v2780 = vtanh.pop %v2779
        %2782 = vrot.lane.b32.xlu0 %v2780, 32
        %v2783 = vpop.permute.xlu0 %2782
        %v2785 = vmul.f32 %v2764, %v2783
        %v2786 = vxor.u32 %v2745, 2147483648
        %v2787 = vmul.f32 %v2786, 1.442695
        %v2788 = vpow.pop %v2787
        %v2789 = vadd.f32 %v2788, 1.0
        %v2790 = vrcp.pop %v2789
        %v2791 = vmul.f32 %v2789, %v2790
        %v2792 = vsub.f32 1.0, %v2791
        %v2793 = vmul.f32 %v2790, %v2792
        %v2794 = vadd.f32 %v2790, %v2793
        %vm2795 = vweird.f32 %v2789
        %vm2796 = vweird.f32 %v2790
        %vm2797 = vmor %vm2795, %vm2796
        %v2798 = vsel %vm2797, %v2790, %v2794
        %v2799 = vand.u32 2147483647, %v2789
        %vm2800 = vcmp.eq.f32.partialorder %v2799, 8.507059e+37
        %v2801 = vand.u32 %v2789, 2147483648
        %v2802 = vor.u32 1.1754944e-38, %v2801
        %v2803 = vsel %vm2800, %v2802, %v2798
        %v2804 = vmul.f32 1.0, %v2803
        %v2805 = vtanh.pop %v2745
        %v2807 = vrot.slane %v2673, 1
        %v2809 = vmul.f32 %v2804, %v2807
        %2811 = vrot.lane.b32.xlu0 %v2805, 96
        %v2812 = vpop.permute.xlu0 %2811
        %v2814 = vmul.f32 %v2804, %v2812
        %2816 = vrot.lane.b32.xlu0 %v2814, 16
        %v2817 = vpop.permute.xlu0 %2816
        %v2819 = vadd.f32 %v2809, %v2817
        %v2820 = vtanh.pop %v2819
        %2822 = vrot.lane.b32.xlu0 %v2820, 32
        %v2823 = vpop.permute.xlu0 %2822
        %v2825 = vmul.f32 %v2804, %v2823
        %v2826 = vmul.f32 %v1552, %v2785
        %v2827 = vmul.f32 %v1557, %v2655
        %v2829 = vrot.slane %v2827, 7
        %v2831 = vadd.f32 %v2826, %v2829
        %v2832 = vmul.f32 %v1552, %v2779
        %v2833 = vmul.f32 %v1557, %v2661
        %v2835 = vrot.slane %v2833, 7
        %v2837 = vadd.f32 %v2832, %v2835
        %v2838 = vmul.f32 %v1532, %v2825
        %v2839 = vmul.f32 %v1537, %v2667
        %v2841 = vrot.slane %v2839, 1
        %v2843 = vadd.f32 %v2838, %v2841
        %v2844 = vmul.f32 %v1532, %v2819
        %v2845 = vmul.f32 %v1537, %v2673
        %v2847 = vrot.slane %v2845, 1
        %v2849 = vadd.f32 %v2844, %v2847
        %v2850 = vmul.f32 %v1552, %v2831
        %2852 = vrot.lane.b32.xlu0 %v2850, 80
        %v2853 = vpop.permute.xlu0 %2852
        %2855 = vst.msk [vmem:[#allocation2 + $0x8] sm:$0x8] %vm1381, %v2853
        %v2856 = vmul.f32 %v1532, %v2843
        %2858 = vrot.lane.b32.xlu0 %v2856, 96
        %v2859 = vpop.permute.xlu0 %2858
        %2861 = vst.msk [vmem:[#allocation2] sm:$0x10] %vm1388, %v2859
        %v2863 = vrot.slane %v2831, 3
        %2864 = vrot.lane.b32.xlu0 %v2863, 80
        %v2865 = vpop.permute.xlu0 %2864
        %v2866 = vsel %vm643, %v2865, 0
        %2868 = vmatpush.msra.mxu0 0.0
        %2869 = vmatpush.msra.mxu0 0.0
        %2870 = vmatpush.msra.mxu0 0.0
        %2871 = vmatpush.msra.mxu0 0.0
        %2872 = vmatpush.msra.mxu0 0.0
        %2873 = vmatpush.msra.mxu0 0.0
        %2874 = vmatpush.msra.mxu0 0.0
        %2875 = vmatpush.msra.mxu0 0.0
        %2876 = vmatpush.msra.mxu0 0.0
        %2877 = vmatpush.msra.mxu0 0.0
        %2878 = vmatpush.msra.mxu0 0.0
        %2879 = vmatpush.msra.mxu0 0.0
        %2880 = vmatpush.msra.mxu0 0.0
        %2881 = vmatpush.msra.mxu0 0.0
        %2882 = vmatpush.msra.mxu0 %v640
        %2883 = vmatpush.msra.mxu0 %v639
        %2884 = vmatmul.f32.gmra.mxu0 %v2866
        %v2885 = vpop.f32.mrf.mxu0
        %v2886 = vadd.f32 0.0, %v2885
        %2887 = vdwg.mxu0
        %v2889 = vrot.slane %v2886, 4
        %v2891 = vadd.f32 %v603, %v2889
        %v2893 = vrot.slane %v2843, 4
        %2894 = vrot.lane.b32.xlu0 %v2893, 80
        %v2895 = vpop.permute.xlu0 %2894
        %v2896 = vsel %vm643, %v2895, 0
        %2898 = vmatpush.msra.mxu0 0.0
        %2899 = vmatpush.msra.mxu0 0.0
        %2900 = vmatpush.msra.mxu0 0.0
        %2901 = vmatpush.msra.mxu0 0.0
        %2902 = vmatpush.msra.mxu0 0.0
        %2903 = vmatpush.msra.mxu0 0.0
        %2904 = vmatpush.msra.mxu0 0.0
        %2905 = vmatpush.msra.mxu0 0.0
        %2906 = vmatpush.msra.mxu0 0.0
        %2907 = vmatpush.msra.mxu0 0.0
        %2908 = vmatpush.msra.mxu0 0.0
        %2909 = vmatpush.msra.mxu0 0.0
        %2910 = vmatpush.msra.mxu0 0.0
        %2911 = vmatpush.msra.mxu0 0.0
        %2912 = vmatpush.msra.mxu0 %v642
        %2913 = vmatpush.msra.mxu0 %v641
        %2914 = vmatmul.f32.gmra.mxu0 %v2896
        %v2915 = vpop.f32.mrf.mxu0
        %v2916 = vadd.f32 0.0, %v2915
        %2917 = vdwg.mxu0
        %v2919 = vrot.slane %v2916, 5
        %v2921 = vadd.f32 %v625, %v2919
        %v2922 = vxor.u32 %v2891, 2147483648
        %v2923 = vmul.f32 %v2922, 1.442695
        %v2924 = vpow.pop %v2923
        %v2925 = vadd.f32 %v2924, 1.0
        %v2926 = vrcp.pop %v2925
        %v2927 = vmul.f32 %v2925, %v2926
        %v2928 = vsub.f32 1.0, %v2927
        %v2929 = vmul.f32 %v2926, %v2928
        %v2930 = vadd.f32 %v2926, %v2929
        %vm2931 = vweird.f32 %v2925
        %vm2932 = vweird.f32 %v2926
        %vm2933 = vmor %vm2931, %vm2932
        %v2934 = vsel %vm2933, %v2926, %v2930
        %v2935 = vand.u32 2147483647, %v2925
        %vm2936 = vcmp.eq.f32.partialorder %v2935, 8.507059e+37
        %v2937 = vand.u32 %v2925, 2147483648
        %v2938 = vor.u32 1.1754944e-38, %v2937
        %v2939 = vsel %vm2936, %v2938, %v2934
        %v2940 = vmul.f32 1.0, %v2939
        %v2941 = vtanh.pop %v2891
        %v2943 = vrot.slane %v2837, 7
        %v2945 = vmul.f32 %v2940, %v2943
        %2947 = vrot.lane.b32.xlu0 %v2941, 96
        %v2948 = vpop.permute.xlu0 %2947
        %v2950 = vmul.f32 %v2940, %v2948
        %2952 = vrot.lane.b32.xlu0 %v2950, 16
        %v2953 = vpop.permute.xlu0 %2952
        %v2955 = vadd.f32 %v2945, %v2953
        %v2956 = vtanh.pop %v2955
        %2958 = vrot.lane.b32.xlu0 %v2956, 32
        %v2959 = vpop.permute.xlu0 %2958
        %v2961 = vmul.f32 %v2940, %v2959
        %v2962 = vxor.u32 %v2921, 2147483648
        %v2963 = vmul.f32 %v2962, 1.442695
        %v2964 = vpow.pop %v2963
        %v2965 = vadd.f32 %v2964, 1.0
        %v2966 = vrcp.pop %v2965
        %v2967 = vmul.f32 %v2965, %v2966
        %v2968 = vsub.f32 1.0, %v2967
        %v2969 = vmul.f32 %v2966, %v2968
        %v2970 = vadd.f32 %v2966, %v2969
        %vm2971 = vweird.f32 %v2965
        %vm2972 = vweird.f32 %v2966
        %vm2973 = vmor %vm2971, %vm2972
        %v2974 = vsel %vm2973, %v2966, %v2970
        %v2975 = vand.u32 2147483647, %v2965
        %vm2976 = vcmp.eq.f32.partialorder %v2975, 8.507059e+37
        %v2977 = vand.u32 %v2965, 2147483648
        %v2978 = vor.u32 1.1754944e-38, %v2977
        %v2979 = vsel %vm2976, %v2978, %v2974
        %v2980 = vmul.f32 1.0, %v2979
        %v2981 = vtanh.pop %v2921
        %v2983 = vrot.slane %v2849, 1
        %v2985 = vmul.f32 %v2980, %v2983
        %2987 = vrot.lane.b32.xlu0 %v2981, 96
        %v2988 = vpop.permute.xlu0 %2987
        %v2990 = vmul.f32 %v2980, %v2988
        %2992 = vrot.lane.b32.xlu0 %v2990, 16
        %v2993 = vpop.permute.xlu0 %2992
        %v2995 = vadd.f32 %v2985, %v2993
        %v2996 = vtanh.pop %v2995
        %2998 = vrot.lane.b32.xlu0 %v2996, 32
        %v2999 = vpop.permute.xlu0 %2998
        %v3001 = vmul.f32 %v2980, %v2999
        %v3002 = vmul.f32 %v1358, %v2961
        %v3003 = vmul.f32 %v1363, %v2831
        %v3005 = vrot.slane %v3003, 7
        %v3007 = vadd.f32 %v3002, %v3005
        %v3008 = vmul.f32 %v1358, %v2955
        %v3009 = vmul.f32 %v1363, %v2837
        %v3011 = vrot.slane %v3009, 7
        %v3013 = vadd.f32 %v3008, %v3011
        %v3014 = vmul.f32 %v1338, %v3001
        %v3015 = vmul.f32 %v1343, %v2843
        %v3017 = vrot.slane %v3015, 1
        %v3019 = vadd.f32 %v3014, %v3017
        %v3020 = vmul.f32 %v1338, %v2995
        %v3021 = vmul.f32 %v1343, %v2849
        %v3023 = vrot.slane %v3021, 1
        %v3025 = vadd.f32 %v3020, %v3023
        %v3026 = vmul.f32 %v1358, %v3007
        %3028 = vrot.lane.b32.xlu0 %v3026, 80
        %v3029 = vpop.permute.xlu0 %3028
        %3031 = vst.msk [vmem:[#allocation2 + $0x8] sm:$0x10] %vm1575, %v3029
        %v3032 = vmul.f32 %v1338, %v3019
        %3034 = vrot.lane.b32.xlu0 %v3032, 96
        %v3035 = vpop.permute.xlu0 %3034
        %3037 = vst.msk [vmem:[#allocation2] sm:$0x8] %vm1582, %v3035
        %v3039 = vrot.slane %v3007, 4
        %3040 = vrot.lane.b32.xlu0 %v3039, 80
        %v3041 = vpop.permute.xlu0 %3040
        %v3042 = vsel %vm643, %v3041, 0
        %3044 = vmatpush.msra.mxu0 0.0
        %3045 = vmatpush.msra.mxu0 0.0
        %3046 = vmatpush.msra.mxu0 0.0
        %3047 = vmatpush.msra.mxu0 0.0
        %3048 = vmatpush.msra.mxu0 0.0
        %3049 = vmatpush.msra.mxu0 0.0
        %3050 = vmatpush.msra.mxu0 0.0
        %3051 = vmatpush.msra.mxu0 0.0
        %3052 = vmatpush.msra.mxu0 0.0
        %3053 = vmatpush.msra.mxu0 0.0
        %3054 = vmatpush.msra.mxu0 0.0
        %3055 = vmatpush.msra.mxu0 0.0
        %3056 = vmatpush.msra.mxu0 0.0
        %3057 = vmatpush.msra.mxu0 0.0
        %3058 = vmatpush.msra.mxu0 %v640
        %3059 = vmatpush.msra.mxu0 %v639
        %3060 = vmatmul.f32.gmra.mxu0 %v3042
        %v3061 = vpop.f32.mrf.mxu0
        %v3062 = vadd.f32 0.0, %v3061
        %3063 = vdwg.mxu0
        %v3065 = vrot.slane %v3062, 3
        %v3067 = vadd.f32 %v603, %v3065
        %v3069 = vrot.slane %v3019, 3
        %3070 = vrot.lane.b32.xlu0 %v3069, 80
        %v3071 = vpop.permute.xlu0 %3070
        %v3072 = vsel %vm643, %v3071, 0
        %3074 = vmatpush.msra.mxu0 0.0
        %3075 = vmatpush.msra.mxu0 0.0
        %3076 = vmatpush.msra.mxu0 0.0
        %3077 = vmatpush.msra.mxu0 0.0
        %3078 = vmatpush.msra.mxu0 0.0
        %3079 = vmatpush.msra.mxu0 0.0
        %3080 = vmatpush.msra.mxu0 0.0
        %3081 = vmatpush.msra.mxu0 0.0
        %3082 = vmatpush.msra.mxu0 0.0
        %3083 = vmatpush.msra.mxu0 0.0
        %3084 = vmatpush.msra.mxu0 0.0
        %3085 = vmatpush.msra.mxu0 0.0
        %3086 = vmatpush.msra.mxu0 0.0
        %3087 = vmatpush.msra.mxu0 0.0
        %3088 = vmatpush.msra.mxu0 %v642
        %3089 = vmatpush.msra.mxu0 %v641
        %3090 = vmatmul.f32.gmra.mxu0 %v3072
        %v3091 = vpop.f32.mrf.mxu0
        %v3092 = vadd.f32 0.0, %v3091
        %3093 = vdwg.mxu0
        %v3095 = vrot.slane %v3092, 6
        %v3097 = vadd.f32 %v625, %v3095
        %v3098 = vxor.u32 %v3067, 2147483648
        %v3099 = vmul.f32 %v3098, 1.442695
        %v3100 = vpow.pop %v3099
        %v3101 = vadd.f32 %v3100, 1.0
        %v3102 = vrcp.pop %v3101
        %v3103 = vmul.f32 %v3101, %v3102
        %v3104 = vsub.f32 1.0, %v3103
        %v3105 = vmul.f32 %v3102, %v3104
        %v3106 = vadd.f32 %v3102, %v3105
        %vm3107 = vweird.f32 %v3101
        %vm3108 = vweird.f32 %v3102
        %vm3109 = vmor %vm3107, %vm3108
        %v3110 = vsel %vm3109, %v3102, %v3106
        %v3111 = vand.u32 2147483647, %v3101
        %vm3112 = vcmp.eq.f32.partialorder %v3111, 8.507059e+37
        %v3113 = vand.u32 %v3101, 2147483648
        %v3114 = vor.u32 1.1754944e-38, %v3113
        %v3115 = vsel %vm3112, %v3114, %v3110
        %v3116 = vmul.f32 1.0, %v3115
        %v3117 = vtanh.pop %v3067
        %v3119 = vrot.slane %v3013, 7
        %v3121 = vmul.f32 %v3116, %v3119
        %3123 = vrot.lane.b32.xlu0 %v3117, 96
        %v3124 = vpop.permute.xlu0 %3123
        %v3126 = vmul.f32 %v3116, %v3124
        %3128 = vrot.lane.b32.xlu0 %v3126, 16
        %v3129 = vpop.permute.xlu0 %3128
        %v3131 = vadd.f32 %v3121, %v3129
        %v3132 = vtanh.pop %v3131
        %3134 = vrot.lane.b32.xlu0 %v3132, 32
        %v3135 = vpop.permute.xlu0 %3134
        %v3137 = vmul.f32 %v3116, %v3135
        %v3138 = vxor.u32 %v3097, 2147483648
        %v3139 = vmul.f32 %v3138, 1.442695
        %v3140 = vpow.pop %v3139
        %v3141 = vadd.f32 %v3140, 1.0
        %v3142 = vrcp.pop %v3141
        %v3143 = vmul.f32 %v3141, %v3142
        %v3144 = vsub.f32 1.0, %v3143
        %v3145 = vmul.f32 %v3142, %v3144
        %v3146 = vadd.f32 %v3142, %v3145
        %vm3147 = vweird.f32 %v3141
        %vm3148 = vweird.f32 %v3142
        %vm3149 = vmor %vm3147, %vm3148
        %v3150 = vsel %vm3149, %v3142, %v3146
        %v3151 = vand.u32 2147483647, %v3141
        %vm3152 = vcmp.eq.f32.partialorder %v3151, 8.507059e+37
        %v3153 = vand.u32 %v3141, 2147483648
        %v3154 = vor.u32 1.1754944e-38, %v3153
        %v3155 = vsel %vm3152, %v3154, %v3150
        %v3156 = vmul.f32 1.0, %v3155
        %v3157 = vtanh.pop %v3097
        %v3159 = vrot.slane %v3025, 1
        %v3161 = vmul.f32 %v3156, %v3159
        %3163 = vrot.lane.b32.xlu0 %v3157, 96
        %v3164 = vpop.permute.xlu0 %3163
        %v3166 = vmul.f32 %v3156, %v3164
        %3168 = vrot.lane.b32.xlu0 %v3166, 16
        %v3169 = vpop.permute.xlu0 %3168
        %v3171 = vadd.f32 %v3161, %v3169
        %v3172 = vtanh.pop %v3171
        %3174 = vrot.lane.b32.xlu0 %v3172, 32
        %v3175 = vpop.permute.xlu0 %3174
        %v3177 = vmul.f32 %v3156, %v3175
        %v3178 = vmul.f32 %v1164, %v3137
        %v3179 = vmul.f32 %v1169, %v3007
        %v3181 = vrot.slane %v3179, 7
        %v3183 = vadd.f32 %v3178, %v3181
        %v3184 = vmul.f32 %v1164, %v3131
        %v3185 = vmul.f32 %v1169, %v3013
        %v3187 = vrot.slane %v3185, 7
        %v3189 = vadd.f32 %v3184, %v3187
        %v3190 = vmul.f32 %v1144, %v3177
        %v3191 = vmul.f32 %v1149, %v3019
        %v3193 = vrot.slane %v3191, 1
        %v3195 = vadd.f32 %v3190, %v3193
        %v3196 = vmul.f32 %v1144, %v3171
        %v3197 = vmul.f32 %v1149, %v3025
        %v3199 = vrot.slane %v3197, 1
        %v3201 = vadd.f32 %v3196, %v3199
        %v3202 = vmul.f32 %v1164, %v3183
        %3204 = vrot.lane.b32.xlu0 %v3202, 80
        %v3205 = vpop.permute.xlu0 %3204
        %3207 = vst.msk [vmem:[#allocation2 + $0x8] sm:$0x20] %vm1769, %v3205
        %v3208 = vmul.f32 %v1144, %v3195
        %3210 = vrot.lane.b32.xlu0 %v3208, 96
        %v3211 = vpop.permute.xlu0 %3210
        %3213 = vst.msk [vmem:[#allocation2] sm:$0x4] %vm1776, %v3211
        %v3215 = vrot.slane %v3183, 5
        %3216 = vrot.lane.b32.xlu0 %v3215, 80
        %v3217 = vpop.permute.xlu0 %3216
        %v3218 = vsel %vm643, %v3217, 0
        %3220 = vmatpush.msra.mxu0 0.0
        %3221 = vmatpush.msra.mxu0 0.0
        %3222 = vmatpush.msra.mxu0 0.0
        %3223 = vmatpush.msra.mxu0 0.0
        %3224 = vmatpush.msra.mxu0 0.0
        %3225 = vmatpush.msra.mxu0 0.0
        %3226 = vmatpush.msra.mxu0 0.0
        %3227 = vmatpush.msra.mxu0 0.0
        %3228 = vmatpush.msra.mxu0 0.0
        %3229 = vmatpush.msra.mxu0 0.0
        %3230 = vmatpush.msra.mxu0 0.0
        %3231 = vmatpush.msra.mxu0 0.0
        %3232 = vmatpush.msra.mxu0 0.0
        %3233 = vmatpush.msra.mxu0 0.0
        %3234 = vmatpush.msra.mxu0 %v640
        %3235 = vmatpush.msra.mxu0 %v639
        %3236 = vmatmul.f32.gmra.mxu0 %v3218
        %v3237 = vpop.f32.mrf.mxu0
        %v3238 = vadd.f32 0.0, %v3237
        %3239 = vdwg.mxu0
        %v3241 = vrot.slane %v3238, 2
        %v3243 = vadd.f32 %v603, %v3241
        %v3245 = vrot.slane %v3195, 2
        %3246 = vrot.lane.b32.xlu0 %v3245, 80
        %v3247 = vpop.permute.xlu0 %3246
        %v3248 = vsel %vm643, %v3247, 0
        %3250 = vmatpush.msra.mxu0 0.0
        %3251 = vmatpush.msra.mxu0 0.0
        %3252 = vmatpush.msra.mxu0 0.0
        %3253 = vmatpush.msra.mxu0 0.0
        %3254 = vmatpush.msra.mxu0 0.0
        %3255 = vmatpush.msra.mxu0 0.0
        %3256 = vmatpush.msra.mxu0 0.0
        %3257 = vmatpush.msra.mxu0 0.0
        %3258 = vmatpush.msra.mxu0 0.0
        %3259 = vmatpush.msra.mxu0 0.0
        %3260 = vmatpush.msra.mxu0 0.0
        %3261 = vmatpush.msra.mxu0 0.0
        %3262 = vmatpush.msra.mxu0 0.0
        %3263 = vmatpush.msra.mxu0 0.0
        %3264 = vmatpush.msra.mxu0 %v642
        %3265 = vmatpush.msra.mxu0 %v641
        %3266 = vmatmul.f32.gmra.mxu0 %v3248
        %v3267 = vpop.f32.mrf.mxu0
        %v3268 = vadd.f32 0.0, %v3267
        %3269 = vdwg.mxu0
        %v3271 = vrot.slane %v3268, 7
        %v3273 = vadd.f32 %v625, %v3271
        %v3274 = vxor.u32 %v3243, 2147483648
        %v3275 = vmul.f32 %v3274, 1.442695
        %v3276 = vpow.pop %v3275
        %v3277 = vadd.f32 %v3276, 1.0
        %v3278 = vrcp.pop %v3277
        %v3279 = vmul.f32 %v3277, %v3278
        %v3280 = vsub.f32 1.0, %v3279
        %v3281 = vmul.f32 %v3278, %v3280
        %v3282 = vadd.f32 %v3278, %v3281
        %vm3283 = vweird.f32 %v3277
        %vm3284 = vweird.f32 %v3278
        %vm3285 = vmor %vm3283, %vm3284
        %v3286 = vsel %vm3285, %v3278, %v3282
        %v3287 = vand.u32 2147483647, %v3277
        %vm3288 = vcmp.eq.f32.partialorder %v3287, 8.507059e+37
        %v3289 = vand.u32 %v3277, 2147483648
        %v3290 = vor.u32 1.1754944e-38, %v3289
        %v3291 = vsel %vm3288, %v3290, %v3286
        %v3292 = vmul.f32 1.0, %v3291
        %v3293 = vtanh.pop %v3243
        %v3295 = vrot.slane %v3189, 7
        %v3297 = vmul.f32 %v3292, %v3295
        %3299 = vrot.lane.b32.xlu0 %v3293, 96
        %v3300 = vpop.permute.xlu0 %3299
        %v3302 = vmul.f32 %v3292, %v3300
        %3304 = vrot.lane.b32.xlu0 %v3302, 16
        %v3305 = vpop.permute.xlu0 %3304
        %v3307 = vadd.f32 %v3297, %v3305
        %v3308 = vtanh.pop %v3307
        %3310 = vrot.lane.b32.xlu0 %v3308, 32
        %v3311 = vpop.permute.xlu0 %3310
        %v3313 = vmul.f32 %v3292, %v3311
        %v3314 = vxor.u32 %v3273, 2147483648
        %v3315 = vmul.f32 %v3314, 1.442695
        %v3316 = vpow.pop %v3315
        %v3317 = vadd.f32 %v3316, 1.0
        %v3318 = vrcp.pop %v3317
        %v3319 = vmul.f32 %v3317, %v3318
        %v3320 = vsub.f32 1.0, %v3319
        %v3321 = vmul.f32 %v3318, %v3320
        %v3322 = vadd.f32 %v3318, %v3321
        %vm3323 = vweird.f32 %v3317
        %vm3324 = vweird.f32 %v3318
        %vm3325 = vmor %vm3323, %vm3324
        %v3326 = vsel %vm3325, %v3318, %v3322
        %v3327 = vand.u32 2147483647, %v3317
        %vm3328 = vcmp.eq.f32.partialorder %v3327, 8.507059e+37
        %v3329 = vand.u32 %v3317, 2147483648
        %v3330 = vor.u32 1.1754944e-38, %v3329
        %v3331 = vsel %vm3328, %v3330, %v3326
        %v3332 = vmul.f32 1.0, %v3331
        %v3333 = vtanh.pop %v3273
        %v3335 = vrot.slane %v3201, 1
        %v3337 = vmul.f32 %v3332, %v3335
        %3339 = vrot.lane.b32.xlu0 %v3333, 96
        %v3340 = vpop.permute.xlu0 %3339
        %v3342 = vmul.f32 %v3332, %v3340
        %3344 = vrot.lane.b32.xlu0 %v3342, 16
        %v3345 = vpop.permute.xlu0 %3344
        %v3347 = vadd.f32 %v3337, %v3345
        %v3348 = vtanh.pop %v3347
        %3350 = vrot.lane.b32.xlu0 %v3348, 32
        %v3351 = vpop.permute.xlu0 %3350
        %v3353 = vmul.f32 %v3332, %v3351
        %v3354 = vmul.f32 %v970, %v3313
        %v3355 = vmul.f32 %v975, %v3183
        %v3357 = vrot.slane %v3355, 7
        %v3359 = vadd.f32 %v3354, %v3357
        %v3360 = vmul.f32 %v970, %v3307
        %v3361 = vmul.f32 %v975, %v3189
        %v3363 = vrot.slane %v3361, 7
        %v3365 = vadd.f32 %v3360, %v3363
        %v3366 = vmul.f32 %v950, %v3353
        %v3367 = vmul.f32 %v955, %v3195
        %v3369 = vrot.slane %v3367, 1
        %v3371 = vadd.f32 %v3366, %v3369
        %v3372 = vmul.f32 %v950, %v3347
        %v3373 = vmul.f32 %v955, %v3201
        %v3375 = vrot.slane %v3373, 1
        %v3377 = vadd.f32 %v3372, %v3375
        %v3378 = vmul.f32 %v970, %v3359
        %3380 = vrot.lane.b32.xlu0 %v3378, 80
        %v3381 = vpop.permute.xlu0 %3380
        %3383 = vst.msk [vmem:[#allocation2 + $0x8] sm:$0x40] %vm1963, %v3381
        %v3384 = vmul.f32 %v950, %v3371
        %3386 = vrot.lane.b32.xlu0 %v3384, 96
        %v3387 = vpop.permute.xlu0 %3386
        %3389 = vst.msk [vmem:[#allocation2] sm:$0x2] %vm1970, %v3387
        %v3391 = vrot.slane %v3359, 6
        %3392 = vrot.lane.b32.xlu0 %v3391, 80
        %v3393 = vpop.permute.xlu0 %3392
        %v3394 = vsel %vm643, %v3393, 0
        %3396 = vmatpush.msra.mxu0 0.0
        %3397 = vmatpush.msra.mxu0 0.0
        %3398 = vmatpush.msra.mxu0 0.0
        %3399 = vmatpush.msra.mxu0 0.0
        %3400 = vmatpush.msra.mxu0 0.0
        %3401 = vmatpush.msra.mxu0 0.0
        %3402 = vmatpush.msra.mxu0 0.0
        %3403 = vmatpush.msra.mxu0 0.0
        %3404 = vmatpush.msra.mxu0 0.0
        %3405 = vmatpush.msra.mxu0 0.0
        %3406 = vmatpush.msra.mxu0 0.0
        %3407 = vmatpush.msra.mxu0 0.0
        %3408 = vmatpush.msra.mxu0 0.0
        %3409 = vmatpush.msra.mxu0 0.0
        %3410 = vmatpush.msra.mxu0 %v640
        %3411 = vmatpush.msra.mxu0 %v639
        %3412 = vmatmul.f32.gmra.mxu0 %v3394
        %v3413 = vpop.f32.mrf.mxu0
        %v3414 = vadd.f32 0.0, %v3413
        %3415 = vdwg.mxu0
        %v3417 = vrot.slane %v3414, 1
        %v3419 = vadd.f32 %v603, %v3417
        %v3421 = vrot.slane %v3371, 1
        %3422 = vrot.lane.b32.xlu0 %v3421, 80
        %v3423 = vpop.permute.xlu0 %3422
        %v3424 = vsel %vm643, %v3423, 0
        %3426 = vmatpush.msra.mxu0 0.0
        %3427 = vmatpush.msra.mxu0 0.0
        %3428 = vmatpush.msra.mxu0 0.0
        %3429 = vmatpush.msra.mxu0 0.0
        %3430 = vmatpush.msra.mxu0 0.0
        %3431 = vmatpush.msra.mxu0 0.0
        %3432 = vmatpush.msra.mxu0 0.0
        %3433 = vmatpush.msra.mxu0 0.0
        %3434 = vmatpush.msra.mxu0 0.0
        %3435 = vmatpush.msra.mxu0 0.0
        %3436 = vmatpush.msra.mxu0 0.0
        %3437 = vmatpush.msra.mxu0 0.0
        %3438 = vmatpush.msra.mxu0 0.0
        %3439 = vmatpush.msra.mxu0 0.0
        %3440 = vmatpush.msra.mxu0 %v642
        %3441 = vmatpush.msra.mxu0 %v641
        %3442 = vmatmul.f32.gmra.mxu0 %v3424
        %v3443 = vpop.f32.mrf.mxu0
        %v3444 = vadd.f32 0.0, %v3443
        %3445 = vdwg.mxu0
        %v3446 = vadd.f32 %v625, %v3444
        %v3447 = vxor.u32 %v3419, 2147483648
        %v3448 = vmul.f32 %v3447, 1.442695
        %v3449 = vpow.pop %v3448
        %v3450 = vadd.f32 %v3449, 1.0
        %v3451 = vrcp.pop %v3450
        %v3452 = vmul.f32 %v3450, %v3451
        %v3453 = vsub.f32 1.0, %v3452
        %v3454 = vmul.f32 %v3451, %v3453
        %v3455 = vadd.f32 %v3451, %v3454
        %vm3456 = vweird.f32 %v3450
        %vm3457 = vweird.f32 %v3451
        %vm3458 = vmor %vm3456, %vm3457
        %v3459 = vsel %vm3458, %v3451, %v3455
        %v3460 = vand.u32 2147483647, %v3450
        %vm3461 = vcmp.eq.f32.partialorder %v3460, 8.507059e+37
        %v3462 = vand.u32 %v3450, 2147483648
        %v3463 = vor.u32 1.1754944e-38, %v3462
        %v3464 = vsel %vm3461, %v3463, %v3459
        %v3465 = vmul.f32 1.0, %v3464
        %v3466 = vtanh.pop %v3419
        %v3468 = vrot.slane %v3365, 7
        %v3470 = vmul.f32 %v3465, %v3468
        %3472 = vrot.lane.b32.xlu0 %v3466, 96
        %v3473 = vpop.permute.xlu0 %3472
        %v3475 = vmul.f32 %v3465, %v3473
        %3477 = vrot.lane.b32.xlu0 %v3475, 16
        %v3478 = vpop.permute.xlu0 %3477
        %v3480 = vadd.f32 %v3470, %v3478
        %v3481 = vtanh.pop %v3480
        %3483 = vrot.lane.b32.xlu0 %v3481, 32
        %v3484 = vpop.permute.xlu0 %3483
        %v3486 = vmul.f32 %v3465, %v3484
        %v3487 = vxor.u32 %v3446, 2147483648
        %v3488 = vmul.f32 %v3487, 1.442695
        %v3489 = vpow.pop %v3488
        %v3490 = vadd.f32 %v3489, 1.0
        %v3491 = vrcp.pop %v3490
        %v3492 = vmul.f32 %v3490, %v3491
        %v3493 = vsub.f32 1.0, %v3492
        %v3494 = vmul.f32 %v3491, %v3493
        %v3495 = vadd.f32 %v3491, %v3494
        %vm3496 = vweird.f32 %v3490
        %vm3497 = vweird.f32 %v3491
        %vm3498 = vmor %vm3496, %vm3497
        %v3499 = vsel %vm3498, %v3491, %v3495
        %v3500 = vand.u32 2147483647, %v3490
        %vm3501 = vcmp.eq.f32.partialorder %v3500, 8.507059e+37
        %v3502 = vand.u32 %v3490, 2147483648
        %v3503 = vor.u32 1.1754944e-38, %v3502
        %v3504 = vsel %vm3501, %v3503, %v3499
        %v3505 = vmul.f32 1.0, %v3504
        %v3506 = vtanh.pop %v3446
        %v3508 = vrot.slane %v3377, 1
        %v3510 = vmul.f32 %v3505, %v3508
        %3512 = vrot.lane.b32.xlu0 %v3506, 96
        %v3513 = vpop.permute.xlu0 %3512
        %v3515 = vmul.f32 %v3505, %v3513
        %3517 = vrot.lane.b32.xlu0 %v3515, 16
        %v3518 = vpop.permute.xlu0 %3517
        %v3520 = vadd.f32 %v3510, %v3518
        %v3521 = vtanh.pop %v3520
        %3523 = vrot.lane.b32.xlu0 %v3521, 32
        %v3524 = vpop.permute.xlu0 %3523
        %v3526 = vmul.f32 %v3505, %v3524
        %v3527 = vmul.f32 %v784, %v3486
        %v3528 = vmul.f32 %v789, %v3359
        %v3530 = vrot.slane %v3528, 7
        %v3532 = vadd.f32 %v3527, %v3530
        %v3533 = vmul.f32 %v769, %v3526
        %v3534 = vmul.f32 %v776, %v3371
        %v3536 = vrot.slane %v3534, 1
        %v3538 = vadd.f32 %v3533, %v3536
        %v3539 = vmul.f32 %v784, %v3532
        %3541 = vrot.lane.b32.xlu0 %v3539, 80
        %v3542 = vpop.permute.xlu0 %3541
        %3544 = vst.msk [vmem:[#allocation2 + $0x8] sm:$0x80] %vm2154, %v3542
        %v3545 = vmul.f32 %v769, %v3538
        %3547 = vrot.lane.b32.xlu0 %v3545, 96
        %v3548 = vpop.permute.xlu0 %3547
        %3550 = vst.msk [vmem:[#allocation2] sm:$0x1] %vm2161, %v3548
        %v3551 = vld [vmem:[#allocation2] sm:$0xff]
        %v3552 = vld [vmem:[#allocation2 + $0x8] sm:$0xff]
        %v3553 = vpack.c.bf16 %v3551, %v3551
        %v3554 = vpack.c.bf16 %v3552, %v3552
        %v3555 = vld [vmem:[%s567] sm:$0xff]
        %v3556 = vld [vmem:[%s567 + $0x8] sm:$0xff]
        %3558 = vset.pattern.permute.xlu0 0
        %3559 = vperm.xlu0 %3558, %v3555
        %v3560 = vpop.permute.xlu0 %3559
        %3563 = vset.pattern.permute.xlu0 0
        %3564 = vperm.xlu0 %3563, %v3556
        %v3565 = vpop.permute.xlu0 %3564
        %v3567 = vmul.f32 %v3560, %v3551
        %v3568 = vmul.f32 %v3565, %v3552
        %v3569 = vpack.c.bf16 %v3568, %v3567
        %v3570 = vld [vmem:[%s10] sm:$0xff]
        %v3571 = vld [vmem:[%s10 + $0x8] sm:$0xff]
        %v3572 = vld [vmem:[%s10 + $0x10] sm:$0xff]
        %v3573 = vld [vmem:[%s10 + $0x18] sm:$0xff]
        %v3574 = vld [vmem:[%s10 + $0x20] sm:$0xff]
        %v3575 = vld [vmem:[%s10 + $0x28] sm:$0xff]
        %v3576 = vld [vmem:[%s10 + $0x30] sm:$0xff]
        %v3577 = vld [vmem:[%s10 + $0x38] sm:$0xff]
        %v3578 = vld [vmem:[%s10 + $0x40] sm:$0xff]
        %v3579 = vld [vmem:[%s10 + $0x48] sm:$0xff]
        %v3580 = vld [vmem:[%s10 + $0x50] sm:$0xff]
        %v3581 = vld [vmem:[%s10 + $0x58] sm:$0xff]
        %v3582 = vpack.c.bf16 %v3570, %v3570
        %v3583 = vpack.c.bf16 %v3571, %v3571
        %v3584 = vpack.c.bf16 %v3572, %v3572
        %v3585 = vpack.c.bf16 %v3573, %v3573
        %v3586 = vpack.c.bf16 %v3574, %v3574
        %v3587 = vpack.c.bf16 %v3575, %v3575
        %v3588 = vpack.c.bf16 %v3576, %v3576
        %v3589 = vpack.c.bf16 %v3577, %v3577
        %v3590 = vpack.c.bf16 %v3578, %v3578
        %v3591 = vpack.c.bf16 %v3579, %v3579
        %v3592 = vpack.c.bf16 %v3580, %v3580
        %v3593 = vpack.c.bf16 %v3581, %v3581
        %v3598 = vunpack.c.l.b16 %v3582
        %v3599 = vunpack.c.l.b16 %v3583
        %v3600 = vunpack.c.l.b16 %v3584
        %v3601 = vunpack.c.l.b16 %v3585
        %v3602 = vpack.c.b16 %v3599, %v3598
        %v3603 = vpack.c.b16 %v3601, %v3600
        %v3607 = vsel %vm587, %v3569, 0
        %3609 = vmatpush.bf16.msra.mxu0 0
        %3610 = vmatpush.bf16.msra.mxu0 0
        %3611 = vmatpush.bf16.msra.mxu0 0
        %3612 = vmatpush.bf16.msra.mxu0 0
        %3613 = vmatpush.bf16.msra.mxu0 0
        %3614 = vmatpush.bf16.msra.mxu0 0
        %3615 = vmatpush.bf16.msra.mxu0 %v3603
        %3616 = vmatpush.bf16.msra.mxu0 %v3602
        %3617 = vmatmul.bf16.gmra.mxu0 %v3607
        %v3618 = vpop.f32.mrf.mxu0
        %v3619 = vadd.f32 0.0, %v3618
        %v3620 = vpop.f32.mrf.mxu0
        %v3621 = vadd.f32 0.0, %v3620
        %3622 = vdwg.mxu0
        %v3627 = vunpack.c.l.b16 %v3586
        %v3628 = vunpack.c.l.b16 %v3587
        %v3629 = vunpack.c.l.b16 %v3588
        %v3630 = vunpack.c.l.b16 %v3589
        %v3631 = vpack.c.b16 %v3628, %v3627
        %v3632 = vpack.c.b16 %v3630, %v3629
        %3635 = vmatpush.bf16.msra.mxu0 0
        %3636 = vmatpush.bf16.msra.mxu0 0
        %3637 = vmatpush.bf16.msra.mxu0 0
        %3638 = vmatpush.bf16.msra.mxu0 0
        %3639 = vmatpush.bf16.msra.mxu0 0
        %3640 = vmatpush.bf16.msra.mxu0 0
        %3641 = vmatpush.bf16.msra.mxu0 %v3632
        %3642 = vmatpush.bf16.msra.mxu0 %v3631
        %3643 = vmatmul.bf16.gmra.mxu0 %v3607
        %v3644 = vpop.f32.mrf.mxu0
        %v3645 = vadd.f32 0.0, %v3644
        %v3646 = vpop.f32.mrf.mxu0
        %v3647 = vadd.f32 0.0, %v3646
        %3648 = vdwg.mxu0
        %v3653 = vunpack.c.l.b16 %v3590
        %v3654 = vunpack.c.l.b16 %v3591
        %v3655 = vunpack.c.l.b16 %v3592
        %v3656 = vunpack.c.l.b16 %v3593
        %v3657 = vpack.c.b16 %v3654, %v3653
        %v3658 = vpack.c.b16 %v3656, %v3655
        %3661 = vmatpush.bf16.msra.mxu0 0
        %3662 = vmatpush.bf16.msra.mxu0 0
        %3663 = vmatpush.bf16.msra.mxu0 0
        %3664 = vmatpush.bf16.msra.mxu0 0
        %3665 = vmatpush.bf16.msra.mxu0 0
        %3666 = vmatpush.bf16.msra.mxu0 0
        %3667 = vmatpush.bf16.msra.mxu0 %v3658
        %3668 = vmatpush.bf16.msra.mxu0 %v3657
        %3669 = vmatmul.bf16.gmra.mxu0 %v3607
        %v3670 = vpop.f32.mrf.mxu0
        %v3671 = vadd.f32 0.0, %v3670
        %v3672 = vpop.f32.mrf.mxu0
        %v3673 = vadd.f32 0.0, %v3672
        %3674 = vdwg.mxu0
        %v3675 = vrot.slane %v3619, 7
        %v3676 = vrot.slane %v3621, 7
        %v3677 = vlaneseq
        %v3678 = vshrl.u32 %v3677, 7
        %vm3679 = vcmp.lt.s32.totalorder %v3678, 1
        %v3680 = vsel %vm3679, %v3675, %v3676
        %v3681 = vsel %vm3679, %v3676, %v3675
        %v3682 = vrot.slane %v3671, 1
        %v3683 = vrot.slane %v3673, 1
        %vm3684 = vcmp.lt.s32.totalorder %v3678, 7
        %v3685 = vsel %vm3684, %v3682, %v3683
        %v3686 = vsel %vm3684, %v3683, %v3682
        %v3687 = vadd.s32 %v3678, 8
        %vm3688 = vcmp.eq.s32.totalorder %v3678, 0
        %vm3689 = vcmp.eq.s32.totalorder %v3687, 0
        %v3690 = vsel %vm3688, 1, 0
        %v3691 = vsel %vm3689, 1, 0
        %vm3692 = vcmp.eq.s32.totalorder %v3690, 1
        %vm3693 = vcmp.eq.s32.totalorder %v3691, 1
        %v3694 = vsel %vm3692, 0.0, %v3681
        %v3695 = vsel %vm3693, 0.0, %v3680
        %vm3696 = vcmp.eq.s32.totalorder %v3678, 15
        %vm3697 = vcmp.eq.s32.totalorder %v3687, 15
        %v3698 = vsel %vm3696, 1, 0
        %v3699 = vsel %vm3697, 1, 0
        %vm3700 = vcmp.eq.s32.totalorder %v3698, 1
        %vm3701 = vcmp.eq.s32.totalorder %v3699, 1
        %v3702 = vsel %vm3700, 0.0, %v3685
        %v3703 = vsel %vm3701, 0.0, %v3686
        %v3704 = vadd.f32 %v3694, %v3645
        %v3705 = vadd.f32 %v3695, %v3647
        %v3706 = vadd.f32 %v3704, %v3702
        %v3707 = vadd.f32 %v3705, %v3703
        %v3708 = vld [vmem:[%s11] sm:$0x1]
        %v3710 = vperm.slane %v3708, 0
        %v3712 = vadd.f32 %v3706, %v3710
        %v3713 = vadd.f32 %v3707, %v3710
        %v3714 = vmax.f32 %v3712, 0.0
        %v3715 = vmax.f32 %v3713, 0.0
        %v3716 = vmul.f32 %v3560, %v3714
        %v3717 = vmul.f32 %v3565, %v3715
        %v3718 = vpack.c.bf16 %v3717, %v3716
        %v3719 = vld [vmem:[%s12] sm:$0xff]
        %v3720 = vld [vmem:[%s12 + $0x8] sm:$0xff]
        %v3721 = vld [vmem:[%s12 + $0x10] sm:$0xff]
        %v3722 = vld [vmem:[%s12 + $0x18] sm:$0xff]
        %v3723 = vld [vmem:[%s12 + $0x20] sm:$0xff]
        %v3724 = vld [vmem:[%s12 + $0x28] sm:$0xff]
        %v3725 = vld [vmem:[%s12 + $0x30] sm:$0xff]
        %v3726 = vld [vmem:[%s12 + $0x38] sm:$0xff]
        %v3727 = vld [vmem:[%s12 + $0x40] sm:$0xff]
        %v3728 = vld [vmem:[%s12 + $0x48] sm:$0xff]
        %v3729 = vld [vmem:[%s12 + $0x50] sm:$0xff]
        %v3730 = vld [vmem:[%s12 + $0x58] sm:$0xff]
        %v3731 = vpack.c.bf16 %v3719, %v3719
        %v3732 = vpack.c.bf16 %v3720, %v3720
        %v3733 = vpack.c.bf16 %v3721, %v3721
        %v3734 = vpack.c.bf16 %v3722, %v3722
        %v3735 = vpack.c.bf16 %v3723, %v3723
        %v3736 = vpack.c.bf16 %v3724, %v3724
        %v3737 = vpack.c.bf16 %v3725, %v3725
        %v3738 = vpack.c.bf16 %v3726, %v3726
        %v3739 = vpack.c.bf16 %v3727, %v3727
        %v3740 = vpack.c.bf16 %v3728, %v3728
        %v3741 = vpack.c.bf16 %v3729, %v3729
        %v3742 = vpack.c.bf16 %v3730, %v3730
        %v3747 = vunpack.c.l.b16 %v3731
        %v3748 = vunpack.c.l.b16 %v3732
        %v3749 = vunpack.c.l.b16 %v3733
        %v3750 = vunpack.c.l.b16 %v3734
        %v3751 = vpack.c.b16 %v3748, %v3747
        %v3752 = vpack.c.b16 %v3750, %v3749
        %v3756 = vsel %vm587, %v3718, 0
        %3758 = vmatpush.bf16.msra.mxu0 0
        %3759 = vmatpush.bf16.msra.mxu0 0
        %3760 = vmatpush.bf16.msra.mxu0 0
        %3761 = vmatpush.bf16.msra.mxu0 0
        %3762 = vmatpush.bf16.msra.mxu0 0
        %3763 = vmatpush.bf16.msra.mxu0 0
        %3764 = vmatpush.bf16.msra.mxu0 %v3752
        %3765 = vmatpush.bf16.msra.mxu0 %v3751
        %3766 = vmatmul.bf16.gmra.mxu0 %v3756
        %v3767 = vpop.f32.mrf.mxu0
        %v3768 = vadd.f32 0.0, %v3767
        %v3769 = vpop.f32.mrf.mxu0
        %v3770 = vadd.f32 0.0, %v3769
        %3771 = vdwg.mxu0
        %v3776 = vunpack.c.l.b16 %v3735
        %v3777 = vunpack.c.l.b16 %v3736
        %v3778 = vunpack.c.l.b16 %v3737
        %v3779 = vunpack.c.l.b16 %v3738
        %v3780 = vpack.c.b16 %v3777, %v3776
        %v3781 = vpack.c.b16 %v3779, %v3778
        %3784 = vmatpush.bf16.msra.mxu0 0
        %3785 = vmatpush.bf16.msra.mxu0 0
        %3786 = vmatpush.bf16.msra.mxu0 0
        %3787 = vmatpush.bf16.msra.mxu0 0
        %3788 = vmatpush.bf16.msra.mxu0 0
        %3789 = vmatpush.bf16.msra.mxu0 0
        %3790 = vmatpush.bf16.msra.mxu0 %v3781
        %3791 = vmatpush.bf16.msra.mxu0 %v3780
        %3792 = vmatmul.bf16.gmra.mxu0 %v3756
        %v3793 = vpop.f32.mrf.mxu0
        %v3794 = vadd.f32 0.0, %v3793
        %v3795 = vpop.f32.mrf.mxu0
        %v3796 = vadd.f32 0.0, %v3795
        %3797 = vdwg.mxu0
        %v3802 = vunpack.c.l.b16 %v3739
        %v3803 = vunpack.c.l.b16 %v3740
        %v3804 = vunpack.c.l.b16 %v3741
        %v3805 = vunpack.c.l.b16 %v3742
        %v3806 = vpack.c.b16 %v3803, %v3802
        %v3807 = vpack.c.b16 %v3805, %v3804
        %3810 = vmatpush.bf16.msra.mxu0 0
        %3811 = vmatpush.bf16.msra.mxu0 0
        %3812 = vmatpush.bf16.msra.mxu0 0
        %3813 = vmatpush.bf16.msra.mxu0 0
        %3814 = vmatpush.bf16.msra.mxu0 0
        %3815 = vmatpush.bf16.msra.mxu0 0
        %3816 = vmatpush.bf16.msra.mxu0 %v3807
        %3817 = vmatpush.bf16.msra.mxu0 %v3806
        %3818 = vmatmul.bf16.gmra.mxu0 %v3756
        %v3819 = vpop.f32.mrf.mxu0
        %v3820 = vadd.f32 0.0, %v3819
        %v3821 = vpop.f32.mrf.mxu0
        %v3822 = vadd.f32 0.0, %v3821
        %3823 = vdwg.mxu0
        %v3824 = vrot.slane %v3768, 7
        %v3825 = vrot.slane %v3770, 7
        %v3826 = vsel %vm3679, %v3824, %v3825
        %v3827 = vsel %vm3679, %v3825, %v3824
        %v3828 = vrot.slane %v3820, 1
        %v3829 = vrot.slane %v3822, 1
        %v3830 = vsel %vm3684, %v3828, %v3829
        %v3831 = vsel %vm3684, %v3829, %v3828
        %v3832 = vsel %vm3692, 0.0, %v3827
        %v3833 = vsel %vm3693, 0.0, %v3826
        %v3834 = vsel %vm3700, 0.0, %v3830
        %v3835 = vsel %vm3701, 0.0, %v3831
        %v3836 = vadd.f32 %v3832, %v3794
        %v3837 = vadd.f32 %v3833, %v3796
        %v3838 = vadd.f32 %v3836, %v3834
        %v3839 = vadd.f32 %v3837, %v3835
        %v3840 = vld [vmem:[%s13] sm:$0x1]
        %v3842 = vperm.slane %v3840, 0
        %v3844 = vadd.f32 %v3838, %v3842
        %v3845 = vadd.f32 %v3839, %v3842
        %v3846 = vmax.f32 %v3844, 0.0
        %v3847 = vmax.f32 %v3845, 0.0
        %v3848 = vld [vmem:[%s572] sm:$0xff]
        %v3849 = vld [vmem:[%s572 + $0x8] sm:$0xff]
        %3851 = vset.pattern.permute.xlu0 0
        %3852 = vperm.xlu0 %3851, %v3848
        %v3853 = vpop.permute.xlu0 %3852
        %3856 = vset.pattern.permute.xlu0 0
        %3857 = vperm.xlu0 %3856, %v3849
        %v3858 = vpop.permute.xlu0 %3857
        %v3860 = vmul.f32 %v3853, %v3846
        %v3861 = vmul.f32 %v3858, %v3847
        %v3862 = vsel %vm587, %v3860, 0.0
        %v3863 = vsel %vm587, %v3861, 0.0
        %v3864 = vadd.f32 %v3862, %v3863
        %v3865 = vrot.slane %v3864, 4
        %v3866 = vadd.f32 %v3864, %v3865
        %v3867 = vrot.slane %v3866, 2
        %v3868 = vadd.f32 %v3866, %v3867
        %v3869 = vrot.slane %v3868, 1
        %v3870 = vadd.f32 %v3868, %v3869
        %v3871 = vpack.c.bf16 %v3870, %v3870
        %v3874 = vunpack.c.l.b16 %v3553
        %v3875 = vunpack.c.l.b16 %v3554
        %v3876 = vpack.c.b16 %v3875, %v3874
        %v3878 = vsel %vm587, %v3871, 0
        %v3881 = vsel %vm587, %v3876, 0
        %3883 = vmatpush.bf16.xpose.msra.mxu0 0
        %3884 = vmatpush.bf16.xpose.msra.mxu0 0
        %3885 = vmatpush.bf16.xpose.msra.mxu0 0
        %3886 = vmatpush.bf16.xpose.msra.mxu0 0
        %3887 = vmatpush.bf16.xpose.msra.mxu0 0
        %3888 = vmatpush.bf16.xpose.msra.mxu0 0
        %3889 = vmatpush.bf16.xpose.msra.mxu0 0
        %3890 = vmatpush.bf16.xpose.msra.mxu0 %v3881
        %3891 = vmatmul.bf16.gmra.mxu0 %v3878
        %v3892 = vpop.f32.mrf.mxu0
        %v3893 = vadd.f32 0.0, %v3892
        %v3894 = vpop.f32.mrf.mxu0
        %3895 = vdwg.mxu0
        %v3896 = vsel %vm800, %v3893, -inf
        %3897 = vmax.xlane.f32.xlu0 %v3896
        %v3898 = vpop.xlane.xlu0 %3897
        %v3899 = vsub.f32 %v3893, %v3898
        %v3900 = vmul.f32 %v3899, 1.442695
        %v3901 = vpow.pop %v3900
        %v3902 = vsel %vm800, %v3901, 0.0
        %3903 = vadd.xlane.f32.xlu0 %v3902
        %v3904 = vpop.xlane.xlu0 %3903
        %v3905 = vrcp.pop %v3904
        %v3906 = vmul.f32 %v3901, %v3905
        %v3907 = vpack.c.bf16 %v3906, %v3906
        %v3910 = vsel %vm643, %v3907, 0
        %3912 = vmatpush.bf16.msra.mxu0 0
        %3913 = vmatpush.bf16.msra.mxu0 0
        %3914 = vmatpush.bf16.msra.mxu0 0
        %3915 = vmatpush.bf16.msra.mxu0 0
        %3916 = vmatpush.bf16.msra.mxu0 0
        %3917 = vmatpush.bf16.msra.mxu0 0
        %3918 = vmatpush.bf16.msra.mxu0 0
        %3919 = vmatpush.bf16.msra.mxu0 %v3876
        %3920 = vmatmul.bf16.gmra.mxu0 %v3910
        %v3921 = vpop.f32.mrf.mxu0
        %v3922 = vadd.f32 0.0, %v3921
        %v3923 = vpop.f32.mrf.mxu0
        %3924 = vdwg.mxu0
        %v3925 = vpack.c.bf16 %v3922, %v3922
        %v3926 = vld [vmem:[%s14] sm:$0xff]
        %v3927 = vld [vmem:[%s14 + $0x8] sm:$0xff]
        %v3928 = vld [vmem:[%s14 + $0x10] sm:$0xff]
        %v3929 = vld [vmem:[%s14 + $0x18] sm:$0xff]
        %v3930 = vpack.c.bf16 %v3927, %v3926
        %v3931 = vpack.c.bf16 %v3929, %v3928
        %v3932 = vld [vmem:[%s15] sm:$0x1]
        %v3934 = vsel %vm587, %v3925, 0
        %3936 = vmatpush.bf16.msra.mxu0 0
        %3937 = vmatpush.bf16.msra.mxu0 0
        %3938 = vmatpush.bf16.msra.mxu0 0
        %3939 = vmatpush.bf16.msra.mxu0 0
        %3940 = vmatpush.bf16.msra.mxu0 0
        %3941 = vmatpush.bf16.msra.mxu0 0
        %3942 = vmatpush.bf16.msra.mxu0 %v3931
        %3943 = vmatpush.bf16.msra.mxu0 %v3930
        %3944 = vmatmul.bf16.gmra.mxu0 %v3934
        %v3945 = vpop.f32.mrf.mxu0
        %v3946 = vadd.f32 %v3932, %v3945
        %v3947 = vpop.f32.mrf.mxu0
        %3948 = vdwg.mxu0
        %vm3949 = vcmask 16384
        %3950 = vst.msk [vmem:[%s554] sm:$0x1] %vm3949, %v3946
        %s3951 = sand.u32 %s394, 1
        %s3952 = scalar_lea.sflag [#allocation4], %s3951
        %s3953 = sand.u32 %s394, 1
        %s3954 = scalar_lea.vmem [#allocation3], %s3953
        // Predicated region
        $region85: #{ascnn_forward.1} parent=83 // pred_check
          %p3955 = pneg %p404
        $region86: #{ascnn_forward.1} parent=83 // pred_check_branch
          %3957 = sbr.rel (%p3955) target = $region88
        $region87: #{ascnn_forward.1} parent=83 // pred_region
          %3959 = vsyncadd %s3952, 0
          %s3960 = scalar_lea.hbm %s16, %s30
          %s3962 = sshll.u32 %s3954, 4
          %s3963 = int_to_ptr.vmem [resolvable:$true] %s3962
          %s3964 = sshll.u32 %s3960, 4
          %s3965 = int_to_ptr.hbm [resolvable:$true] %s3964
          %3967 = dma.vmem_to_hbm [thread:$0]  %s3963, 16, %s3965, %s3952
        $region88: #{ascnn_forward.1} parent=83 // pred_fallthru
          _
      $region84: #{ascnn_forward.1} parent=5 // pred_fallthru
        _
      %p3968 = scmp.le.s32.totalorder 2, %s25
      // Predicated region
      $region89: #{ascnn_forward.1} parent=5 // pred_check
        %p3969 = pneg %p3968
      $region90: #{ascnn_forward.1} parent=5 // pred_check_branch
        %3971 = sbr.rel (%p3969) target = $region92
      $region91: #{ascnn_forward.1} parent=5 // pred_region
        %s3972 = ssub.s32 %s25, 2
        // Predicated region
        $region93: #{ascnn_forward.1} parent=91 // pred_check
          %p3973 = pneg %p410
        $region94: #{ascnn_forward.1} parent=91 // pred_check_branch
          %3975 = sbr.rel (%p3973) target = $region96
        $region95: #{ascnn_forward.1} parent=91 // pred_region
          %s3976 = sand.u32 %s395, 1
          %s3977 = scalar_lea.sflag [#allocation4], %s3976
          %s3978 = sand.u32 %s395, 1
          %s3979 = scalar_lea.vmem [#allocation3], %s3978
          %3981 = dma.done %s3977, 16
        $region96: #{ascnn_forward.1} parent=91 // pred_fallthru
          _
      $region92: #{ascnn_forward.1} parent=5 // pred_fallthru
        _
    $region6: #{ascnn_forward.1} parent=1 // loop_footer
      %s29 = sadd.s32 1, %s25
    $region7: #{ascnn_forward.1} parent=1 // loop_footer_branch
      %24 = sbr.rel target = $region3
    $region8: #{ascnn_forward.1} parent=1 // loop_exit
      _
    %3982 = vsyncpa [#allocation4], 1
    %s3983 = scalar_lea.sflag [#allocation4], 1
    %3984 = vsyncpa %s3983, 1

</llo_original>
